<compile_context>
chip_gen: v7x
topology: tpu7x:2x2x1
jax: 0.10.0
libtpu: 0.0.40
codegen_flags: <defaults>
</compile_context>

<pallas_src>
import math
import jax
import jax.numpy as jnp
from jax.experimental import pallas as pl
from jax.experimental.pallas import tpu as pltpu

# ----------------------------- hyper-params ---------------------------------
B = 2          # batch
S = 8          # encoder (text) length
T = 8          # number of decoded frames (= target.shape[2])
VOCAB = 40     # hp.symbols_count() + 3
EMB = 32       # hp.embedding_dimension
ENC = 32       # hp.encoder_dimension (== decoder_input_dimension, no spk/lang emb)
DEC = 32       # hp.decoder_dimension
PRE = 32       # hp.prenet_dimension
ATT = 32       # hp.attention_dimension
MELS = 16      # hp.num_mels
POST = 32      # hp.postnet_dimension
KPOST = 5      # hp.postnet_kernel_size
NPOST = 5      # hp.postnet_blocks
PAD = (KPOST - 1) // 2

LANES = 128
HEAD = MELS + 1           # frame|stop head width (17)
HEADW = 32                # lane-padded head width

# decoder slab lane layout (32-aligned fields)
SPEC_OFF = 0              # lanes 0:16   spectrogram frame
STOP_OFF = MELS           # lane  16     stop logit
ALIGN_OFF = 32            # lanes 32:40  alignment weights
POSTL_OFF = 64            # lanes 64:80  postnet (residual-added) spectrogram

# weight-slab row offsets (all sublane aligned)
OFF_WENC = 0
OFF_WMEM = OFF_WENC + EMB
OFF_WP1 = OFF_WMEM + ENC
OFF_WP2 = OFF_WP1 + MELS
OFF_WQ = OFF_WP2 + PRE
OFF_WATT = OFF_WQ + DEC                   # (PRE+ENC+DEC, 4*DEC)
OFF_WGEN = OFF_WATT + (PRE + ENC + DEC)   # (DEC+ENC+DEC, 4*DEC)
OFF_WHEAD = OFF_WGEN + (DEC + ENC + DEC)  # (DEC+ENC, HEAD)
_CHANS = [MELS] + [POST] * (NPOST - 1) + [MELS]
POST_OFFS = []
_off = OFF_WHEAD + (DEC + ENC)
for _blk in range(NPOST):
    POST_OFFS.append(_off)
    _off += KPOST * _CHANS[_blk]
WROWS = ((_off + 15) // 16) * 16          # 1120

# bias-slab rows
BROW_ENC, BROW_P1, BROW_P2, BROW_A, BROW_G, BROW_HEAD, BROW_VATT, BROW_POST = range(8)
BROWS = 16

# TODO(synk): stochastic prenet dropout / teacher-forcing RNG omitted (rates fixed to 0.0).


# ----------------------------- fused kernel ---------------------------------
def tacotron_kernel(len_ref, emb_ref, w_ref, b_ref, enc_out_ref, dec_out_ref):
    f32 = jnp.float32
    bf16 = jnp.bfloat16
    b = pl.program_id(0)

    def dot(a, w):
        # bf16 MXU operands, f32 accumulation; element-wise math stays f32 (v5e-safe).
        return jnp.dot(a.astype(bf16), w, preferred_element_type=f32)

    # zero-init the decoder output slab once (one (T,128) store)
    dec_out_ref[...] = jnp.zeros((1, T, LANES), f32)

    # ---------------- encoder (stand-in: dense projection + tanh) -----------
    # TODO(synk): the real Encoder (conv stack + BiLSTM) is not defined in the provided
    # source; stand-in is a dense projection + tanh (plus the attention memory
    # projection computed once here).
    x = emb_ref[...].reshape(S, EMB)
    enc = jnp.tanh(dot(x, w_ref[OFF_WENC:OFF_WENC + EMB, 0:ENC])
                   + b_ref[BROW_ENC:BROW_ENC + 1, 0:ENC])                # (S, ENC)
    pmem = dot(enc, w_ref[OFF_WMEM:OFF_WMEM + ENC, 0:ATT])               # (S, ATT)
    enc_out_ref[...] = jnp.concatenate(
        [enc, jnp.zeros((S, LANES - ENC), f32)], axis=-1).reshape(1, S, LANES)

    # source mask built from the prefetched length scalar (no mask array / relayout)
    lenb = len_ref[b]
    valid = jax.lax.broadcasted_iota(jnp.int32, (S, 1), 0) < lenb        # (S, 1) bool

    # loop-invariant bias rows (single vregs)
    b_p1 = b_ref[BROW_P1:BROW_P1 + 1, 0:PRE]
    b_p2 = b_ref[BROW_P2:BROW_P2 + 1, 0:PRE]
    b_a = b_ref[BROW_A:BROW_A + 1, :]
    b_g = b_ref[BROW_G:BROW_G + 1, :]
    b_h = b_ref[BROW_HEAD:BROW_HEAD + 1, 0:HEADW]
    v_att = b_ref[BROW_VATT:BROW_VATT + 1, 0:ATT]

    # ---------------- decoder: T steps unrolled, state in vregs -------------
    h_att = jnp.zeros((1, DEC), f32)
    c_att = jnp.zeros((1, DEC), f32)
    h_gen = jnp.zeros((1, DEC), f32)
    c_gen = jnp.zeros((1, DEC), f32)
    ctx = jnp.zeros((1, ENC), f32)        # attention.reset -> zero initial context
    frame = jnp.zeros((1, MELS), f32)

    for t in range(T):                    # teacher_forcing_ratio == 0.0 path
        # Pre-net on previous predicted frame (dropout rate fixed to 0.0).
        p1 = jnp.maximum(dot(frame, w_ref[OFF_WP1:OFF_WP1 + MELS, 0:PRE]) + b_p1, 0.0)
        p2 = jnp.maximum(dot(p1, w_ref[OFF_WP2:OFF_WP2 + PRE, 0:PRE]) + b_p2, 0.0)

        # Attention LSTM: input = cat(prenet_out, context) (+ hidden), one fused dot,
        # one full-width sigmoid + one full-width tanh over the 128-lane gate vector.
        att_in = jnp.concatenate([p2, ctx, h_att], axis=-1)             # (1, 96)
        gates = dot(att_in, w_ref[OFF_WATT:OFF_WATT + PRE + ENC + DEC, :]) + b_a
        sg = jax.nn.sigmoid(gates)
        tg = jnp.tanh(gates)
        c_att = sg[:, DEC:2 * DEC] * c_att + sg[:, 0:DEC] * tg[:, 2 * DEC:3 * DEC]
        h_att = sg[:, 3 * DEC:4 * DEC] * jnp.tanh(c_att)

        # TODO(synk): LocationSensitiveAttention not provided; content-based additive attention.
        q = dot(h_att, w_ref[OFF_WQ:OFF_WQ + DEC, 0:ATT])               # (1, ATT)
        sc = jnp.tanh(pmem + q)                                          # (S, ATT)
        e = jnp.sum(sc * v_att, axis=-1, keepdims=True)                  # (S, 1)
        e = jnp.where(valid, e, -1e30)
        m = jnp.max(e, axis=0, keepdims=True)
        pexp = jnp.exp(e - m)
        w_col = pexp * pl.reciprocal(jnp.sum(pexp, axis=0, keepdims=True), approx=True)
        # context on VPU + sublane reduce (keeps the 1-row MXU round trip off the chain)
        ctx = jnp.sum(w_col * enc, axis=0, keepdims=True)                # (1, ENC)

        # Generator LSTM: input = cat(h_att, context) (+ hidden).
        gen_in = jnp.concatenate([h_att, ctx, h_gen], axis=-1)           # (1, 96)
        gates2 = dot(gen_in, w_ref[OFF_WGEN:OFF_WGEN + DEC + ENC + DEC, :]) + b_g
        sg2 = jax.nn.sigmoid(gates2)
        tg2 = jnp.tanh(gates2)
        c_gen = sg2[:, DEC:2 * DEC] * c_gen + sg2[:, 0:DEC] * tg2[:, 2 * DEC:3 * DEC]
        h_gen = sg2[:, 3 * DEC:4 * DEC] * jnp.tanh(c_gen)

        # Fused frame|stop heads on proto_output = cat(h_gen, context); lanes 0:16 frame,
        # lane 16 stop, 17:32 zero.
        heads = dot(jnp.concatenate([h_gen, ctx], axis=-1),
                    w_ref[OFF_WHEAD:OFF_WHEAD + DEC + ENC, 0:HEADW]) + b_h
        frame = heads[:, 0:MELS]

        # Stream this step's outputs straight into the slab (frees vregs immediately).
        dec_out_ref[0:1, t:t + 1, 0:HEADW] = heads.reshape(1, 1, HEADW)
        dec_out_ref[0:1, t:t + 1, ALIGN_OFF:ALIGN_OFF + S] = w_col.reshape(1, 1, S)

    # ---------------- post-net: KPOST accumulated dots per block, BN folded --
    # TODO(synk): ConvBlock source not provided; conv -> BN(eval) -> activation (dropout=0) assumed.
    spec = dec_out_ref[0:1, :, SPEC_OFF:SPEC_OFF + MELS].reshape(T, MELS)
    h = spec
    for blk in range(NPOST):
        cin, cout = _CHANS[blk], _CHANS[blk + 1]
        zp = jnp.zeros((PAD, cin), f32)
        hpad = jnp.concatenate([zp, h, zp], axis=0)          # zero "same" padding in time
        woff = POST_OFFS[blk]
        acc = dot(hpad[0:T, :], w_ref[woff:woff + cin, 0:cout])
        for k in range(1, KPOST):
            acc = acc + dot(hpad[k:k + T, :],
                            w_ref[woff + k * cin:woff + (k + 1) * cin, 0:cout])
        y = acc + b_ref[BROW_POST + blk:BROW_POST + blk + 1, 0:cout]
        if blk < NPOST - 1:
            y = jnp.tanh(y)
        h = y
    post = spec + h                                           # residual of Postnet.forward
    dec_out_ref[0:1, :, POSTL_OFF:POSTL_OFF + MELS] = post.reshape(1, T, MELS)


def tacotron_call(text_length, embedded, wslab, bslab):
    out_shape = (jax.ShapeDtypeStruct((B, S, LANES), jnp.float32),
                 jax.ShapeDtypeStruct((B, T, LANES), jnp.float32))
    grid_spec = pltpu.PrefetchScalarGridSpec(
        num_scalar_prefetch=1,                      # text_length -> SMEM
        grid=(B,),
        in_specs=[
            pl.BlockSpec((1, S, EMB), lambda b, lens: (b, 0, 0)),
            pl.BlockSpec((WROWS, LANES), lambda b, lens: (0, 0)),   # resident across grid
            pl.BlockSpec((BROWS, LANES), lambda b, lens: (0, 0)),
        ],
        out_specs=[
            pl.BlockSpec((1, S, LANES), lambda b, lens: (b, 0, 0)),
            pl.BlockSpec((1, T, LANES), lambda b, lens: (b, 0, 0)),
        ],
    )
    return pl.pallas_call(
        tacotron_kernel,
        out_shape=out_shape,
        grid_spec=grid_spec,
        compiler_params=pltpu.CompilerParams(dimension_semantics=("parallel",)),
    )(text_length, embedded, wslab, bslab)


# ----------------------------- parameters -----------------------------------
def init_params(key):
    """Raw (PyTorch-layout-equivalent) parameters."""
    p = {}
    keys = [key]

    def nxt():
        keys[0], sub = jax.random.split(keys[0])
        return sub

    def xavier(shape, fan_in=None, fan_out=None):
        fi = fan_in if fan_in is not None else (shape[0] if len(shape) > 1 else shape[-1])
        fo = fan_out if fan_out is not None else shape[-1]
        lim = math.sqrt(6.0 / (fi + fo))
        return jax.random.uniform(nxt(), shape, jnp.float32, -lim, lim)

    emb = xavier((VOCAB, EMB))
    p['embedding'] = emb.at[0].set(0.0)                         # padding_idx = 0
    p['wenc'] = xavier((EMB, ENC)); p['benc'] = jnp.zeros((ENC,), jnp.float32)
    p['wmem'] = xavier((ENC, ATT))
    # pre-net (2 layers)
    p['wp1'] = xavier((MELS, PRE)); p['bp1'] = jnp.zeros((PRE,), jnp.float32)
    p['wp2'] = xavier((PRE, PRE)); p['bp2'] = jnp.zeros((PRE,), jnp.float32)
    # attention LSTM cell (input PRE + ENC, hidden DEC), gate order (i, f, g, o)
    p['wax'] = xavier((PRE, 4 * DEC)); p['wac'] = xavier((ENC, 4 * DEC))
    p['whha'] = xavier((DEC, 4 * DEC)); p['ba'] = jnp.zeros((4 * DEC,), jnp.float32)
    # attention projections
    p['wq'] = xavier((DEC, ATT)); p['vatt'] = xavier((ATT,))
    # generator LSTM cell (input DEC + ENC, hidden DEC)
    p['wgh'] = xavier((DEC, 4 * DEC)); p['wgc'] = xavier((ENC, 4 * DEC))
    p['whhg'] = xavier((DEC, 4 * DEC)); p['bg'] = jnp.zeros((4 * DEC,), jnp.float32)
    # frame / stop prediction heads (Linear(DEC + ENC, .))
    p['wfh'] = xavier((DEC, MELS)); p['wfc'] = xavier((ENC, MELS))
    p['bf'] = jnp.zeros((MELS,), jnp.float32)
    p['wsh'] = xavier((DEC, 1)); p['wsc'] = xavier((ENC, 1))
    p['bs'] = jnp.zeros((1,), jnp.float32)
    # post-net conv blocks (weights stored as (K, Cin, Cout); BN in eval mode)
    for blk in range(NPOST):
        cin, cout = _CHANS[blk], _CHANS[blk + 1]
        p[f'post{blk}_w'] = xavier((KPOST, cin, cout), fan_in=KPOST * cin) * 0.3
        p[f'post{blk}_b'] = jnp.zeros((cout,), jnp.float32)
        p[f'post{blk}_gamma'] = jnp.ones((cout,), jnp.float32)
        p[f'post{blk}_beta'] = jnp.zeros((cout,), jnp.float32)
        p[f'post{blk}_mean'] = jnp.zeros((cout,), jnp.float32)
        p[f'post{blk}_var'] = jnp.ones((cout,), jnp.float32)
    return p


def pack_params(p):
    """One bf16 (WROWS,128) weight slab + one f32 (16,128) bias slab (eval-mode BN folded
    into the postnet conv weights/biases).  Call ONCE, outside the per-step path."""
    f32 = jnp.float32
    wslab = jnp.zeros((WROWS, LANES), f32)

    def put(slab, roff, w):
        r, c = w.shape
        return slab.at[roff:roff + r, 0:c].set(w)

    wslab = put(wslab, OFF_WENC, p['wenc'])
    wslab = put(wslab, OFF_WMEM, p['wmem'])
    wslab = put(wslab, OFF_WP1, p['wp1'])
    wslab = put(wslab, OFF_WP2, p['wp2'])
    wslab = put(wslab, OFF_WQ, p['wq'])
    # attention LSTM rows = [prenet_out | context | hidden]
    wslab = put(wslab, OFF_WATT, jnp.concatenate([p['wax'], p['wac'], p['whha']], axis=0))
    # generator LSTM rows = [h_att | context | hidden]
    wslab = put(wslab, OFF_WGEN, jnp.concatenate([p['wgh'], p['wgc'], p['whhg']], axis=0))
    # fused frame|stop heads on cat(h_gen, context)
    whead = jnp.concatenate(
        [jnp.concatenate([p['wfh'], p['wsh']], axis=1),
         jnp.concatenate([p['wfc'], p['wsc']], axis=1)], axis=0)          # (64, 17)
    wslab = put(wslab, OFF_WHEAD, whead)

    bslab = jnp.zeros((BROWS, LANES), f32)
    bslab = bslab.at[BROW_ENC, 0:ENC].set(p['benc'])
    bslab = bslab.at[BROW_P1, 0:PRE].set(p['bp1'])
    bslab = bslab.at[BROW_P2, 0:PRE].set(p['bp2'])
    bslab = bslab.at[BROW_A, 0:4 * DEC].set(p['ba'])
    bslab = bslab.at[BROW_G, 0:4 * DEC].set(p['bg'])
    bslab = bslab.at[BROW_HEAD, 0:HEAD].set(jnp.concatenate([p['bf'], p['bs']]))
    bslab = bslab.at[BROW_VATT, 0:ATT].set(p['vatt'])

    # post-net: fold eval-mode BatchNorm into conv weight/bias; per-tap (cin,cout) blocks
    for blk in range(NPOST):
        cin, cout = _CHANS[blk], _CHANS[blk + 1]
        s = p[f'post{blk}_gamma'] * jax.lax.rsqrt(p[f'post{blk}_var'] + 1e-5)
        wf = p[f'post{blk}_w'] * s
        bf_ = (p[f'post{blk}_b'] - p[f'post{blk}_mean']) * s + p[f'post{blk}_beta']
        for k in range(KPOST):
            wslab = put(wslab, POST_OFFS[blk] + k * cin, wf[k])
        bslab = bslab.at[BROW_POST + blk, 0:cout].set(bf_)

    return {'wslab': wslab.astype(jnp.bfloat16), 'bslab': bslab}


# ----------------------------- full forward ---------------------------------
@jax.jit
def _forward_jit(kp, embedding, text, text_length, target_length):
    embedded = jnp.take(embedding, text, axis=0)                          # (B,S,EMB) f32
    enc_slab, dec_slab = tacotron_call(text_length.astype(jnp.int32), embedded,
                                       kp['wslab'], kp['bslab'])

    encoder_output = enc_slab[:, :, :ENC]                                 # (B, S, ENC)
    prediction = dec_slab[:, :, SPEC_OFF:SPEC_OFF + MELS]                 # (B, T, MELS)
    stop_token = dec_slab[:, :, STOP_OFF]                                 # (B, T)
    alignment = dec_slab[:, :, ALIGN_OFF:ALIGN_OFF + S]                   # (B, T, S)
    post = dec_slab[:, :, POSTL_OFF:POSTL_OFF + MELS]                     # (B, T, MELS)

    pre_prediction = jnp.transpose(prediction, (0, 2, 1))                 # (B, MELS, T)
    post_prediction = jnp.transpose(post, (0, 2, 1))                      # (B, MELS, T)

    target_mask = jnp.arange(T)[None, :] < target_length[:, None]         # (B, T) bool
    stop_token = jnp.where(target_mask, stop_token, 1000.0)
    maskf = target_mask[:, None, :].astype(jnp.float32)                   # (B, 1, T)
    pre_prediction = pre_prediction * maskf
    post_prediction = post_prediction * maskf
    return post_prediction, pre_prediction, stop_token, alignment, encoder_output


def tacotron_forward(kp, embedding, text, text_length, target, target_length,
                     speakers=None, languages=None, teacher_forcing_ratio=0.0):
    """Mirrors Tacotron.forward. Returns
    (post_prediction, pre_prediction, stop_token, alignment, speaker_prediction, encoder_output)."""
    del speakers, languages               # hp.multi_speaker = hp.multi_language = False
    assert teacher_forcing_ratio == 0.0   # teacher = rand > 1 -> all False (deterministic)
    assert target.shape[2] == T
    post, pre, stop, align, enc = _forward_jit(kp, embedding, text, text_length, target_length)
    speaker_prediction = None             # hp.reversal_classifier = False
    return post, pre, stop, align, speaker_prediction, enc


if __name__ == "__main__":
    root = jax.random.PRNGKey(0)
    k_par, k_text, k_tgt = jax.random.split(root, 3)

    params = init_params(k_par)
    kp = pack_params(params)                       # hoisted: weights packed once

    text = jax.random.randint(k_text, (B, S), 1, VOCAB, dtype=jnp.int32)
    text_length = jnp.array([S, S - 3], dtype=jnp.int32)
    target = jax.random.normal(k_tgt, (B, MELS, T), dtype=jnp.float32)
    target_length = jnp.array([T, T - 2], dtype=jnp.int32)

    outs = tacotron_forward(kp, params['embedding'], text, text_length, target,
                            target_length, speakers=None, languages=None,
                            teacher_forcing_ratio=0.0)
    post_pred, pre_pred, stop_tok, align, spk_pred, enc_out = outs
    jax.block_until_ready((post_pred, pre_pred, stop_tok, align, enc_out))

    assert post_pred.shape == (B, MELS, T)
    assert pre_pred.shape == (B, MELS, T)
    assert stop_tok.shape == (B, T)
    assert align.shape == (B, T, S)
    assert enc_out.shape == (B, S, ENC)
    assert bool(jnp.all(jnp.isfinite(post_pred)))
    print("KERNEL_OK")
</pallas_src>

<mosaic_0001>
module attributes {stable_mosaic.version = 11 : i64} {
  func.func @tacotron_kernel(%arg0: i32, %arg1: memref<2xi32, #tpu.memory_space<smem>>, %arg2: memref<1x8x32xf32, #tpu.memory_space<vmem>>, %arg3: memref<1120x128xbf16, #tpu.memory_space<vmem>>, %arg4: memref<16x128xf32, #tpu.memory_space<vmem>>, %arg5: memref<1x8x128xf32, #tpu.memory_space<vmem>>, %arg6: memref<1x8x128xf32, #tpu.memory_space<vmem>>) attributes {dimension_semantics = [#tpu.dimension_semantics<parallel>], iteration_bounds = array<i64: 2>, scalar_prefetch = 1 : i64, scratch_operands = 0 : i64, tpu.core_type = #tpu.core_type<tc>, window_params = [{transform_indices = @transform_0, window_bounds = array<i64: 1, 8, 32>}, {pipeline_mode = #tpu.pipeline_mode<synchronous>, transform_indices = @transform_1, window_bounds = array<i64: 1120, 128>}, {pipeline_mode = #tpu.pipeline_mode<synchronous>, transform_indices = @transform_2, window_bounds = array<i64: 16, 128>}, {transform_indices = @transform_3, window_bounds = array<i64: 1, 8, 128>}, {transform_indices = @transform_4, window_bounds = array<i64: 1, 8, 128>}]} {
    %cst = arith.constant 0.000000e+00 : f32
    %0 = vector.broadcast %cst : f32 to vector<1x8x128xf32>
    %c0 = arith.constant 0 : index
    %c0_0 = arith.constant 0 : index
    %c0_1 = arith.constant 0 : index
    %1 = vector.load %arg6[%c0, %c0_0, %c0_1] : memref<1x8x128xf32, #tpu.memory_space<vmem>>, vector<1x8x128xf32>
    tpu.vector_store %arg6[%c0, %c0_0, %c0_1], %0 {strides = array<i32>} : memref<1x8x128xf32, #tpu.memory_space<vmem>>, vector<1x8x128xf32>,
    %c0_2 = arith.constant 0 : index
    %c0_3 = arith.constant 0 : index
    %c0_4 = arith.constant 0 : index
    %2 = vector.load %arg2[%c0_2, %c0_3, %c0_4] : memref<1x8x32xf32, #tpu.memory_space<vmem>>, vector<1x8x32xf32>
    %3 = vector.shape_cast %2 : vector<1x8x32xf32> to vector<8x32xf32>
    %c0_5 = arith.constant 0 : index
    %c0_6 = arith.constant 0 : index
    %4 = vector.load %arg3[%c0_5, %c0_6] : memref<1120x128xbf16, #tpu.memory_space<vmem>>, vector<32x32xbf16>
    %5 = arith.truncf %3 : vector<8x32xf32> to vector<8x32xbf16>
    %cst_7 = arith.constant dense<0.000000e+00> : vector<8x32xf32>
    %6 = tpu.matmul %5, %4, %cst_7 {dimension_numbers = #tpu.dot_dimension_numbers<[1], [0], [0], [1], [0, 0, 1, 1], [], []>} : vector<8x32xbf16>, vector<32x32xbf16>, vector<8x32xf32> -> vector<8x32xf32>
    %c0_8 = arith.constant 0 : index
    %c0_9 = arith.constant 0 : index
    %7 = vector.load %arg4[%c0_8, %c0_9] : memref<16x128xf32, #tpu.memory_space<vmem>>, vector<1x32xf32>
    %8 = vector.broadcast %7 : vector<1x32xf32> to vector<8x32xf32>
    %9 = arith.addf %6, %8 : vector<8x32xf32>
    %10 = math.tanh %9 : vector<8x32xf32>
    %c32 = arith.constant 32 : index
    %c0_10 = arith.constant 0 : index
    %11 = vector.load %arg3[%c32, %c0_10] : memref<1120x128xbf16, #tpu.memory_space<vmem>>, vector<32x32xbf16>
    %12 = arith.truncf %10 : vector<8x32xf32> to vector<8x32xbf16>
    %cst_11 = arith.constant dense<0.000000e+00> : vector<8x32xf32>
    %13 = tpu.matmul %12, %11, %cst_11 {dimension_numbers = #tpu.dot_dimension_numbers<[1], [0], [0], [1], [0, 0, 1, 1], [], []>} : vector<8x32xbf16>, vector<32x32xbf16>, vector<8x32xf32> -> vector<8x32xf32>
    %cst_12 = arith.constant 0.000000e+00 : f32
    %14 = vector.broadcast %cst_12 : f32 to vector<8x96xf32>
    %15 = tpu.concatenate %10, %14 in 1 : vector<8x32xf32>, vector<8x96xf32> -> vector<8x128xf32>
    %16 = vector.shape_cast %15 : vector<8x128xf32> to vector<1x8x128xf32>
    %c0_13 = arith.constant 0 : index
    %c0_14 = arith.constant 0 : index
    %c0_15 = arith.constant 0 : index
    %17 = vector.load %arg5[%c0_13, %c0_14, %c0_15] : memref<1x8x128xf32, #tpu.memory_space<vmem>>, vector<1x8x128xf32>
    tpu.vector_store %arg5[%c0_13, %c0_14, %c0_15], %16 {strides = array<i32>} : memref<1x8x128xf32, #tpu.memory_space<vmem>>, vector<1x8x128xf32>,
    %18 = arith.index_cast %arg0 : i32 to index
    %19 = memref.load %arg1[%18] : memref<2xi32, #tpu.memory_space<smem>>
    %20 = tpu.iota {dimensions = array<i32: 0>} : vector<8x1xi32>
    %21 = vector.broadcast %19 : i32 to vector<8x1xi32>
    %22 = arith.cmpi slt, %20, %21 : vector<8x1xi32>
    %c1 = arith.constant 1 : index
    %c0_16 = arith.constant 0 : index
    %23 = vector.load %arg4[%c1, %c0_16] : memref<16x128xf32, #tpu.memory_space<vmem>>, vector<1x32xf32>
    %c2 = arith.constant 2 : index
    %c0_17 = arith.constant 0 : index
    %24 = vector.load %arg4[%c2, %c0_17] : memref<16x128xf32, #tpu.memory_space<vmem>>, vector<1x32xf32>
    %c3 = arith.constant 3 : index
    %c0_18 = arith.constant 0 : index
    %25 = vector.load %arg4[%c3, %c0_18] : memref<16x128xf32, #tpu.memory_space<vmem>>, vector<1x128xf32>
    %c4 = arith.constant 4 : index
    %c0_19 = arith.constant 0 : index
    %26 = vector.load %arg4[%c4, %c0_19] : memref<16x128xf32, #tpu.memory_space<vmem>>, vector<1x128xf32>
    %c5 = arith.constant 5 : index
    %c0_20 = arith.constant 0 : index
    %27 = vector.load %arg4[%c5, %c0_20] : memref<16x128xf32, #tpu.memory_space<vmem>>, vector<1x32xf32>
    %c6 = arith.constant 6 : index
    %c0_21 = arith.constant 0 : index
    %28 = vector.load %arg4[%c6, %c0_21] : memref<16x128xf32, #tpu.memory_space<vmem>>, vector<1x32xf32>
    %cst_22 = arith.constant 0.000000e+00 : f32
    %29 = vector.broadcast %cst_22 : f32 to vector<1x32xf32>
    %cst_23 = arith.constant 0.000000e+00 : f32
    %30 = vector.broadcast %cst_23 : f32 to vector<1x32xf32>
    %cst_24 = arith.constant 0.000000e+00 : f32
    %31 = vector.broadcast %cst_24 : f32 to vector<1x32xf32>
    %cst_25 = arith.constant 0.000000e+00 : f32
    %32 = vector.broadcast %cst_25 : f32 to vector<1x32xf32>
    %cst_26 = arith.constant 0.000000e+00 : f32
    %33 = vector.broadcast %cst_26 : f32 to vector<1x32xf32>
    %cst_27 = arith.constant 0.000000e+00 : f32
    %34 = vector.broadcast %cst_27 : f32 to vector<1x16xf32>
    %c64 = arith.constant 64 : index
    %c0_28 = arith.constant 0 : index
    %35 = vector.load %arg3[%c64, %c0_28] : memref<1120x128xbf16, #tpu.memory_space<vmem>>, vector<16x32xbf16>
    %36 = arith.truncf %34 : vector<1x16xf32> to vector<1x16xbf16>
    %cst_29 = arith.constant dense<0.000000e+00> : vector<1x32xf32>
    %37 = tpu.matmul %36, %35, %cst_29 {dimension_numbers = #tpu.dot_dimension_numbers<[1], [0], [0], [1], [0, 0, 1, 1], [], []>} : vector<1x16xbf16>, vector<16x32xbf16>, vector<1x32xf32> -> vector<1x32xf32>
    %38 = arith.addf %37, %23 : vector<1x32xf32>
    %cst_30 = arith.constant 0.000000e+00 : f32
    %39 = vector.broadcast %cst_30 : f32 to vector<1x32xf32>
    %40 = arith.maximumf %38, %39 : vector<1x32xf32>
    %c80 = arith.constant 80 : index
    %c0_31 = arith.constant 0 : index
    %41 = vector.load %arg3[%c80, %c0_31] : memref<1120x128xbf16, #tpu.memory_space<vmem>>, vector<32x32xbf16>
    %42 = arith.truncf %40 : vector<1x32xf32> to vector<1x32xbf16>
    %cst_32 = arith.constant dense<0.000000e+00> : vector<1x32xf32>
    %43 = tpu.matmul %42, %41, %cst_32 {dimension_numbers = #tpu.dot_dimension_numbers<[1], [0], [0], [1], [0, 0, 1, 1], [], []>} : vector<1x32xbf16>, vector<32x32xbf16>, vector<1x32xf32> -> vector<1x32xf32>
    %44 = arith.addf %43, %24 : vector<1x32xf32>
    %cst_33 = arith.constant 0.000000e+00 : f32
    %45 = vector.broadcast %cst_33 : f32 to vector<1x32xf32>
    %46 = arith.maximumf %44, %45 : vector<1x32xf32>
    %47 = tpu.concatenate %46, %33, %29 in 1 : vector<1x32xf32>, vector<1x32xf32>, vector<1x32xf32> -> vector<1x96xf32>
    %c144 = arith.constant 144 : index
    %c0_34 = arith.constant 0 : index
    %48 = vector.load %arg3[%c144, %c0_34] : memref<1120x128xbf16, #tpu.memory_space<vmem>>, vector<96x128xbf16>
    %49 = arith.truncf %47 : vector<1x96xf32> to vector<1x96xbf16>
    %cst_35 = arith.constant dense<0.000000e+00> : vector<1x128xf32>
    %50 = tpu.matmul %49, %48, %cst_35 {dimension_numbers = #tpu.dot_dimension_numbers<[1], [0], [0], [1], [0, 0, 1, 1], [], []>} : vector<1x96xbf16>, vector<96x128xbf16>, vector<1x128xf32> -> vector<1x128xf32>
    %51 = arith.addf %50, %25 : vector<1x128xf32>
    %52 = arith.negf %51 : vector<1x128xf32>
    %53 = math.exp %52 : vector<1x128xf32>
    %cst_36 = arith.constant 1.000000e+00 : f32
    %54 = vector.broadcast %cst_36 : f32 to vector<1x128xf32>
    %55 = arith.addf %54, %53 : vector<1x128xf32>
    %56 = arith.divf %54, %55 : vector<1x128xf32>
    %57 = math.tanh %51 : vector<1x128xf32>
    %58 = vector.extract_strided_slice %56 {offsets = [0, 32], sizes = [1, 32], strides = [1, 1]} : vector<1x128xf32> to vector<1x32xf32>
    %59 = arith.mulf %58, %30 : vector<1x32xf32>
    %60 = vector.extract_strided_slice %56 {offsets = [0, 0], sizes = [1, 32], strides = [1, 1]} : vector<1x128xf32> to vector<1x32xf32>
    %61 = vector.extract_strided_slice %57 {offsets = [0, 64], sizes = [1, 32], strides = [1, 1]} : vector<1x128xf32> to vector<1x32xf32>
    %62 = arith.mulf %60, %61 : vector<1x32xf32>
    %63 = arith.addf %59, %62 : vector<1x32xf32>
    %64 = vector.extract_strided_slice %56 {offsets = [0, 96], sizes = [1, 32], strides = [1, 1]} : vector<1x128xf32> to vector<1x32xf32>
    %65 = math.tanh %63 : vector<1x32xf32>
    %66 = arith.mulf %64, %65 : vector<1x32xf32>
    %c112 = arith.constant 112 : index
    %c0_37 = arith.constant 0 : index
    %67 = vector.load %arg3[%c112, %c0_37] : memref<1120x128xbf16, #tpu.memory_space<vmem>>, vector<32x32xbf16>
    %68 = arith.truncf %66 : vector<1x32xf32> to vector<1x32xbf16>
    %cst_38 = arith.constant dense<0.000000e+00> : vector<1x32xf32>
    %69 = tpu.matmul %68, %67, %cst_38 {dimension_numbers = #tpu.dot_dimension_numbers<[1], [0], [0], [1], [0, 0, 1, 1], [], []>} : vector<1x32xbf16>, vector<32x32xbf16>, vector<1x32xf32> -> vector<1x32xf32>
    %70 = vector.broadcast %69 : vector<1x32xf32> to vector<8x32xf32>
    %71 = arith.addf %13, %70 : vector<8x32xf32>
    %72 = math.tanh %71 : vector<8x32xf32>
    %73 = vector.broadcast %28 : vector<1x32xf32> to vector<8x32xf32>
    %74 = arith.mulf %72, %73 : vector<8x32xf32>
    %cst_39 = arith.constant dense<0.000000e+00> : vector<8xf32>
    %75 = vector.multi_reduction <add>, %74, %cst_39 [1] : vector<8x32xf32> to vector<8xf32>
    %76 = vector.shape_cast %75 : vector<8xf32> to vector<8x1xf32>
    %cst_40 = arith.constant -1.000000e+30 : f32
    %77 = vector.broadcast %cst_40 : f32 to vector<8x1xf32>
    %78 = arith.select %22, %76, %77 : vector<8x1xi1>, vector<8x1xf32>
    %cst_41 = arith.constant dense<0xFF800000> : vector<1xf32>
    %79 = vector.multi_reduction <maximumf>, %78, %cst_41 [0] : vector<8x1xf32> to vector<1xf32>
    %80 = vector.shape_cast %79 : vector<1xf32> to vector<1x1xf32>
    %81 = vector.broadcast %80 : vector<1x1xf32> to vector<8x1xf32>
    %82 = arith.subf %78, %81 : vector<8x1xf32>
    %83 = math.exp %82 : vector<8x1xf32>
    %cst_42 = arith.constant dense<0.000000e+00> : vector<1xf32>
    %84 = vector.multi_reduction <add>, %83, %cst_42 [0] : vector<8x1xf32> to vector<1xf32>
    %85 = vector.shape_cast %84 : vector<1xf32> to vector<1x1xf32>
    %86 = tpu.reciprocal %85 {approx = true} : vector<1x1xf32> -> vector<1x1xf32>
    %87 = vector.broadcast %86 : vector<1x1xf32> to vector<8x1xf32>
    %88 = arith.mulf %83, %87 : vector<8x1xf32>
    %89 = vector.broadcast %88 : vector<8x1xf32> to vector<8x32xf32>
    %90 = arith.mulf %89, %10 : vector<8x32xf32>
    %cst_43 = arith.constant dense<0.000000e+00> : vector<32xf32>
    %91 = vector.multi_reduction <add>, %90, %cst_43 [0] : vector<8x32xf32> to vector<32xf32>
    %92 = vector.shape_cast %91 : vector<32xf32> to vector<1x32xf32>
    %93 = tpu.concatenate %66, %92, %31 in 1 : vector<1x32xf32>, vector<1x32xf32>, vector<1x32xf32> -> vector<1x96xf32>
    %c240 = arith.constant 240 : index
    %c0_44 = arith.constant 0 : index
    %94 = vector.load %arg3[%c240, %c0_44] : memref<1120x128xbf16, #tpu.memory_space<vmem>>, vector<96x128xbf16>
    %95 = arith.truncf %93 : vector<1x96xf32> to vector<1x96xbf16>
    %cst_45 = arith.constant dense<0.000000e+00> : vector<1x128xf32>
    %96 = tpu.matmul %95, %94, %cst_45 {dimension_numbers = #tpu.dot_dimension_numbers<[1], [0], [0], [1], [0, 0, 1, 1], [], []>} : vector<1x96xbf16>, vector<96x128xbf16>, vector<1x128xf32> -> vector<1x128xf32>
    %97 = arith.addf %96, %26 : vector<1x128xf32>
    %98 = arith.negf %97 : vector<1x128xf32>
    %99 = math.exp %98 : vector<1x128xf32>
    %cst_46 = arith.constant 1.000000e+00 : f32
    %100 = vector.broadcast %cst_46 : f32 to vector<1x128xf32>
    %101 = arith.addf %100, %99 : vector<1x128xf32>
    %102 = arith.divf %100, %101 : vector<1x128xf32>
    %103 = math.tanh %97 : vector<1x128xf32>
    %104 = vector.extract_strided_slice %102 {offsets = [0, 32], sizes = [1, 32], strides = [1, 1]} : vector<1x128xf32> to vector<1x32xf32>
    %105 = arith.mulf %104, %32 : vector<1x32xf32>
    %106 = vector.extract_strided_slice %102 {offsets = [0, 0], sizes = [1, 32], strides = [1, 1]} : vector<1x128xf32> to vector<1x32xf32>
    %107 = vector.extract_strided_slice %103 {offsets = [0, 64], sizes = [1, 32], strides = [1, 1]} : vector<1x128xf32> to vector<1x32xf32>
    %108 = arith.mulf %106, %107 : vector<1x32xf32>
    %109 = arith.addf %105, %108 : vector<1x32xf32>
    %110 = vector.extract_strided_slice %102 {offsets = [0, 96], sizes = [1, 32], strides = [1, 1]} : vector<1x128xf32> to vector<1x32xf32>
    %111 = math.tanh %109 : vector<1x32xf32>
    %112 = arith.mulf %110, %111 : vector<1x32xf32>
    %113 = tpu.concatenate %112, %92 in 1 : vector<1x32xf32>, vector<1x32xf32> -> vector<1x64xf32>
    %c336 = arith.constant 336 : index
    %c0_47 = arith.constant 0 : index
    %114 = vector.load %arg3[%c336, %c0_47] : memref<1120x128xbf16, #tpu.memory_space<vmem>>, vector<64x32xbf16>
    %115 = arith.truncf %113 : vector<1x64xf32> to vector<1x64xbf16>
    %cst_48 = arith.constant dense<0.000000e+00> : vector<1x32xf32>
    %116 = tpu.matmul %115, %114, %cst_48 {dimension_numbers = #tpu.dot_dimension_numbers<[1], [0], [0], [1], [0, 0, 1, 1], [], []>} : vector<1x64xbf16>, vector<64x32xbf16>, vector<1x32xf32> -> vector<1x32xf32>
    %117 = arith.addf %116, %27 : vector<1x32xf32>
    %118 = vector.extract_strided_slice %117 {offsets = [0, 0], sizes = [1, 16], strides = [1, 1]} : vector<1x32xf32> to vector<1x16xf32>
    %119 = vector.shape_cast %117 : vector<1x32xf32> to vector<1x1x32xf32>
    %c0_49 = arith.constant 0 : index
    %c0_50 = arith.constant 0 : index
    %c0_51 = arith.constant 0 : index
    %120 = vector.load %arg6[%c0_49, %c0_50, %c0_51] : memref<1x8x128xf32, #tpu.memory_space<vmem>>, vector<1x1x32xf32>
    tpu.vector_store %arg6[%c0_49, %c0_50, %c0_51], %119 {strides = array<i32>} : memref<1x8x128xf32, #tpu.memory_space<vmem>>, vector<1x1x32xf32>,
    %121 = vector.shape_cast %88 : vector<8x1xf32> to vector<1x1x8xf32>
    %c0_52 = arith.constant 0 : index
    %c0_53 = arith.constant 0 : index
    %c32_54 = arith.constant 32 : index
    %122 = vector.load %arg6[%c0_52, %c0_53, %c32_54] : memref<1x8x128xf32, #tpu.memory_space<vmem>>, vector<1x1x8xf32>
    tpu.vector_store %arg6[%c0_52, %c0_53, %c32_54], %121 {strides = array<i32>} : memref<1x8x128xf32, #tpu.memory_space<vmem>>, vector<1x1x8xf32>,
    %c64_55 = arith.constant 64 : index
    %c0_56 = arith.constant 0 : index
    %123 = vector.load %arg3[%c64_55, %c0_56] : memref<1120x128xbf16, #tpu.memory_space<vmem>>, vector<16x32xbf16>
    %124 = arith.truncf %118 : vector<1x16xf32> to vector<1x16xbf16>
    %cst_57 = arith.constant dense<0.000000e+00> : vector<1x32xf32>
    %125 = tpu.matmul %124, %123, %cst_57 {dimension_numbers = #tpu.dot_dimension_numbers<[1], [0], [0], [1], [0, 0, 1, 1], [], []>} : vector<1x16xbf16>, vector<16x32xbf16>, vector<1x32xf32> -> vector<1x32xf32>
    %126 = arith.addf %125, %23 : vector<1x32xf32>
    %cst_58 = arith.constant 0.000000e+00 : f32
    %127 = vector.broadcast %cst_58 : f32 to vector<1x32xf32>
    %128 = arith.maximumf %126, %127 : vector<1x32xf32>
    %c80_59 = arith.constant 80 : index
    %c0_60 = arith.constant 0 : index
    %129 = vector.load %arg3[%c80_59, %c0_60] : memref<1120x128xbf16, #tpu.memory_space<vmem>>, vector<32x32xbf16>
    %130 = arith.truncf %128 : vector<1x32xf32> to vector<1x32xbf16>
    %cst_61 = arith.constant dense<0.000000e+00> : vector<1x32xf32>
    %131 = tpu.matmul %130, %129, %cst_61 {dimension_numbers = #tpu.dot_dimension_numbers<[1], [0], [0], [1], [0, 0, 1, 1], [], []>} : vector<1x32xbf16>, vector<32x32xbf16>, vector<1x32xf32> -> vector<1x32xf32>
    %132 = arith.addf %131, %24 : vector<1x32xf32>
    %cst_62 = arith.constant 0.000000e+00 : f32
    %133 = vector.broadcast %cst_62 : f32 to vector<1x32xf32>
    %134 = arith.maximumf %132, %133 : vector<1x32xf32>
    %135 = tpu.concatenate %134, %92, %66 in 1 : vector<1x32xf32>, vector<1x32xf32>, vector<1x32xf32> -> vector<1x96xf32>
    %c144_63 = arith.constant 144 : index
    %c0_64 = arith.constant 0 : index
    %136 = vector.load %arg3[%c144_63, %c0_64] : memref<1120x128xbf16, #tpu.memory_space<vmem>>, vector<96x128xbf16>
    %137 = arith.truncf %135 : vector<1x96xf32> to vector<1x96xbf16>
    %cst_65 = arith.constant dense<0.000000e+00> : vector<1x128xf32>
    %138 = tpu.matmul %137, %136, %cst_65 {dimension_numbers = #tpu.dot_dimension_numbers<[1], [0], [0], [1], [0, 0, 1, 1], [], []>} : vector<1x96xbf16>, vector<96x128xbf16>, vector<1x128xf32> -> vector<1x128xf32>
    %139 = arith.addf %138, %25 : vector<1x128xf32>
    %140 = arith.negf %139 : vector<1x128xf32>
    %141 = math.exp %140 : vector<1x128xf32>
    %cst_66 = arith.constant 1.000000e+00 : f32
    %142 = vector.broadcast %cst_66 : f32 to vector<1x128xf32>
    %143 = arith.addf %142, %141 : vector<1x128xf32>
    %144 = arith.divf %142, %143 : vector<1x128xf32>
    %145 = math.tanh %139 : vector<1x128xf32>
    %146 = vector.extract_strided_slice %144 {offsets = [0, 32], sizes = [1, 32], strides = [1, 1]} : vector<1x128xf32> to vector<1x32xf32>
    %147 = arith.mulf %146, %63 : vector<1x32xf32>
    %148 = vector.extract_strided_slice %144 {offsets = [0, 0], sizes = [1, 32], strides = [1, 1]} : vector<1x128xf32> to vector<1x32xf32>
    %149 = vector.extract_strided_slice %145 {offsets = [0, 64], sizes = [1, 32], strides = [1, 1]} : vector<1x128xf32> to vector<1x32xf32>
    %150 = arith.mulf %148, %149 : vector<1x32xf32>
    %151 = arith.addf %147, %150 : vector<1x32xf32>
    %152 = vector.extract_strided_slice %144 {offsets = [0, 96], sizes = [1, 32], strides = [1, 1]} : vector<1x128xf32> to vector<1x32xf32>
    %153 = math.tanh %151 : vector<1x32xf32>
    %154 = arith.mulf %152, %153 : vector<1x32xf32>
    %c112_67 = arith.constant 112 : index
    %c0_68 = arith.constant 0 : index
    %155 = vector.load %arg3[%c112_67, %c0_68] : memref<1120x128xbf16, #tpu.memory_space<vmem>>, vector<32x32xbf16>
    %156 = arith.truncf %154 : vector<1x32xf32> to vector<1x32xbf16>
    %cst_69 = arith.constant dense<0.000000e+00> : vector<1x32xf32>
    %157 = tpu.matmul %156, %155, %cst_69 {dimension_numbers = #tpu.dot_dimension_numbers<[1], [0], [0], [1], [0, 0, 1, 1], [], []>} : vector<1x32xbf16>, vector<32x32xbf16>, vector<1x32xf32> -> vector<1x32xf32>
    %158 = vector.broadcast %157 : vector<1x32xf32> to vector<8x32xf32>
    %159 = arith.addf %13, %158 : vector<8x32xf32>
    %160 = math.tanh %159 : vector<8x32xf32>
    %161 = vector.broadcast %28 : vector<1x32xf32> to vector<8x32xf32>
    %162 = arith.mulf %160, %161 : vector<8x32xf32>
    %cst_70 = arith.constant dense<0.000000e+00> : vector<8xf32>
    %163 = vector.multi_reduction <add>, %162, %cst_70 [1] : vector<8x32xf32> to vector<8xf32>
    %164 = vector.shape_cast %163 : vector<8xf32> to vector<8x1xf32>
    %cst_71 = arith.constant -1.000000e+30 : f32
    %165 = vector.broadcast %cst_71 : f32 to vector<8x1xf32>
    %166 = arith.select %22, %164, %165 : vector<8x1xi1>, vector<8x1xf32>
    %cst_72 = arith.constant dense<0xFF800000> : vector<1xf32>
    %167 = vector.multi_reduction <maximumf>, %166, %cst_72 [0] : vector<8x1xf32> to vector<1xf32>
    %168 = vector.shape_cast %167 : vector<1xf32> to vector<1x1xf32>
    %169 = vector.broadcast %168 : vector<1x1xf32> to vector<8x1xf32>
    %170 = arith.subf %166, %169 : vector<8x1xf32>
    %171 = math.exp %170 : vector<8x1xf32>
    %cst_73 = arith.constant dense<0.000000e+00> : vector<1xf32>
    %172 = vector.multi_reduction <add>, %171, %cst_73 [0] : vector<8x1xf32> to vector<1xf32>
    %173 = vector.shape_cast %172 : vector<1xf32> to vector<1x1xf32>
    %174 = tpu.reciprocal %173 {approx = true} : vector<1x1xf32> -> vector<1x1xf32>
    %175 = vector.broadcast %174 : vector<1x1xf32> to vector<8x1xf32>
    %176 = arith.mulf %171, %175 : vector<8x1xf32>
    %177 = vector.broadcast %176 : vector<8x1xf32> to vector<8x32xf32>
    %178 = arith.mulf %177, %10 : vector<8x32xf32>
    %cst_74 = arith.constant dense<0.000000e+00> : vector<32xf32>
    %179 = vector.multi_reduction <add>, %178, %cst_74 [0] : vector<8x32xf32> to vector<32xf32>
    %180 = vector.shape_cast %179 : vector<32xf32> to vector<1x32xf32>
    %181 = tpu.concatenate %154, %180, %112 in 1 : vector<1x32xf32>, vector<1x32xf32>, vector<1x32xf32> -> vector<1x96xf32>
    %c240_75 = arith.constant 240 : index
    %c0_76 = arith.constant 0 : index
    %182 = vector.load %arg3[%c240_75, %c0_76] : memref<1120x128xbf16, #tpu.memory_space<vmem>>, vector<96x128xbf16>
    %183 = arith.truncf %181 : vector<1x96xf32> to vector<1x96xbf16>
    %cst_77 = arith.constant dense<0.000000e+00> : vector<1x128xf32>
    %184 = tpu.matmul %183, %182, %cst_77 {dimension_numbers = #tpu.dot_dimension_numbers<[1], [0], [0], [1], [0, 0, 1, 1], [], []>} : vector<1x96xbf16>, vector<96x128xbf16>, vector<1x128xf32> -> vector<1x128xf32>
    %185 = arith.addf %184, %26 : vector<1x128xf32>
    %186 = arith.negf %185 : vector<1x128xf32>
    %187 = math.exp %186 : vector<1x128xf32>
    %cst_78 = arith.constant 1.000000e+00 : f32
    %188 = vector.broadcast %cst_78 : f32 to vector<1x128xf32>
    %189 = arith.addf %188, %187 : vector<1x128xf32>
    %190 = arith.divf %188, %189 : vector<1x128xf32>
    %191 = math.tanh %185 : vector<1x128xf32>
    %192 = vector.extract_strided_slice %190 {offsets = [0, 32], sizes = [1, 32], strides = [1, 1]} : vector<1x128xf32> to vector<1x32xf32>
    %193 = arith.mulf %192, %109 : vector<1x32xf32>
    %194 = vector.extract_strided_slice %190 {offsets = [0, 0], sizes = [1, 32], strides = [1, 1]} : vector<1x128xf32> to vector<1x32xf32>
    %195 = vector.extract_strided_slice %191 {offsets = [0, 64], sizes = [1, 32], strides = [1, 1]} : vector<1x128xf32> to vector<1x32xf32>
    %196 = arith.mulf %194, %195 : vector<1x32xf32>
    %197 = arith.addf %193, %196 : vector<1x32xf32>
    %198 = vector.extract_strided_slice %190 {offsets = [0, 96], sizes = [1, 32], strides = [1, 1]} : vector<1x128xf32> to vector<1x32xf32>
    %199 = math.tanh %197 : vector<1x32xf32>
    %200 = arith.mulf %198, %199 : vector<1x32xf32>
    %201 = tpu.concatenate %200, %180 in 1 : vector<1x32xf32>, vector<1x32xf32> -> vector<1x64xf32>
    %c336_79 = arith.constant 336 : index
    %c0_80 = arith.constant 0 : index
    %202 = vector.load %arg3[%c336_79, %c0_80] : memref<1120x128xbf16, #tpu.memory_space<vmem>>, vector<64x32xbf16>
    %203 = arith.truncf %201 : vector<1x64xf32> to vector<1x64xbf16>
    %cst_81 = arith.constant dense<0.000000e+00> : vector<1x32xf32>
    %204 = tpu.matmul %203, %202, %cst_81 {dimension_numbers = #tpu.dot_dimension_numbers<[1], [0], [0], [1], [0, 0, 1, 1], [], []>} : vector<1x64xbf16>, vector<64x32xbf16>, vector<1x32xf32> -> vector<1x32xf32>
    %205 = arith.addf %204, %27 : vector<1x32xf32>
    %206 = vector.extract_strided_slice %205 {offsets = [0, 0], sizes = [1, 16], strides = [1, 1]} : vector<1x32xf32> to vector<1x16xf32>
    %207 = vector.shape_cast %205 : vector<1x32xf32> to vector<1x1x32xf32>
    %c0_82 = arith.constant 0 : index
    %c1_83 = arith.constant 1 : index
    %c0_84 = arith.constant 0 : index
    %208 = vector.load %arg6[%c0_82, %c1_83, %c0_84] : memref<1x8x128xf32, #tpu.memory_space<vmem>>, vector<1x1x32xf32>
    tpu.vector_store %arg6[%c0_82, %c1_83, %c0_84], %207 {strides = array<i32>} : memref<1x8x128xf32, #tpu.memory_space<vmem>>, vector<1x1x32xf32>,
    %209 = vector.shape_cast %176 : vector<8x1xf32> to vector<1x1x8xf32>
    %c0_85 = arith.constant 0 : index
    %c1_86 = arith.constant 1 : index
    %c32_87 = arith.constant 32 : index
    %210 = vector.load %arg6[%c0_85, %c1_86, %c32_87] : memref<1x8x128xf32, #tpu.memory_space<vmem>>, vector<1x1x8xf32>
    tpu.vector_store %arg6[%c0_85, %c1_86, %c32_87], %209 {strides = array<i32>} : memref<1x8x128xf32, #tpu.memory_space<vmem>>, vector<1x1x8xf32>,
    %c64_88 = arith.constant 64 : index
    %c0_89 = arith.constant 0 : index
    %211 = vector.load %arg3[%c64_88, %c0_89] : memref<1120x128xbf16, #tpu.memory_space<vmem>>, vector<16x32xbf16>
    %212 = arith.truncf %206 : vector<1x16xf32> to vector<1x16xbf16>
    %cst_90 = arith.constant dense<0.000000e+00> : vector<1x32xf32>
    %213 = tpu.matmul %212, %211, %cst_90 {dimension_numbers = #tpu.dot_dimension_numbers<[1], [0], [0], [1], [0, 0, 1, 1], [], []>} : vector<1x16xbf16>, vector<16x32xbf16>, vector<1x32xf32> -> vector<1x32xf32>
    %214 = arith.addf %213, %23 : vector<1x32xf32>
    %cst_91 = arith.constant 0.000000e+00 : f32
    %215 = vector.broadcast %cst_91 : f32 to vector<1x32xf32>
    %216 = arith.maximumf %214, %215 : vector<1x32xf32>
    %c80_92 = arith.constant 80 : index
    %c0_93 = arith.constant 0 : index
    %217 = vector.load %arg3[%c80_92, %c0_93] : memref<1120x128xbf16, #tpu.memory_space<vmem>>, vector<32x32xbf16>
    %218 = arith.truncf %216 : vector<1x32xf32> to vector<1x32xbf16>
    %cst_94 = arith.constant dense<0.000000e+00> : vector<1x32xf32>
    %219 = tpu.matmul %218, %217, %cst_94 {dimension_numbers = #tpu.dot_dimension_numbers<[1], [0], [0], [1], [0, 0, 1, 1], [], []>} : vector<1x32xbf16>, vector<32x32xbf16>, vector<1x32xf32> -> vector<1x32xf32>
    %220 = arith.addf %219, %24 : vector<1x32xf32>
    %cst_95 = arith.constant 0.000000e+00 : f32
    %221 = vector.broadcast %cst_95 : f32 to vector<1x32xf32>
    %222 = arith.maximumf %220, %221 : vector<1x32xf32>
    %223 = tpu.concatenate %222, %180, %154 in 1 : vector<1x32xf32>, vector<1x32xf32>, vector<1x32xf32> -> vector<1x96xf32>
    %c144_96 = arith.constant 144 : index
    %c0_97 = arith.constant 0 : index
    %224 = vector.load %arg3[%c144_96, %c0_97] : memref<1120x128xbf16, #tpu.memory_space<vmem>>, vector<96x128xbf16>
    %225 = arith.truncf %223 : vector<1x96xf32> to vector<1x96xbf16>
    %cst_98 = arith.constant dense<0.000000e+00> : vector<1x128xf32>
    %226 = tpu.matmul %225, %224, %cst_98 {dimension_numbers = #tpu.dot_dimension_numbers<[1], [0], [0], [1], [0, 0, 1, 1], [], []>} : vector<1x96xbf16>, vector<96x128xbf16>, vector<1x128xf32> -> vector<1x128xf32>
    %227 = arith.addf %226, %25 : vector<1x128xf32>
    %228 = arith.negf %227 : vector<1x128xf32>
    %229 = math.exp %228 : vector<1x128xf32>
    %cst_99 = arith.constant 1.000000e+00 : f32
    %230 = vector.broadcast %cst_99 : f32 to vector<1x128xf32>
    %231 = arith.addf %230, %229 : vector<1x128xf32>
    %232 = arith.divf %230, %231 : vector<1x128xf32>
    %233 = math.tanh %227 : vector<1x128xf32>
    %234 = vector.extract_strided_slice %232 {offsets = [0, 32], sizes = [1, 32], strides = [1, 1]} : vector<1x128xf32> to vector<1x32xf32>
    %235 = arith.mulf %234, %151 : vector<1x32xf32>
    %236 = vector.extract_strided_slice %232 {offsets = [0, 0], sizes = [1, 32], strides = [1, 1]} : vector<1x128xf32> to vector<1x32xf32>
    %237 = vector.extract_strided_slice %233 {offsets = [0, 64], sizes = [1, 32], strides = [1, 1]} : vector<1x128xf32> to vector<1x32xf32>
    %238 = arith.mulf %236, %237 : vector<1x32xf32>
    %239 = arith.addf %235, %238 : vector<1x32xf32>
    %240 = vector.extract_strided_slice %232 {offsets = [0, 96], sizes = [1, 32], strides = [1, 1]} : vector<1x128xf32> to vector<1x32xf32>
    %241 = math.tanh %239 : vector<1x32xf32>
    %242 = arith.mulf %240, %241 : vector<1x32xf32>
    %c112_100 = arith.constant 112 : index
    %c0_101 = arith.constant 0 : index
    %243 = vector.load %arg3[%c112_100, %c0_101] : memref<1120x128xbf16, #tpu.memory_space<vmem>>, vector<32x32xbf16>
    %244 = arith.truncf %242 : vector<1x32xf32> to vector<1x32xbf16>
    %cst_102 = arith.constant dense<0.000000e+00> : vector<1x32xf32>
    %245 = tpu.matmul %244, %243, %cst_102 {dimension_numbers = #tpu.dot_dimension_numbers<[1], [0], [0], [1], [0, 0, 1, 1], [], []>} : vector<1x32xbf16>, vector<32x32xbf16>, vector<1x32xf32> -> vector<1x32xf32>
    %246 = vector.broadcast %245 : vector<1x32xf32> to vector<8x32xf32>
    %247 = arith.addf %13, %246 : vector<8x32xf32>
    %248 = math.tanh %247 : vector<8x32xf32>
    %249 = vector.broadcast %28 : vector<1x32xf32> to vector<8x32xf32>
    %250 = arith.mulf %248, %249 : vector<8x32xf32>
    %cst_103 = arith.constant dense<0.000000e+00> : vector<8xf32>
    %251 = vector.multi_reduction <add>, %250, %cst_103 [1] : vector<8x32xf32> to vector<8xf32>
    %252 = vector.shape_cast %251 : vector<8xf32> to vector<8x1xf32>
    %cst_104 = arith.constant -1.000000e+30 : f32
    %253 = vector.broadcast %cst_104 : f32 to vector<8x1xf32>
    %254 = arith.select %22, %252, %253 : vector<8x1xi1>, vector<8x1xf32>
    %cst_105 = arith.constant dense<0xFF800000> : vector<1xf32>
    %255 = vector.multi_reduction <maximumf>, %254, %cst_105 [0] : vector<8x1xf32> to vector<1xf32>
    %256 = vector.shape_cast %255 : vector<1xf32> to vector<1x1xf32>
    %257 = vector.broadcast %256 : vector<1x1xf32> to vector<8x1xf32>
    %258 = arith.subf %254, %257 : vector<8x1xf32>
    %259 = math.exp %258 : vector<8x1xf32>
    %cst_106 = arith.constant dense<0.000000e+00> : vector<1xf32>
    %260 = vector.multi_reduction <add>, %259, %cst_106 [0] : vector<8x1xf32> to vector<1xf32>
    %261 = vector.shape_cast %260 : vector<1xf32> to vector<1x1xf32>
    %262 = tpu.reciprocal %261 {approx = true} : vector<1x1xf32> -> vector<1x1xf32>
    %263 = vector.broadcast %262 : vector<1x1xf32> to vector<8x1xf32>
    %264 = arith.mulf %259, %263 : vector<8x1xf32>
    %265 = vector.broadcast %264 : vector<8x1xf32> to vector<8x32xf32>
    %266 = arith.mulf %265, %10 : vector<8x32xf32>
    %cst_107 = arith.constant dense<0.000000e+00> : vector<32xf32>
    %267 = vector.multi_reduction <add>, %266, %cst_107 [0] : vector<8x32xf32> to vector<32xf32>
    %268 = vector.shape_cast %267 : vector<32xf32> to vector<1x32xf32>
    %269 = tpu.concatenate %242, %268, %200 in 1 : vector<1x32xf32>, vector<1x32xf32>, vector<1x32xf32> -> vector<1x96xf32>
    %c240_108 = arith.constant 240 : index
    %c0_109 = arith.constant 0 : index
    %270 = vector.load %arg3[%c240_108, %c0_109] : memref<1120x128xbf16, #tpu.memory_space<vmem>>, vector<96x128xbf16>
    %271 = arith.truncf %269 : vector<1x96xf32> to vector<1x96xbf16>
    %cst_110 = arith.constant dense<0.000000e+00> : vector<1x128xf32>
    %272 = tpu.matmul %271, %270, %cst_110 {dimension_numbers = #tpu.dot_dimension_numbers<[1], [0], [0], [1], [0, 0, 1, 1], [], []>} : vector<1x96xbf16>, vector<96x128xbf16>, vector<1x128xf32> -> vector<1x128xf32>
    %273 = arith.addf %272, %26 : vector<1x128xf32>
    %274 = arith.negf %273 : vector<1x128xf32>
    %275 = math.exp %274 : vector<1x128xf32>
    %cst_111 = arith.constant 1.000000e+00 : f32
    %276 = vector.broadcast %cst_111 : f32 to vector<1x128xf32>
    %277 = arith.addf %276, %275 : vector<1x128xf32>
    %278 = arith.divf %276, %277 : vector<1x128xf32>
    %279 = math.tanh %273 : vector<1x128xf32>
    %280 = vector.extract_strided_slice %278 {offsets = [0, 32], sizes = [1, 32], strides = [1, 1]} : vector<1x128xf32> to vector<1x32xf32>
    %281 = arith.mulf %280, %197 : vector<1x32xf32>
    %282 = vector.extract_strided_slice %278 {offsets = [0, 0], sizes = [1, 32], strides = [1, 1]} : vector<1x128xf32> to vector<1x32xf32>
    %283 = vector.extract_strided_slice %279 {offsets = [0, 64], sizes = [1, 32], strides = [1, 1]} : vector<1x128xf32> to vector<1x32xf32>
    %284 = arith.mulf %282, %283 : vector<1x32xf32>
    %285 = arith.addf %281, %284 : vector<1x32xf32>
    %286 = vector.extract_strided_slice %278 {offsets = [0, 96], sizes = [1, 32], strides = [1, 1]} : vector<1x128xf32> to vector<1x32xf32>
    %287 = math.tanh %285 : vector<1x32xf32>
    %288 = arith.mulf %286, %287 : vector<1x32xf32>
    %289 = tpu.concatenate %288, %268 in 1 : vector<1x32xf32>, vector<1x32xf32> -> vector<1x64xf32>
    %c336_112 = arith.constant 336 : index
    %c0_113 = arith.constant 0 : index
    %290 = vector.load %arg3[%c336_112, %c0_113] : memref<1120x128xbf16, #tpu.memory_space<vmem>>, vector<64x32xbf16>
    %291 = arith.truncf %289 : vector<1x64xf32> to vector<1x64xbf16>
    %cst_114 = arith.constant dense<0.000000e+00> : vector<1x32xf32>
    %292 = tpu.matmul %291, %290, %cst_114 {dimension_numbers = #tpu.dot_dimension_numbers<[1], [0], [0], [1], [0, 0, 1, 1], [], []>} : vector<1x64xbf16>, vector<64x32xbf16>, vector<1x32xf32> -> vector<1x32xf32>
    %293 = arith.addf %292, %27 : vector<1x32xf32>
    %294 = vector.extract_strided_slice %293 {offsets = [0, 0], sizes = [1, 16], strides = [1, 1]} : vector<1x32xf32> to vector<1x16xf32>
    %295 = vector.shape_cast %293 : vector<1x32xf32> to vector<1x1x32xf32>
    %c0_115 = arith.constant 0 : index
    %c2_116 = arith.constant 2 : index
    %c0_117 = arith.constant 0 : index
    %296 = vector.load %arg6[%c0_115, %c2_116, %c0_117] : memref<1x8x128xf32, #tpu.memory_space<vmem>>, vector<1x1x32xf32>
    tpu.vector_store %arg6[%c0_115, %c2_116, %c0_117], %295 {strides = array<i32>} : memref<1x8x128xf32, #tpu.memory_space<vmem>>, vector<1x1x32xf32>,
    %297 = vector.shape_cast %264 : vector<8x1xf32> to vector<1x1x8xf32>
    %c0_118 = arith.constant 0 : index
    %c2_119 = arith.constant 2 : index
    %c32_120 = arith.constant 32 : index
    %298 = vector.load %arg6[%c0_118, %c2_119, %c32_120] : memref<1x8x128xf32, #tpu.memory_space<vmem>>, vector<1x1x8xf32>
    tpu.vector_store %arg6[%c0_118, %c2_119, %c32_120], %297 {strides = array<i32>} : memref<1x8x128xf32, #tpu.memory_space<vmem>>, vector<1x1x8xf32>,
    %c64_121 = arith.constant 64 : index
    %c0_122 = arith.constant 0 : index
    %299 = vector.load %arg3[%c64_121, %c0_122] : memref<1120x128xbf16, #tpu.memory_space<vmem>>, vector<16x32xbf16>
    %300 = arith.truncf %294 : vector<1x16xf32> to vector<1x16xbf16>
    %cst_123 = arith.constant dense<0.000000e+00> : vector<1x32xf32>
    %301 = tpu.matmul %300, %299, %cst_123 {dimension_numbers = #tpu.dot_dimension_numbers<[1], [0], [0], [1], [0, 0, 1, 1], [], []>} : vector<1x16xbf16>, vector<16x32xbf16>, vector<1x32xf32> -> vector<1x32xf32>
    %302 = arith.addf %301, %23 : vector<1x32xf32>
    %cst_124 = arith.constant 0.000000e+00 : f32
    %303 = vector.broadcast %cst_124 : f32 to vector<1x32xf32>
    %304 = arith.maximumf %302, %303 : vector<1x32xf32>
    %c80_125 = arith.constant 80 : index
    %c0_126 = arith.constant 0 : index
    %305 = vector.load %arg3[%c80_125, %c0_126] : memref<1120x128xbf16, #tpu.memory_space<vmem>>, vector<32x32xbf16>
    %306 = arith.truncf %304 : vector<1x32xf32> to vector<1x32xbf16>
    %cst_127 = arith.constant dense<0.000000e+00> : vector<1x32xf32>
    %307 = tpu.matmul %306, %305, %cst_127 {dimension_numbers = #tpu.dot_dimension_numbers<[1], [0], [0], [1], [0, 0, 1, 1], [], []>} : vector<1x32xbf16>, vector<32x32xbf16>, vector<1x32xf32> -> vector<1x32xf32>
    %308 = arith.addf %307, %24 : vector<1x32xf32>
    %cst_128 = arith.constant 0.000000e+00 : f32
    %309 = vector.broadcast %cst_128 : f32 to vector<1x32xf32>
    %310 = arith.maximumf %308, %309 : vector<1x32xf32>
    %311 = tpu.concatenate %310, %268, %242 in 1 : vector<1x32xf32>, vector<1x32xf32>, vector<1x32xf32> -> vector<1x96xf32>
    %c144_129 = arith.constant 144 : index
    %c0_130 = arith.constant 0 : index
    %312 = vector.load %arg3[%c144_129, %c0_130] : memref<1120x128xbf16, #tpu.memory_space<vmem>>, vector<96x128xbf16>
    %313 = arith.truncf %311 : vector<1x96xf32> to vector<1x96xbf16>
    %cst_131 = arith.constant dense<0.000000e+00> : vector<1x128xf32>
    %314 = tpu.matmul %313, %312, %cst_131 {dimension_numbers = #tpu.dot_dimension_numbers<[1], [0], [0], [1], [0, 0, 1, 1], [], []>} : vector<1x96xbf16>, vector<96x128xbf16>, vector<1x128xf32> -> vector<1x128xf32>
    %315 = arith.addf %314, %25 : vector<1x128xf32>
    %316 = arith.negf %315 : vector<1x128xf32>
    %317 = math.exp %316 : vector<1x128xf32>
    %cst_132 = arith.constant 1.000000e+00 : f32
    %318 = vector.broadcast %cst_132 : f32 to vector<1x128xf32>
    %319 = arith.addf %318, %317 : vector<1x128xf32>
    %320 = arith.divf %318, %319 : vector<1x128xf32>
    %321 = math.tanh %315 : vector<1x128xf32>
    %322 = vector.extract_strided_slice %320 {offsets = [0, 32], sizes = [1, 32], strides = [1, 1]} : vector<1x128xf32> to vector<1x32xf32>
    %323 = arith.mulf %322, %239 : vector<1x32xf32>
    %324 = vector.extract_strided_slice %320 {offsets = [0, 0], sizes = [1, 32], strides = [1, 1]} : vector<1x128xf32> to vector<1x32xf32>
    %325 = vector.extract_strided_slice %321 {offsets = [0, 64], sizes = [1, 32], strides = [1, 1]} : vector<1x128xf32> to vector<1x32xf32>
    %326 = arith.mulf %324, %325 : vector<1x32xf32>
    %327 = arith.addf %323, %326 : vector<1x32xf32>
    %328 = vector.extract_strided_slice %320 {offsets = [0, 96], sizes = [1, 32], strides = [1, 1]} : vector<1x128xf32> to vector<1x32xf32>
    %329 = math.tanh %327 : vector<1x32xf32>
    %330 = arith.mulf %328, %329 : vector<1x32xf32>
    %c112_133 = arith.constant 112 : index
    %c0_134 = arith.constant 0 : index
    %331 = vector.load %arg3[%c112_133, %c0_134] : memref<1120x128xbf16, #tpu.memory_space<vmem>>, vector<32x32xbf16>
    %332 = arith.truncf %330 : vector<1x32xf32> to vector<1x32xbf16>
    %cst_135 = arith.constant dense<0.000000e+00> : vector<1x32xf32>
    %333 = tpu.matmul %332, %331, %cst_135 {dimension_numbers = #tpu.dot_dimension_numbers<[1], [0], [0], [1], [0, 0, 1, 1], [], []>} : vector<1x32xbf16>, vector<32x32xbf16>, vector<1x32xf32> -> vector<1x32xf32>
    %334 = vector.broadcast %333 : vector<1x32xf32> to vector<8x32xf32>
    %335 = arith.addf %13, %334 : vector<8x32xf32>
    %336 = math.tanh %335 : vector<8x32xf32>
    %337 = vector.broadcast %28 : vector<1x32xf32> to vector<8x32xf32>
    %338 = arith.mulf %336, %337 : vector<8x32xf32>
    %cst_136 = arith.constant dense<0.000000e+00> : vector<8xf32>
    %339 = vector.multi_reduction <add>, %338, %cst_136 [1] : vector<8x32xf32> to vector<8xf32>
    %340 = vector.shape_cast %339 : vector<8xf32> to vector<8x1xf32>
    %cst_137 = arith.constant -1.000000e+30 : f32
    %341 = vector.broadcast %cst_137 : f32 to vector<8x1xf32>
    %342 = arith.select %22, %340, %341 : vector<8x1xi1>, vector<8x1xf32>
    %cst_138 = arith.constant dense<0xFF800000> : vector<1xf32>
    %343 = vector.multi_reduction <maximumf>, %342, %cst_138 [0] : vector<8x1xf32> to vector<1xf32>
    %344 = vector.shape_cast %343 : vector<1xf32> to vector<1x1xf32>
    %345 = vector.broadcast %344 : vector<1x1xf32> to vector<8x1xf32>
    %346 = arith.subf %342, %345 : vector<8x1xf32>
    %347 = math.exp %346 : vector<8x1xf32>
    %cst_139 = arith.constant dense<0.000000e+00> : vector<1xf32>
    %348 = vector.multi_reduction <add>, %347, %cst_139 [0] : vector<8x1xf32> to vector<1xf32>
    %349 = vector.shape_cast %348 : vector<1xf32> to vector<1x1xf32>
    %350 = tpu.reciprocal %349 {approx = true} : vector<1x1xf32> -> vector<1x1xf32>
    %351 = vector.broadcast %350 : vector<1x1xf32> to vector<8x1xf32>
    %352 = arith.mulf %347, %351 : vector<8x1xf32>
    %353 = vector.broadcast %352 : vector<8x1xf32> to vector<8x32xf32>
    %354 = arith.mulf %353, %10 : vector<8x32xf32>
    %cst_140 = arith.constant dense<0.000000e+00> : vector<32xf32>
    %355 = vector.multi_reduction <add>, %354, %cst_140 [0] : vector<8x32xf32> to vector<32xf32>
    %356 = vector.shape_cast %355 : vector<32xf32> to vector<1x32xf32>
    %357 = tpu.concatenate %330, %356, %288 in 1 : vector<1x32xf32>, vector<1x32xf32>, vector<1x32xf32> -> vector<1x96xf32>
    %c240_141 = arith.constant 240 : index
    %c0_142 = arith.constant 0 : index
    %358 = vector.load %arg3[%c240_141, %c0_142] : memref<1120x128xbf16, #tpu.memory_space<vmem>>, vector<96x128xbf16>
    %359 = arith.truncf %357 : vector<1x96xf32> to vector<1x96xbf16>
    %cst_143 = arith.constant dense<0.000000e+00> : vector<1x128xf32>
    %360 = tpu.matmul %359, %358, %cst_143 {dimension_numbers = #tpu.dot_dimension_numbers<[1], [0], [0], [1], [0, 0, 1, 1], [], []>} : vector<1x96xbf16>, vector<96x128xbf16>, vector<1x128xf32> -> vector<1x128xf32>
    %361 = arith.addf %360, %26 : vector<1x128xf32>
    %362 = arith.negf %361 : vector<1x128xf32>
    %363 = math.exp %362 : vector<1x128xf32>
    %cst_144 = arith.constant 1.000000e+00 : f32
    %364 = vector.broadcast %cst_144 : f32 to vector<1x128xf32>
    %365 = arith.addf %364, %363 : vector<1x128xf32>
    %366 = arith.divf %364, %365 : vector<1x128xf32>
    %367 = math.tanh %361 : vector<1x128xf32>
    %368 = vector.extract_strided_slice %366 {offsets = [0, 32], sizes = [1, 32], strides = [1, 1]} : vector<1x128xf32> to vector<1x32xf32>
    %369 = arith.mulf %368, %285 : vector<1x32xf32>
    %370 = vector.extract_strided_slice %366 {offsets = [0, 0], sizes = [1, 32], strides = [1, 1]} : vector<1x128xf32> to vector<1x32xf32>
    %371 = vector.extract_strided_slice %367 {offsets = [0, 64], sizes = [1, 32], strides = [1, 1]} : vector<1x128xf32> to vector<1x32xf32>
    %372 = arith.mulf %370, %371 : vector<1x32xf32>
    %373 = arith.addf %369, %372 : vector<1x32xf32>
    %374 = vector.extract_strided_slice %366 {offsets = [0, 96], sizes = [1, 32], strides = [1, 1]} : vector<1x128xf32> to vector<1x32xf32>
    %375 = math.tanh %373 : vector<1x32xf32>
    %376 = arith.mulf %374, %375 : vector<1x32xf32>
    %377 = tpu.concatenate %376, %356 in 1 : vector<1x32xf32>, vector<1x32xf32> -> vector<1x64xf32>
    %c336_145 = arith.constant 336 : index
    %c0_146 = arith.constant 0 : index
    %378 = vector.load %arg3[%c336_145, %c0_146] : memref<1120x128xbf16, #tpu.memory_space<vmem>>, vector<64x32xbf16>
    %379 = arith.truncf %377 : vector<1x64xf32> to vector<1x64xbf16>
    %cst_147 = arith.constant dense<0.000000e+00> : vector<1x32xf32>
    %380 = tpu.matmul %379, %378, %cst_147 {dimension_numbers = #tpu.dot_dimension_numbers<[1], [0], [0], [1], [0, 0, 1, 1], [], []>} : vector<1x64xbf16>, vector<64x32xbf16>, vector<1x32xf32> -> vector<1x32xf32>
    %381 = arith.addf %380, %27 : vector<1x32xf32>
    %382 = vector.extract_strided_slice %381 {offsets = [0, 0], sizes = [1, 16], strides = [1, 1]} : vector<1x32xf32> to vector<1x16xf32>
    %383 = vector.shape_cast %381 : vector<1x32xf32> to vector<1x1x32xf32>
    %c0_148 = arith.constant 0 : index
    %c3_149 = arith.constant 3 : index
    %c0_150 = arith.constant 0 : index
    %384 = vector.load %arg6[%c0_148, %c3_149, %c0_150] : memref<1x8x128xf32, #tpu.memory_space<vmem>>, vector<1x1x32xf32>
    tpu.vector_store %arg6[%c0_148, %c3_149, %c0_150], %383 {strides = array<i32>} : memref<1x8x128xf32, #tpu.memory_space<vmem>>, vector<1x1x32xf32>,
    %385 = vector.shape_cast %352 : vector<8x1xf32> to vector<1x1x8xf32>
    %c0_151 = arith.constant 0 : index
    %c3_152 = arith.constant 3 : index
    %c32_153 = arith.constant 32 : index
    %386 = vector.load %arg6[%c0_151, %c3_152, %c32_153] : memref<1x8x128xf32, #tpu.memory_space<vmem>>, vector<1x1x8xf32>
    tpu.vector_store %arg6[%c0_151, %c3_152, %c32_153], %385 {strides = array<i32>} : memref<1x8x128xf32, #tpu.memory_space<vmem>>, vector<1x1x8xf32>,
    %c64_154 = arith.constant 64 : index
    %c0_155 = arith.constant 0 : index
    %387 = vector.load %arg3[%c64_154, %c0_155] : memref<1120x128xbf16, #tpu.memory_space<vmem>>, vector<16x32xbf16>
    %388 = arith.truncf %382 : vector<1x16xf32> to vector<1x16xbf16>
    %cst_156 = arith.constant dense<0.000000e+00> : vector<1x32xf32>
    %389 = tpu.matmul %388, %387, %cst_156 {dimension_numbers = #tpu.dot_dimension_numbers<[1], [0], [0], [1], [0, 0, 1, 1], [], []>} : vector<1x16xbf16>, vector<16x32xbf16>, vector<1x32xf32> -> vector<1x32xf32>
    %390 = arith.addf %389, %23 : vector<1x32xf32>
    %cst_157 = arith.constant 0.000000e+00 : f32
    %391 = vector.broadcast %cst_157 : f32 to vector<1x32xf32>
    %392 = arith.maximumf %390, %391 : vector<1x32xf32>
    %c80_158 = arith.constant 80 : index
    %c0_159 = arith.constant 0 : index
    %393 = vector.load %arg3[%c80_158, %c0_159] : memref<1120x128xbf16, #tpu.memory_space<vmem>>, vector<32x32xbf16>
    %394 = arith.truncf %392 : vector<1x32xf32> to vector<1x32xbf16>
    %cst_160 = arith.constant dense<0.000000e+00> : vector<1x32xf32>
    %395 = tpu.matmul %394, %393, %cst_160 {dimension_numbers = #tpu.dot_dimension_numbers<[1], [0], [0], [1], [0, 0, 1, 1], [], []>} : vector<1x32xbf16>, vector<32x32xbf16>, vector<1x32xf32> -> vector<1x32xf32>
    %396 = arith.addf %395, %24 : vector<1x32xf32>
    %cst_161 = arith.constant 0.000000e+00 : f32
    %397 = vector.broadcast %cst_161 : f32 to vector<1x32xf32>
    %398 = arith.maximumf %396, %397 : vector<1x32xf32>
    %399 = tpu.concatenate %398, %356, %330 in 1 : vector<1x32xf32>, vector<1x32xf32>, vector<1x32xf32> -> vector<1x96xf32>
    %c144_162 = arith.constant 144 : index
    %c0_163 = arith.constant 0 : index
    %400 = vector.load %arg3[%c144_162, %c0_163] : memref<1120x128xbf16, #tpu.memory_space<vmem>>, vector<96x128xbf16>
    %401 = arith.truncf %399 : vector<1x96xf32> to vector<1x96xbf16>
    %cst_164 = arith.constant dense<0.000000e+00> : vector<1x128xf32>
    %402 = tpu.matmul %401, %400, %cst_164 {dimension_numbers = #tpu.dot_dimension_numbers<[1], [0], [0], [1], [0, 0, 1, 1], [], []>} : vector<1x96xbf16>, vector<96x128xbf16>, vector<1x128xf32> -> vector<1x128xf32>
    %403 = arith.addf %402, %25 : vector<1x128xf32>
    %404 = arith.negf %403 : vector<1x128xf32>
    %405 = math.exp %404 : vector<1x128xf32>
    %cst_165 = arith.constant 1.000000e+00 : f32
    %406 = vector.broadcast %cst_165 : f32 to vector<1x128xf32>
    %407 = arith.addf %406, %405 : vector<1x128xf32>
    %408 = arith.divf %406, %407 : vector<1x128xf32>
    %409 = math.tanh %403 : vector<1x128xf32>
    %410 = vector.extract_strided_slice %408 {offsets = [0, 32], sizes = [1, 32], strides = [1, 1]} : vector<1x128xf32> to vector<1x32xf32>
    %411 = arith.mulf %410, %327 : vector<1x32xf32>
    %412 = vector.extract_strided_slice %408 {offsets = [0, 0], sizes = [1, 32], strides = [1, 1]} : vector<1x128xf32> to vector<1x32xf32>
    %413 = vector.extract_strided_slice %409 {offsets = [0, 64], sizes = [1, 32], strides = [1, 1]} : vector<1x128xf32> to vector<1x32xf32>
    %414 = arith.mulf %412, %413 : vector<1x32xf32>
    %415 = arith.addf %411, %414 : vector<1x32xf32>
    %416 = vector.extract_strided_slice %408 {offsets = [0, 96], sizes = [1, 32], strides = [1, 1]} : vector<1x128xf32> to vector<1x32xf32>
    %417 = math.tanh %415 : vector<1x32xf32>
    %418 = arith.mulf %416, %417 : vector<1x32xf32>
    %c112_166 = arith.constant 112 : index
    %c0_167 = arith.constant 0 : index
    %419 = vector.load %arg3[%c112_166, %c0_167] : memref<1120x128xbf16, #tpu.memory_space<vmem>>, vector<32x32xbf16>
    %420 = arith.truncf %418 : vector<1x32xf32> to vector<1x32xbf16>
    %cst_168 = arith.constant dense<0.000000e+00> : vector<1x32xf32>
    %421 = tpu.matmul %420, %419, %cst_168 {dimension_numbers = #tpu.dot_dimension_numbers<[1], [0], [0], [1], [0, 0, 1, 1], [], []>} : vector<1x32xbf16>, vector<32x32xbf16>, vector<1x32xf32> -> vector<1x32xf32>
    %422 = vector.broadcast %421 : vector<1x32xf32> to vector<8x32xf32>
    %423 = arith.addf %13, %422 : vector<8x32xf32>
    %424 = math.tanh %423 : vector<8x32xf32>
    %425 = vector.broadcast %28 : vector<1x32xf32> to vector<8x32xf32>
    %426 = arith.mulf %424, %425 : vector<8x32xf32>
    %cst_169 = arith.constant dense<0.000000e+00> : vector<8xf32>
    %427 = vector.multi_reduction <add>, %426, %cst_169 [1] : vector<8x32xf32> to vector<8xf32>
    %428 = vector.shape_cast %427 : vector<8xf32> to vector<8x1xf32>
    %cst_170 = arith.constant -1.000000e+30 : f32
    %429 = vector.broadcast %cst_170 : f32 to vector<8x1xf32>
    %430 = arith.select %22, %428, %429 : vector<8x1xi1>, vector<8x1xf32>
    %cst_171 = arith.constant dense<0xFF800000> : vector<1xf32>
    %431 = vector.multi_reduction <maximumf>, %430, %cst_171 [0] : vector<8x1xf32> to vector<1xf32>
    %432 = vector.shape_cast %431 : vector<1xf32> to vector<1x1xf32>
    %433 = vector.broadcast %432 : vector<1x1xf32> to vector<8x1xf32>
    %434 = arith.subf %430, %433 : vector<8x1xf32>
    %435 = math.exp %434 : vector<8x1xf32>
    %cst_172 = arith.constant dense<0.000000e+00> : vector<1xf32>
    %436 = vector.multi_reduction <add>, %435, %cst_172 [0] : vector<8x1xf32> to vector<1xf32>
    %437 = vector.shape_cast %436 : vector<1xf32> to vector<1x1xf32>
    %438 = tpu.reciprocal %437 {approx = true} : vector<1x1xf32> -> vector<1x1xf32>
    %439 = vector.broadcast %438 : vector<1x1xf32> to vector<8x1xf32>
    %440 = arith.mulf %435, %439 : vector<8x1xf32>
    %441 = vector.broadcast %440 : vector<8x1xf32> to vector<8x32xf32>
    %442 = arith.mulf %441, %10 : vector<8x32xf32>
    %cst_173 = arith.constant dense<0.000000e+00> : vector<32xf32>
    %443 = vector.multi_reduction <add>, %442, %cst_173 [0] : vector<8x32xf32> to vector<32xf32>
    %444 = vector.shape_cast %443 : vector<32xf32> to vector<1x32xf32>
    %445 = tpu.concatenate %418, %444, %376 in 1 : vector<1x32xf32>, vector<1x32xf32>, vector<1x32xf32> -> vector<1x96xf32>
    %c240_174 = arith.constant 240 : index
    %c0_175 = arith.constant 0 : index
    %446 = vector.load %arg3[%c240_174, %c0_175] : memref<1120x128xbf16, #tpu.memory_space<vmem>>, vector<96x128xbf16>
    %447 = arith.truncf %445 : vector<1x96xf32> to vector<1x96xbf16>
    %cst_176 = arith.constant dense<0.000000e+00> : vector<1x128xf32>
    %448 = tpu.matmul %447, %446, %cst_176 {dimension_numbers = #tpu.dot_dimension_numbers<[1], [0], [0], [1], [0, 0, 1, 1], [], []>} : vector<1x96xbf16>, vector<96x128xbf16>, vector<1x128xf32> -> vector<1x128xf32>
    %449 = arith.addf %448, %26 : vector<1x128xf32>
    %450 = arith.negf %449 : vector<1x128xf32>
    %451 = math.exp %450 : vector<1x128xf32>
    %cst_177 = arith.constant 1.000000e+00 : f32
    %452 = vector.broadcast %cst_177 : f32 to vector<1x128xf32>
    %453 = arith.addf %452, %451 : vector<1x128xf32>
    %454 = arith.divf %452, %453 : vector<1x128xf32>
    %455 = math.tanh %449 : vector<1x128xf32>
    %456 = vector.extract_strided_slice %454 {offsets = [0, 32], sizes = [1, 32], strides = [1, 1]} : vector<1x128xf32> to vector<1x32xf32>
    %457 = arith.mulf %456, %373 : vector<1x32xf32>
    %458 = vector.extract_strided_slice %454 {offsets = [0, 0], sizes = [1, 32], strides = [1, 1]} : vector<1x128xf32> to vector<1x32xf32>
    %459 = vector.extract_strided_slice %455 {offsets = [0, 64], sizes = [1, 32], strides = [1, 1]} : vector<1x128xf32> to vector<1x32xf32>
    %460 = arith.mulf %458, %459 : vector<1x32xf32>
    %461 = arith.addf %457, %460 : vector<1x32xf32>
    %462 = vector.extract_strided_slice %454 {offsets = [0, 96], sizes = [1, 32], strides = [1, 1]} : vector<1x128xf32> to vector<1x32xf32>
    %463 = math.tanh %461 : vector<1x32xf32>
    %464 = arith.mulf %462, %463 : vector<1x32xf32>
    %465 = tpu.concatenate %464, %444 in 1 : vector<1x32xf32>, vector<1x32xf32> -> vector<1x64xf32>
    %c336_178 = arith.constant 336 : index
    %c0_179 = arith.constant 0 : index
    %466 = vector.load %arg3[%c336_178, %c0_179] : memref<1120x128xbf16, #tpu.memory_space<vmem>>, vector<64x32xbf16>
    %467 = arith.truncf %465 : vector<1x64xf32> to vector<1x64xbf16>
    %cst_180 = arith.constant dense<0.000000e+00> : vector<1x32xf32>
    %468 = tpu.matmul %467, %466, %cst_180 {dimension_numbers = #tpu.dot_dimension_numbers<[1], [0], [0], [1], [0, 0, 1, 1], [], []>} : vector<1x64xbf16>, vector<64x32xbf16>, vector<1x32xf32> -> vector<1x32xf32>
    %469 = arith.addf %468, %27 : vector<1x32xf32>
    %470 = vector.extract_strided_slice %469 {offsets = [0, 0], sizes = [1, 16], strides = [1, 1]} : vector<1x32xf32> to vector<1x16xf32>
    %471 = vector.shape_cast %469 : vector<1x32xf32> to vector<1x1x32xf32>
    %c0_181 = arith.constant 0 : index
    %c4_182 = arith.constant 4 : index
    %c0_183 = arith.constant 0 : index
    %472 = vector.load %arg6[%c0_181, %c4_182, %c0_183] : memref<1x8x128xf32, #tpu.memory_space<vmem>>, vector<1x1x32xf32>
    tpu.vector_store %arg6[%c0_181, %c4_182, %c0_183], %471 {strides = array<i32>} : memref<1x8x128xf32, #tpu.memory_space<vmem>>, vector<1x1x32xf32>,
    %473 = vector.shape_cast %440 : vector<8x1xf32> to vector<1x1x8xf32>
    %c0_184 = arith.constant 0 : index
    %c4_185 = arith.constant 4 : index
    %c32_186 = arith.constant 32 : index
    %474 = vector.load %arg6[%c0_184, %c4_185, %c32_186] : memref<1x8x128xf32, #tpu.memory_space<vmem>>, vector<1x1x8xf32>
    tpu.vector_store %arg6[%c0_184, %c4_185, %c32_186], %473 {strides = array<i32>} : memref<1x8x128xf32, #tpu.memory_space<vmem>>, vector<1x1x8xf32>,
    %c64_187 = arith.constant 64 : index
    %c0_188 = arith.constant 0 : index
    %475 = vector.load %arg3[%c64_187, %c0_188] : memref<1120x128xbf16, #tpu.memory_space<vmem>>, vector<16x32xbf16>
    %476 = arith.truncf %470 : vector<1x16xf32> to vector<1x16xbf16>
    %cst_189 = arith.constant dense<0.000000e+00> : vector<1x32xf32>
    %477 = tpu.matmul %476, %475, %cst_189 {dimension_numbers = #tpu.dot_dimension_numbers<[1], [0], [0], [1], [0, 0, 1, 1], [], []>} : vector<1x16xbf16>, vector<16x32xbf16>, vector<1x32xf32> -> vector<1x32xf32>
    %478 = arith.addf %477, %23 : vector<1x32xf32>
    %cst_190 = arith.constant 0.000000e+00 : f32
    %479 = vector.broadcast %cst_190 : f32 to vector<1x32xf32>
    %480 = arith.maximumf %478, %479 : vector<1x32xf32>
    %c80_191 = arith.constant 80 : index
    %c0_192 = arith.constant 0 : index
    %481 = vector.load %arg3[%c80_191, %c0_192] : memref<1120x128xbf16, #tpu.memory_space<vmem>>, vector<32x32xbf16>
    %482 = arith.truncf %480 : vector<1x32xf32> to vector<1x32xbf16>
    %cst_193 = arith.constant dense<0.000000e+00> : vector<1x32xf32>
    %483 = tpu.matmul %482, %481, %cst_193 {dimension_numbers = #tpu.dot_dimension_numbers<[1], [0], [0], [1], [0, 0, 1, 1], [], []>} : vector<1x32xbf16>, vector<32x32xbf16>, vector<1x32xf32> -> vector<1x32xf32>
    %484 = arith.addf %483, %24 : vector<1x32xf32>
    %cst_194 = arith.constant 0.000000e+00 : f32
    %485 = vector.broadcast %cst_194 : f32 to vector<1x32xf32>
    %486 = arith.maximumf %484, %485 : vector<1x32xf32>
    %487 = tpu.concatenate %486, %444, %418 in 1 : vector<1x32xf32>, vector<1x32xf32>, vector<1x32xf32> -> vector<1x96xf32>
    %c144_195 = arith.constant 144 : index
    %c0_196 = arith.constant 0 : index
    %488 = vector.load %arg3[%c144_195, %c0_196] : memref<1120x128xbf16, #tpu.memory_space<vmem>>, vector<96x128xbf16>
    %489 = arith.truncf %487 : vector<1x96xf32> to vector<1x96xbf16>
    %cst_197 = arith.constant dense<0.000000e+00> : vector<1x128xf32>
    %490 = tpu.matmul %489, %488, %cst_197 {dimension_numbers = #tpu.dot_dimension_numbers<[1], [0], [0], [1], [0, 0, 1, 1], [], []>} : vector<1x96xbf16>, vector<96x128xbf16>, vector<1x128xf32> -> vector<1x128xf32>
    %491 = arith.addf %490, %25 : vector<1x128xf32>
    %492 = arith.negf %491 : vector<1x128xf32>
    %493 = math.exp %492 : vector<1x128xf32>
    %cst_198 = arith.constant 1.000000e+00 : f32
    %494 = vector.broadcast %cst_198 : f32 to vector<1x128xf32>
    %495 = arith.addf %494, %493 : vector<1x128xf32>
    %496 = arith.divf %494, %495 : vector<1x128xf32>
    %497 = math.tanh %491 : vector<1x128xf32>
    %498 = vector.extract_strided_slice %496 {offsets = [0, 32], sizes = [1, 32], strides = [1, 1]} : vector<1x128xf32> to vector<1x32xf32>
    %499 = arith.mulf %498, %415 : vector<1x32xf32>
    %500 = vector.extract_strided_slice %496 {offsets = [0, 0], sizes = [1, 32], strides = [1, 1]} : vector<1x128xf32> to vector<1x32xf32>
    %501 = vector.extract_strided_slice %497 {offsets = [0, 64], sizes = [1, 32], strides = [1, 1]} : vector<1x128xf32> to vector<1x32xf32>
    %502 = arith.mulf %500, %501 : vector<1x32xf32>
    %503 = arith.addf %499, %502 : vector<1x32xf32>
    %504 = vector.extract_strided_slice %496 {offsets = [0, 96], sizes = [1, 32], strides = [1, 1]} : vector<1x128xf32> to vector<1x32xf32>
    %505 = math.tanh %503 : vector<1x32xf32>
    %506 = arith.mulf %504, %505 : vector<1x32xf32>
    %c112_199 = arith.constant 112 : index
    %c0_200 = arith.constant 0 : index
    %507 = vector.load %arg3[%c112_199, %c0_200] : memref<1120x128xbf16, #tpu.memory_space<vmem>>, vector<32x32xbf16>
    %508 = arith.truncf %506 : vector<1x32xf32> to vector<1x32xbf16>
    %cst_201 = arith.constant dense<0.000000e+00> : vector<1x32xf32>
    %509 = tpu.matmul %508, %507, %cst_201 {dimension_numbers = #tpu.dot_dimension_numbers<[1], [0], [0], [1], [0, 0, 1, 1], [], []>} : vector<1x32xbf16>, vector<32x32xbf16>, vector<1x32xf32> -> vector<1x32xf32>
    %510 = vector.broadcast %509 : vector<1x32xf32> to vector<8x32xf32>
    %511 = arith.addf %13, %510 : vector<8x32xf32>
    %512 = math.tanh %511 : vector<8x32xf32>
    %513 = vector.broadcast %28 : vector<1x32xf32> to vector<8x32xf32>
    %514 = arith.mulf %512, %513 : vector<8x32xf32>
    %cst_202 = arith.constant dense<0.000000e+00> : vector<8xf32>
    %515 = vector.multi_reduction <add>, %514, %cst_202 [1] : vector<8x32xf32> to vector<8xf32>
    %516 = vector.shape_cast %515 : vector<8xf32> to vector<8x1xf32>
    %cst_203 = arith.constant -1.000000e+30 : f32
    %517 = vector.broadcast %cst_203 : f32 to vector<8x1xf32>
    %518 = arith.select %22, %516, %517 : vector<8x1xi1>, vector<8x1xf32>
    %cst_204 = arith.constant dense<0xFF800000> : vector<1xf32>
    %519 = vector.multi_reduction <maximumf>, %518, %cst_204 [0] : vector<8x1xf32> to vector<1xf32>
    %520 = vector.shape_cast %519 : vector<1xf32> to vector<1x1xf32>
    %521 = vector.broadcast %520 : vector<1x1xf32> to vector<8x1xf32>
    %522 = arith.subf %518, %521 : vector<8x1xf32>
    %523 = math.exp %522 : vector<8x1xf32>
    %cst_205 = arith.constant dense<0.000000e+00> : vector<1xf32>
    %524 = vector.multi_reduction <add>, %523, %cst_205 [0] : vector<8x1xf32> to vector<1xf32>
    %525 = vector.shape_cast %524 : vector<1xf32> to vector<1x1xf32>
    %526 = tpu.reciprocal %525 {approx = true} : vector<1x1xf32> -> vector<1x1xf32>
    %527 = vector.broadcast %526 : vector<1x1xf32> to vector<8x1xf32>
    %528 = arith.mulf %523, %527 : vector<8x1xf32>
    %529 = vector.broadcast %528 : vector<8x1xf32> to vector<8x32xf32>
    %530 = arith.mulf %529, %10 : vector<8x32xf32>
    %cst_206 = arith.constant dense<0.000000e+00> : vector<32xf32>
    %531 = vector.multi_reduction <add>, %530, %cst_206 [0] : vector<8x32xf32> to vector<32xf32>
    %532 = vector.shape_cast %531 : vector<32xf32> to vector<1x32xf32>
    %533 = tpu.concatenate %506, %532, %464 in 1 : vector<1x32xf32>, vector<1x32xf32>, vector<1x32xf32> -> vector<1x96xf32>
    %c240_207 = arith.constant 240 : index
    %c0_208 = arith.constant 0 : index
    %534 = vector.load %arg3[%c240_207, %c0_208] : memref<1120x128xbf16, #tpu.memory_space<vmem>>, vector<96x128xbf16>
    %535 = arith.truncf %533 : vector<1x96xf32> to vector<1x96xbf16>
    %cst_209 = arith.constant dense<0.000000e+00> : vector<1x128xf32>
    %536 = tpu.matmul %535, %534, %cst_209 {dimension_numbers = #tpu.dot_dimension_numbers<[1], [0], [0], [1], [0, 0, 1, 1], [], []>} : vector<1x96xbf16>, vector<96x128xbf16>, vector<1x128xf32> -> vector<1x128xf32>
    %537 = arith.addf %536, %26 : vector<1x128xf32>
    %538 = arith.negf %537 : vector<1x128xf32>
    %539 = math.exp %538 : vector<1x128xf32>
    %cst_210 = arith.constant 1.000000e+00 : f32
    %540 = vector.broadcast %cst_210 : f32 to vector<1x128xf32>
    %541 = arith.addf %540, %539 : vector<1x128xf32>
    %542 = arith.divf %540, %541 : vector<1x128xf32>
    %543 = math.tanh %537 : vector<1x128xf32>
    %544 = vector.extract_strided_slice %542 {offsets = [0, 32], sizes = [1, 32], strides = [1, 1]} : vector<1x128xf32> to vector<1x32xf32>
    %545 = arith.mulf %544, %461 : vector<1x32xf32>
    %546 = vector.extract_strided_slice %542 {offsets = [0, 0], sizes = [1, 32], strides = [1, 1]} : vector<1x128xf32> to vector<1x32xf32>
    %547 = vector.extract_strided_slice %543 {offsets = [0, 64], sizes = [1, 32], strides = [1, 1]} : vector<1x128xf32> to vector<1x32xf32>
    %548 = arith.mulf %546, %547 : vector<1x32xf32>
    %549 = arith.addf %545, %548 : vector<1x32xf32>
    %550 = vector.extract_strided_slice %542 {offsets = [0, 96], sizes = [1, 32], strides = [1, 1]} : vector<1x128xf32> to vector<1x32xf32>
    %551 = math.tanh %549 : vector<1x32xf32>
    %552 = arith.mulf %550, %551 : vector<1x32xf32>
    %553 = tpu.concatenate %552, %532 in 1 : vector<1x32xf32>, vector<1x32xf32> -> vector<1x64xf32>
    %c336_211 = arith.constant 336 : index
    %c0_212 = arith.constant 0 : index
    %554 = vector.load %arg3[%c336_211, %c0_212] : memref<1120x128xbf16, #tpu.memory_space<vmem>>, vector<64x32xbf16>
    %555 = arith.truncf %553 : vector<1x64xf32> to vector<1x64xbf16>
    %cst_213 = arith.constant dense<0.000000e+00> : vector<1x32xf32>
    %556 = tpu.matmul %555, %554, %cst_213 {dimension_numbers = #tpu.dot_dimension_numbers<[1], [0], [0], [1], [0, 0, 1, 1], [], []>} : vector<1x64xbf16>, vector<64x32xbf16>, vector<1x32xf32> -> vector<1x32xf32>
    %557 = arith.addf %556, %27 : vector<1x32xf32>
    %558 = vector.extract_strided_slice %557 {offsets = [0, 0], sizes = [1, 16], strides = [1, 1]} : vector<1x32xf32> to vector<1x16xf32>
    %559 = vector.shape_cast %557 : vector<1x32xf32> to vector<1x1x32xf32>
    %c0_214 = arith.constant 0 : index
    %c5_215 = arith.constant 5 : index
    %c0_216 = arith.constant 0 : index
    %560 = vector.load %arg6[%c0_214, %c5_215, %c0_216] : memref<1x8x128xf32, #tpu.memory_space<vmem>>, vector<1x1x32xf32>
    tpu.vector_store %arg6[%c0_214, %c5_215, %c0_216], %559 {strides = array<i32>} : memref<1x8x128xf32, #tpu.memory_space<vmem>>, vector<1x1x32xf32>,
    %561 = vector.shape_cast %528 : vector<8x1xf32> to vector<1x1x8xf32>
    %c0_217 = arith.constant 0 : index
    %c5_218 = arith.constant 5 : index
    %c32_219 = arith.constant 32 : index
    %562 = vector.load %arg6[%c0_217, %c5_218, %c32_219] : memref<1x8x128xf32, #tpu.memory_space<vmem>>, vector<1x1x8xf32>
    tpu.vector_store %arg6[%c0_217, %c5_218, %c32_219], %561 {strides = array<i32>} : memref<1x8x128xf32, #tpu.memory_space<vmem>>, vector<1x1x8xf32>,
    %c64_220 = arith.constant 64 : index
    %c0_221 = arith.constant 0 : index
    %563 = vector.load %arg3[%c64_220, %c0_221] : memref<1120x128xbf16, #tpu.memory_space<vmem>>, vector<16x32xbf16>
    %564 = arith.truncf %558 : vector<1x16xf32> to vector<1x16xbf16>
    %cst_222 = arith.constant dense<0.000000e+00> : vector<1x32xf32>
    %565 = tpu.matmul %564, %563, %cst_222 {dimension_numbers = #tpu.dot_dimension_numbers<[1], [0], [0], [1], [0, 0, 1, 1], [], []>} : vector<1x16xbf16>, vector<16x32xbf16>, vector<1x32xf32> -> vector<1x32xf32>
    %566 = arith.addf %565, %23 : vector<1x32xf32>
    %cst_223 = arith.constant 0.000000e+00 : f32
    %567 = vector.broadcast %cst_223 : f32 to vector<1x32xf32>
    %568 = arith.maximumf %566, %567 : vector<1x32xf32>
    %c80_224 = arith.constant 80 : index
    %c0_225 = arith.constant 0 : index
    %569 = vector.load %arg3[%c80_224, %c0_225] : memref<1120x128xbf16, #tpu.memory_space<vmem>>, vector<32x32xbf16>
    %570 = arith.truncf %568 : vector<1x32xf32> to vector<1x32xbf16>
    %cst_226 = arith.constant dense<0.000000e+00> : vector<1x32xf32>
    %571 = tpu.matmul %570, %569, %cst_226 {dimension_numbers = #tpu.dot_dimension_numbers<[1], [0], [0], [1], [0, 0, 1, 1], [], []>} : vector<1x32xbf16>, vector<32x32xbf16>, vector<1x32xf32> -> vector<1x32xf32>
    %572 = arith.addf %571, %24 : vector<1x32xf32>
    %cst_227 = arith.constant 0.000000e+00 : f32
    %573 = vector.broadcast %cst_227 : f32 to vector<1x32xf32>
    %574 = arith.maximumf %572, %573 : vector<1x32xf32>
    %575 = tpu.concatenate %574, %532, %506 in 1 : vector<1x32xf32>, vector<1x32xf32>, vector<1x32xf32> -> vector<1x96xf32>
    %c144_228 = arith.constant 144 : index
    %c0_229 = arith.constant 0 : index
    %576 = vector.load %arg3[%c144_228, %c0_229] : memref<1120x128xbf16, #tpu.memory_space<vmem>>, vector<96x128xbf16>
    %577 = arith.truncf %575 : vector<1x96xf32> to vector<1x96xbf16>
    %cst_230 = arith.constant dense<0.000000e+00> : vector<1x128xf32>
    %578 = tpu.matmul %577, %576, %cst_230 {dimension_numbers = #tpu.dot_dimension_numbers<[1], [0], [0], [1], [0, 0, 1, 1], [], []>} : vector<1x96xbf16>, vector<96x128xbf16>, vector<1x128xf32> -> vector<1x128xf32>
    %579 = arith.addf %578, %25 : vector<1x128xf32>
    %580 = arith.negf %579 : vector<1x128xf32>
    %581 = math.exp %580 : vector<1x128xf32>
    %cst_231 = arith.constant 1.000000e+00 : f32
    %582 = vector.broadcast %cst_231 : f32 to vector<1x128xf32>
    %583 = arith.addf %582, %581 : vector<1x128xf32>
    %584 = arith.divf %582, %583 : vector<1x128xf32>
    %585 = math.tanh %579 : vector<1x128xf32>
    %586 = vector.extract_strided_slice %584 {offsets = [0, 32], sizes = [1, 32], strides = [1, 1]} : vector<1x128xf32> to vector<1x32xf32>
    %587 = arith.mulf %586, %503 : vector<1x32xf32>
    %588 = vector.extract_strided_slice %584 {offsets = [0, 0], sizes = [1, 32], strides = [1, 1]} : vector<1x128xf32> to vector<1x32xf32>
    %589 = vector.extract_strided_slice %585 {offsets = [0, 64], sizes = [1, 32], strides = [1, 1]} : vector<1x128xf32> to vector<1x32xf32>
    %590 = arith.mulf %588, %589 : vector<1x32xf32>
    %591 = arith.addf %587, %590 : vector<1x32xf32>
    %592 = vector.extract_strided_slice %584 {offsets = [0, 96], sizes = [1, 32], strides = [1, 1]} : vector<1x128xf32> to vector<1x32xf32>
    %593 = math.tanh %591 : vector<1x32xf32>
    %594 = arith.mulf %592, %593 : vector<1x32xf32>
    %c112_232 = arith.constant 112 : index
    %c0_233 = arith.constant 0 : index
    %595 = vector.load %arg3[%c112_232, %c0_233] : memref<1120x128xbf16, #tpu.memory_space<vmem>>, vector<32x32xbf16>
    %596 = arith.truncf %594 : vector<1x32xf32> to vector<1x32xbf16>
    %cst_234 = arith.constant dense<0.000000e+00> : vector<1x32xf32>
    %597 = tpu.matmul %596, %595, %cst_234 {dimension_numbers = #tpu.dot_dimension_numbers<[1], [0], [0], [1], [0, 0, 1, 1], [], []>} : vector<1x32xbf16>, vector<32x32xbf16>, vector<1x32xf32> -> vector<1x32xf32>
    %598 = vector.broadcast %597 : vector<1x32xf32> to vector<8x32xf32>
    %599 = arith.addf %13, %598 : vector<8x32xf32>
    %600 = math.tanh %599 : vector<8x32xf32>
    %601 = vector.broadcast %28 : vector<1x32xf32> to vector<8x32xf32>
    %602 = arith.mulf %600, %601 : vector<8x32xf32>
    %cst_235 = arith.constant dense<0.000000e+00> : vector<8xf32>
    %603 = vector.multi_reduction <add>, %602, %cst_235 [1] : vector<8x32xf32> to vector<8xf32>
    %604 = vector.shape_cast %603 : vector<8xf32> to vector<8x1xf32>
    %cst_236 = arith.constant -1.000000e+30 : f32
    %605 = vector.broadcast %cst_236 : f32 to vector<8x1xf32>
    %606 = arith.select %22, %604, %605 : vector<8x1xi1>, vector<8x1xf32>
    %cst_237 = arith.constant dense<0xFF800000> : vector<1xf32>
    %607 = vector.multi_reduction <maximumf>, %606, %cst_237 [0] : vector<8x1xf32> to vector<1xf32>
    %608 = vector.shape_cast %607 : vector<1xf32> to vector<1x1xf32>
    %609 = vector.broadcast %608 : vector<1x1xf32> to vector<8x1xf32>
    %610 = arith.subf %606, %609 : vector<8x1xf32>
    %611 = math.exp %610 : vector<8x1xf32>
    %cst_238 = arith.constant dense<0.000000e+00> : vector<1xf32>
    %612 = vector.multi_reduction <add>, %611, %cst_238 [0] : vector<8x1xf32> to vector<1xf32>
    %613 = vector.shape_cast %612 : vector<1xf32> to vector<1x1xf32>
    %614 = tpu.reciprocal %613 {approx = true} : vector<1x1xf32> -> vector<1x1xf32>
    %615 = vector.broadcast %614 : vector<1x1xf32> to vector<8x1xf32>
    %616 = arith.mulf %611, %615 : vector<8x1xf32>
    %617 = vector.broadcast %616 : vector<8x1xf32> to vector<8x32xf32>
    %618 = arith.mulf %617, %10 : vector<8x32xf32>
    %cst_239 = arith.constant dense<0.000000e+00> : vector<32xf32>
    %619 = vector.multi_reduction <add>, %618, %cst_239 [0] : vector<8x32xf32> to vector<32xf32>
    %620 = vector.shape_cast %619 : vector<32xf32> to vector<1x32xf32>
    %621 = tpu.concatenate %594, %620, %552 in 1 : vector<1x32xf32>, vector<1x32xf32>, vector<1x32xf32> -> vector<1x96xf32>
    %c240_240 = arith.constant 240 : index
    %c0_241 = arith.constant 0 : index
    %622 = vector.load %arg3[%c240_240, %c0_241] : memref<1120x128xbf16, #tpu.memory_space<vmem>>, vector<96x128xbf16>
    %623 = arith.truncf %621 : vector<1x96xf32> to vector<1x96xbf16>
    %cst_242 = arith.constant dense<0.000000e+00> : vector<1x128xf32>
    %624 = tpu.matmul %623, %622, %cst_242 {dimension_numbers = #tpu.dot_dimension_numbers<[1], [0], [0], [1], [0, 0, 1, 1], [], []>} : vector<1x96xbf16>, vector<96x128xbf16>, vector<1x128xf32> -> vector<1x128xf32>
    %625 = arith.addf %624, %26 : vector<1x128xf32>
    %626 = arith.negf %625 : vector<1x128xf32>
    %627 = math.exp %626 : vector<1x128xf32>
    %cst_243 = arith.constant 1.000000e+00 : f32
    %628 = vector.broadcast %cst_243 : f32 to vector<1x128xf32>
    %629 = arith.addf %628, %627 : vector<1x128xf32>
    %630 = arith.divf %628, %629 : vector<1x128xf32>
    %631 = math.tanh %625 : vector<1x128xf32>
    %632 = vector.extract_strided_slice %630 {offsets = [0, 32], sizes = [1, 32], strides = [1, 1]} : vector<1x128xf32> to vector<1x32xf32>
    %633 = arith.mulf %632, %549 : vector<1x32xf32>
    %634 = vector.extract_strided_slice %630 {offsets = [0, 0], sizes = [1, 32], strides = [1, 1]} : vector<1x128xf32> to vector<1x32xf32>
    %635 = vector.extract_strided_slice %631 {offsets = [0, 64], sizes = [1, 32], strides = [1, 1]} : vector<1x128xf32> to vector<1x32xf32>
    %636 = arith.mulf %634, %635 : vector<1x32xf32>
    %637 = arith.addf %633, %636 : vector<1x32xf32>
    %638 = vector.extract_strided_slice %630 {offsets = [0, 96], sizes = [1, 32], strides = [1, 1]} : vector<1x128xf32> to vector<1x32xf32>
    %639 = math.tanh %637 : vector<1x32xf32>
    %640 = arith.mulf %638, %639 : vector<1x32xf32>
    %641 = tpu.concatenate %640, %620 in 1 : vector<1x32xf32>, vector<1x32xf32> -> vector<1x64xf32>
    %c336_244 = arith.constant 336 : index
    %c0_245 = arith.constant 0 : index
    %642 = vector.load %arg3[%c336_244, %c0_245] : memref<1120x128xbf16, #tpu.memory_space<vmem>>, vector<64x32xbf16>
    %643 = arith.truncf %641 : vector<1x64xf32> to vector<1x64xbf16>
    %cst_246 = arith.constant dense<0.000000e+00> : vector<1x32xf32>
    %644 = tpu.matmul %643, %642, %cst_246 {dimension_numbers = #tpu.dot_dimension_numbers<[1], [0], [0], [1], [0, 0, 1, 1], [], []>} : vector<1x64xbf16>, vector<64x32xbf16>, vector<1x32xf32> -> vector<1x32xf32>
    %645 = arith.addf %644, %27 : vector<1x32xf32>
    %646 = vector.extract_strided_slice %645 {offsets = [0, 0], sizes = [1, 16], strides = [1, 1]} : vector<1x32xf32> to vector<1x16xf32>
    %647 = vector.shape_cast %645 : vector<1x32xf32> to vector<1x1x32xf32>
    %c0_247 = arith.constant 0 : index
    %c6_248 = arith.constant 6 : index
    %c0_249 = arith.constant 0 : index
    %648 = vector.load %arg6[%c0_247, %c6_248, %c0_249] : memref<1x8x128xf32, #tpu.memory_space<vmem>>, vector<1x1x32xf32>
    tpu.vector_store %arg6[%c0_247, %c6_248, %c0_249], %647 {strides = array<i32>} : memref<1x8x128xf32, #tpu.memory_space<vmem>>, vector<1x1x32xf32>,
    %649 = vector.shape_cast %616 : vector<8x1xf32> to vector<1x1x8xf32>
    %c0_250 = arith.constant 0 : index
    %c6_251 = arith.constant 6 : index
    %c32_252 = arith.constant 32 : index
    %650 = vector.load %arg6[%c0_250, %c6_251, %c32_252] : memref<1x8x128xf32, #tpu.memory_space<vmem>>, vector<1x1x8xf32>
    tpu.vector_store %arg6[%c0_250, %c6_251, %c32_252], %649 {strides = array<i32>} : memref<1x8x128xf32, #tpu.memory_space<vmem>>, vector<1x1x8xf32>,
    %c64_253 = arith.constant 64 : index
    %c0_254 = arith.constant 0 : index
    %651 = vector.load %arg3[%c64_253, %c0_254] : memref<1120x128xbf16, #tpu.memory_space<vmem>>, vector<16x32xbf16>
    %652 = arith.truncf %646 : vector<1x16xf32> to vector<1x16xbf16>
    %cst_255 = arith.constant dense<0.000000e+00> : vector<1x32xf32>
    %653 = tpu.matmul %652, %651, %cst_255 {dimension_numbers = #tpu.dot_dimension_numbers<[1], [0], [0], [1], [0, 0, 1, 1], [], []>} : vector<1x16xbf16>, vector<16x32xbf16>, vector<1x32xf32> -> vector<1x32xf32>
    %654 = arith.addf %653, %23 : vector<1x32xf32>
    %cst_256 = arith.constant 0.000000e+00 : f32
    %655 = vector.broadcast %cst_256 : f32 to vector<1x32xf32>
    %656 = arith.maximumf %654, %655 : vector<1x32xf32>
    %c80_257 = arith.constant 80 : index
    %c0_258 = arith.constant 0 : index
    %657 = vector.load %arg3[%c80_257, %c0_258] : memref<1120x128xbf16, #tpu.memory_space<vmem>>, vector<32x32xbf16>
    %658 = arith.truncf %656 : vector<1x32xf32> to vector<1x32xbf16>
    %cst_259 = arith.constant dense<0.000000e+00> : vector<1x32xf32>
    %659 = tpu.matmul %658, %657, %cst_259 {dimension_numbers = #tpu.dot_dimension_numbers<[1], [0], [0], [1], [0, 0, 1, 1], [], []>} : vector<1x32xbf16>, vector<32x32xbf16>, vector<1x32xf32> -> vector<1x32xf32>
    %660 = arith.addf %659, %24 : vector<1x32xf32>
    %cst_260 = arith.constant 0.000000e+00 : f32
    %661 = vector.broadcast %cst_260 : f32 to vector<1x32xf32>
    %662 = arith.maximumf %660, %661 : vector<1x32xf32>
    %663 = tpu.concatenate %662, %620, %594 in 1 : vector<1x32xf32>, vector<1x32xf32>, vector<1x32xf32> -> vector<1x96xf32>
    %c144_261 = arith.constant 144 : index
    %c0_262 = arith.constant 0 : index
    %664 = vector.load %arg3[%c144_261, %c0_262] : memref<1120x128xbf16, #tpu.memory_space<vmem>>, vector<96x128xbf16>
    %665 = arith.truncf %663 : vector<1x96xf32> to vector<1x96xbf16>
    %cst_263 = arith.constant dense<0.000000e+00> : vector<1x128xf32>
    %666 = tpu.matmul %665, %664, %cst_263 {dimension_numbers = #tpu.dot_dimension_numbers<[1], [0], [0], [1], [0, 0, 1, 1], [], []>} : vector<1x96xbf16>, vector<96x128xbf16>, vector<1x128xf32> -> vector<1x128xf32>
    %667 = arith.addf %666, %25 : vector<1x128xf32>
    %668 = arith.negf %667 : vector<1x128xf32>
    %669 = math.exp %668 : vector<1x128xf32>
    %cst_264 = arith.constant 1.000000e+00 : f32
    %670 = vector.broadcast %cst_264 : f32 to vector<1x128xf32>
    %671 = arith.addf %670, %669 : vector<1x128xf32>
    %672 = arith.divf %670, %671 : vector<1x128xf32>
    %673 = math.tanh %667 : vector<1x128xf32>
    %674 = vector.extract_strided_slice %672 {offsets = [0, 32], sizes = [1, 32], strides = [1, 1]} : vector<1x128xf32> to vector<1x32xf32>
    %675 = arith.mulf %674, %591 : vector<1x32xf32>
    %676 = vector.extract_strided_slice %672 {offsets = [0, 0], sizes = [1, 32], strides = [1, 1]} : vector<1x128xf32> to vector<1x32xf32>
    %677 = vector.extract_strided_slice %673 {offsets = [0, 64], sizes = [1, 32], strides = [1, 1]} : vector<1x128xf32> to vector<1x32xf32>
    %678 = arith.mulf %676, %677 : vector<1x32xf32>
    %679 = arith.addf %675, %678 : vector<1x32xf32>
    %680 = vector.extract_strided_slice %672 {offsets = [0, 96], sizes = [1, 32], strides = [1, 1]} : vector<1x128xf32> to vector<1x32xf32>
    %681 = math.tanh %679 : vector<1x32xf32>
    %682 = arith.mulf %680, %681 : vector<1x32xf32>
    %c112_265 = arith.constant 112 : index
    %c0_266 = arith.constant 0 : index
    %683 = vector.load %arg3[%c112_265, %c0_266] : memref<1120x128xbf16, #tpu.memory_space<vmem>>, vector<32x32xbf16>
    %684 = arith.truncf %682 : vector<1x32xf32> to vector<1x32xbf16>
    %cst_267 = arith.constant dense<0.000000e+00> : vector<1x32xf32>
    %685 = tpu.matmul %684, %683, %cst_267 {dimension_numbers = #tpu.dot_dimension_numbers<[1], [0], [0], [1], [0, 0, 1, 1], [], []>} : vector<1x32xbf16>, vector<32x32xbf16>, vector<1x32xf32> -> vector<1x32xf32>
    %686 = vector.broadcast %685 : vector<1x32xf32> to vector<8x32xf32>
    %687 = arith.addf %13, %686 : vector<8x32xf32>
    %688 = math.tanh %687 : vector<8x32xf32>
    %689 = vector.broadcast %28 : vector<1x32xf32> to vector<8x32xf32>
    %690 = arith.mulf %688, %689 : vector<8x32xf32>
    %cst_268 = arith.constant dense<0.000000e+00> : vector<8xf32>
    %691 = vector.multi_reduction <add>, %690, %cst_268 [1] : vector<8x32xf32> to vector<8xf32>
    %692 = vector.shape_cast %691 : vector<8xf32> to vector<8x1xf32>
    %cst_269 = arith.constant -1.000000e+30 : f32
    %693 = vector.broadcast %cst_269 : f32 to vector<8x1xf32>
    %694 = arith.select %22, %692, %693 : vector<8x1xi1>, vector<8x1xf32>
    %cst_270 = arith.constant dense<0xFF800000> : vector<1xf32>
    %695 = vector.multi_reduction <maximumf>, %694, %cst_270 [0] : vector<8x1xf32> to vector<1xf32>
    %696 = vector.shape_cast %695 : vector<1xf32> to vector<1x1xf32>
    %697 = vector.broadcast %696 : vector<1x1xf32> to vector<8x1xf32>
    %698 = arith.subf %694, %697 : vector<8x1xf32>
    %699 = math.exp %698 : vector<8x1xf32>
    %cst_271 = arith.constant dense<0.000000e+00> : vector<1xf32>
    %700 = vector.multi_reduction <add>, %699, %cst_271 [0] : vector<8x1xf32> to vector<1xf32>
    %701 = vector.shape_cast %700 : vector<1xf32> to vector<1x1xf32>
    %702 = tpu.reciprocal %701 {approx = true} : vector<1x1xf32> -> vector<1x1xf32>
    %703 = vector.broadcast %702 : vector<1x1xf32> to vector<8x1xf32>
    %704 = arith.mulf %699, %703 : vector<8x1xf32>
    %705 = vector.broadcast %704 : vector<8x1xf32> to vector<8x32xf32>
    %706 = arith.mulf %705, %10 : vector<8x32xf32>
    %cst_272 = arith.constant dense<0.000000e+00> : vector<32xf32>
    %707 = vector.multi_reduction <add>, %706, %cst_272 [0] : vector<8x32xf32> to vector<32xf32>
    %708 = vector.shape_cast %707 : vector<32xf32> to vector<1x32xf32>
    %709 = tpu.concatenate %682, %708, %640 in 1 : vector<1x32xf32>, vector<1x32xf32>, vector<1x32xf32> -> vector<1x96xf32>
    %c240_273 = arith.constant 240 : index
    %c0_274 = arith.constant 0 : index
    %710 = vector.load %arg3[%c240_273, %c0_274] : memref<1120x128xbf16, #tpu.memory_space<vmem>>, vector<96x128xbf16>
    %711 = arith.truncf %709 : vector<1x96xf32> to vector<1x96xbf16>
    %cst_275 = arith.constant dense<0.000000e+00> : vector<1x128xf32>
    %712 = tpu.matmul %711, %710, %cst_275 {dimension_numbers = #tpu.dot_dimension_numbers<[1], [0], [0], [1], [0, 0, 1, 1], [], []>} : vector<1x96xbf16>, vector<96x128xbf16>, vector<1x128xf32> -> vector<1x128xf32>
    %713 = arith.addf %712, %26 : vector<1x128xf32>
    %714 = arith.negf %713 : vector<1x128xf32>
    %715 = math.exp %714 : vector<1x128xf32>
    %cst_276 = arith.constant 1.000000e+00 : f32
    %716 = vector.broadcast %cst_276 : f32 to vector<1x128xf32>
    %717 = arith.addf %716, %715 : vector<1x128xf32>
    %718 = arith.divf %716, %717 : vector<1x128xf32>
    %719 = math.tanh %713 : vector<1x128xf32>
    %720 = vector.extract_strided_slice %718 {offsets = [0, 32], sizes = [1, 32], strides = [1, 1]} : vector<1x128xf32> to vector<1x32xf32>
    %721 = arith.mulf %720, %637 : vector<1x32xf32>
    %722 = vector.extract_strided_slice %718 {offsets = [0, 0], sizes = [1, 32], strides = [1, 1]} : vector<1x128xf32> to vector<1x32xf32>
    %723 = vector.extract_strided_slice %719 {offsets = [0, 64], sizes = [1, 32], strides = [1, 1]} : vector<1x128xf32> to vector<1x32xf32>
    %724 = arith.mulf %722, %723 : vector<1x32xf32>
    %725 = arith.addf %721, %724 : vector<1x32xf32>
    %726 = vector.extract_strided_slice %718 {offsets = [0, 96], sizes = [1, 32], strides = [1, 1]} : vector<1x128xf32> to vector<1x32xf32>
    %727 = math.tanh %725 : vector<1x32xf32>
    %728 = arith.mulf %726, %727 : vector<1x32xf32>
    %729 = tpu.concatenate %728, %708 in 1 : vector<1x32xf32>, vector<1x32xf32> -> vector<1x64xf32>
    %c336_277 = arith.constant 336 : index
    %c0_278 = arith.constant 0 : index
    %730 = vector.load %arg3[%c336_277, %c0_278] : memref<1120x128xbf16, #tpu.memory_space<vmem>>, vector<64x32xbf16>
    %731 = arith.truncf %729 : vector<1x64xf32> to vector<1x64xbf16>
    %cst_279 = arith.constant dense<0.000000e+00> : vector<1x32xf32>
    %732 = tpu.matmul %731, %730, %cst_279 {dimension_numbers = #tpu.dot_dimension_numbers<[1], [0], [0], [1], [0, 0, 1, 1], [], []>} : vector<1x64xbf16>, vector<64x32xbf16>, vector<1x32xf32> -> vector<1x32xf32>
    %733 = arith.addf %732, %27 : vector<1x32xf32>
    %734 = vector.shape_cast %733 : vector<1x32xf32> to vector<1x1x32xf32>
    %c0_280 = arith.constant 0 : index
    %c7 = arith.constant 7 : index
    %c0_281 = arith.constant 0 : index
    %735 = vector.load %arg6[%c0_280, %c7, %c0_281] : memref<1x8x128xf32, #tpu.memory_space<vmem>>, vector<1x1x32xf32>
    tpu.vector_store %arg6[%c0_280, %c7, %c0_281], %734 {strides = array<i32>} : memref<1x8x128xf32, #tpu.memory_space<vmem>>, vector<1x1x32xf32>,
    %736 = vector.shape_cast %704 : vector<8x1xf32> to vector<1x1x8xf32>
    %c0_282 = arith.constant 0 : index
    %c7_283 = arith.constant 7 : index
    %c32_284 = arith.constant 32 : index
    %737 = vector.load %arg6[%c0_282, %c7_283, %c32_284] : memref<1x8x128xf32, #tpu.memory_space<vmem>>, vector<1x1x8xf32>
    tpu.vector_store %arg6[%c0_282, %c7_283, %c32_284], %736 {strides = array<i32>} : memref<1x8x128xf32, #tpu.memory_space<vmem>>, vector<1x1x8xf32>,
    %c0_285 = arith.constant 0 : index
    %c0_286 = arith.constant 0 : index
    %c0_287 = arith.constant 0 : index
    %738 = vector.load %arg6[%c0_285, %c0_286, %c0_287] : memref<1x8x128xf32, #tpu.memory_space<vmem>>, vector<1x8x16xf32>
    %739 = vector.shape_cast %738 : vector<1x8x16xf32> to vector<8x16xf32>
    %cst_288 = arith.constant 0.000000e+00 : f32
    %740 = vector.broadcast %cst_288 : f32 to vector<2x16xf32>
    %741 = tpu.concatenate %740, %739, %740 in 0 : vector<2x16xf32>, vector<8x16xf32>, vector<2x16xf32> -> vector<12x16xf32>
    %742 = vector.extract_strided_slice %741 {offsets = [0, 0], sizes = [8, 16], strides = [1, 1]} : vector<12x16xf32> to vector<8x16xf32>
    %c400 = arith.constant 400 : index
    %c0_289 = arith.constant 0 : index
    %743 = vector.load %arg3[%c400, %c0_289] : memref<1120x128xbf16, #tpu.memory_space<vmem>>, vector<16x32xbf16>
    %744 = arith.truncf %742 : vector<8x16xf32> to vector<8x16xbf16>
    %cst_290 = arith.constant dense<0.000000e+00> : vector<8x32xf32>
    %745 = tpu.matmul %744, %743, %cst_290 {dimension_numbers = #tpu.dot_dimension_numbers<[1], [0], [0], [1], [0, 0, 1, 1], [], []>} : vector<8x16xbf16>, vector<16x32xbf16>, vector<8x32xf32> -> vector<8x32xf32>
    %746 = vector.extract_strided_slice %741 {offsets = [1, 0], sizes = [8, 16], strides = [1, 1]} : vector<12x16xf32> to vector<8x16xf32>
    %c416 = arith.constant 416 : index
    %c0_291 = arith.constant 0 : index
    %747 = vector.load %arg3[%c416, %c0_291] : memref<1120x128xbf16, #tpu.memory_space<vmem>>, vector<16x32xbf16>
    %748 = arith.truncf %746 : vector<8x16xf32> to vector<8x16xbf16>
    %cst_292 = arith.constant dense<0.000000e+00> : vector<8x32xf32>
    %749 = tpu.matmul %748, %747, %cst_292 {dimension_numbers = #tpu.dot_dimension_numbers<[1], [0], [0], [1], [0, 0, 1, 1], [], []>} : vector<8x16xbf16>, vector<16x32xbf16>, vector<8x32xf32> -> vector<8x32xf32>
    %750 = arith.addf %745, %749 : vector<8x32xf32>
    %751 = vector.extract_strided_slice %741 {offsets = [2, 0], sizes = [8, 16], strides = [1, 1]} : vector<12x16xf32> to vector<8x16xf32>
    %c432 = arith.constant 432 : index
    %c0_293 = arith.constant 0 : index
    %752 = vector.load %arg3[%c432, %c0_293] : memref<1120x128xbf16, #tpu.memory_space<vmem>>, vector<16x32xbf16>
    %753 = arith.truncf %751 : vector<8x16xf32> to vector<8x16xbf16>
    %cst_294 = arith.constant dense<0.000000e+00> : vector<8x32xf32>
    %754 = tpu.matmul %753, %752, %cst_294 {dimension_numbers = #tpu.dot_dimension_numbers<[1], [0], [0], [1], [0, 0, 1, 1], [], []>} : vector<8x16xbf16>, vector<16x32xbf16>, vector<8x32xf32> -> vector<8x32xf32>
    %755 = arith.addf %750, %754 : vector<8x32xf32>
    %756 = vector.extract_strided_slice %741 {offsets = [3, 0], sizes = [8, 16], strides = [1, 1]} : vector<12x16xf32> to vector<8x16xf32>
    %c448 = arith.constant 448 : index
    %c0_295 = arith.constant 0 : index
    %757 = vector.load %arg3[%c448, %c0_295] : memref<1120x128xbf16, #tpu.memory_space<vmem>>, vector<16x32xbf16>
    %758 = arith.truncf %756 : vector<8x16xf32> to vector<8x16xbf16>
    %cst_296 = arith.constant dense<0.000000e+00> : vector<8x32xf32>
    %759 = tpu.matmul %758, %757, %cst_296 {dimension_numbers = #tpu.dot_dimension_numbers<[1], [0], [0], [1], [0, 0, 1, 1], [], []>} : vector<8x16xbf16>, vector<16x32xbf16>, vector<8x32xf32> -> vector<8x32xf32>
    %760 = arith.addf %755, %759 : vector<8x32xf32>
    %761 = vector.extract_strided_slice %741 {offsets = [4, 0], sizes = [8, 16], strides = [1, 1]} : vector<12x16xf32> to vector<8x16xf32>
    %c464 = arith.constant 464 : index
    %c0_297 = arith.constant 0 : index
    %762 = vector.load %arg3[%c464, %c0_297] : memref<1120x128xbf16, #tpu.memory_space<vmem>>, vector<16x32xbf16>
    %763 = arith.truncf %761 : vector<8x16xf32> to vector<8x16xbf16>
    %cst_298 = arith.constant dense<0.000000e+00> : vector<8x32xf32>
    %764 = tpu.matmul %763, %762, %cst_298 {dimension_numbers = #tpu.dot_dimension_numbers<[1], [0], [0], [1], [0, 0, 1, 1], [], []>} : vector<8x16xbf16>, vector<16x32xbf16>, vector<8x32xf32> -> vector<8x32xf32>
    %765 = arith.addf %760, %764 : vector<8x32xf32>
    %c7_299 = arith.constant 7 : index
    %c0_300 = arith.constant 0 : index
    %766 = vector.load %arg4[%c7_299, %c0_300] : memref<16x128xf32, #tpu.memory_space<vmem>>, vector<1x32xf32>
    %767 = vector.broadcast %766 : vector<1x32xf32> to vector<8x32xf32>
    %768 = arith.addf %765, %767 : vector<8x32xf32>
    %769 = math.tanh %768 : vector<8x32xf32>
    %cst_301 = arith.constant 0.000000e+00 : f32
    %770 = vector.broadcast %cst_301 : f32 to vector<2x32xf32>
    %771 = tpu.concatenate %770, %769, %770 in 0 : vector<2x32xf32>, vector<8x32xf32>, vector<2x32xf32> -> vector<12x32xf32>
    %772 = vector.extract_strided_slice %771 {offsets = [0, 0], sizes = [8, 32], strides = [1, 1]} : vector<12x32xf32> to vector<8x32xf32>
    %c480 = arith.constant 480 : index
    %c0_302 = arith.constant 0 : index
    %773 = vector.load %arg3[%c480, %c0_302] : memref<1120x128xbf16, #tpu.memory_space<vmem>>, vector<32x32xbf16>
    %774 = arith.truncf %772 : vector<8x32xf32> to vector<8x32xbf16>
    %cst_303 = arith.constant dense<0.000000e+00> : vector<8x32xf32>
    %775 = tpu.matmul %774, %773, %cst_303 {dimension_numbers = #tpu.dot_dimension_numbers<[1], [0], [0], [1], [0, 0, 1, 1], [], []>} : vector<8x32xbf16>, vector<32x32xbf16>, vector<8x32xf32> -> vector<8x32xf32>
    %776 = vector.extract_strided_slice %771 {offsets = [1, 0], sizes = [8, 32], strides = [1, 1]} : vector<12x32xf32> to vector<8x32xf32>
    %c512 = arith.constant 512 : index
    %c0_304 = arith.constant 0 : index
    %777 = vector.load %arg3[%c512, %c0_304] : memref<1120x128xbf16, #tpu.memory_space<vmem>>, vector<32x32xbf16>
    %778 = arith.truncf %776 : vector<8x32xf32> to vector<8x32xbf16>
    %cst_305 = arith.constant dense<0.000000e+00> : vector<8x32xf32>
    %779 = tpu.matmul %778, %777, %cst_305 {dimension_numbers = #tpu.dot_dimension_numbers<[1], [0], [0], [1], [0, 0, 1, 1], [], []>} : vector<8x32xbf16>, vector<32x32xbf16>, vector<8x32xf32> -> vector<8x32xf32>
    %780 = arith.addf %775, %779 : vector<8x32xf32>
    %781 = vector.extract_strided_slice %771 {offsets = [2, 0], sizes = [8, 32], strides = [1, 1]} : vector<12x32xf32> to vector<8x32xf32>
    %c544 = arith.constant 544 : index
    %c0_306 = arith.constant 0 : index
    %782 = vector.load %arg3[%c544, %c0_306] : memref<1120x128xbf16, #tpu.memory_space<vmem>>, vector<32x32xbf16>
    %783 = arith.truncf %781 : vector<8x32xf32> to vector<8x32xbf16>
    %cst_307 = arith.constant dense<0.000000e+00> : vector<8x32xf32>
    %784 = tpu.matmul %783, %782, %cst_307 {dimension_numbers = #tpu.dot_dimension_numbers<[1], [0], [0], [1], [0, 0, 1, 1], [], []>} : vector<8x32xbf16>, vector<32x32xbf16>, vector<8x32xf32> -> vector<8x32xf32>
    %785 = arith.addf %780, %784 : vector<8x32xf32>
    %786 = vector.extract_strided_slice %771 {offsets = [3, 0], sizes = [8, 32], strides = [1, 1]} : vector<12x32xf32> to vector<8x32xf32>
    %c576 = arith.constant 576 : index
    %c0_308 = arith.constant 0 : index
    %787 = vector.load %arg3[%c576, %c0_308] : memref<1120x128xbf16, #tpu.memory_space<vmem>>, vector<32x32xbf16>
    %788 = arith.truncf %786 : vector<8x32xf32> to vector<8x32xbf16>
    %cst_309 = arith.constant dense<0.000000e+00> : vector<8x32xf32>
    %789 = tpu.matmul %788, %787, %cst_309 {dimension_numbers = #tpu.dot_dimension_numbers<[1], [0], [0], [1], [0, 0, 1, 1], [], []>} : vector<8x32xbf16>, vector<32x32xbf16>, vector<8x32xf32> -> vector<8x32xf32>
    %790 = arith.addf %785, %789 : vector<8x32xf32>
    %791 = vector.extract_strided_slice %771 {offsets = [4, 0], sizes = [8, 32], strides = [1, 1]} : vector<12x32xf32> to vector<8x32xf32>
    %c608 = arith.constant 608 : index
    %c0_310 = arith.constant 0 : index
    %792 = vector.load %arg3[%c608, %c0_310] : memref<1120x128xbf16, #tpu.memory_space<vmem>>, vector<32x32xbf16>
    %793 = arith.truncf %791 : vector<8x32xf32> to vector<8x32xbf16>
    %cst_311 = arith.constant dense<0.000000e+00> : vector<8x32xf32>
    %794 = tpu.matmul %793, %792, %cst_311 {dimension_numbers = #tpu.dot_dimension_numbers<[1], [0], [0], [1], [0, 0, 1, 1], [], []>} : vector<8x32xbf16>, vector<32x32xbf16>, vector<8x32xf32> -> vector<8x32xf32>
    %795 = arith.addf %790, %794 : vector<8x32xf32>
    %c8 = arith.constant 8 : index
    %c0_312 = arith.constant 0 : index
    %796 = vector.load %arg4[%c8, %c0_312] : memref<16x128xf32, #tpu.memory_space<vmem>>, vector<1x32xf32>
    %797 = vector.broadcast %796 : vector<1x32xf32> to vector<8x32xf32>
    %798 = arith.addf %795, %797 : vector<8x32xf32>
    %799 = math.tanh %798 : vector<8x32xf32>
    %cst_313 = arith.constant 0.000000e+00 : f32
    %800 = vector.broadcast %cst_313 : f32 to vector<2x32xf32>
    %801 = tpu.concatenate %800, %799, %800 in 0 : vector<2x32xf32>, vector<8x32xf32>, vector<2x32xf32> -> vector<12x32xf32>
    %802 = vector.extract_strided_slice %801 {offsets = [0, 0], sizes = [8, 32], strides = [1, 1]} : vector<12x32xf32> to vector<8x32xf32>
    %c640 = arith.constant 640 : index
    %c0_314 = arith.constant 0 : index
    %803 = vector.load %arg3[%c640, %c0_314] : memref<1120x128xbf16, #tpu.memory_space<vmem>>, vector<32x32xbf16>
    %804 = arith.truncf %802 : vector<8x32xf32> to vector<8x32xbf16>
    %cst_315 = arith.constant dense<0.000000e+00> : vector<8x32xf32>
    %805 = tpu.matmul %804, %803, %cst_315 {dimension_numbers = #tpu.dot_dimension_numbers<[1], [0], [0], [1], [0, 0, 1, 1], [], []>} : vector<8x32xbf16>, vector<32x32xbf16>, vector<8x32xf32> -> vector<8x32xf32>
    %806 = vector.extract_strided_slice %801 {offsets = [1, 0], sizes = [8, 32], strides = [1, 1]} : vector<12x32xf32> to vector<8x32xf32>
    %c672 = arith.constant 672 : index
    %c0_316 = arith.constant 0 : index
    %807 = vector.load %arg3[%c672, %c0_316] : memref<1120x128xbf16, #tpu.memory_space<vmem>>, vector<32x32xbf16>
    %808 = arith.truncf %806 : vector<8x32xf32> to vector<8x32xbf16>
    %cst_317 = arith.constant dense<0.000000e+00> : vector<8x32xf32>
    %809 = tpu.matmul %808, %807, %cst_317 {dimension_numbers = #tpu.dot_dimension_numbers<[1], [0], [0], [1], [0, 0, 1, 1], [], []>} : vector<8x32xbf16>, vector<32x32xbf16>, vector<8x32xf32> -> vector<8x32xf32>
    %810 = arith.addf %805, %809 : vector<8x32xf32>
    %811 = vector.extract_strided_slice %801 {offsets = [2, 0], sizes = [8, 32], strides = [1, 1]} : vector<12x32xf32> to vector<8x32xf32>
    %c704 = arith.constant 704 : index
    %c0_318 = arith.constant 0 : index
    %812 = vector.load %arg3[%c704, %c0_318] : memref<1120x128xbf16, #tpu.memory_space<vmem>>, vector<32x32xbf16>
    %813 = arith.truncf %811 : vector<8x32xf32> to vector<8x32xbf16>
    %cst_319 = arith.constant dense<0.000000e+00> : vector<8x32xf32>
    %814 = tpu.matmul %813, %812, %cst_319 {dimension_numbers = #tpu.dot_dimension_numbers<[1], [0], [0], [1], [0, 0, 1, 1], [], []>} : vector<8x32xbf16>, vector<32x32xbf16>, vector<8x32xf32> -> vector<8x32xf32>
    %815 = arith.addf %810, %814 : vector<8x32xf32>
    %816 = vector.extract_strided_slice %801 {offsets = [3, 0], sizes = [8, 32], strides = [1, 1]} : vector<12x32xf32> to vector<8x32xf32>
    %c736 = arith.constant 736 : index
    %c0_320 = arith.constant 0 : index
    %817 = vector.load %arg3[%c736, %c0_320] : memref<1120x128xbf16, #tpu.memory_space<vmem>>, vector<32x32xbf16>
    %818 = arith.truncf %816 : vector<8x32xf32> to vector<8x32xbf16>
    %cst_321 = arith.constant dense<0.000000e+00> : vector<8x32xf32>
    %819 = tpu.matmul %818, %817, %cst_321 {dimension_numbers = #tpu.dot_dimension_numbers<[1], [0], [0], [1], [0, 0, 1, 1], [], []>} : vector<8x32xbf16>, vector<32x32xbf16>, vector<8x32xf32> -> vector<8x32xf32>
    %820 = arith.addf %815, %819 : vector<8x32xf32>
    %821 = vector.extract_strided_slice %801 {offsets = [4, 0], sizes = [8, 32], strides = [1, 1]} : vector<12x32xf32> to vector<8x32xf32>
    %c768 = arith.constant 768 : index
    %c0_322 = arith.constant 0 : index
    %822 = vector.load %arg3[%c768, %c0_322] : memref<1120x128xbf16, #tpu.memory_space<vmem>>, vector<32x32xbf16>
    %823 = arith.truncf %821 : vector<8x32xf32> to vector<8x32xbf16>
    %cst_323 = arith.constant dense<0.000000e+00> : vector<8x32xf32>
    %824 = tpu.matmul %823, %822, %cst_323 {dimension_numbers = #tpu.dot_dimension_numbers<[1], [0], [0], [1], [0, 0, 1, 1], [], []>} : vector<8x32xbf16>, vector<32x32xbf16>, vector<8x32xf32> -> vector<8x32xf32>
    %825 = arith.addf %820, %824 : vector<8x32xf32>
    %c9 = arith.constant 9 : index
    %c0_324 = arith.constant 0 : index
    %826 = vector.load %arg4[%c9, %c0_324] : memref<16x128xf32, #tpu.memory_space<vmem>>, vector<1x32xf32>
    %827 = vector.broadcast %826 : vector<1x32xf32> to vector<8x32xf32>
    %828 = arith.addf %825, %827 : vector<8x32xf32>
    %829 = math.tanh %828 : vector<8x32xf32>
    %cst_325 = arith.constant 0.000000e+00 : f32
    %830 = vector.broadcast %cst_325 : f32 to vector<2x32xf32>
    %831 = tpu.concatenate %830, %829, %830 in 0 : vector<2x32xf32>, vector<8x32xf32>, vector<2x32xf32> -> vector<12x32xf32>
    %832 = vector.extract_strided_slice %831 {offsets = [0, 0], sizes = [8, 32], strides = [1, 1]} : vector<12x32xf32> to vector<8x32xf32>
    %c800 = arith.constant 800 : index
    %c0_326 = arith.constant 0 : index
    %833 = vector.load %arg3[%c800, %c0_326] : memref<1120x128xbf16, #tpu.memory_space<vmem>>, vector<32x32xbf16>
    %834 = arith.truncf %832 : vector<8x32xf32> to vector<8x32xbf16>
    %cst_327 = arith.constant dense<0.000000e+00> : vector<8x32xf32>
    %835 = tpu.matmul %834, %833, %cst_327 {dimension_numbers = #tpu.dot_dimension_numbers<[1], [0], [0], [1], [0, 0, 1, 1], [], []>} : vector<8x32xbf16>, vector<32x32xbf16>, vector<8x32xf32> -> vector<8x32xf32>
    %836 = vector.extract_strided_slice %831 {offsets = [1, 0], sizes = [8, 32], strides = [1, 1]} : vector<12x32xf32> to vector<8x32xf32>
    %c832 = arith.constant 832 : index
    %c0_328 = arith.constant 0 : index
    %837 = vector.load %arg3[%c832, %c0_328] : memref<1120x128xbf16, #tpu.memory_space<vmem>>, vector<32x32xbf16>
    %838 = arith.truncf %836 : vector<8x32xf32> to vector<8x32xbf16>
    %cst_329 = arith.constant dense<0.000000e+00> : vector<8x32xf32>
    %839 = tpu.matmul %838, %837, %cst_329 {dimension_numbers = #tpu.dot_dimension_numbers<[1], [0], [0], [1], [0, 0, 1, 1], [], []>} : vector<8x32xbf16>, vector<32x32xbf16>, vector<8x32xf32> -> vector<8x32xf32>
    %840 = arith.addf %835, %839 : vector<8x32xf32>
    %841 = vector.extract_strided_slice %831 {offsets = [2, 0], sizes = [8, 32], strides = [1, 1]} : vector<12x32xf32> to vector<8x32xf32>
    %c864 = arith.constant 864 : index
    %c0_330 = arith.constant 0 : index
    %842 = vector.load %arg3[%c864, %c0_330] : memref<1120x128xbf16, #tpu.memory_space<vmem>>, vector<32x32xbf16>
    %843 = arith.truncf %841 : vector<8x32xf32> to vector<8x32xbf16>
    %cst_331 = arith.constant dense<0.000000e+00> : vector<8x32xf32>
    %844 = tpu.matmul %843, %842, %cst_331 {dimension_numbers = #tpu.dot_dimension_numbers<[1], [0], [0], [1], [0, 0, 1, 1], [], []>} : vector<8x32xbf16>, vector<32x32xbf16>, vector<8x32xf32> -> vector<8x32xf32>
    %845 = arith.addf %840, %844 : vector<8x32xf32>
    %846 = vector.extract_strided_slice %831 {offsets = [3, 0], sizes = [8, 32], strides = [1, 1]} : vector<12x32xf32> to vector<8x32xf32>
    %c896 = arith.constant 896 : index
    %c0_332 = arith.constant 0 : index
    %847 = vector.load %arg3[%c896, %c0_332] : memref<1120x128xbf16, #tpu.memory_space<vmem>>, vector<32x32xbf16>
    %848 = arith.truncf %846 : vector<8x32xf32> to vector<8x32xbf16>
    %cst_333 = arith.constant dense<0.000000e+00> : vector<8x32xf32>
    %849 = tpu.matmul %848, %847, %cst_333 {dimension_numbers = #tpu.dot_dimension_numbers<[1], [0], [0], [1], [0, 0, 1, 1], [], []>} : vector<8x32xbf16>, vector<32x32xbf16>, vector<8x32xf32> -> vector<8x32xf32>
    %850 = arith.addf %845, %849 : vector<8x32xf32>
    %851 = vector.extract_strided_slice %831 {offsets = [4, 0], sizes = [8, 32], strides = [1, 1]} : vector<12x32xf32> to vector<8x32xf32>
    %c928 = arith.constant 928 : index
    %c0_334 = arith.constant 0 : index
    %852 = vector.load %arg3[%c928, %c0_334] : memref<1120x128xbf16, #tpu.memory_space<vmem>>, vector<32x32xbf16>
    %853 = arith.truncf %851 : vector<8x32xf32> to vector<8x32xbf16>
    %cst_335 = arith.constant dense<0.000000e+00> : vector<8x32xf32>
    %854 = tpu.matmul %853, %852, %cst_335 {dimension_numbers = #tpu.dot_dimension_numbers<[1], [0], [0], [1], [0, 0, 1, 1], [], []>} : vector<8x32xbf16>, vector<32x32xbf16>, vector<8x32xf32> -> vector<8x32xf32>
    %855 = arith.addf %850, %854 : vector<8x32xf32>
    %c10 = arith.constant 10 : index
    %c0_336 = arith.constant 0 : index
    %856 = vector.load %arg4[%c10, %c0_336] : memref<16x128xf32, #tpu.memory_space<vmem>>, vector<1x32xf32>
    %857 = vector.broadcast %856 : vector<1x32xf32> to vector<8x32xf32>
    %858 = arith.addf %855, %857 : vector<8x32xf32>
    %859 = math.tanh %858 : vector<8x32xf32>
    %cst_337 = arith.constant 0.000000e+00 : f32
    %860 = vector.broadcast %cst_337 : f32 to vector<2x32xf32>
    %861 = tpu.concatenate %860, %859, %860 in 0 : vector<2x32xf32>, vector<8x32xf32>, vector<2x32xf32> -> vector<12x32xf32>
    %862 = vector.extract_strided_slice %861 {offsets = [0, 0], sizes = [8, 32], strides = [1, 1]} : vector<12x32xf32> to vector<8x32xf32>
    %c960 = arith.constant 960 : index
    %c0_338 = arith.constant 0 : index
    %863 = vector.load %arg3[%c960, %c0_338] : memref<1120x128xbf16, #tpu.memory_space<vmem>>, vector<32x16xbf16>
    %864 = arith.truncf %862 : vector<8x32xf32> to vector<8x32xbf16>
    %cst_339 = arith.constant dense<0.000000e+00> : vector<8x16xf32>
    %865 = tpu.matmul %864, %863, %cst_339 {dimension_numbers = #tpu.dot_dimension_numbers<[1], [0], [0], [1], [0, 0, 1, 1], [], []>} : vector<8x32xbf16>, vector<32x16xbf16>, vector<8x16xf32> -> vector<8x16xf32>
    %866 = vector.extract_strided_slice %861 {offsets = [1, 0], sizes = [8, 32], strides = [1, 1]} : vector<12x32xf32> to vector<8x32xf32>
    %c992 = arith.constant 992 : index
    %c0_340 = arith.constant 0 : index
    %867 = vector.load %arg3[%c992, %c0_340] : memref<1120x128xbf16, #tpu.memory_space<vmem>>, vector<32x16xbf16>
    %868 = arith.truncf %866 : vector<8x32xf32> to vector<8x32xbf16>
    %cst_341 = arith.constant dense<0.000000e+00> : vector<8x16xf32>
    %869 = tpu.matmul %868, %867, %cst_341 {dimension_numbers = #tpu.dot_dimension_numbers<[1], [0], [0], [1], [0, 0, 1, 1], [], []>} : vector<8x32xbf16>, vector<32x16xbf16>, vector<8x16xf32> -> vector<8x16xf32>
    %870 = arith.addf %865, %869 : vector<8x16xf32>
    %871 = vector.extract_strided_slice %861 {offsets = [2, 0], sizes = [8, 32], strides = [1, 1]} : vector<12x32xf32> to vector<8x32xf32>
    %c1024 = arith.constant 1024 : index
    %c0_342 = arith.constant 0 : index
    %872 = vector.load %arg3[%c1024, %c0_342] : memref<1120x128xbf16, #tpu.memory_space<vmem>>, vector<32x16xbf16>
    %873 = arith.truncf %871 : vector<8x32xf32> to vector<8x32xbf16>
    %cst_343 = arith.constant dense<0.000000e+00> : vector<8x16xf32>
    %874 = tpu.matmul %873, %872, %cst_343 {dimension_numbers = #tpu.dot_dimension_numbers<[1], [0], [0], [1], [0, 0, 1, 1], [], []>} : vector<8x32xbf16>, vector<32x16xbf16>, vector<8x16xf32> -> vector<8x16xf32>
    %875 = arith.addf %870, %874 : vector<8x16xf32>
    %876 = vector.extract_strided_slice %861 {offsets = [3, 0], sizes = [8, 32], strides = [1, 1]} : vector<12x32xf32> to vector<8x32xf32>
    %c1056 = arith.constant 1056 : index
    %c0_344 = arith.constant 0 : index
    %877 = vector.load %arg3[%c1056, %c0_344] : memref<1120x128xbf16, #tpu.memory_space<vmem>>, vector<32x16xbf16>
    %878 = arith.truncf %876 : vector<8x32xf32> to vector<8x32xbf16>
    %cst_345 = arith.constant dense<0.000000e+00> : vector<8x16xf32>
    %879 = tpu.matmul %878, %877, %cst_345 {dimension_numbers = #tpu.dot_dimension_numbers<[1], [0], [0], [1], [0, 0, 1, 1], [], []>} : vector<8x32xbf16>, vector<32x16xbf16>, vector<8x16xf32> -> vector<8x16xf32>
    %880 = arith.addf %875, %879 : vector<8x16xf32>
    %881 = vector.extract_strided_slice %861 {offsets = [4, 0], sizes = [8, 32], strides = [1, 1]} : vector<12x32xf32> to vector<8x32xf32>
    %c1088 = arith.constant 1088 : index
    %c0_346 = arith.constant 0 : index
    %882 = vector.load %arg3[%c1088, %c0_346] : memref<1120x128xbf16, #tpu.memory_space<vmem>>, vector<32x16xbf16>
    %883 = arith.truncf %881 : vector<8x32xf32> to vector<8x32xbf16>
    %cst_347 = arith.constant dense<0.000000e+00> : vector<8x16xf32>
    %884 = tpu.matmul %883, %882, %cst_347 {dimension_numbers = #tpu.dot_dimension_numbers<[1], [0], [0], [1], [0, 0, 1, 1], [], []>} : vector<8x32xbf16>, vector<32x16xbf16>, vector<8x16xf32> -> vector<8x16xf32>
    %885 = arith.addf %880, %884 : vector<8x16xf32>
    %c11 = arith.constant 11 : index
    %c0_348 = arith.constant 0 : index
    %886 = vector.load %arg4[%c11, %c0_348] : memref<16x128xf32, #tpu.memory_space<vmem>>, vector<1x16xf32>
    %887 = vector.broadcast %886 : vector<1x16xf32> to vector<8x16xf32>
    %888 = arith.addf %885, %887 : vector<8x16xf32>
    %889 = arith.addf %739, %888 : vector<8x16xf32>
    %890 = vector.shape_cast %889 : vector<8x16xf32> to vector<1x8x16xf32>
    %c0_349 = arith.constant 0 : index
    %c0_350 = arith.constant 0 : index
    %c64_351 = arith.constant 64 : index
    %891 = vector.load %arg6[%c0_349, %c0_350, %c64_351] : memref<1x8x128xf32, #tpu.memory_space<vmem>>, vector<1x8x16xf32>
    tpu.vector_store %arg6[%c0_349, %c0_350, %c64_351], %890 {strides = array<i32>} : memref<1x8x128xf32, #tpu.memory_space<vmem>>, vector<1x8x16xf32>,
    return
  }
  func.func @transform_0(%arg0: i32, %arg1: memref<2xi32, #tpu.memory_space<smem>>) -> (i32, i32, i32) {
    %c0_i32 = arith.constant 0 : i32
    %c0_i32_0 = arith.constant 0 : i32
    %c0_i32_1 = arith.constant 0 : i32
    return %arg0, %c0_i32, %c0_i32_0 : i32, i32, i32
  }
  func.func @transform_1(%arg0: i32, %arg1: memref<2xi32, #tpu.memory_space<smem>>) -> (i32, i32) {
    %c0_i32 = arith.constant 0 : i32
    %c0_i32_0 = arith.constant 0 : i32
    %c0_i32_1 = arith.constant 0 : i32
    return %c0_i32, %c0_i32_0 : i32, i32
  }
  func.func @transform_2(%arg0: i32, %arg1: memref<2xi32, #tpu.memory_space<smem>>) -> (i32, i32) {
    %c0_i32 = arith.constant 0 : i32
    %c0_i32_0 = arith.constant 0 : i32
    %c0_i32_1 = arith.constant 0 : i32
    return %c0_i32, %c0_i32_0 : i32, i32
  }
  func.func @transform_3(%arg0: i32, %arg1: memref<2xi32, #tpu.memory_space<smem>>) -> (i32, i32, i32) {
    %c0_i32 = arith.constant 0 : i32
    %c0_i32_0 = arith.constant 0 : i32
    %c0_i32_1 = arith.constant 0 : i32
    return %arg0, %c0_i32, %c0_i32_0 : i32, i32, i32
  }
  func.func @transform_4(%arg0: i32, %arg1: memref<2xi32, #tpu.memory_space<smem>>) -> (i32, i32, i32) {
    %c0_i32 = arith.constant 0 : i32
    %c0_i32_0 = arith.constant 0 : i32
    %c0_i32_1 = arith.constant 0 : i32
    return %arg0, %c0_i32, %c0_i32_0 : i32, i32, i32
  }
}

</mosaic_0001>

<llo_original>
// kernel: _forward_jit.1
$region0: #{_forward_jit.1}
  #allocation0 [shape = 'u32[]', space=smem, size = 0x4, offset = 0x4, fixed_abs, tag = 'smem constant byte address 0x4 - core index']
  #allocation1 [shape = 'u32[144,128]{1,0:T(1,128)}', space=vmem, size = 0x12000, scoped, tag = 'internal scratch']
  #allocation2 [shape = 's32[1]{0}', space=sflag, size = 0x4, scoped, tag = 'scoped memory for _forward_jit.1']
  #allocation3 [shape = 'u8[512]{0}', space=smem, size = 0x200, scoped, tag = 'prefetched SMEM operand 0']
  %s0 = inlined_call_operand.vmem [shape: s32[2], index: 0, kind: input, shape index: {}]
  %s1 = inlined_call_operand.vmem [shape: f32[2,8,32], index: 1, kind: input, shape index: {}]
  %s2 = inlined_call_operand.hbm [shape: bf16[1120,128], index: 2, kind: input, shape index: {}]
  %s3 = inlined_call_operand.vmem [shape: f32[16,128], index: 3, kind: input, shape index: {}]
  %s4 = inlined_call_operand.hbm [shape: f32[2,8,128], index: 4, kind: output, shape index: {0}]
  %s5 = inlined_call_operand.vmem [shape: f32[2,8,128], index: 5, kind: output, shape index: {1}]
  %6 = xla_tuple %s4, %s5
  %s7 = sld [smem:[#allocation0]]
  $region57: #{_forward_jit.1} parent=0
    _
  %s9 = ssub.s32 1, %s7
  %s10 = scalar_select 0, %s9, %s7
  %s11 = sshll.u32 %s0, 4
  %s12 = int_to_ptr.vmem [resolvable:$true] %s11
  %14 = dma.vmem_to_smem %s12, 16, [#allocation3], [#allocation2]
  %15 = dma.done [#allocation2], 16
  %16 = sfence
  $region1: #{_forward_jit.1} parent=0
    #allocation4 [shape = 'u8[286720]{0}', space=vmem, size = 0x46000, scoped, tag = 'input window, operand 2, single buffered']
    #allocation5 [shape = 's32[2]{0}', space=sflag, size = 0x8, scoped, tag = 'scoped memory for _forward_jit.1']
    #allocation6 [shape = 's32[2]{0}', space=sflag, size = 0x8, scoped, tag = 'scoped memory for _forward_jit.1']
    #allocation7 [shape = 'u8[8192]{0}', space=vmem, size = 0x2000, scoped, tag = 'output window, operand 0']
    %17 = vsyncpa [#allocation5], 0
    %18 = vsyncpa [#allocation6], 0
    %s19 = scalar_lea.sflag [#allocation6], 1
    %20 = vsyncpa %s19, 0
    loop: start=0, step=1, limit=4
    $region2: #{_forward_jit.1} parent=1 // loop_pre_header
      _
    $region3: #{_forward_jit.1} parent=1 // loop_header
      %s22 = sphi 0, %s26
      %p23 = scmp.ge.s32.totalorder %s22, 4
      %s32 = sphi 0, %s34
      %s35 = sphi 0, %s32
      %s36 = sphi 0, %s35
      %s52 = sphi 0, %s36
      %s56 = sphi 0, %s56
      %s58 = sphi 0, %s56
      %s59 = sphi 0, %s58
      %s73 = sphi 0, %s59
      %s77 = sphi 0, %s77
      %s79 = sphi 0, %s77
      %s80 = sphi 0, %s79
      %s94 = sphi 0, %s80
      %s100 = sphi 0, %s102
      %s103 = sphi 0, %s100
      %s104 = sphi 0, %s103
      %s120 = sphi 0, %s104
      %s126 = sphi 0, %s128
      %s129 = sphi 0, %s126
      %s130 = sphi 0, %s129
      %s146 = sphi 0, %s130
    $region4: #{_forward_jit.1} parent=1 // loop_header_branch
      %25 = sbr.rel (%p23) target = $region8
    $region5: #{_forward_jit.1} parent=1 // loop_body
      %s27 = ssub.s32 %s22, 1
      %s28 = ssub.s32 %s22, 2
      %s29 = sadd.s32 %s22, 1
      %s30 = ssub.s32 %s22, %s29
      %p31 = scmp.eq.s32.totalorder %s30, 0
      %s33 = sadd.s32 %s32, 1
      %s34 = scalar_select %p31, %s32, %s33
      %p37 = pneg %p31
      %p38 = scmp.eq.s32.totalorder %s22, 1
      %p39 = por %p37, %p38
      %p40 = scmp.ne.s32.totalorder %s32, %s35
      %p41 = scmp.eq.s32.totalorder %s22, 0
      %p42 = por %p40, %p41
      %p43 = scmp.ne.s32.totalorder %s32, %s35
      %p44 = scmp.eq.s32.totalorder %s27, 1
      %p45 = por %p43, %p44
      %p46 = scmp.ne.s32.totalorder %s35, %s36
      %p47 = scmp.eq.s32.totalorder %s27, 0
      %p48 = por %p46, %p47
      %p49 = scmp.ne.s32.totalorder %s35, %s36
      %p50 = scmp.eq.s32.totalorder %s28, 1
      %p51 = por %p49, %p50
      %p53 = scmp.ne.s32.totalorder %s36, %s52
      %p54 = scmp.eq.s32.totalorder %s28, 0
      %p55 = por %p53, %p54
      %s57 = sadd.s32 %s56, 1
      %p60 = scmp.eq.s32.totalorder %s22, 1
      %p61 = scmp.ne.s32.totalorder %s56, %s58
      %p62 = scmp.eq.s32.totalorder %s22, 0
      %p63 = por %p61, %p62
      %p64 = scmp.ne.s32.totalorder %s56, %s58
      %p65 = scmp.eq.s32.totalorder %s27, 1
      %p66 = por %p64, %p65
      %p67 = scmp.ne.s32.totalorder %s58, %s59
      %p68 = scmp.eq.s32.totalorder %s27, 0
      %p69 = por %p67, %p68
      %p70 = scmp.ne.s32.totalorder %s58, %s59
      %p71 = scmp.eq.s32.totalorder %s28, 1
      %p72 = por %p70, %p71
      %p74 = scmp.ne.s32.totalorder %s59, %s73
      %p75 = scmp.eq.s32.totalorder %s28, 0
      %p76 = por %p74, %p75
      %s78 = sadd.s32 %s77, 1
      %p81 = scmp.eq.s32.totalorder %s22, 1
      %p82 = scmp.ne.s32.totalorder %s77, %s79
      %p83 = scmp.eq.s32.totalorder %s22, 0
      %p84 = por %p82, %p83
      %p85 = scmp.ne.s32.totalorder %s77, %s79
      %p86 = scmp.eq.s32.totalorder %s27, 1
      %p87 = por %p85, %p86
      %p88 = scmp.ne.s32.totalorder %s79, %s80
      %p89 = scmp.eq.s32.totalorder %s27, 0
      %p90 = por %p88, %p89
      %p91 = scmp.ne.s32.totalorder %s79, %s80
      %p92 = scmp.eq.s32.totalorder %s28, 1
      %p93 = por %p91, %p92
      %p95 = scmp.ne.s32.totalorder %s80, %s94
      %p96 = scmp.eq.s32.totalorder %s28, 0
      %p97 = por %p95, %p96
      %s98 = ssub.s32 %s22, %s29
      %p99 = scmp.eq.s32.totalorder %s98, 0
      %s101 = sadd.s32 %s100, 1
      %s102 = scalar_select %p99, %s100, %s101
      %p105 = pneg %p99
      %p106 = scmp.eq.s32.totalorder %s22, 1
      %p107 = por %p105, %p106
      %p108 = scmp.ne.s32.totalorder %s100, %s103
      %p109 = scmp.eq.s32.totalorder %s22, 0
      %p110 = por %p108, %p109
      %p111 = scmp.ne.s32.totalorder %s100, %s103
      %p112 = scmp.eq.s32.totalorder %s27, 1
      %p113 = por %p111, %p112
      %p114 = scmp.ne.s32.totalorder %s103, %s104
      %p115 = scmp.eq.s32.totalorder %s27, 0
      %p116 = por %p114, %p115
      %p117 = scmp.ne.s32.totalorder %s103, %s104
      %p118 = scmp.eq.s32.totalorder %s28, 1
      %p119 = por %p117, %p118
      %p121 = scmp.ne.s32.totalorder %s104, %s120
      %p122 = scmp.eq.s32.totalorder %s28, 0
      %p123 = por %p121, %p122
      %s124 = ssub.s32 %s22, %s29
      %p125 = scmp.eq.s32.totalorder %s124, 0
      %s127 = sadd.s32 %s126, 1
      %s128 = scalar_select %p125, %s126, %s127
      %p131 = pneg %p125
      %p132 = scmp.eq.s32.totalorder %s22, 1
      %p133 = por %p131, %p132
      %p134 = scmp.ne.s32.totalorder %s126, %s129
      %p135 = scmp.eq.s32.totalorder %s22, 0
      %p136 = por %p134, %p135
      %p137 = scmp.ne.s32.totalorder %s126, %s129
      %p138 = scmp.eq.s32.totalorder %s27, 1
      %p139 = por %p137, %p138
      %p140 = scmp.ne.s32.totalorder %s129, %s130
      %p141 = scmp.eq.s32.totalorder %s27, 0
      %p142 = por %p140, %p141
      %p143 = scmp.ne.s32.totalorder %s129, %s130
      %p144 = scmp.eq.s32.totalorder %s28, 1
      %p145 = por %p143, %p144
      %p147 = scmp.ne.s32.totalorder %s130, %s146
      %p148 = scmp.eq.s32.totalorder %s28, 0
      %p149 = por %p147, %p148
      %p150 = scmp.le.s32.totalorder 1, %s22
      %p151 = scmp.lt.s32.totalorder %s22, 3
      %p152 = pnand %p150, %p151
      %p153 = pneg %p152
      // Predicated region
      $region9: #{_forward_jit.1} parent=5 // pred_check
        _
      $region10: #{_forward_jit.1} parent=5 // pred_check_branch
        %155 = sbr.rel (%p152) target = $region12
      $region11: #{_forward_jit.1} parent=5 // pred_region
        %s156 = ssub.s32 %s22, 1
        // Predicated region
        $region13: #{_forward_jit.1} parent=11 // pred_check
          %p157 = pneg %p69
        $region14: #{_forward_jit.1} parent=11 // pred_check_branch
          %159 = sbr.rel (%p157) target = $region16
        $region15: #{_forward_jit.1} parent=11 // pred_region
          %s161 = ssub.s32 8960, 8960
          %162 = vsyncadd [#allocation5], %s161
          %s163 = sshll.u32 [#allocation4], 4
          %s164 = int_to_ptr.vmem [resolvable:$true] %s163
          %169 = dma.hbm_to_vmem [thread:$0]  %s2, 8960, %s164, [#allocation5], 64, 64, 4
        $region16: #{_forward_jit.1} parent=11 // pred_fallthru
          _
        // Predicated region
        $region17: #{_forward_jit.1} parent=11 // pred_check
          %p170 = pneg %p90
        $region18: #{_forward_jit.1} parent=11 // pred_check_branch
          %172 = sbr.rel (%p170) target = $region20
        $region19: #{_forward_jit.1} parent=11 // pred_region
          _
        $region20: #{_forward_jit.1} parent=11 // pred_fallthru
          _
      $region12: #{_forward_jit.1} parent=5 // pred_fallthru
        _
      %p173 = scmp.lt.s32.totalorder %s22, 2
      // Predicated region
      $region21: #{_forward_jit.1} parent=5 // pred_check
        %p174 = pneg %p173
      $region22: #{_forward_jit.1} parent=5 // pred_check_branch
        %176 = sbr.rel (%p174) target = $region24
      $region23: #{_forward_jit.1} parent=5 // pred_region
        // Predicated region
        $region25: #{_forward_jit.1} parent=23 // pred_check
          %p177 = pneg %p42
        $region26: #{_forward_jit.1} parent=23 // pred_check_branch
          %179 = sbr.rel (%p177) target = $region28
        $region27: #{_forward_jit.1} parent=23 // pred_region
          %p180 = scmp.lt.s32.totalorder %s22, 1
          %s181 = scalar_select %p180, %s22, 1
          %s182 = smul.addr %s181, 8
          %s183 = scalar_lea.vmem %s1, %s182
        $region28: #{_forward_jit.1} parent=23 // pred_fallthru
          _
      $region24: #{_forward_jit.1} parent=5 // pred_fallthru
        _
      %p184 = scmp.le.s32.totalorder 1, %s22
      %p185 = scmp.lt.s32.totalorder %s22, 3
      %p186 = pnand %p184, %p185
      %p187 = pneg %p186
      // Predicated region
      $region29: #{_forward_jit.1} parent=5 // pred_check
        _
      $region30: #{_forward_jit.1} parent=5 // pred_check_branch
        %189 = sbr.rel (%p186) target = $region32
      $region31: #{_forward_jit.1} parent=5 // pred_region
        %s190 = ssub.s32 %s22, 1
        // Predicated region
        $region33: #{_forward_jit.1} parent=31 // pred_check
          %p191 = pneg %p69
        $region34: #{_forward_jit.1} parent=31 // pred_check_branch
          %193 = sbr.rel (%p191) target = $region36
        $region35: #{_forward_jit.1} parent=31 // pred_region
          %194 = dma.done [#allocation5], 8960
        $region36: #{_forward_jit.1} parent=31 // pred_fallthru
          _
        %p195 = scmp.lt.s32.totalorder %s27, 1
        %s196 = scalar_select %p195, %s27, 1
        %s197 = smul.addr %s196, 8
        %s198 = scalar_lea.vmem %s1, %s197
        %p199 = pneg %p48
        %p200 = pneg %p45
        %p201 = pneg %p69
        %p202 = pneg %p66
        %p203 = pneg %p90
        %p204 = pneg %p87
        %p205 = pneg %p116
        %p206 = pneg %p113
        %s207 = sand.u32 %s103, 1
        %s208 = scalar_lea.sflag [#allocation6], %s207
        %s209 = sand.u32 %s103, 1
        %s210 = smul.addr %s209, 8
        %s211 = scalar_lea.vmem [#allocation7], %s210
        %p212 = pneg %p142
        %p213 = pneg %p139
        %p214 = scmp.lt.s32.totalorder %s27, 1
        %s215 = scalar_select %p214, %s27, 1
        %s216 = smul.addr %s215, 8
        %s217 = scalar_lea.vmem %s5, %s216
        %p218 = scmp.lt.s32.totalorder %s27, 1
        %s219 = scalar_select %p218, %s27, 1
        %s220 = smul.addr %s219, 8
        %s221 = scalar_lea.vmem %s1, %s220
        %p222 = scmp.lt.s32.totalorder %s27, 1
        %s223 = scalar_select %p222, %s27, 1
        %s224 = smul.addr %s223, 8
        %s225 = scalar_lea.vmem %s5, %s224
        %227 = vst [vmem:[%s225] sm:$0xff] 0.0
        %v228 = vld [vmem:[%s221] sm:$0xff]
        %v229 = vld [vmem:[#allocation4] sm:$0xf]
        %v230 = vld [vmem:[#allocation4 + $0x4] sm:$0xf]
        %v231 = vld [vmem:[#allocation4 + $0x8] sm:$0xf]
        %v232 = vld [vmem:[#allocation4 + $0xc] sm:$0xf]
        %v233 = vpack.c.bf16 %v228, %v228
        %v234 = vld [vmem:[%s3] sm:$0x1]
        %v235 = vlaneseq
        %v236 = vshrl.u32 %v235, 7
        %v237 = vsub.s32 0, %v236
        %v238 = vrot.slane %v234, %v237
        %v243 = vunpack.c.l.b16 %v229
        %v244 = vunpack.c.l.b16 %v230
        %v245 = vunpack.c.l.b16 %v231
        %v246 = vunpack.c.l.b16 %v232
        %v247 = vpack.c.b16 %v244, %v243
        %v248 = vpack.c.b16 %v246, %v245
        %vm251 = vcmask 261120
        %v253 = vsel %vm251, %v233, 0
        %255 = vmatprep.subr.bf16.mxu0 0
        %256 = vmatpush1.bf16.msra.mxu0 %v247
        %257 = vmatprep.subr.bf16.mxu0 0
        %258 = vmatpush1.bf16.msra.mxu0 %v248
        %259 = vmatprep.subr.bf16.mxu0 0
        %260 = vmatpush1.bf16.msra.mxu0 0
        %261 = vmatprep.subr.bf16.mxu0 0
        %262 = vmatpush1.bf16.msra.mxu0 0
        %263 = vmatprep.subr.bf16.mxu0 0
        %264 = vmatpush1.bf16.msra.mxu0 0
        %265 = vmatprep.subr.bf16.mxu0 0
        %266 = vmatpush1.bf16.msra.mxu0 0
        %267 = vmatprep.subr.bf16.mxu0 0
        %268 = vmatpush1.bf16.msra.mxu0 0
        %269 = vmatprep.subr.bf16.mxu0 0
        %270 = vmatpush1.bf16.msra.mxu0 0
        %271 = vmatprep.subr.bf16.mxu0 0
        %272 = vmatpush1.bf16.msra.mxu0 0
        %273 = vmatprep.subr.bf16.mxu0 0
        %274 = vmatpush1.bf16.msra.mxu0 0
        %275 = vmatprep.subr.bf16.mxu0 0
        %276 = vmatpush1.bf16.msra.mxu0 0
        %277 = vmatprep.subr.bf16.mxu0 0
        %278 = vmatpush1.bf16.msra.mxu0 0
        %279 = vmatprep.subr.bf16.mxu0 0
        %280 = vmatpush1.bf16.msra.mxu0 0
        %281 = vmatprep.subr.bf16.mxu0 0
        %282 = vmatpush1.bf16.msra.mxu0 0
        %283 = vmatprep.subr.bf16.mxu0 0
        %284 = vmatpush1.bf16.msra.mxu0 0
        %285 = vmatprep.subr.bf16.mxu0 0
        %286 = vmatpush1.bf16.msra.mxu0 0
        %287 = vmatprep.mubr.bf16.mxu0 0
        %288 = vmatmul.mubr.bf16.gmra.mrb[0].mxu0 %v253
        %v289 = vpop.f32.mrb[0].mxu0
        %v290 = vadd.f32 %v238, %v289
        %v291 = vpop.f32.mrb[0].mxu0
        %v292 = vpop.f32.mrb[0].mxu0
        %v293 = vpop.f32.mrb[0].mxu0
        %294 = vdwg.mxu0
        %v295 = vtanh.pop %v290
        %v296 = vld [vmem:[#allocation4 + $0x10] sm:$0xf]
        %v297 = vld [vmem:[#allocation4 + $0x14] sm:$0xf]
        %v298 = vld [vmem:[#allocation4 + $0x18] sm:$0xf]
        %v299 = vld [vmem:[#allocation4 + $0x1c] sm:$0xf]
        %v300 = vpack.c.bf16 %v295, %v295
        %v305 = vunpack.c.l.b16 %v296
        %v306 = vunpack.c.l.b16 %v297
        %v307 = vunpack.c.l.b16 %v298
        %v308 = vunpack.c.l.b16 %v299
        %v309 = vpack.c.b16 %v306, %v305
        %v310 = vpack.c.b16 %v308, %v307
        %v314 = vsel %vm251, %v300, 0
        %316 = vmatprep.subr.bf16.mxu0 0
        %317 = vmatpush1.bf16.msra.mxu0 %v309
        %318 = vmatprep.subr.bf16.mxu0 0
        %319 = vmatpush1.bf16.msra.mxu0 %v310
        %320 = vmatprep.subr.bf16.mxu0 0
        %321 = vmatpush1.bf16.msra.mxu0 0
        %322 = vmatprep.subr.bf16.mxu0 0
        %323 = vmatpush1.bf16.msra.mxu0 0
        %324 = vmatprep.subr.bf16.mxu0 0
        %325 = vmatpush1.bf16.msra.mxu0 0
        %326 = vmatprep.subr.bf16.mxu0 0
        %327 = vmatpush1.bf16.msra.mxu0 0
        %328 = vmatprep.subr.bf16.mxu0 0
        %329 = vmatpush1.bf16.msra.mxu0 0
        %330 = vmatprep.subr.bf16.mxu0 0
        %331 = vmatpush1.bf16.msra.mxu0 0
        %332 = vmatprep.subr.bf16.mxu0 0
        %333 = vmatpush1.bf16.msra.mxu0 0
        %334 = vmatprep.subr.bf16.mxu0 0
        %335 = vmatpush1.bf16.msra.mxu0 0
        %336 = vmatprep.subr.bf16.mxu0 0
        %337 = vmatpush1.bf16.msra.mxu0 0
        %338 = vmatprep.subr.bf16.mxu0 0
        %339 = vmatpush1.bf16.msra.mxu0 0
        %340 = vmatprep.subr.bf16.mxu0 0
        %341 = vmatpush1.bf16.msra.mxu0 0
        %342 = vmatprep.subr.bf16.mxu0 0
        %343 = vmatpush1.bf16.msra.mxu0 0
        %344 = vmatprep.subr.bf16.mxu0 0
        %345 = vmatpush1.bf16.msra.mxu0 0
        %346 = vmatprep.subr.bf16.mxu0 0
        %347 = vmatpush1.bf16.msra.mxu0 0
        %348 = vmatprep.mubr.bf16.mxu0 0
        %349 = vmatmul.mubr.bf16.gmra.mrb[0].mxu0 %v314
        %v350 = vpop.f32.mrb[0].mxu0
        %v351 = vadd.f32 0.0, %v350
        %v352 = vpop.f32.mrb[0].mxu0
        %v353 = vpop.f32.mrb[0].mxu0
        %v354 = vpop.f32.mrb[0].mxu0
        %355 = vdwg.mxu0
        %v356 = vsel %vm251, %v295, 0.0
        %357 = vst [vmem:[%s211] sm:$0xff] %v356
        %s358 = sld [smem:[#allocation3 + %s27]]
        %v359 = vlaneseq
        %v360 = vshrl.u32 %v359, 7
        %v361 = vstv %s358
        %vm362 = vcmp.lt.s32.totalorder %v360, %v361
        %v363 = vld [vmem:[%s3 + $0x1] sm:$0x1]
        %v364 = vld [vmem:[%s3 + $0x2] sm:$0x1]
        %v365 = vld [vmem:[%s3 + $0x3] sm:$0x1]
        %v366 = vld [vmem:[%s3 + $0x4] sm:$0x1]
        %v367 = vld [vmem:[%s3 + $0x5] sm:$0x1]
        %v368 = vld [vmem:[%s3 + $0x6] sm:$0x1]
        %v369 = vld [vmem:[#allocation4 + $0x20] sm:$0xf]
        %v370 = vld [vmem:[#allocation4 + $0x24] sm:$0xf]
        %v373 = vunpack.c.l.b16 %v369
        %v374 = vunpack.c.l.b16 %v370
        %v375 = vpack.c.b16 %v374, %v373
        %vm377 = vcmask 130048
        %v379 = vsel %vm377, 0, 0
        %381 = vmatprep.subr.bf16.mxu0 0
        %382 = vmatpush1.bf16.msra.mxu0 %v375
        %383 = vmatprep.subr.bf16.mxu0 0
        %384 = vmatpush1.bf16.msra.mxu0 0
        %385 = vmatprep.subr.bf16.mxu0 0
        %386 = vmatpush1.bf16.msra.mxu0 0
        %387 = vmatprep.subr.bf16.mxu0 0
        %388 = vmatpush1.bf16.msra.mxu0 0
        %389 = vmatprep.subr.bf16.mxu0 0
        %390 = vmatpush1.bf16.msra.mxu0 0
        %391 = vmatprep.subr.bf16.mxu0 0
        %392 = vmatpush1.bf16.msra.mxu0 0
        %393 = vmatprep.subr.bf16.mxu0 0
        %394 = vmatpush1.bf16.msra.mxu0 0
        %395 = vmatprep.subr.bf16.mxu0 0
        %396 = vmatpush1.bf16.msra.mxu0 0
        %397 = vmatprep.subr.bf16.mxu0 0
        %398 = vmatpush1.bf16.msra.mxu0 0
        %399 = vmatprep.subr.bf16.mxu0 0
        %400 = vmatpush1.bf16.msra.mxu0 0
        %401 = vmatprep.subr.bf16.mxu0 0
        %402 = vmatpush1.bf16.msra.mxu0 0
        %403 = vmatprep.subr.bf16.mxu0 0
        %404 = vmatpush1.bf16.msra.mxu0 0
        %405 = vmatprep.subr.bf16.mxu0 0
        %406 = vmatpush1.bf16.msra.mxu0 0
        %407 = vmatprep.subr.bf16.mxu0 0
        %408 = vmatpush1.bf16.msra.mxu0 0
        %409 = vmatprep.subr.bf16.mxu0 0
        %410 = vmatpush1.bf16.msra.mxu0 0
        %411 = vmatprep.subr.bf16.mxu0 0
        %412 = vmatpush1.bf16.msra.mxu0 0
        %413 = vmatprep.mubr.bf16.mxu0 0
        %414 = vmatmul.mubr.bf16.gmra.mrb[0].mxu0 %v379
        %v415 = vpop.f32.mrb[0].mxu0
        %v416 = vadd.f32 %v363, %v415
        %v417 = vpop.f32.mrb[0].mxu0
        %v418 = vpop.f32.mrb[0].mxu0
        %v419 = vpop.f32.mrb[0].mxu0
        %420 = vdwg.mxu0
        %v421 = vmax.f32 %v416, 0.0
        %v422 = vld [vmem:[#allocation4 + $0x28] sm:$0xf]
        %v423 = vld [vmem:[#allocation4 + $0x2c] sm:$0xf]
        %v424 = vld [vmem:[#allocation4 + $0x30] sm:$0xf]
        %v425 = vld [vmem:[#allocation4 + $0x34] sm:$0xf]
        %v426 = vpack.c.bf16 %v421, %v421
        %v431 = vunpack.c.l.b16 %v422
        %v432 = vunpack.c.l.b16 %v423
        %v433 = vunpack.c.l.b16 %v424
        %v434 = vunpack.c.l.b16 %v425
        %v435 = vpack.c.b16 %v432, %v431
        %v436 = vpack.c.b16 %v434, %v433
        %v440 = vsel %vm251, %v426, 0
        %442 = vmatprep.subr.bf16.mxu0 0
        %443 = vmatpush1.bf16.msra.mxu0 %v435
        %444 = vmatprep.subr.bf16.mxu0 0
        %445 = vmatpush1.bf16.msra.mxu0 %v436
        %446 = vmatprep.subr.bf16.mxu0 0
        %447 = vmatpush1.bf16.msra.mxu0 0
        %448 = vmatprep.subr.bf16.mxu0 0
        %449 = vmatpush1.bf16.msra.mxu0 0
        %450 = vmatprep.subr.bf16.mxu0 0
        %451 = vmatpush1.bf16.msra.mxu0 0
        %452 = vmatprep.subr.bf16.mxu0 0
        %453 = vmatpush1.bf16.msra.mxu0 0
        %454 = vmatprep.subr.bf16.mxu0 0
        %455 = vmatpush1.bf16.msra.mxu0 0
        %456 = vmatprep.subr.bf16.mxu0 0
        %457 = vmatpush1.bf16.msra.mxu0 0
        %458 = vmatprep.subr.bf16.mxu0 0
        %459 = vmatpush1.bf16.msra.mxu0 0
        %460 = vmatprep.subr.bf16.mxu0 0
        %461 = vmatpush1.bf16.msra.mxu0 0
        %462 = vmatprep.subr.bf16.mxu0 0
        %463 = vmatpush1.bf16.msra.mxu0 0
        %464 = vmatprep.subr.bf16.mxu0 0
        %465 = vmatpush1.bf16.msra.mxu0 0
        %466 = vmatprep.subr.bf16.mxu0 0
        %467 = vmatpush1.bf16.msra.mxu0 0
        %468 = vmatprep.subr.bf16.mxu0 0
        %469 = vmatpush1.bf16.msra.mxu0 0
        %470 = vmatprep.subr.bf16.mxu0 0
        %471 = vmatpush1.bf16.msra.mxu0 0
        %472 = vmatprep.subr.bf16.mxu0 0
        %473 = vmatpush1.bf16.msra.mxu0 0
        %474 = vmatprep.mubr.bf16.mxu0 0
        %475 = vmatmul.mubr.bf16.gmra.mrb[0].mxu0 %v440
        %v476 = vpop.f32.mrb[0].mxu0
        %v477 = vadd.f32 %v364, %v476
        %v478 = vpop.f32.mrb[0].mxu0
        %v479 = vpop.f32.mrb[0].mxu0
        %v480 = vpop.f32.mrb[0].mxu0
        %481 = vdwg.mxu0
        %v482 = vmax.f32 %v477, 0.0
        %v483 = vsel %vm251, %v482, 0.0
        %vm484 = vcmask 523264
        %v485 = vsel %vm484, %v483, 0.0
        %v486 = vld [vmem:[#allocation4 + $0x48] sm:$0xf]
        %v487 = vld [vmem:[#allocation4 + $0x4c] sm:$0xf]
        %v488 = vld [vmem:[#allocation4 + $0x50] sm:$0xf]
        %v489 = vld [vmem:[#allocation4 + $0x54] sm:$0xf]
        %v490 = vld [vmem:[#allocation4 + $0x58] sm:$0xf]
        %v491 = vld [vmem:[#allocation4 + $0x5c] sm:$0xf]
        %v492 = vld [vmem:[#allocation4 + $0x60] sm:$0xf]
        %v493 = vld [vmem:[#allocation4 + $0x64] sm:$0xf]
        %v494 = vld [vmem:[#allocation4 + $0x68] sm:$0xf]
        %v495 = vld [vmem:[#allocation4 + $0x6c] sm:$0xf]
        %v496 = vld [vmem:[#allocation4 + $0x70] sm:$0xf]
        %v497 = vld [vmem:[#allocation4 + $0x74] sm:$0xf]
        %v498 = vpack.c.bf16 %v485, %v485
        %v511 = vunpack.c.l.b16 %v486
        %v512 = vunpack.c.l.b16 %v487
        %v513 = vunpack.c.l.b16 %v488
        %v514 = vunpack.c.l.b16 %v489
        %v515 = vunpack.c.l.b16 %v490
        %v516 = vunpack.c.l.b16 %v491
        %v517 = vunpack.c.l.b16 %v492
        %v518 = vunpack.c.l.b16 %v493
        %v519 = vunpack.c.l.b16 %v494
        %v520 = vunpack.c.l.b16 %v495
        %v521 = vunpack.c.l.b16 %v496
        %v522 = vunpack.c.l.b16 %v497
        %v523 = vpack.c.b16 %v512, %v511
        %v524 = vpack.c.b16 %v514, %v513
        %v525 = vpack.c.b16 %v516, %v515
        %v526 = vpack.c.b16 %v518, %v517
        %v527 = vpack.c.b16 %v520, %v519
        %v528 = vpack.c.b16 %v522, %v521
        %vm535 = vcmask 785408
        %v537 = vsel %vm535, %v498, 0
        %539 = vmatprep.subr.bf16.mxu0 0
        %540 = vmatpush1.bf16.msra.mxu0 %v523
        %541 = vmatprep.subr.bf16.mxu0 0
        %542 = vmatpush1.bf16.msra.mxu0 %v524
        %543 = vmatprep.subr.bf16.mxu0 0
        %544 = vmatpush1.bf16.msra.mxu0 %v525
        %545 = vmatprep.subr.bf16.mxu0 0
        %546 = vmatpush1.bf16.msra.mxu0 %v526
        %547 = vmatprep.subr.bf16.mxu0 0
        %548 = vmatpush1.bf16.msra.mxu0 %v527
        %549 = vmatprep.subr.bf16.mxu0 0
        %550 = vmatpush1.bf16.msra.mxu0 %v528
        %551 = vmatprep.subr.bf16.mxu0 0
        %552 = vmatpush1.bf16.msra.mxu0 0
        %553 = vmatprep.subr.bf16.mxu0 0
        %554 = vmatpush1.bf16.msra.mxu0 0
        %555 = vmatprep.subr.bf16.mxu0 0
        %556 = vmatpush1.bf16.msra.mxu0 0
        %557 = vmatprep.subr.bf16.mxu0 0
        %558 = vmatpush1.bf16.msra.mxu0 0
        %559 = vmatprep.subr.bf16.mxu0 0
        %560 = vmatpush1.bf16.msra.mxu0 0
        %561 = vmatprep.subr.bf16.mxu0 0
        %562 = vmatpush1.bf16.msra.mxu0 0
        %563 = vmatprep.subr.bf16.mxu0 0
        %564 = vmatpush1.bf16.msra.mxu0 0
        %565 = vmatprep.subr.bf16.mxu0 0
        %566 = vmatpush1.bf16.msra.mxu0 0
        %567 = vmatprep.subr.bf16.mxu0 0
        %568 = vmatpush1.bf16.msra.mxu0 0
        %569 = vmatprep.subr.bf16.mxu0 0
        %570 = vmatpush1.bf16.msra.mxu0 0
        %571 = vmatprep.mubr.bf16.mxu0 0
        %572 = vmatmul.mubr.bf16.gmra.mrb[0].mxu0 %v537
        %v573 = vpop.f32.mrb[0].mxu0
        %v574 = vadd.f32 %v365, %v573
        %v575 = vpop.f32.mrb[0].mxu0
        %v576 = vpop.f32.mrb[0].mxu0
        %v577 = vpop.f32.mrb[0].mxu0
        %578 = vdwg.mxu0
        %v579 = vxor.u32 %v574, 2147483648
        %v580 = vmul.f32 %v579, 1.442695
        %v581 = vpow.pop %v580
        %v582 = vadd.f32 %v581, 1.0
        %v583 = vrcp.pop %v582
        %v584 = vmul.f32 1.0, %v583
        %v585 = vtanh.pop %v574
        %v586 = vmul.f32 %v584, 0.0
        %588 = vrot.lane.b32.xlu0 %v585, 64
        %v589 = vpop.permute.xlu0 %588
        %v591 = vmul.f32 %v584, %v589
        %593 = vrot.lane.b32.xlu0 %v591, 32
        %v594 = vpop.permute.xlu0 %593
        %v596 = vadd.f32 %v586, %v594
        %v597 = vtanh.pop %v596
        %599 = vrot.lane.b32.xlu0 %v597, 64
        %v600 = vpop.permute.xlu0 %599
        %v602 = vmul.f32 %v584, %v600
        %v603 = vld [vmem:[#allocation4 + $0x38] sm:$0xf]
        %v604 = vld [vmem:[#allocation4 + $0x3c] sm:$0xf]
        %v605 = vld [vmem:[#allocation4 + $0x40] sm:$0xf]
        %v606 = vld [vmem:[#allocation4 + $0x44] sm:$0xf]
        %v607 = vpack.c.bf16 %v602, %v602
        %609 = vrot.lane.b32.xlu0 %v607, 32
        %v610 = vpop.permute.xlu0 %609
        %v615 = vunpack.c.l.b16 %v603
        %v616 = vunpack.c.l.b16 %v604
        %v617 = vunpack.c.l.b16 %v605
        %v618 = vunpack.c.l.b16 %v606
        %v619 = vpack.c.b16 %v616, %v615
        %v620 = vpack.c.b16 %v618, %v617
        %v624 = vsel %vm251, %v610, 0
        %626 = vmatprep.subr.bf16.mxu0 0
        %627 = vmatpush1.bf16.msra.mxu0 %v619
        %628 = vmatprep.subr.bf16.mxu0 0
        %629 = vmatpush1.bf16.msra.mxu0 %v620
        %630 = vmatprep.subr.bf16.mxu0 0
        %631 = vmatpush1.bf16.msra.mxu0 0
        %632 = vmatprep.subr.bf16.mxu0 0
        %633 = vmatpush1.bf16.msra.mxu0 0
        %634 = vmatprep.subr.bf16.mxu0 0
        %635 = vmatpush1.bf16.msra.mxu0 0
        %636 = vmatprep.subr.bf16.mxu0 0
        %637 = vmatpush1.bf16.msra.mxu0 0
        %638 = vmatprep.subr.bf16.mxu0 0
        %639 = vmatpush1.bf16.msra.mxu0 0
        %640 = vmatprep.subr.bf16.mxu0 0
        %641 = vmatpush1.bf16.msra.mxu0 0
        %642 = vmatprep.subr.bf16.mxu0 0
        %643 = vmatpush1.bf16.msra.mxu0 0
        %644 = vmatprep.subr.bf16.mxu0 0
        %645 = vmatpush1.bf16.msra.mxu0 0
        %646 = vmatprep.subr.bf16.mxu0 0
        %647 = vmatpush1.bf16.msra.mxu0 0
        %648 = vmatprep.subr.bf16.mxu0 0
        %649 = vmatpush1.bf16.msra.mxu0 0
        %650 = vmatprep.subr.bf16.mxu0 0
        %651 = vmatpush1.bf16.msra.mxu0 0
        %652 = vmatprep.subr.bf16.mxu0 0
        %653 = vmatpush1.bf16.msra.mxu0 0
        %654 = vmatprep.subr.bf16.mxu0 0
        %655 = vmatpush1.bf16.msra.mxu0 0
        %656 = vmatprep.subr.bf16.mxu0 0
        %657 = vmatpush1.bf16.msra.mxu0 0
        %658 = vmatprep.mubr.bf16.mxu0 0
        %659 = vmatmul.mubr.bf16.gmra.mrb[0].mxu0 %v624
        %v660 = vpop.f32.mrb[0].mxu0
        %v661 = vadd.f32 0.0, %v660
        %v662 = vpop.f32.mrb[0].mxu0
        %v663 = vpop.f32.mrb[0].mxu0
        %v664 = vpop.f32.mrb[0].mxu0
        %665 = vdwg.mxu0
        %v666 = vlaneseq
        %v667 = vshrl.u32 %v666, 7
        %v668 = vsub.s32 0, %v667
        %v669 = vrot.slane %v661, %v668
        %v670 = vadd.f32 %v351, %v669
        %v671 = vtanh.pop %v670
        %v672 = vlaneseq
        %v673 = vshrl.u32 %v672, 7
        %v674 = vsub.s32 0, %v673
        %v675 = vrot.slane %v368, %v674
        %v676 = vmul.f32 %v671, %v675
        %v677 = vsel %vm251, %v676, 0.0
        %678 = vadd.xlane.f32.xlu0 %v677
        %v679 = vpop.xlane.xlu0 %678
        %v680 = vsel %vm362, %v679, -1e+30
        %v681 = vrot.slane %v680, 4
        %v682 = vmax.f32 %v680, %v681
        %v683 = vrot.slane %v682, 2
        %v684 = vmax.f32 %v682, %v683
        %v685 = vrot.slane %v684, 1
        %v686 = vmax.f32 %v684, %v685
        %v687 = vsub.f32 %v680, %v686
        %v688 = vmul.f32 %v687, 1.442695
        %v689 = vpow.pop %v688
        %v690 = vrot.slane %v689, 4
        %v691 = vadd.f32 %v689, %v690
        %v692 = vrot.slane %v691, 2
        %v693 = vadd.f32 %v691, %v692
        %v694 = vrot.slane %v693, 1
        %v695 = vadd.f32 %v693, %v694
        %v696 = vrcp.pop %v695
        %v697 = vmul.f32 %v689, %v696
        %v698 = vmul.f32 %v697, %v295
        %v699 = vsel %vm251, %v698, 0.0
        %v700 = vrot.slane %v699, 4
        %v701 = vadd.f32 %v699, %v700
        %v702 = vrot.slane %v701, 2
        %v703 = vadd.f32 %v701, %v702
        %v704 = vrot.slane %v703, 1
        %v705 = vadd.f32 %v703, %v704
        %707 = vrot.lane.b32.xlu0 %v602, 32
        %v708 = vpop.permute.xlu0 %707
        %711 = vrot.lane.b32.xlu0 %v705, 32
        %v712 = vpop.permute.xlu0 %711
        %v714 = vsel %vm251, %v708, %v712
        %v715 = vsel %vm484, %v714, 0.0
        %v716 = vld [vmem:[#allocation4 + $0x78] sm:$0xf]
        %v717 = vld [vmem:[#allocation4 + $0x7c] sm:$0xf]
        %v718 = vld [vmem:[#allocation4 + $0x80] sm:$0xf]
        %v719 = vld [vmem:[#allocation4 + $0x84] sm:$0xf]
        %v720 = vld [vmem:[#allocation4 + $0x88] sm:$0xf]
        %v721 = vld [vmem:[#allocation4 + $0x8c] sm:$0xf]
        %v722 = vld [vmem:[#allocation4 + $0x90] sm:$0xf]
        %v723 = vld [vmem:[#allocation4 + $0x94] sm:$0xf]
        %v724 = vld [vmem:[#allocation4 + $0x98] sm:$0xf]
        %v725 = vld [vmem:[#allocation4 + $0x9c] sm:$0xf]
        %v726 = vld [vmem:[#allocation4 + $0xa0] sm:$0xf]
        %v727 = vld [vmem:[#allocation4 + $0xa4] sm:$0xf]
        %v728 = vpack.c.bf16 %v715, %v715
        %v741 = vunpack.c.l.b16 %v716
        %v742 = vunpack.c.l.b16 %v717
        %v743 = vunpack.c.l.b16 %v718
        %v744 = vunpack.c.l.b16 %v719
        %v745 = vunpack.c.l.b16 %v720
        %v746 = vunpack.c.l.b16 %v721
        %v747 = vunpack.c.l.b16 %v722
        %v748 = vunpack.c.l.b16 %v723
        %v749 = vunpack.c.l.b16 %v724
        %v750 = vunpack.c.l.b16 %v725
        %v751 = vunpack.c.l.b16 %v726
        %v752 = vunpack.c.l.b16 %v727
        %v753 = vpack.c.b16 %v742, %v741
        %v754 = vpack.c.b16 %v744, %v743
        %v755 = vpack.c.b16 %v746, %v745
        %v756 = vpack.c.b16 %v748, %v747
        %v757 = vpack.c.b16 %v750, %v749
        %v758 = vpack.c.b16 %v752, %v751
        %v766 = vsel %vm535, %v728, 0
        %768 = vmatprep.subr.bf16.mxu0 0
        %769 = vmatpush1.bf16.msra.mxu0 %v753
        %770 = vmatprep.subr.bf16.mxu0 0
        %771 = vmatpush1.bf16.msra.mxu0 %v754
        %772 = vmatprep.subr.bf16.mxu0 0
        %773 = vmatpush1.bf16.msra.mxu0 %v755
        %774 = vmatprep.subr.bf16.mxu0 0
        %775 = vmatpush1.bf16.msra.mxu0 %v756
        %776 = vmatprep.subr.bf16.mxu0 0
        %777 = vmatpush1.bf16.msra.mxu0 %v757
        %778 = vmatprep.subr.bf16.mxu0 0
        %779 = vmatpush1.bf16.msra.mxu0 %v758
        %780 = vmatprep.subr.bf16.mxu0 0
        %781 = vmatpush1.bf16.msra.mxu0 0
        %782 = vmatprep.subr.bf16.mxu0 0
        %783 = vmatpush1.bf16.msra.mxu0 0
        %784 = vmatprep.subr.bf16.mxu0 0
        %785 = vmatpush1.bf16.msra.mxu0 0
        %786 = vmatprep.subr.bf16.mxu0 0
        %787 = vmatpush1.bf16.msra.mxu0 0
        %788 = vmatprep.subr.bf16.mxu0 0
        %789 = vmatpush1.bf16.msra.mxu0 0
        %790 = vmatprep.subr.bf16.mxu0 0
        %791 = vmatpush1.bf16.msra.mxu0 0
        %792 = vmatprep.subr.bf16.mxu0 0
        %793 = vmatpush1.bf16.msra.mxu0 0
        %794 = vmatprep.subr.bf16.mxu0 0
        %795 = vmatpush1.bf16.msra.mxu0 0
        %796 = vmatprep.subr.bf16.mxu0 0
        %797 = vmatpush1.bf16.msra.mxu0 0
        %798 = vmatprep.subr.bf16.mxu0 0
        %799 = vmatpush1.bf16.msra.mxu0 0
        %800 = vmatprep.mubr.bf16.mxu0 0
        %801 = vmatmul.mubr.bf16.gmra.mrb[0].mxu0 %v766
        %v802 = vpop.f32.mrb[0].mxu0
        %v803 = vadd.f32 %v366, %v802
        %v804 = vpop.f32.mrb[0].mxu0
        %v805 = vpop.f32.mrb[0].mxu0
        %v806 = vpop.f32.mrb[0].mxu0
        %807 = vdwg.mxu0
        %v808 = vxor.u32 %v803, 2147483648
        %v809 = vmul.f32 %v808, 1.442695
        %v810 = vpow.pop %v809
        %v811 = vadd.f32 %v810, 1.0
        %v812 = vrcp.pop %v811
        %v813 = vmul.f32 1.0, %v812
        %v814 = vtanh.pop %v803
        %v815 = vmul.f32 %v813, 0.0
        %817 = vrot.lane.b32.xlu0 %v814, 64
        %v818 = vpop.permute.xlu0 %817
        %v820 = vmul.f32 %v813, %v818
        %822 = vrot.lane.b32.xlu0 %v820, 32
        %v823 = vpop.permute.xlu0 %822
        %v825 = vadd.f32 %v815, %v823
        %v826 = vtanh.pop %v825
        %828 = vrot.lane.b32.xlu0 %v826, 64
        %v829 = vpop.permute.xlu0 %828
        %v831 = vmul.f32 %v813, %v829
        %833 = vrot.lane.b32.xlu0 %v831, 32
        %v834 = vpop.permute.xlu0 %833
        %v836 = vsel %vm251, %v834, %v712
        %v837 = vld [vmem:[#allocation4 + $0xa8] sm:$0xf]
        %v838 = vld [vmem:[#allocation4 + $0xac] sm:$0xf]
        %v839 = vld [vmem:[#allocation4 + $0xb0] sm:$0xf]
        %v840 = vld [vmem:[#allocation4 + $0xb4] sm:$0xf]
        %v841 = vld [vmem:[#allocation4 + $0xb8] sm:$0xf]
        %v842 = vld [vmem:[#allocation4 + $0xbc] sm:$0xf]
        %v843 = vld [vmem:[#allocation4 + $0xc0] sm:$0xf]
        %v844 = vld [vmem:[#allocation4 + $0xc4] sm:$0xf]
        %v845 = vpack.c.bf16 %v836, %v836
        %v854 = vunpack.c.l.b16 %v837
        %v855 = vunpack.c.l.b16 %v838
        %v856 = vunpack.c.l.b16 %v839
        %v857 = vunpack.c.l.b16 %v840
        %v858 = vunpack.c.l.b16 %v841
        %v859 = vunpack.c.l.b16 %v842
        %v860 = vunpack.c.l.b16 %v843
        %v861 = vunpack.c.l.b16 %v844
        %v862 = vpack.c.b16 %v855, %v854
        %v863 = vpack.c.b16 %v857, %v856
        %v864 = vpack.c.b16 %v859, %v858
        %v865 = vpack.c.b16 %v861, %v860
        %v871 = vsel %vm484, %v845, 0
        %873 = vmatprep.subr.bf16.mxu0 0
        %874 = vmatpush1.bf16.msra.mxu0 %v862
        %875 = vmatprep.subr.bf16.mxu0 0
        %876 = vmatpush1.bf16.msra.mxu0 %v863
        %877 = vmatprep.subr.bf16.mxu0 0
        %878 = vmatpush1.bf16.msra.mxu0 %v864
        %879 = vmatprep.subr.bf16.mxu0 0
        %880 = vmatpush1.bf16.msra.mxu0 %v865
        %881 = vmatprep.subr.bf16.mxu0 0
        %882 = vmatpush1.bf16.msra.mxu0 0
        %883 = vmatprep.subr.bf16.mxu0 0
        %884 = vmatpush1.bf16.msra.mxu0 0
        %885 = vmatprep.subr.bf16.mxu0 0
        %886 = vmatpush1.bf16.msra.mxu0 0
        %887 = vmatprep.subr.bf16.mxu0 0
        %888 = vmatpush1.bf16.msra.mxu0 0
        %889 = vmatprep.subr.bf16.mxu0 0
        %890 = vmatpush1.bf16.msra.mxu0 0
        %891 = vmatprep.subr.bf16.mxu0 0
        %892 = vmatpush1.bf16.msra.mxu0 0
        %893 = vmatprep.subr.bf16.mxu0 0
        %894 = vmatpush1.bf16.msra.mxu0 0
        %895 = vmatprep.subr.bf16.mxu0 0
        %896 = vmatpush1.bf16.msra.mxu0 0
        %897 = vmatprep.subr.bf16.mxu0 0
        %898 = vmatpush1.bf16.msra.mxu0 0
        %899 = vmatprep.subr.bf16.mxu0 0
        %900 = vmatpush1.bf16.msra.mxu0 0
        %901 = vmatprep.subr.bf16.mxu0 0
        %902 = vmatpush1.bf16.msra.mxu0 0
        %903 = vmatprep.subr.bf16.mxu0 0
        %904 = vmatpush1.bf16.msra.mxu0 0
        %905 = vmatprep.mubr.bf16.mxu0 0
        %906 = vmatmul.mubr.bf16.gmra.mrb[0].mxu0 %v871
        %v907 = vpop.f32.mrb[0].mxu0
        %v908 = vadd.f32 %v367, %v907
        %v909 = vpop.f32.mrb[0].mxu0
        %v910 = vpop.f32.mrb[0].mxu0
        %v911 = vpop.f32.mrb[0].mxu0
        %912 = vdwg.mxu0
        %vm913 = vcmask 253952
        %914 = vst.msk [vmem:[%s225] sm:$0x1] %vm913, %v908
        %v916 = vlaneseq
        %v917 = vand.u32 %v916, 127
        %v918 = vadd.s32 %v917, 4294967264
        %v919 = vlaneseq
        %v920 = vshrl.u32 %v919, 7
        %v921 = vsub.s32 %v918, %v920
        %v922 = vrot.slane %v697, %v921
        %vm924 = vcmask 319744
        %925 = vst.msk [vmem:[%s225] sm:$0x1] %vm924, %v922
        %v926 = vld [vmem:[#allocation4 + $0x20] sm:$0xf]
        %v927 = vld [vmem:[#allocation4 + $0x24] sm:$0xf]
        %v928 = vpack.c.bf16 %v908, %v908
        %v931 = vunpack.c.l.b16 %v926
        %v932 = vunpack.c.l.b16 %v927
        %v933 = vpack.c.b16 %v932, %v931
        %v936 = vsel %vm377, %v928, 0
        %938 = vmatprep.subr.bf16.mxu0 0
        %939 = vmatpush1.bf16.msra.mxu0 %v933
        %940 = vmatprep.subr.bf16.mxu0 0
        %941 = vmatpush1.bf16.msra.mxu0 0
        %942 = vmatprep.subr.bf16.mxu0 0
        %943 = vmatpush1.bf16.msra.mxu0 0
        %944 = vmatprep.subr.bf16.mxu0 0
        %945 = vmatpush1.bf16.msra.mxu0 0
        %946 = vmatprep.subr.bf16.mxu0 0
        %947 = vmatpush1.bf16.msra.mxu0 0
        %948 = vmatprep.subr.bf16.mxu0 0
        %949 = vmatpush1.bf16.msra.mxu0 0
        %950 = vmatprep.subr.bf16.mxu0 0
        %951 = vmatpush1.bf16.msra.mxu0 0
        %952 = vmatprep.subr.bf16.mxu0 0
        %953 = vmatpush1.bf16.msra.mxu0 0
        %954 = vmatprep.subr.bf16.mxu0 0
        %955 = vmatpush1.bf16.msra.mxu0 0
        %956 = vmatprep.subr.bf16.mxu0 0
        %957 = vmatpush1.bf16.msra.mxu0 0
        %958 = vmatprep.subr.bf16.mxu0 0
        %959 = vmatpush1.bf16.msra.mxu0 0
        %960 = vmatprep.subr.bf16.mxu0 0
        %961 = vmatpush1.bf16.msra.mxu0 0
        %962 = vmatprep.subr.bf16.mxu0 0
        %963 = vmatpush1.bf16.msra.mxu0 0
        %964 = vmatprep.subr.bf16.mxu0 0
        %965 = vmatpush1.bf16.msra.mxu0 0
        %966 = vmatprep.subr.bf16.mxu0 0
        %967 = vmatpush1.bf16.msra.mxu0 0
        %968 = vmatprep.subr.bf16.mxu0 0
        %969 = vmatpush1.bf16.msra.mxu0 0
        %970 = vmatprep.mubr.bf16.mxu0 0
        %971 = vmatmul.mubr.bf16.gmra.mrb[0].mxu0 %v936
        %v972 = vpop.f32.mrb[0].mxu0
        %v973 = vadd.f32 %v363, %v972
        %v974 = vpop.f32.mrb[0].mxu0
        %v975 = vpop.f32.mrb[0].mxu0
        %v976 = vpop.f32.mrb[0].mxu0
        %977 = vdwg.mxu0
        %v978 = vmax.f32 %v973, 0.0
        %v979 = vld [vmem:[#allocation4 + $0x28] sm:$0xf]
        %v980 = vld [vmem:[#allocation4 + $0x2c] sm:$0xf]
        %v981 = vld [vmem:[#allocation4 + $0x30] sm:$0xf]
        %v982 = vld [vmem:[#allocation4 + $0x34] sm:$0xf]
        %v983 = vpack.c.bf16 %v978, %v978
        %v988 = vunpack.c.l.b16 %v979
        %v989 = vunpack.c.l.b16 %v980
        %v990 = vunpack.c.l.b16 %v981
        %v991 = vunpack.c.l.b16 %v982
        %v992 = vpack.c.b16 %v989, %v988
        %v993 = vpack.c.b16 %v991, %v990
        %v997 = vsel %vm251, %v983, 0
        %999 = vmatprep.subr.bf16.mxu0 0
        %1000 = vmatpush1.bf16.msra.mxu0 %v992
        %1001 = vmatprep.subr.bf16.mxu0 0
        %1002 = vmatpush1.bf16.msra.mxu0 %v993
        %1003 = vmatprep.subr.bf16.mxu0 0
        %1004 = vmatpush1.bf16.msra.mxu0 0
        %1005 = vmatprep.subr.bf16.mxu0 0
        %1006 = vmatpush1.bf16.msra.mxu0 0
        %1007 = vmatprep.subr.bf16.mxu0 0
        %1008 = vmatpush1.bf16.msra.mxu0 0
        %1009 = vmatprep.subr.bf16.mxu0 0
        %1010 = vmatpush1.bf16.msra.mxu0 0
        %1011 = vmatprep.subr.bf16.mxu0 0
        %1012 = vmatpush1.bf16.msra.mxu0 0
        %1013 = vmatprep.subr.bf16.mxu0 0
        %1014 = vmatpush1.bf16.msra.mxu0 0
        %1015 = vmatprep.subr.bf16.mxu0 0
        %1016 = vmatpush1.bf16.msra.mxu0 0
        %1017 = vmatprep.subr.bf16.mxu0 0
        %1018 = vmatpush1.bf16.msra.mxu0 0
        %1019 = vmatprep.subr.bf16.mxu0 0
        %1020 = vmatpush1.bf16.msra.mxu0 0
        %1021 = vmatprep.subr.bf16.mxu0 0
        %1022 = vmatpush1.bf16.msra.mxu0 0
        %1023 = vmatprep.subr.bf16.mxu0 0
        %1024 = vmatpush1.bf16.msra.mxu0 0
        %1025 = vmatprep.subr.bf16.mxu0 0
        %1026 = vmatpush1.bf16.msra.mxu0 0
        %1027 = vmatprep.subr.bf16.mxu0 0
        %1028 = vmatpush1.bf16.msra.mxu0 0
        %1029 = vmatprep.subr.bf16.mxu0 0
        %1030 = vmatpush1.bf16.msra.mxu0 0
        %1031 = vmatprep.mubr.bf16.mxu0 0
        %1032 = vmatmul.mubr.bf16.gmra.mrb[0].mxu0 %v997
        %v1033 = vpop.f32.mrb[0].mxu0
        %v1034 = vadd.f32 %v364, %v1033
        %v1035 = vpop.f32.mrb[0].mxu0
        %v1036 = vpop.f32.mrb[0].mxu0
        %v1037 = vpop.f32.mrb[0].mxu0
        %1038 = vdwg.mxu0
        %v1039 = vmax.f32 %v1034, 0.0
        %1040 = vrot.lane.b32.xlu0 %v602, 96
        %v1041 = vpop.permute.xlu0 %1040
        %v1043 = vsel %vm251, %v1039, %v712
        %v1044 = vsel %vm484, %v1043, %v1041
        %v1045 = vld [vmem:[#allocation4 + $0x48] sm:$0xf]
        %v1046 = vld [vmem:[#allocation4 + $0x4c] sm:$0xf]
        %v1047 = vld [vmem:[#allocation4 + $0x50] sm:$0xf]
        %v1048 = vld [vmem:[#allocation4 + $0x54] sm:$0xf]
        %v1049 = vld [vmem:[#allocation4 + $0x58] sm:$0xf]
        %v1050 = vld [vmem:[#allocation4 + $0x5c] sm:$0xf]
        %v1051 = vld [vmem:[#allocation4 + $0x60] sm:$0xf]
        %v1052 = vld [vmem:[#allocation4 + $0x64] sm:$0xf]
        %v1053 = vld [vmem:[#allocation4 + $0x68] sm:$0xf]
        %v1054 = vld [vmem:[#allocation4 + $0x6c] sm:$0xf]
        %v1055 = vld [vmem:[#allocation4 + $0x70] sm:$0xf]
        %v1056 = vld [vmem:[#allocation4 + $0x74] sm:$0xf]
        %v1057 = vpack.c.bf16 %v1044, %v1044
        %v1070 = vunpack.c.l.b16 %v1045
        %v1071 = vunpack.c.l.b16 %v1046
        %v1072 = vunpack.c.l.b16 %v1047
        %v1073 = vunpack.c.l.b16 %v1048
        %v1074 = vunpack.c.l.b16 %v1049
        %v1075 = vunpack.c.l.b16 %v1050
        %v1076 = vunpack.c.l.b16 %v1051
        %v1077 = vunpack.c.l.b16 %v1052
        %v1078 = vunpack.c.l.b16 %v1053
        %v1079 = vunpack.c.l.b16 %v1054
        %v1080 = vunpack.c.l.b16 %v1055
        %v1081 = vunpack.c.l.b16 %v1056
        %v1082 = vpack.c.b16 %v1071, %v1070
        %v1083 = vpack.c.b16 %v1073, %v1072
        %v1084 = vpack.c.b16 %v1075, %v1074
        %v1085 = vpack.c.b16 %v1077, %v1076
        %v1086 = vpack.c.b16 %v1079, %v1078
        %v1087 = vpack.c.b16 %v1081, %v1080
        %v1095 = vsel %vm535, %v1057, 0
        %1097 = vmatprep.subr.bf16.mxu0 0
        %1098 = vmatpush1.bf16.msra.mxu0 %v1082
        %1099 = vmatprep.subr.bf16.mxu0 0
        %1100 = vmatpush1.bf16.msra.mxu0 %v1083
        %1101 = vmatprep.subr.bf16.mxu0 0
        %1102 = vmatpush1.bf16.msra.mxu0 %v1084
        %1103 = vmatprep.subr.bf16.mxu0 0
        %1104 = vmatpush1.bf16.msra.mxu0 %v1085
        %1105 = vmatprep.subr.bf16.mxu0 0
        %1106 = vmatpush1.bf16.msra.mxu0 %v1086
        %1107 = vmatprep.subr.bf16.mxu0 0
        %1108 = vmatpush1.bf16.msra.mxu0 %v1087
        %1109 = vmatprep.subr.bf16.mxu0 0
        %1110 = vmatpush1.bf16.msra.mxu0 0
        %1111 = vmatprep.subr.bf16.mxu0 0
        %1112 = vmatpush1.bf16.msra.mxu0 0
        %1113 = vmatprep.subr.bf16.mxu0 0
        %1114 = vmatpush1.bf16.msra.mxu0 0
        %1115 = vmatprep.subr.bf16.mxu0 0
        %1116 = vmatpush1.bf16.msra.mxu0 0
        %1117 = vmatprep.subr.bf16.mxu0 0
        %1118 = vmatpush1.bf16.msra.mxu0 0
        %1119 = vmatprep.subr.bf16.mxu0 0
        %1120 = vmatpush1.bf16.msra.mxu0 0
        %1121 = vmatprep.subr.bf16.mxu0 0
        %1122 = vmatpush1.bf16.msra.mxu0 0
        %1123 = vmatprep.subr.bf16.mxu0 0
        %1124 = vmatpush1.bf16.msra.mxu0 0
        %1125 = vmatprep.subr.bf16.mxu0 0
        %1126 = vmatpush1.bf16.msra.mxu0 0
        %1127 = vmatprep.subr.bf16.mxu0 0
        %1128 = vmatpush1.bf16.msra.mxu0 0
        %1129 = vmatprep.mubr.bf16.mxu0 0
        %1130 = vmatmul.mubr.bf16.gmra.mrb[0].mxu0 %v1095
        %v1131 = vpop.f32.mrb[0].mxu0
        %v1132 = vadd.f32 %v365, %v1131
        %v1133 = vpop.f32.mrb[0].mxu0
        %v1134 = vpop.f32.mrb[0].mxu0
        %v1135 = vpop.f32.mrb[0].mxu0
        %1136 = vdwg.mxu0
        %v1137 = vxor.u32 %v1132, 2147483648
        %v1138 = vmul.f32 %v1137, 1.442695
        %v1139 = vpow.pop %v1138
        %v1140 = vadd.f32 %v1139, 1.0
        %v1141 = vrcp.pop %v1140
        %v1142 = vmul.f32 1.0, %v1141
        %v1143 = vtanh.pop %v1132
        %v1144 = vmul.f32 %v1142, %v596
        %1146 = vrot.lane.b32.xlu0 %v1143, 64
        %v1147 = vpop.permute.xlu0 %1146
        %v1149 = vmul.f32 %v1142, %v1147
        %1151 = vrot.lane.b32.xlu0 %v1149, 32
        %v1152 = vpop.permute.xlu0 %1151
        %v1154 = vadd.f32 %v1144, %v1152
        %v1155 = vtanh.pop %v1154
        %1157 = vrot.lane.b32.xlu0 %v1155, 64
        %v1158 = vpop.permute.xlu0 %1157
        %v1160 = vmul.f32 %v1142, %v1158
        %v1161 = vld [vmem:[#allocation4 + $0x38] sm:$0xf]
        %v1162 = vld [vmem:[#allocation4 + $0x3c] sm:$0xf]
        %v1163 = vld [vmem:[#allocation4 + $0x40] sm:$0xf]
        %v1164 = vld [vmem:[#allocation4 + $0x44] sm:$0xf]
        %v1165 = vpack.c.bf16 %v1160, %v1160
        %1167 = vrot.lane.b32.xlu0 %v1165, 32
        %v1168 = vpop.permute.xlu0 %1167
        %v1173 = vunpack.c.l.b16 %v1161
        %v1174 = vunpack.c.l.b16 %v1162
        %v1175 = vunpack.c.l.b16 %v1163
        %v1176 = vunpack.c.l.b16 %v1164
        %v1177 = vpack.c.b16 %v1174, %v1173
        %v1178 = vpack.c.b16 %v1176, %v1175
        %v1182 = vsel %vm251, %v1168, 0
        %1184 = vmatprep.subr.bf16.mxu0 0
        %1185 = vmatpush1.bf16.msra.mxu0 %v1177
        %1186 = vmatprep.subr.bf16.mxu0 0
        %1187 = vmatpush1.bf16.msra.mxu0 %v1178
        %1188 = vmatprep.subr.bf16.mxu0 0
        %1189 = vmatpush1.bf16.msra.mxu0 0
        %1190 = vmatprep.subr.bf16.mxu0 0
        %1191 = vmatpush1.bf16.msra.mxu0 0
        %1192 = vmatprep.subr.bf16.mxu0 0
        %1193 = vmatpush1.bf16.msra.mxu0 0
        %1194 = vmatprep.subr.bf16.mxu0 0
        %1195 = vmatpush1.bf16.msra.mxu0 0
        %1196 = vmatprep.subr.bf16.mxu0 0
        %1197 = vmatpush1.bf16.msra.mxu0 0
        %1198 = vmatprep.subr.bf16.mxu0 0
        %1199 = vmatpush1.bf16.msra.mxu0 0
        %1200 = vmatprep.subr.bf16.mxu0 0
        %1201 = vmatpush1.bf16.msra.mxu0 0
        %1202 = vmatprep.subr.bf16.mxu0 0
        %1203 = vmatpush1.bf16.msra.mxu0 0
        %1204 = vmatprep.subr.bf16.mxu0 0
        %1205 = vmatpush1.bf16.msra.mxu0 0
        %1206 = vmatprep.subr.bf16.mxu0 0
        %1207 = vmatpush1.bf16.msra.mxu0 0
        %1208 = vmatprep.subr.bf16.mxu0 0
        %1209 = vmatpush1.bf16.msra.mxu0 0
        %1210 = vmatprep.subr.bf16.mxu0 0
        %1211 = vmatpush1.bf16.msra.mxu0 0
        %1212 = vmatprep.subr.bf16.mxu0 0
        %1213 = vmatpush1.bf16.msra.mxu0 0
        %1214 = vmatprep.subr.bf16.mxu0 0
        %1215 = vmatpush1.bf16.msra.mxu0 0
        %1216 = vmatprep.mubr.bf16.mxu0 0
        %1217 = vmatmul.mubr.bf16.gmra.mrb[0].mxu0 %v1182
        %v1218 = vpop.f32.mrb[0].mxu0
        %v1219 = vadd.f32 0.0, %v1218
        %v1220 = vpop.f32.mrb[0].mxu0
        %v1221 = vpop.f32.mrb[0].mxu0
        %v1222 = vpop.f32.mrb[0].mxu0
        %1223 = vdwg.mxu0
        %v1224 = vlaneseq
        %v1225 = vshrl.u32 %v1224, 7
        %v1226 = vsub.s32 0, %v1225
        %v1227 = vrot.slane %v1219, %v1226
        %v1228 = vadd.f32 %v351, %v1227
        %v1229 = vtanh.pop %v1228
        %v1230 = vmul.f32 %v1229, %v675
        %v1231 = vsel %vm251, %v1230, 0.0
        %1232 = vadd.xlane.f32.xlu0 %v1231
        %v1233 = vpop.xlane.xlu0 %1232
        %v1234 = vsel %vm362, %v1233, -1e+30
        %v1235 = vrot.slane %v1234, 4
        %v1236 = vmax.f32 %v1234, %v1235
        %v1237 = vrot.slane %v1236, 2
        %v1238 = vmax.f32 %v1236, %v1237
        %v1239 = vrot.slane %v1238, 1
        %v1240 = vmax.f32 %v1238, %v1239
        %v1241 = vsub.f32 %v1234, %v1240
        %v1242 = vmul.f32 %v1241, 1.442695
        %v1243 = vpow.pop %v1242
        %v1244 = vrot.slane %v1243, 4
        %v1245 = vadd.f32 %v1243, %v1244
        %v1246 = vrot.slane %v1245, 2
        %v1247 = vadd.f32 %v1245, %v1246
        %v1248 = vrot.slane %v1247, 1
        %v1249 = vadd.f32 %v1247, %v1248
        %v1250 = vrcp.pop %v1249
        %v1251 = vmul.f32 %v1243, %v1250
        %v1252 = vmul.f32 %v1251, %v295
        %v1253 = vsel %vm251, %v1252, 0.0
        %v1254 = vrot.slane %v1253, 4
        %v1255 = vadd.f32 %v1253, %v1254
        %v1256 = vrot.slane %v1255, 2
        %v1257 = vadd.f32 %v1255, %v1256
        %v1258 = vrot.slane %v1257, 1
        %v1259 = vadd.f32 %v1257, %v1258
        %1261 = vrot.lane.b32.xlu0 %v1160, 32
        %v1262 = vpop.permute.xlu0 %1261
        %1265 = vrot.lane.b32.xlu0 %v1259, 32
        %v1266 = vpop.permute.xlu0 %1265
        %1268 = vrot.lane.b32.xlu0 %v831, 96
        %v1269 = vpop.permute.xlu0 %1268
        %v1271 = vsel %vm251, %v1262, %v1266
        %v1272 = vsel %vm484, %v1271, %v1269
        %v1273 = vld [vmem:[#allocation4 + $0x78] sm:$0xf]
        %v1274 = vld [vmem:[#allocation4 + $0x7c] sm:$0xf]
        %v1275 = vld [vmem:[#allocation4 + $0x80] sm:$0xf]
        %v1276 = vld [vmem:[#allocation4 + $0x84] sm:$0xf]
        %v1277 = vld [vmem:[#allocation4 + $0x88] sm:$0xf]
        %v1278 = vld [vmem:[#allocation4 + $0x8c] sm:$0xf]
        %v1279 = vld [vmem:[#allocation4 + $0x90] sm:$0xf]
        %v1280 = vld [vmem:[#allocation4 + $0x94] sm:$0xf]
        %v1281 = vld [vmem:[#allocation4 + $0x98] sm:$0xf]
        %v1282 = vld [vmem:[#allocation4 + $0x9c] sm:$0xf]
        %v1283 = vld [vmem:[#allocation4 + $0xa0] sm:$0xf]
        %v1284 = vld [vmem:[#allocation4 + $0xa4] sm:$0xf]
        %v1285 = vpack.c.bf16 %v1272, %v1272
        %v1298 = vunpack.c.l.b16 %v1273
        %v1299 = vunpack.c.l.b16 %v1274
        %v1300 = vunpack.c.l.b16 %v1275
        %v1301 = vunpack.c.l.b16 %v1276
        %v1302 = vunpack.c.l.b16 %v1277
        %v1303 = vunpack.c.l.b16 %v1278
        %v1304 = vunpack.c.l.b16 %v1279
        %v1305 = vunpack.c.l.b16 %v1280
        %v1306 = vunpack.c.l.b16 %v1281
        %v1307 = vunpack.c.l.b16 %v1282
        %v1308 = vunpack.c.l.b16 %v1283
        %v1309 = vunpack.c.l.b16 %v1284
        %v1310 = vpack.c.b16 %v1299, %v1298
        %v1311 = vpack.c.b16 %v1301, %v1300
        %v1312 = vpack.c.b16 %v1303, %v1302
        %v1313 = vpack.c.b16 %v1305, %v1304
        %v1314 = vpack.c.b16 %v1307, %v1306
        %v1315 = vpack.c.b16 %v1309, %v1308
        %v1323 = vsel %vm535, %v1285, 0
        %1325 = vmatprep.subr.bf16.mxu0 0
        %1326 = vmatpush1.bf16.msra.mxu0 %v1310
        %1327 = vmatprep.subr.bf16.mxu0 0
        %1328 = vmatpush1.bf16.msra.mxu0 %v1311
        %1329 = vmatprep.subr.bf16.mxu0 0
        %1330 = vmatpush1.bf16.msra.mxu0 %v1312
        %1331 = vmatprep.subr.bf16.mxu0 0
        %1332 = vmatpush1.bf16.msra.mxu0 %v1313
        %1333 = vmatprep.subr.bf16.mxu0 0
        %1334 = vmatpush1.bf16.msra.mxu0 %v1314
        %1335 = vmatprep.subr.bf16.mxu0 0
        %1336 = vmatpush1.bf16.msra.mxu0 %v1315
        %1337 = vmatprep.subr.bf16.mxu0 0
        %1338 = vmatpush1.bf16.msra.mxu0 0
        %1339 = vmatprep.subr.bf16.mxu0 0
        %1340 = vmatpush1.bf16.msra.mxu0 0
        %1341 = vmatprep.subr.bf16.mxu0 0
        %1342 = vmatpush1.bf16.msra.mxu0 0
        %1343 = vmatprep.subr.bf16.mxu0 0
        %1344 = vmatpush1.bf16.msra.mxu0 0
        %1345 = vmatprep.subr.bf16.mxu0 0
        %1346 = vmatpush1.bf16.msra.mxu0 0
        %1347 = vmatprep.subr.bf16.mxu0 0
        %1348 = vmatpush1.bf16.msra.mxu0 0
        %1349 = vmatprep.subr.bf16.mxu0 0
        %1350 = vmatpush1.bf16.msra.mxu0 0
        %1351 = vmatprep.subr.bf16.mxu0 0
        %1352 = vmatpush1.bf16.msra.mxu0 0
        %1353 = vmatprep.subr.bf16.mxu0 0
        %1354 = vmatpush1.bf16.msra.mxu0 0
        %1355 = vmatprep.subr.bf16.mxu0 0
        %1356 = vmatpush1.bf16.msra.mxu0 0
        %1357 = vmatprep.mubr.bf16.mxu0 0
        %1358 = vmatmul.mubr.bf16.gmra.mrb[0].mxu0 %v1323
        %v1359 = vpop.f32.mrb[0].mxu0
        %v1360 = vadd.f32 %v366, %v1359
        %v1361 = vpop.f32.mrb[0].mxu0
        %v1362 = vpop.f32.mrb[0].mxu0
        %v1363 = vpop.f32.mrb[0].mxu0
        %1364 = vdwg.mxu0
        %v1365 = vxor.u32 %v1360, 2147483648
        %v1366 = vmul.f32 %v1365, 1.442695
        %v1367 = vpow.pop %v1366
        %v1368 = vadd.f32 %v1367, 1.0
        %v1369 = vrcp.pop %v1368
        %v1370 = vmul.f32 1.0, %v1369
        %v1371 = vtanh.pop %v1360
        %v1372 = vmul.f32 %v1370, %v825
        %1374 = vrot.lane.b32.xlu0 %v1371, 64
        %v1375 = vpop.permute.xlu0 %1374
        %v1377 = vmul.f32 %v1370, %v1375
        %1379 = vrot.lane.b32.xlu0 %v1377, 32
        %v1380 = vpop.permute.xlu0 %1379
        %v1382 = vadd.f32 %v1372, %v1380
        %v1383 = vtanh.pop %v1382
        %1385 = vrot.lane.b32.xlu0 %v1383, 64
        %v1386 = vpop.permute.xlu0 %1385
        %v1388 = vmul.f32 %v1370, %v1386
        %1390 = vrot.lane.b32.xlu0 %v1388, 32
        %v1391 = vpop.permute.xlu0 %1390
        %v1393 = vsel %vm251, %v1391, %v1266
        %v1394 = vld [vmem:[#allocation4 + $0xa8] sm:$0xf]
        %v1395 = vld [vmem:[#allocation4 + $0xac] sm:$0xf]
        %v1396 = vld [vmem:[#allocation4 + $0xb0] sm:$0xf]
        %v1397 = vld [vmem:[#allocation4 + $0xb4] sm:$0xf]
        %v1398 = vld [vmem:[#allocation4 + $0xb8] sm:$0xf]
        %v1399 = vld [vmem:[#allocation4 + $0xbc] sm:$0xf]
        %v1400 = vld [vmem:[#allocation4 + $0xc0] sm:$0xf]
        %v1401 = vld [vmem:[#allocation4 + $0xc4] sm:$0xf]
        %v1402 = vpack.c.bf16 %v1393, %v1393
        %v1411 = vunpack.c.l.b16 %v1394
        %v1412 = vunpack.c.l.b16 %v1395
        %v1413 = vunpack.c.l.b16 %v1396
        %v1414 = vunpack.c.l.b16 %v1397
        %v1415 = vunpack.c.l.b16 %v1398
        %v1416 = vunpack.c.l.b16 %v1399
        %v1417 = vunpack.c.l.b16 %v1400
        %v1418 = vunpack.c.l.b16 %v1401
        %v1419 = vpack.c.b16 %v1412, %v1411
        %v1420 = vpack.c.b16 %v1414, %v1413
        %v1421 = vpack.c.b16 %v1416, %v1415
        %v1422 = vpack.c.b16 %v1418, %v1417
        %v1428 = vsel %vm484, %v1402, 0
        %1430 = vmatprep.subr.bf16.mxu0 0
        %1431 = vmatpush1.bf16.msra.mxu0 %v1419
        %1432 = vmatprep.subr.bf16.mxu0 0
        %1433 = vmatpush1.bf16.msra.mxu0 %v1420
        %1434 = vmatprep.subr.bf16.mxu0 0
        %1435 = vmatpush1.bf16.msra.mxu0 %v1421
        %1436 = vmatprep.subr.bf16.mxu0 0
        %1437 = vmatpush1.bf16.msra.mxu0 %v1422
        %1438 = vmatprep.subr.bf16.mxu0 0
        %1439 = vmatpush1.bf16.msra.mxu0 0
        %1440 = vmatprep.subr.bf16.mxu0 0
        %1441 = vmatpush1.bf16.msra.mxu0 0
        %1442 = vmatprep.subr.bf16.mxu0 0
        %1443 = vmatpush1.bf16.msra.mxu0 0
        %1444 = vmatprep.subr.bf16.mxu0 0
        %1445 = vmatpush1.bf16.msra.mxu0 0
        %1446 = vmatprep.subr.bf16.mxu0 0
        %1447 = vmatpush1.bf16.msra.mxu0 0
        %1448 = vmatprep.subr.bf16.mxu0 0
        %1449 = vmatpush1.bf16.msra.mxu0 0
        %1450 = vmatprep.subr.bf16.mxu0 0
        %1451 = vmatpush1.bf16.msra.mxu0 0
        %1452 = vmatprep.subr.bf16.mxu0 0
        %1453 = vmatpush1.bf16.msra.mxu0 0
        %1454 = vmatprep.subr.bf16.mxu0 0
        %1455 = vmatpush1.bf16.msra.mxu0 0
        %1456 = vmatprep.subr.bf16.mxu0 0
        %1457 = vmatpush1.bf16.msra.mxu0 0
        %1458 = vmatprep.subr.bf16.mxu0 0
        %1459 = vmatpush1.bf16.msra.mxu0 0
        %1460 = vmatprep.subr.bf16.mxu0 0
        %1461 = vmatpush1.bf16.msra.mxu0 0
        %1462 = vmatprep.mubr.bf16.mxu0 0
        %1463 = vmatmul.mubr.bf16.gmra.mrb[0].mxu0 %v1428
        %v1464 = vpop.f32.mrb[0].mxu0
        %v1465 = vadd.f32 %v367, %v1464
        %v1466 = vpop.f32.mrb[0].mxu0
        %v1467 = vpop.f32.mrb[0].mxu0
        %v1468 = vpop.f32.mrb[0].mxu0
        %1469 = vdwg.mxu0
        %1470 = vst.msk [vmem:[%s225 + $0x1] sm:$0x1] %vm913, %v1465
        %v1472 = vlaneseq
        %v1473 = vshrl.u32 %v1472, 7
        %v1474 = vsub.s32 %v918, %v1473
        %v1475 = vrot.slane %v1251, %v1474
        %1477 = vst.msk [vmem:[%s225 + $0x1] sm:$0x1] %vm924, %v1475
        %v1478 = vld [vmem:[#allocation4 + $0x20] sm:$0xf]
        %v1479 = vld [vmem:[#allocation4 + $0x24] sm:$0xf]
        %v1480 = vpack.c.bf16 %v1465, %v1465
        %v1483 = vunpack.c.l.b16 %v1478
        %v1484 = vunpack.c.l.b16 %v1479
        %v1485 = vpack.c.b16 %v1484, %v1483
        %v1488 = vsel %vm377, %v1480, 0
        %1490 = vmatprep.subr.bf16.mxu0 0
        %1491 = vmatpush1.bf16.msra.mxu0 %v1485
        %1492 = vmatprep.subr.bf16.mxu0 0
        %1493 = vmatpush1.bf16.msra.mxu0 0
        %1494 = vmatprep.subr.bf16.mxu0 0
        %1495 = vmatpush1.bf16.msra.mxu0 0
        %1496 = vmatprep.subr.bf16.mxu0 0
        %1497 = vmatpush1.bf16.msra.mxu0 0
        %1498 = vmatprep.subr.bf16.mxu0 0
        %1499 = vmatpush1.bf16.msra.mxu0 0
        %1500 = vmatprep.subr.bf16.mxu0 0
        %1501 = vmatpush1.bf16.msra.mxu0 0
        %1502 = vmatprep.subr.bf16.mxu0 0
        %1503 = vmatpush1.bf16.msra.mxu0 0
        %1504 = vmatprep.subr.bf16.mxu0 0
        %1505 = vmatpush1.bf16.msra.mxu0 0
        %1506 = vmatprep.subr.bf16.mxu0 0
        %1507 = vmatpush1.bf16.msra.mxu0 0
        %1508 = vmatprep.subr.bf16.mxu0 0
        %1509 = vmatpush1.bf16.msra.mxu0 0
        %1510 = vmatprep.subr.bf16.mxu0 0
        %1511 = vmatpush1.bf16.msra.mxu0 0
        %1512 = vmatprep.subr.bf16.mxu0 0
        %1513 = vmatpush1.bf16.msra.mxu0 0
        %1514 = vmatprep.subr.bf16.mxu0 0
        %1515 = vmatpush1.bf16.msra.mxu0 0
        %1516 = vmatprep.subr.bf16.mxu0 0
        %1517 = vmatpush1.bf16.msra.mxu0 0
        %1518 = vmatprep.subr.bf16.mxu0 0
        %1519 = vmatpush1.bf16.msra.mxu0 0
        %1520 = vmatprep.subr.bf16.mxu0 0
        %1521 = vmatpush1.bf16.msra.mxu0 0
        %1522 = vmatprep.mubr.bf16.mxu0 0
        %1523 = vmatmul.mubr.bf16.gmra.mrb[0].mxu0 %v1488
        %v1524 = vpop.f32.mrb[0].mxu0
        %v1525 = vadd.f32 %v363, %v1524
        %v1526 = vpop.f32.mrb[0].mxu0
        %v1527 = vpop.f32.mrb[0].mxu0
        %v1528 = vpop.f32.mrb[0].mxu0
        %1529 = vdwg.mxu0
        %v1530 = vmax.f32 %v1525, 0.0
        %v1531 = vld [vmem:[#allocation4 + $0x28] sm:$0xf]
        %v1532 = vld [vmem:[#allocation4 + $0x2c] sm:$0xf]
        %v1533 = vld [vmem:[#allocation4 + $0x30] sm:$0xf]
        %v1534 = vld [vmem:[#allocation4 + $0x34] sm:$0xf]
        %v1535 = vpack.c.bf16 %v1530, %v1530
        %v1540 = vunpack.c.l.b16 %v1531
        %v1541 = vunpack.c.l.b16 %v1532
        %v1542 = vunpack.c.l.b16 %v1533
        %v1543 = vunpack.c.l.b16 %v1534
        %v1544 = vpack.c.b16 %v1541, %v1540
        %v1545 = vpack.c.b16 %v1543, %v1542
        %v1549 = vsel %vm251, %v1535, 0
        %1551 = vmatprep.subr.bf16.mxu0 0
        %1552 = vmatpush1.bf16.msra.mxu0 %v1544
        %1553 = vmatprep.subr.bf16.mxu0 0
        %1554 = vmatpush1.bf16.msra.mxu0 %v1545
        %1555 = vmatprep.subr.bf16.mxu0 0
        %1556 = vmatpush1.bf16.msra.mxu0 0
        %1557 = vmatprep.subr.bf16.mxu0 0
        %1558 = vmatpush1.bf16.msra.mxu0 0
        %1559 = vmatprep.subr.bf16.mxu0 0
        %1560 = vmatpush1.bf16.msra.mxu0 0
        %1561 = vmatprep.subr.bf16.mxu0 0
        %1562 = vmatpush1.bf16.msra.mxu0 0
        %1563 = vmatprep.subr.bf16.mxu0 0
        %1564 = vmatpush1.bf16.msra.mxu0 0
        %1565 = vmatprep.subr.bf16.mxu0 0
        %1566 = vmatpush1.bf16.msra.mxu0 0
        %1567 = vmatprep.subr.bf16.mxu0 0
        %1568 = vmatpush1.bf16.msra.mxu0 0
        %1569 = vmatprep.subr.bf16.mxu0 0
        %1570 = vmatpush1.bf16.msra.mxu0 0
        %1571 = vmatprep.subr.bf16.mxu0 0
        %1572 = vmatpush1.bf16.msra.mxu0 0
        %1573 = vmatprep.subr.bf16.mxu0 0
        %1574 = vmatpush1.bf16.msra.mxu0 0
        %1575 = vmatprep.subr.bf16.mxu0 0
        %1576 = vmatpush1.bf16.msra.mxu0 0
        %1577 = vmatprep.subr.bf16.mxu0 0
        %1578 = vmatpush1.bf16.msra.mxu0 0
        %1579 = vmatprep.subr.bf16.mxu0 0
        %1580 = vmatpush1.bf16.msra.mxu0 0
        %1581 = vmatprep.subr.bf16.mxu0 0
        %1582 = vmatpush1.bf16.msra.mxu0 0
        %1583 = vmatprep.mubr.bf16.mxu0 0
        %1584 = vmatmul.mubr.bf16.gmra.mrb[0].mxu0 %v1549
        %v1585 = vpop.f32.mrb[0].mxu0
        %v1586 = vadd.f32 %v364, %v1585
        %v1587 = vpop.f32.mrb[0].mxu0
        %v1588 = vpop.f32.mrb[0].mxu0
        %v1589 = vpop.f32.mrb[0].mxu0
        %1590 = vdwg.mxu0
        %v1591 = vmax.f32 %v1586, 0.0
        %1592 = vrot.lane.b32.xlu0 %v1160, 96
        %v1593 = vpop.permute.xlu0 %1592
        %v1595 = vsel %vm251, %v1591, %v1266
        %v1596 = vsel %vm484, %v1595, %v1593
        %v1597 = vld [vmem:[#allocation4 + $0x48] sm:$0xf]
        %v1598 = vld [vmem:[#allocation4 + $0x4c] sm:$0xf]
        %v1599 = vld [vmem:[#allocation4 + $0x50] sm:$0xf]
        %v1600 = vld [vmem:[#allocation4 + $0x54] sm:$0xf]
        %v1601 = vld [vmem:[#allocation4 + $0x58] sm:$0xf]
        %v1602 = vld [vmem:[#allocation4 + $0x5c] sm:$0xf]
        %v1603 = vld [vmem:[#allocation4 + $0x60] sm:$0xf]
        %v1604 = vld [vmem:[#allocation4 + $0x64] sm:$0xf]
        %v1605 = vld [vmem:[#allocation4 + $0x68] sm:$0xf]
        %v1606 = vld [vmem:[#allocation4 + $0x6c] sm:$0xf]
        %v1607 = vld [vmem:[#allocation4 + $0x70] sm:$0xf]
        %v1608 = vld [vmem:[#allocation4 + $0x74] sm:$0xf]
        %v1609 = vpack.c.bf16 %v1596, %v1596
        %v1622 = vunpack.c.l.b16 %v1597
        %v1623 = vunpack.c.l.b16 %v1598
        %v1624 = vunpack.c.l.b16 %v1599
        %v1625 = vunpack.c.l.b16 %v1600
        %v1626 = vunpack.c.l.b16 %v1601
        %v1627 = vunpack.c.l.b16 %v1602
        %v1628 = vunpack.c.l.b16 %v1603
        %v1629 = vunpack.c.l.b16 %v1604
        %v1630 = vunpack.c.l.b16 %v1605
        %v1631 = vunpack.c.l.b16 %v1606
        %v1632 = vunpack.c.l.b16 %v1607
        %v1633 = vunpack.c.l.b16 %v1608
        %v1634 = vpack.c.b16 %v1623, %v1622
        %v1635 = vpack.c.b16 %v1625, %v1624
        %v1636 = vpack.c.b16 %v1627, %v1626
        %v1637 = vpack.c.b16 %v1629, %v1628
        %v1638 = vpack.c.b16 %v1631, %v1630
        %v1639 = vpack.c.b16 %v1633, %v1632
        %v1647 = vsel %vm535, %v1609, 0
        %1649 = vmatprep.subr.bf16.mxu0 0
        %1650 = vmatpush1.bf16.msra.mxu0 %v1634
        %1651 = vmatprep.subr.bf16.mxu0 0
        %1652 = vmatpush1.bf16.msra.mxu0 %v1635
        %1653 = vmatprep.subr.bf16.mxu0 0
        %1654 = vmatpush1.bf16.msra.mxu0 %v1636
        %1655 = vmatprep.subr.bf16.mxu0 0
        %1656 = vmatpush1.bf16.msra.mxu0 %v1637
        %1657 = vmatprep.subr.bf16.mxu0 0
        %1658 = vmatpush1.bf16.msra.mxu0 %v1638
        %1659 = vmatprep.subr.bf16.mxu0 0
        %1660 = vmatpush1.bf16.msra.mxu0 %v1639
        %1661 = vmatprep.subr.bf16.mxu0 0
        %1662 = vmatpush1.bf16.msra.mxu0 0
        %1663 = vmatprep.subr.bf16.mxu0 0
        %1664 = vmatpush1.bf16.msra.mxu0 0
        %1665 = vmatprep.subr.bf16.mxu0 0
        %1666 = vmatpush1.bf16.msra.mxu0 0
        %1667 = vmatprep.subr.bf16.mxu0 0
        %1668 = vmatpush1.bf16.msra.mxu0 0
        %1669 = vmatprep.subr.bf16.mxu0 0
        %1670 = vmatpush1.bf16.msra.mxu0 0
        %1671 = vmatprep.subr.bf16.mxu0 0
        %1672 = vmatpush1.bf16.msra.mxu0 0
        %1673 = vmatprep.subr.bf16.mxu0 0
        %1674 = vmatpush1.bf16.msra.mxu0 0
        %1675 = vmatprep.subr.bf16.mxu0 0
        %1676 = vmatpush1.bf16.msra.mxu0 0
        %1677 = vmatprep.subr.bf16.mxu0 0
        %1678 = vmatpush1.bf16.msra.mxu0 0
        %1679 = vmatprep.subr.bf16.mxu0 0
        %1680 = vmatpush1.bf16.msra.mxu0 0
        %1681 = vmatprep.mubr.bf16.mxu0 0
        %1682 = vmatmul.mubr.bf16.gmra.mrb[0].mxu0 %v1647
        %v1683 = vpop.f32.mrb[0].mxu0
        %v1684 = vadd.f32 %v365, %v1683
        %v1685 = vpop.f32.mrb[0].mxu0
        %v1686 = vpop.f32.mrb[0].mxu0
        %v1687 = vpop.f32.mrb[0].mxu0
        %1688 = vdwg.mxu0
        %v1689 = vxor.u32 %v1684, 2147483648
        %v1690 = vmul.f32 %v1689, 1.442695
        %v1691 = vpow.pop %v1690
        %v1692 = vadd.f32 %v1691, 1.0
        %v1693 = vrcp.pop %v1692
        %v1694 = vmul.f32 1.0, %v1693
        %v1695 = vtanh.pop %v1684
        %v1696 = vmul.f32 %v1694, %v1154
        %1698 = vrot.lane.b32.xlu0 %v1695, 64
        %v1699 = vpop.permute.xlu0 %1698
        %v1701 = vmul.f32 %v1694, %v1699
        %1703 = vrot.lane.b32.xlu0 %v1701, 32
        %v1704 = vpop.permute.xlu0 %1703
        %v1706 = vadd.f32 %v1696, %v1704
        %v1707 = vtanh.pop %v1706
        %1709 = vrot.lane.b32.xlu0 %v1707, 64
        %v1710 = vpop.permute.xlu0 %1709
        %v1712 = vmul.f32 %v1694, %v1710
        %v1713 = vld [vmem:[#allocation4 + $0x38] sm:$0xf]
        %v1714 = vld [vmem:[#allocation4 + $0x3c] sm:$0xf]
        %v1715 = vld [vmem:[#allocation4 + $0x40] sm:$0xf]
        %v1716 = vld [vmem:[#allocation4 + $0x44] sm:$0xf]
        %v1717 = vpack.c.bf16 %v1712, %v1712
        %1719 = vrot.lane.b32.xlu0 %v1717, 32
        %v1720 = vpop.permute.xlu0 %1719
        %v1725 = vunpack.c.l.b16 %v1713
        %v1726 = vunpack.c.l.b16 %v1714
        %v1727 = vunpack.c.l.b16 %v1715
        %v1728 = vunpack.c.l.b16 %v1716
        %v1729 = vpack.c.b16 %v1726, %v1725
        %v1730 = vpack.c.b16 %v1728, %v1727
        %v1734 = vsel %vm251, %v1720, 0
        %1736 = vmatprep.subr.bf16.mxu0 0
        %1737 = vmatpush1.bf16.msra.mxu0 %v1729
        %1738 = vmatprep.subr.bf16.mxu0 0
        %1739 = vmatpush1.bf16.msra.mxu0 %v1730
        %1740 = vmatprep.subr.bf16.mxu0 0
        %1741 = vmatpush1.bf16.msra.mxu0 0
        %1742 = vmatprep.subr.bf16.mxu0 0
        %1743 = vmatpush1.bf16.msra.mxu0 0
        %1744 = vmatprep.subr.bf16.mxu0 0
        %1745 = vmatpush1.bf16.msra.mxu0 0
        %1746 = vmatprep.subr.bf16.mxu0 0
        %1747 = vmatpush1.bf16.msra.mxu0 0
        %1748 = vmatprep.subr.bf16.mxu0 0
        %1749 = vmatpush1.bf16.msra.mxu0 0
        %1750 = vmatprep.subr.bf16.mxu0 0
        %1751 = vmatpush1.bf16.msra.mxu0 0
        %1752 = vmatprep.subr.bf16.mxu0 0
        %1753 = vmatpush1.bf16.msra.mxu0 0
        %1754 = vmatprep.subr.bf16.mxu0 0
        %1755 = vmatpush1.bf16.msra.mxu0 0
        %1756 = vmatprep.subr.bf16.mxu0 0
        %1757 = vmatpush1.bf16.msra.mxu0 0
        %1758 = vmatprep.subr.bf16.mxu0 0
        %1759 = vmatpush1.bf16.msra.mxu0 0
        %1760 = vmatprep.subr.bf16.mxu0 0
        %1761 = vmatpush1.bf16.msra.mxu0 0
        %1762 = vmatprep.subr.bf16.mxu0 0
        %1763 = vmatpush1.bf16.msra.mxu0 0
        %1764 = vmatprep.subr.bf16.mxu0 0
        %1765 = vmatpush1.bf16.msra.mxu0 0
        %1766 = vmatprep.subr.bf16.mxu0 0
        %1767 = vmatpush1.bf16.msra.mxu0 0
        %1768 = vmatprep.mubr.bf16.mxu0 0
        %1769 = vmatmul.mubr.bf16.gmra.mrb[0].mxu0 %v1734
        %v1770 = vpop.f32.mrb[0].mxu0
        %v1771 = vadd.f32 0.0, %v1770
        %v1772 = vpop.f32.mrb[0].mxu0
        %v1773 = vpop.f32.mrb[0].mxu0
        %v1774 = vpop.f32.mrb[0].mxu0
        %1775 = vdwg.mxu0
        %v1776 = vlaneseq
        %v1777 = vshrl.u32 %v1776, 7
        %v1778 = vsub.s32 0, %v1777
        %v1779 = vrot.slane %v1771, %v1778
        %v1780 = vadd.f32 %v351, %v1779
        %v1781 = vtanh.pop %v1780
        %v1782 = vmul.f32 %v1781, %v675
        %v1783 = vsel %vm251, %v1782, 0.0
        %1784 = vadd.xlane.f32.xlu0 %v1783
        %v1785 = vpop.xlane.xlu0 %1784
        %v1786 = vsel %vm362, %v1785, -1e+30
        %v1787 = vrot.slane %v1786, 4
        %v1788 = vmax.f32 %v1786, %v1787
        %v1789 = vrot.slane %v1788, 2
        %v1790 = vmax.f32 %v1788, %v1789
        %v1791 = vrot.slane %v1790, 1
        %v1792 = vmax.f32 %v1790, %v1791
        %v1793 = vsub.f32 %v1786, %v1792
        %v1794 = vmul.f32 %v1793, 1.442695
        %v1795 = vpow.pop %v1794
        %v1796 = vrot.slane %v1795, 4
        %v1797 = vadd.f32 %v1795, %v1796
        %v1798 = vrot.slane %v1797, 2
        %v1799 = vadd.f32 %v1797, %v1798
        %v1800 = vrot.slane %v1799, 1
        %v1801 = vadd.f32 %v1799, %v1800
        %v1802 = vrcp.pop %v1801
        %v1803 = vmul.f32 %v1795, %v1802
        %v1804 = vmul.f32 %v1803, %v295
        %v1805 = vsel %vm251, %v1804, 0.0
        %v1806 = vrot.slane %v1805, 4
        %v1807 = vadd.f32 %v1805, %v1806
        %v1808 = vrot.slane %v1807, 2
        %v1809 = vadd.f32 %v1807, %v1808
        %v1810 = vrot.slane %v1809, 1
        %v1811 = vadd.f32 %v1809, %v1810
        %1813 = vrot.lane.b32.xlu0 %v1712, 32
        %v1814 = vpop.permute.xlu0 %1813
        %1817 = vrot.lane.b32.xlu0 %v1811, 32
        %v1818 = vpop.permute.xlu0 %1817
        %1820 = vrot.lane.b32.xlu0 %v1388, 96
        %v1821 = vpop.permute.xlu0 %1820
        %v1823 = vsel %vm251, %v1814, %v1818
        %v1824 = vsel %vm484, %v1823, %v1821
        %v1825 = vld [vmem:[#allocation4 + $0x78] sm:$0xf]
        %v1826 = vld [vmem:[#allocation4 + $0x7c] sm:$0xf]
        %v1827 = vld [vmem:[#allocation4 + $0x80] sm:$0xf]
        %v1828 = vld [vmem:[#allocation4 + $0x84] sm:$0xf]
        %v1829 = vld [vmem:[#allocation4 + $0x88] sm:$0xf]
        %v1830 = vld [vmem:[#allocation4 + $0x8c] sm:$0xf]
        %v1831 = vld [vmem:[#allocation4 + $0x90] sm:$0xf]
        %v1832 = vld [vmem:[#allocation4 + $0x94] sm:$0xf]
        %v1833 = vld [vmem:[#allocation4 + $0x98] sm:$0xf]
        %v1834 = vld [vmem:[#allocation4 + $0x9c] sm:$0xf]
        %v1835 = vld [vmem:[#allocation4 + $0xa0] sm:$0xf]
        %v1836 = vld [vmem:[#allocation4 + $0xa4] sm:$0xf]
        %v1837 = vpack.c.bf16 %v1824, %v1824
        %v1850 = vunpack.c.l.b16 %v1825
        %v1851 = vunpack.c.l.b16 %v1826
        %v1852 = vunpack.c.l.b16 %v1827
        %v1853 = vunpack.c.l.b16 %v1828
        %v1854 = vunpack.c.l.b16 %v1829
        %v1855 = vunpack.c.l.b16 %v1830
        %v1856 = vunpack.c.l.b16 %v1831
        %v1857 = vunpack.c.l.b16 %v1832
        %v1858 = vunpack.c.l.b16 %v1833
        %v1859 = vunpack.c.l.b16 %v1834
        %v1860 = vunpack.c.l.b16 %v1835
        %v1861 = vunpack.c.l.b16 %v1836
        %v1862 = vpack.c.b16 %v1851, %v1850
        %v1863 = vpack.c.b16 %v1853, %v1852
        %v1864 = vpack.c.b16 %v1855, %v1854
        %v1865 = vpack.c.b16 %v1857, %v1856
        %v1866 = vpack.c.b16 %v1859, %v1858
        %v1867 = vpack.c.b16 %v1861, %v1860
        %v1875 = vsel %vm535, %v1837, 0
        %1877 = vmatprep.subr.bf16.mxu0 0
        %1878 = vmatpush1.bf16.msra.mxu0 %v1862
        %1879 = vmatprep.subr.bf16.mxu0 0
        %1880 = vmatpush1.bf16.msra.mxu0 %v1863
        %1881 = vmatprep.subr.bf16.mxu0 0
        %1882 = vmatpush1.bf16.msra.mxu0 %v1864
        %1883 = vmatprep.subr.bf16.mxu0 0
        %1884 = vmatpush1.bf16.msra.mxu0 %v1865
        %1885 = vmatprep.subr.bf16.mxu0 0
        %1886 = vmatpush1.bf16.msra.mxu0 %v1866
        %1887 = vmatprep.subr.bf16.mxu0 0
        %1888 = vmatpush1.bf16.msra.mxu0 %v1867
        %1889 = vmatprep.subr.bf16.mxu0 0
        %1890 = vmatpush1.bf16.msra.mxu0 0
        %1891 = vmatprep.subr.bf16.mxu0 0
        %1892 = vmatpush1.bf16.msra.mxu0 0
        %1893 = vmatprep.subr.bf16.mxu0 0
        %1894 = vmatpush1.bf16.msra.mxu0 0
        %1895 = vmatprep.subr.bf16.mxu0 0
        %1896 = vmatpush1.bf16.msra.mxu0 0
        %1897 = vmatprep.subr.bf16.mxu0 0
        %1898 = vmatpush1.bf16.msra.mxu0 0
        %1899 = vmatprep.subr.bf16.mxu0 0
        %1900 = vmatpush1.bf16.msra.mxu0 0
        %1901 = vmatprep.subr.bf16.mxu0 0
        %1902 = vmatpush1.bf16.msra.mxu0 0
        %1903 = vmatprep.subr.bf16.mxu0 0
        %1904 = vmatpush1.bf16.msra.mxu0 0
        %1905 = vmatprep.subr.bf16.mxu0 0
        %1906 = vmatpush1.bf16.msra.mxu0 0
        %1907 = vmatprep.subr.bf16.mxu0 0
        %1908 = vmatpush1.bf16.msra.mxu0 0
        %1909 = vmatprep.mubr.bf16.mxu0 0
        %1910 = vmatmul.mubr.bf16.gmra.mrb[0].mxu0 %v1875
        %v1911 = vpop.f32.mrb[0].mxu0
        %v1912 = vadd.f32 %v366, %v1911
        %v1913 = vpop.f32.mrb[0].mxu0
        %v1914 = vpop.f32.mrb[0].mxu0
        %v1915 = vpop.f32.mrb[0].mxu0
        %1916 = vdwg.mxu0
        %v1917 = vxor.u32 %v1912, 2147483648
        %v1918 = vmul.f32 %v1917, 1.442695
        %v1919 = vpow.pop %v1918
        %v1920 = vadd.f32 %v1919, 1.0
        %v1921 = vrcp.pop %v1920
        %v1922 = vmul.f32 1.0, %v1921
        %v1923 = vtanh.pop %v1912
        %v1924 = vmul.f32 %v1922, %v1382
        %1926 = vrot.lane.b32.xlu0 %v1923, 64
        %v1927 = vpop.permute.xlu0 %1926
        %v1929 = vmul.f32 %v1922, %v1927
        %1931 = vrot.lane.b32.xlu0 %v1929, 32
        %v1932 = vpop.permute.xlu0 %1931
        %v1934 = vadd.f32 %v1924, %v1932
        %v1935 = vtanh.pop %v1934
        %1937 = vrot.lane.b32.xlu0 %v1935, 64
        %v1938 = vpop.permute.xlu0 %1937
        %v1940 = vmul.f32 %v1922, %v1938
        %1942 = vrot.lane.b32.xlu0 %v1940, 32
        %v1943 = vpop.permute.xlu0 %1942
        %v1945 = vsel %vm251, %v1943, %v1818
        %v1946 = vld [vmem:[#allocation4 + $0xa8] sm:$0xf]
        %v1947 = vld [vmem:[#allocation4 + $0xac] sm:$0xf]
        %v1948 = vld [vmem:[#allocation4 + $0xb0] sm:$0xf]
        %v1949 = vld [vmem:[#allocation4 + $0xb4] sm:$0xf]
        %v1950 = vld [vmem:[#allocation4 + $0xb8] sm:$0xf]
        %v1951 = vld [vmem:[#allocation4 + $0xbc] sm:$0xf]
        %v1952 = vld [vmem:[#allocation4 + $0xc0] sm:$0xf]
        %v1953 = vld [vmem:[#allocation4 + $0xc4] sm:$0xf]
        %v1954 = vpack.c.bf16 %v1945, %v1945
        %v1963 = vunpack.c.l.b16 %v1946
        %v1964 = vunpack.c.l.b16 %v1947
        %v1965 = vunpack.c.l.b16 %v1948
        %v1966 = vunpack.c.l.b16 %v1949
        %v1967 = vunpack.c.l.b16 %v1950
        %v1968 = vunpack.c.l.b16 %v1951
        %v1969 = vunpack.c.l.b16 %v1952
        %v1970 = vunpack.c.l.b16 %v1953
        %v1971 = vpack.c.b16 %v1964, %v1963
        %v1972 = vpack.c.b16 %v1966, %v1965
        %v1973 = vpack.c.b16 %v1968, %v1967
        %v1974 = vpack.c.b16 %v1970, %v1969
        %v1980 = vsel %vm484, %v1954, 0
        %1982 = vmatprep.subr.bf16.mxu0 0
        %1983 = vmatpush1.bf16.msra.mxu0 %v1971
        %1984 = vmatprep.subr.bf16.mxu0 0
        %1985 = vmatpush1.bf16.msra.mxu0 %v1972
        %1986 = vmatprep.subr.bf16.mxu0 0
        %1987 = vmatpush1.bf16.msra.mxu0 %v1973
        %1988 = vmatprep.subr.bf16.mxu0 0
        %1989 = vmatpush1.bf16.msra.mxu0 %v1974
        %1990 = vmatprep.subr.bf16.mxu0 0
        %1991 = vmatpush1.bf16.msra.mxu0 0
        %1992 = vmatprep.subr.bf16.mxu0 0
        %1993 = vmatpush1.bf16.msra.mxu0 0
        %1994 = vmatprep.subr.bf16.mxu0 0
        %1995 = vmatpush1.bf16.msra.mxu0 0
        %1996 = vmatprep.subr.bf16.mxu0 0
        %1997 = vmatpush1.bf16.msra.mxu0 0
        %1998 = vmatprep.subr.bf16.mxu0 0
        %1999 = vmatpush1.bf16.msra.mxu0 0
        %2000 = vmatprep.subr.bf16.mxu0 0
        %2001 = vmatpush1.bf16.msra.mxu0 0
        %2002 = vmatprep.subr.bf16.mxu0 0
        %2003 = vmatpush1.bf16.msra.mxu0 0
        %2004 = vmatprep.subr.bf16.mxu0 0
        %2005 = vmatpush1.bf16.msra.mxu0 0
        %2006 = vmatprep.subr.bf16.mxu0 0
        %2007 = vmatpush1.bf16.msra.mxu0 0
        %2008 = vmatprep.subr.bf16.mxu0 0
        %2009 = vmatpush1.bf16.msra.mxu0 0
        %2010 = vmatprep.subr.bf16.mxu0 0
        %2011 = vmatpush1.bf16.msra.mxu0 0
        %2012 = vmatprep.subr.bf16.mxu0 0
        %2013 = vmatpush1.bf16.msra.mxu0 0
        %2014 = vmatprep.mubr.bf16.mxu0 0
        %2015 = vmatmul.mubr.bf16.gmra.mrb[0].mxu0 %v1980
        %v2016 = vpop.f32.mrb[0].mxu0
        %v2017 = vadd.f32 %v367, %v2016
        %v2018 = vpop.f32.mrb[0].mxu0
        %v2019 = vpop.f32.mrb[0].mxu0
        %v2020 = vpop.f32.mrb[0].mxu0
        %2021 = vdwg.mxu0
        %2022 = vst.msk [vmem:[%s225 + $0x2] sm:$0x1] %vm913, %v2017
        %v2024 = vlaneseq
        %v2025 = vshrl.u32 %v2024, 7
        %v2026 = vsub.s32 %v918, %v2025
        %v2027 = vrot.slane %v1803, %v2026
        %2029 = vst.msk [vmem:[%s225 + $0x2] sm:$0x1] %vm924, %v2027
        %v2030 = vld [vmem:[#allocation4 + $0x20] sm:$0xf]
        %v2031 = vld [vmem:[#allocation4 + $0x24] sm:$0xf]
        %v2032 = vpack.c.bf16 %v2017, %v2017
        %v2035 = vunpack.c.l.b16 %v2030
        %v2036 = vunpack.c.l.b16 %v2031
        %v2037 = vpack.c.b16 %v2036, %v2035
        %v2040 = vsel %vm377, %v2032, 0
        %2042 = vmatprep.subr.bf16.mxu0 0
        %2043 = vmatpush1.bf16.msra.mxu0 %v2037
        %2044 = vmatprep.subr.bf16.mxu0 0
        %2045 = vmatpush1.bf16.msra.mxu0 0
        %2046 = vmatprep.subr.bf16.mxu0 0
        %2047 = vmatpush1.bf16.msra.mxu0 0
        %2048 = vmatprep.subr.bf16.mxu0 0
        %2049 = vmatpush1.bf16.msra.mxu0 0
        %2050 = vmatprep.subr.bf16.mxu0 0
        %2051 = vmatpush1.bf16.msra.mxu0 0
        %2052 = vmatprep.subr.bf16.mxu0 0
        %2053 = vmatpush1.bf16.msra.mxu0 0
        %2054 = vmatprep.subr.bf16.mxu0 0
        %2055 = vmatpush1.bf16.msra.mxu0 0
        %2056 = vmatprep.subr.bf16.mxu0 0
        %2057 = vmatpush1.bf16.msra.mxu0 0
        %2058 = vmatprep.subr.bf16.mxu0 0
        %2059 = vmatpush1.bf16.msra.mxu0 0
        %2060 = vmatprep.subr.bf16.mxu0 0
        %2061 = vmatpush1.bf16.msra.mxu0 0
        %2062 = vmatprep.subr.bf16.mxu0 0
        %2063 = vmatpush1.bf16.msra.mxu0 0
        %2064 = vmatprep.subr.bf16.mxu0 0
        %2065 = vmatpush1.bf16.msra.mxu0 0
        %2066 = vmatprep.subr.bf16.mxu0 0
        %2067 = vmatpush1.bf16.msra.mxu0 0
        %2068 = vmatprep.subr.bf16.mxu0 0
        %2069 = vmatpush1.bf16.msra.mxu0 0
        %2070 = vmatprep.subr.bf16.mxu0 0
        %2071 = vmatpush1.bf16.msra.mxu0 0
        %2072 = vmatprep.subr.bf16.mxu0 0
        %2073 = vmatpush1.bf16.msra.mxu0 0
        %2074 = vmatprep.mubr.bf16.mxu0 0
        %2075 = vmatmul.mubr.bf16.gmra.mrb[0].mxu0 %v2040
        %v2076 = vpop.f32.mrb[0].mxu0
        %v2077 = vadd.f32 %v363, %v2076
        %v2078 = vpop.f32.mrb[0].mxu0
        %v2079 = vpop.f32.mrb[0].mxu0
        %v2080 = vpop.f32.mrb[0].mxu0
        %2081 = vdwg.mxu0
        %v2082 = vmax.f32 %v2077, 0.0
        %v2083 = vld [vmem:[#allocation4 + $0x28] sm:$0xf]
        %v2084 = vld [vmem:[#allocation4 + $0x2c] sm:$0xf]
        %v2085 = vld [vmem:[#allocation4 + $0x30] sm:$0xf]
        %v2086 = vld [vmem:[#allocation4 + $0x34] sm:$0xf]
        %v2087 = vpack.c.bf16 %v2082, %v2082
        %v2092 = vunpack.c.l.b16 %v2083
        %v2093 = vunpack.c.l.b16 %v2084
        %v2094 = vunpack.c.l.b16 %v2085
        %v2095 = vunpack.c.l.b16 %v2086
        %v2096 = vpack.c.b16 %v2093, %v2092
        %v2097 = vpack.c.b16 %v2095, %v2094
        %v2101 = vsel %vm251, %v2087, 0
        %2103 = vmatprep.subr.bf16.mxu0 0
        %2104 = vmatpush1.bf16.msra.mxu0 %v2096
        %2105 = vmatprep.subr.bf16.mxu0 0
        %2106 = vmatpush1.bf16.msra.mxu0 %v2097
        %2107 = vmatprep.subr.bf16.mxu0 0
        %2108 = vmatpush1.bf16.msra.mxu0 0
        %2109 = vmatprep.subr.bf16.mxu0 0
        %2110 = vmatpush1.bf16.msra.mxu0 0
        %2111 = vmatprep.subr.bf16.mxu0 0
        %2112 = vmatpush1.bf16.msra.mxu0 0
        %2113 = vmatprep.subr.bf16.mxu0 0
        %2114 = vmatpush1.bf16.msra.mxu0 0
        %2115 = vmatprep.subr.bf16.mxu0 0
        %2116 = vmatpush1.bf16.msra.mxu0 0
        %2117 = vmatprep.subr.bf16.mxu0 0
        %2118 = vmatpush1.bf16.msra.mxu0 0
        %2119 = vmatprep.subr.bf16.mxu0 0
        %2120 = vmatpush1.bf16.msra.mxu0 0
        %2121 = vmatprep.subr.bf16.mxu0 0
        %2122 = vmatpush1.bf16.msra.mxu0 0
        %2123 = vmatprep.subr.bf16.mxu0 0
        %2124 = vmatpush1.bf16.msra.mxu0 0
        %2125 = vmatprep.subr.bf16.mxu0 0
        %2126 = vmatpush1.bf16.msra.mxu0 0
        %2127 = vmatprep.subr.bf16.mxu0 0
        %2128 = vmatpush1.bf16.msra.mxu0 0
        %2129 = vmatprep.subr.bf16.mxu0 0
        %2130 = vmatpush1.bf16.msra.mxu0 0
        %2131 = vmatprep.subr.bf16.mxu0 0
        %2132 = vmatpush1.bf16.msra.mxu0 0
        %2133 = vmatprep.subr.bf16.mxu0 0
        %2134 = vmatpush1.bf16.msra.mxu0 0
        %2135 = vmatprep.mubr.bf16.mxu0 0
        %2136 = vmatmul.mubr.bf16.gmra.mrb[0].mxu0 %v2101
        %v2137 = vpop.f32.mrb[0].mxu0
        %v2138 = vadd.f32 %v364, %v2137
        %v2139 = vpop.f32.mrb[0].mxu0
        %v2140 = vpop.f32.mrb[0].mxu0
        %v2141 = vpop.f32.mrb[0].mxu0
        %2142 = vdwg.mxu0
        %v2143 = vmax.f32 %v2138, 0.0
        %2144 = vrot.lane.b32.xlu0 %v1712, 96
        %v2145 = vpop.permute.xlu0 %2144
        %v2147 = vsel %vm251, %v2143, %v1818
        %v2148 = vsel %vm484, %v2147, %v2145
        %v2149 = vld [vmem:[#allocation4 + $0x48] sm:$0xf]
        %v2150 = vld [vmem:[#allocation4 + $0x4c] sm:$0xf]
        %v2151 = vld [vmem:[#allocation4 + $0x50] sm:$0xf]
        %v2152 = vld [vmem:[#allocation4 + $0x54] sm:$0xf]
        %v2153 = vld [vmem:[#allocation4 + $0x58] sm:$0xf]
        %v2154 = vld [vmem:[#allocation4 + $0x5c] sm:$0xf]
        %v2155 = vld [vmem:[#allocation4 + $0x60] sm:$0xf]
        %v2156 = vld [vmem:[#allocation4 + $0x64] sm:$0xf]
        %v2157 = vld [vmem:[#allocation4 + $0x68] sm:$0xf]
        %v2158 = vld [vmem:[#allocation4 + $0x6c] sm:$0xf]
        %v2159 = vld [vmem:[#allocation4 + $0x70] sm:$0xf]
        %v2160 = vld [vmem:[#allocation4 + $0x74] sm:$0xf]
        %v2161 = vpack.c.bf16 %v2148, %v2148
        %v2174 = vunpack.c.l.b16 %v2149
        %v2175 = vunpack.c.l.b16 %v2150
        %v2176 = vunpack.c.l.b16 %v2151
        %v2177 = vunpack.c.l.b16 %v2152
        %v2178 = vunpack.c.l.b16 %v2153
        %v2179 = vunpack.c.l.b16 %v2154
        %v2180 = vunpack.c.l.b16 %v2155
        %v2181 = vunpack.c.l.b16 %v2156
        %v2182 = vunpack.c.l.b16 %v2157
        %v2183 = vunpack.c.l.b16 %v2158
        %v2184 = vunpack.c.l.b16 %v2159
        %v2185 = vunpack.c.l.b16 %v2160
        %v2186 = vpack.c.b16 %v2175, %v2174
        %v2187 = vpack.c.b16 %v2177, %v2176
        %v2188 = vpack.c.b16 %v2179, %v2178
        %v2189 = vpack.c.b16 %v2181, %v2180
        %v2190 = vpack.c.b16 %v2183, %v2182
        %v2191 = vpack.c.b16 %v2185, %v2184
        %v2199 = vsel %vm535, %v2161, 0
        %2201 = vmatprep.subr.bf16.mxu0 0
        %2202 = vmatpush1.bf16.msra.mxu0 %v2186
        %2203 = vmatprep.subr.bf16.mxu0 0
        %2204 = vmatpush1.bf16.msra.mxu0 %v2187
        %2205 = vmatprep.subr.bf16.mxu0 0
        %2206 = vmatpush1.bf16.msra.mxu0 %v2188
        %2207 = vmatprep.subr.bf16.mxu0 0
        %2208 = vmatpush1.bf16.msra.mxu0 %v2189
        %2209 = vmatprep.subr.bf16.mxu0 0
        %2210 = vmatpush1.bf16.msra.mxu0 %v2190
        %2211 = vmatprep.subr.bf16.mxu0 0
        %2212 = vmatpush1.bf16.msra.mxu0 %v2191
        %2213 = vmatprep.subr.bf16.mxu0 0
        %2214 = vmatpush1.bf16.msra.mxu0 0
        %2215 = vmatprep.subr.bf16.mxu0 0
        %2216 = vmatpush1.bf16.msra.mxu0 0
        %2217 = vmatprep.subr.bf16.mxu0 0
        %2218 = vmatpush1.bf16.msra.mxu0 0
        %2219 = vmatprep.subr.bf16.mxu0 0
        %2220 = vmatpush1.bf16.msra.mxu0 0
        %2221 = vmatprep.subr.bf16.mxu0 0
        %2222 = vmatpush1.bf16.msra.mxu0 0
        %2223 = vmatprep.subr.bf16.mxu0 0
        %2224 = vmatpush1.bf16.msra.mxu0 0
        %2225 = vmatprep.subr.bf16.mxu0 0
        %2226 = vmatpush1.bf16.msra.mxu0 0
        %2227 = vmatprep.subr.bf16.mxu0 0
        %2228 = vmatpush1.bf16.msra.mxu0 0
        %2229 = vmatprep.subr.bf16.mxu0 0
        %2230 = vmatpush1.bf16.msra.mxu0 0
        %2231 = vmatprep.subr.bf16.mxu0 0
        %2232 = vmatpush1.bf16.msra.mxu0 0
        %2233 = vmatprep.mubr.bf16.mxu0 0
        %2234 = vmatmul.mubr.bf16.gmra.mrb[0].mxu0 %v2199
        %v2235 = vpop.f32.mrb[0].mxu0
        %v2236 = vadd.f32 %v365, %v2235
        %v2237 = vpop.f32.mrb[0].mxu0
        %v2238 = vpop.f32.mrb[0].mxu0
        %v2239 = vpop.f32.mrb[0].mxu0
        %2240 = vdwg.mxu0
        %v2241 = vxor.u32 %v2236, 2147483648
        %v2242 = vmul.f32 %v2241, 1.442695
        %v2243 = vpow.pop %v2242
        %v2244 = vadd.f32 %v2243, 1.0
        %v2245 = vrcp.pop %v2244
        %v2246 = vmul.f32 1.0, %v2245
        %v2247 = vtanh.pop %v2236
        %v2248 = vmul.f32 %v2246, %v1706
        %2250 = vrot.lane.b32.xlu0 %v2247, 64
        %v2251 = vpop.permute.xlu0 %2250
        %v2253 = vmul.f32 %v2246, %v2251
        %2255 = vrot.lane.b32.xlu0 %v2253, 32
        %v2256 = vpop.permute.xlu0 %2255
        %v2258 = vadd.f32 %v2248, %v2256
        %v2259 = vtanh.pop %v2258
        %2261 = vrot.lane.b32.xlu0 %v2259, 64
        %v2262 = vpop.permute.xlu0 %2261
        %v2264 = vmul.f32 %v2246, %v2262
        %v2265 = vld [vmem:[#allocation4 + $0x38] sm:$0xf]
        %v2266 = vld [vmem:[#allocation4 + $0x3c] sm:$0xf]
        %v2267 = vld [vmem:[#allocation4 + $0x40] sm:$0xf]
        %v2268 = vld [vmem:[#allocation4 + $0x44] sm:$0xf]
        %v2269 = vpack.c.bf16 %v2264, %v2264
        %2271 = vrot.lane.b32.xlu0 %v2269, 32
        %v2272 = vpop.permute.xlu0 %2271
        %v2277 = vunpack.c.l.b16 %v2265
        %v2278 = vunpack.c.l.b16 %v2266
        %v2279 = vunpack.c.l.b16 %v2267
        %v2280 = vunpack.c.l.b16 %v2268
        %v2281 = vpack.c.b16 %v2278, %v2277
        %v2282 = vpack.c.b16 %v2280, %v2279
        %v2286 = vsel %vm251, %v2272, 0
        %2288 = vmatprep.subr.bf16.mxu0 0
        %2289 = vmatpush1.bf16.msra.mxu0 %v2281
        %2290 = vmatprep.subr.bf16.mxu0 0
        %2291 = vmatpush1.bf16.msra.mxu0 %v2282
        %2292 = vmatprep.subr.bf16.mxu0 0
        %2293 = vmatpush1.bf16.msra.mxu0 0
        %2294 = vmatprep.subr.bf16.mxu0 0
        %2295 = vmatpush1.bf16.msra.mxu0 0
        %2296 = vmatprep.subr.bf16.mxu0 0
        %2297 = vmatpush1.bf16.msra.mxu0 0
        %2298 = vmatprep.subr.bf16.mxu0 0
        %2299 = vmatpush1.bf16.msra.mxu0 0
        %2300 = vmatprep.subr.bf16.mxu0 0
        %2301 = vmatpush1.bf16.msra.mxu0 0
        %2302 = vmatprep.subr.bf16.mxu0 0
        %2303 = vmatpush1.bf16.msra.mxu0 0
        %2304 = vmatprep.subr.bf16.mxu0 0
        %2305 = vmatpush1.bf16.msra.mxu0 0
        %2306 = vmatprep.subr.bf16.mxu0 0
        %2307 = vmatpush1.bf16.msra.mxu0 0
        %2308 = vmatprep.subr.bf16.mxu0 0
        %2309 = vmatpush1.bf16.msra.mxu0 0
        %2310 = vmatprep.subr.bf16.mxu0 0
        %2311 = vmatpush1.bf16.msra.mxu0 0
        %2312 = vmatprep.subr.bf16.mxu0 0
        %2313 = vmatpush1.bf16.msra.mxu0 0
        %2314 = vmatprep.subr.bf16.mxu0 0
        %2315 = vmatpush1.bf16.msra.mxu0 0
        %2316 = vmatprep.subr.bf16.mxu0 0
        %2317 = vmatpush1.bf16.msra.mxu0 0
        %2318 = vmatprep.subr.bf16.mxu0 0
        %2319 = vmatpush1.bf16.msra.mxu0 0
        %2320 = vmatprep.mubr.bf16.mxu0 0
        %2321 = vmatmul.mubr.bf16.gmra.mrb[0].mxu0 %v2286
        %v2322 = vpop.f32.mrb[0].mxu0
        %v2323 = vadd.f32 0.0, %v2322
        %v2324 = vpop.f32.mrb[0].mxu0
        %v2325 = vpop.f32.mrb[0].mxu0
        %v2326 = vpop.f32.mrb[0].mxu0
        %2327 = vdwg.mxu0
        %v2328 = vlaneseq
        %v2329 = vshrl.u32 %v2328, 7
        %v2330 = vsub.s32 0, %v2329
        %v2331 = vrot.slane %v2323, %v2330
        %v2332 = vadd.f32 %v351, %v2331
        %v2333 = vtanh.pop %v2332
        %v2334 = vmul.f32 %v2333, %v675
        %v2335 = vsel %vm251, %v2334, 0.0
        %2336 = vadd.xlane.f32.xlu0 %v2335
        %v2337 = vpop.xlane.xlu0 %2336
        %v2338 = vsel %vm362, %v2337, -1e+30
        %v2339 = vrot.slane %v2338, 4
        %v2340 = vmax.f32 %v2338, %v2339
        %v2341 = vrot.slane %v2340, 2
        %v2342 = vmax.f32 %v2340, %v2341
        %v2343 = vrot.slane %v2342, 1
        %v2344 = vmax.f32 %v2342, %v2343
        %v2345 = vsub.f32 %v2338, %v2344
        %v2346 = vmul.f32 %v2345, 1.442695
        %v2347 = vpow.pop %v2346
        %v2348 = vrot.slane %v2347, 4
        %v2349 = vadd.f32 %v2347, %v2348
        %v2350 = vrot.slane %v2349, 2
        %v2351 = vadd.f32 %v2349, %v2350
        %v2352 = vrot.slane %v2351, 1
        %v2353 = vadd.f32 %v2351, %v2352
        %v2354 = vrcp.pop %v2353
        %v2355 = vmul.f32 %v2347, %v2354
        %v2356 = vmul.f32 %v2355, %v295
        %v2357 = vsel %vm251, %v2356, 0.0
        %v2358 = vrot.slane %v2357, 4
        %v2359 = vadd.f32 %v2357, %v2358
        %v2360 = vrot.slane %v2359, 2
        %v2361 = vadd.f32 %v2359, %v2360
        %v2362 = vrot.slane %v2361, 1
        %v2363 = vadd.f32 %v2361, %v2362
        %2365 = vrot.lane.b32.xlu0 %v2264, 32
        %v2366 = vpop.permute.xlu0 %2365
        %2369 = vrot.lane.b32.xlu0 %v2363, 32
        %v2370 = vpop.permute.xlu0 %2369
        %2372 = vrot.lane.b32.xlu0 %v1940, 96
        %v2373 = vpop.permute.xlu0 %2372
        %v2375 = vsel %vm251, %v2366, %v2370
        %v2376 = vsel %vm484, %v2375, %v2373
        %v2377 = vld [vmem:[#allocation4 + $0x78] sm:$0xf]
        %v2378 = vld [vmem:[#allocation4 + $0x7c] sm:$0xf]
        %v2379 = vld [vmem:[#allocation4 + $0x80] sm:$0xf]
        %v2380 = vld [vmem:[#allocation4 + $0x84] sm:$0xf]
        %v2381 = vld [vmem:[#allocation4 + $0x88] sm:$0xf]
        %v2382 = vld [vmem:[#allocation4 + $0x8c] sm:$0xf]
        %v2383 = vld [vmem:[#allocation4 + $0x90] sm:$0xf]
        %v2384 = vld [vmem:[#allocation4 + $0x94] sm:$0xf]
        %v2385 = vld [vmem:[#allocation4 + $0x98] sm:$0xf]
        %v2386 = vld [vmem:[#allocation4 + $0x9c] sm:$0xf]
        %v2387 = vld [vmem:[#allocation4 + $0xa0] sm:$0xf]
        %v2388 = vld [vmem:[#allocation4 + $0xa4] sm:$0xf]
        %v2389 = vpack.c.bf16 %v2376, %v2376
        %v2402 = vunpack.c.l.b16 %v2377
        %v2403 = vunpack.c.l.b16 %v2378
        %v2404 = vunpack.c.l.b16 %v2379
        %v2405 = vunpack.c.l.b16 %v2380
        %v2406 = vunpack.c.l.b16 %v2381
        %v2407 = vunpack.c.l.b16 %v2382
        %v2408 = vunpack.c.l.b16 %v2383
        %v2409 = vunpack.c.l.b16 %v2384
        %v2410 = vunpack.c.l.b16 %v2385
        %v2411 = vunpack.c.l.b16 %v2386
        %v2412 = vunpack.c.l.b16 %v2387
        %v2413 = vunpack.c.l.b16 %v2388
        %v2414 = vpack.c.b16 %v2403, %v2402
        %v2415 = vpack.c.b16 %v2405, %v2404
        %v2416 = vpack.c.b16 %v2407, %v2406
        %v2417 = vpack.c.b16 %v2409, %v2408
        %v2418 = vpack.c.b16 %v2411, %v2410
        %v2419 = vpack.c.b16 %v2413, %v2412
        %v2427 = vsel %vm535, %v2389, 0
        %2429 = vmatprep.subr.bf16.mxu0 0
        %2430 = vmatpush1.bf16.msra.mxu0 %v2414
        %2431 = vmatprep.subr.bf16.mxu0 0
        %2432 = vmatpush1.bf16.msra.mxu0 %v2415
        %2433 = vmatprep.subr.bf16.mxu0 0
        %2434 = vmatpush1.bf16.msra.mxu0 %v2416
        %2435 = vmatprep.subr.bf16.mxu0 0
        %2436 = vmatpush1.bf16.msra.mxu0 %v2417
        %2437 = vmatprep.subr.bf16.mxu0 0
        %2438 = vmatpush1.bf16.msra.mxu0 %v2418
        %2439 = vmatprep.subr.bf16.mxu0 0
        %2440 = vmatpush1.bf16.msra.mxu0 %v2419
        %2441 = vmatprep.subr.bf16.mxu0 0
        %2442 = vmatpush1.bf16.msra.mxu0 0
        %2443 = vmatprep.subr.bf16.mxu0 0
        %2444 = vmatpush1.bf16.msra.mxu0 0
        %2445 = vmatprep.subr.bf16.mxu0 0
        %2446 = vmatpush1.bf16.msra.mxu0 0
        %2447 = vmatprep.subr.bf16.mxu0 0
        %2448 = vmatpush1.bf16.msra.mxu0 0
        %2449 = vmatprep.subr.bf16.mxu0 0
        %2450 = vmatpush1.bf16.msra.mxu0 0
        %2451 = vmatprep.subr.bf16.mxu0 0
        %2452 = vmatpush1.bf16.msra.mxu0 0
        %2453 = vmatprep.subr.bf16.mxu0 0
        %2454 = vmatpush1.bf16.msra.mxu0 0
        %2455 = vmatprep.subr.bf16.mxu0 0
        %2456 = vmatpush1.bf16.msra.mxu0 0
        %2457 = vmatprep.subr.bf16.mxu0 0
        %2458 = vmatpush1.bf16.msra.mxu0 0
        %2459 = vmatprep.subr.bf16.mxu0 0
        %2460 = vmatpush1.bf16.msra.mxu0 0
        %2461 = vmatprep.mubr.bf16.mxu0 0
        %2462 = vmatmul.mubr.bf16.gmra.mrb[0].mxu0 %v2427
        %v2463 = vpop.f32.mrb[0].mxu0
        %v2464 = vadd.f32 %v366, %v2463
        %v2465 = vpop.f32.mrb[0].mxu0
        %v2466 = vpop.f32.mrb[0].mxu0
        %v2467 = vpop.f32.mrb[0].mxu0
        %2468 = vdwg.mxu0
        %v2469 = vxor.u32 %v2464, 2147483648
        %v2470 = vmul.f32 %v2469, 1.442695
        %v2471 = vpow.pop %v2470
        %v2472 = vadd.f32 %v2471, 1.0
        %v2473 = vrcp.pop %v2472
        %v2474 = vmul.f32 1.0, %v2473
        %v2475 = vtanh.pop %v2464
        %v2476 = vmul.f32 %v2474, %v1934
        %2478 = vrot.lane.b32.xlu0 %v2475, 64
        %v2479 = vpop.permute.xlu0 %2478
        %v2481 = vmul.f32 %v2474, %v2479
        %2483 = vrot.lane.b32.xlu0 %v2481, 32
        %v2484 = vpop.permute.xlu0 %2483
        %v2486 = vadd.f32 %v2476, %v2484
        %v2487 = vtanh.pop %v2486
        %2489 = vrot.lane.b32.xlu0 %v2487, 64
        %v2490 = vpop.permute.xlu0 %2489
        %v2492 = vmul.f32 %v2474, %v2490
        %2494 = vrot.lane.b32.xlu0 %v2492, 32
        %v2495 = vpop.permute.xlu0 %2494
        %v2497 = vsel %vm251, %v2495, %v2370
        %v2498 = vld [vmem:[#allocation4 + $0xa8] sm:$0xf]
        %v2499 = vld [vmem:[#allocation4 + $0xac] sm:$0xf]
        %v2500 = vld [vmem:[#allocation4 + $0xb0] sm:$0xf]
        %v2501 = vld [vmem:[#allocation4 + $0xb4] sm:$0xf]
        %v2502 = vld [vmem:[#allocation4 + $0xb8] sm:$0xf]
        %v2503 = vld [vmem:[#allocation4 + $0xbc] sm:$0xf]
        %v2504 = vld [vmem:[#allocation4 + $0xc0] sm:$0xf]
        %v2505 = vld [vmem:[#allocation4 + $0xc4] sm:$0xf]
        %v2506 = vpack.c.bf16 %v2497, %v2497
        %v2515 = vunpack.c.l.b16 %v2498
        %v2516 = vunpack.c.l.b16 %v2499
        %v2517 = vunpack.c.l.b16 %v2500
        %v2518 = vunpack.c.l.b16 %v2501
        %v2519 = vunpack.c.l.b16 %v2502
        %v2520 = vunpack.c.l.b16 %v2503
        %v2521 = vunpack.c.l.b16 %v2504
        %v2522 = vunpack.c.l.b16 %v2505
        %v2523 = vpack.c.b16 %v2516, %v2515
        %v2524 = vpack.c.b16 %v2518, %v2517
        %v2525 = vpack.c.b16 %v2520, %v2519
        %v2526 = vpack.c.b16 %v2522, %v2521
        %v2532 = vsel %vm484, %v2506, 0
        %2534 = vmatprep.subr.bf16.mxu0 0
        %2535 = vmatpush1.bf16.msra.mxu0 %v2523
        %2536 = vmatprep.subr.bf16.mxu0 0
        %2537 = vmatpush1.bf16.msra.mxu0 %v2524
        %2538 = vmatprep.subr.bf16.mxu0 0
        %2539 = vmatpush1.bf16.msra.mxu0 %v2525
        %2540 = vmatprep.subr.bf16.mxu0 0
        %2541 = vmatpush1.bf16.msra.mxu0 %v2526
        %2542 = vmatprep.subr.bf16.mxu0 0
        %2543 = vmatpush1.bf16.msra.mxu0 0
        %2544 = vmatprep.subr.bf16.mxu0 0
        %2545 = vmatpush1.bf16.msra.mxu0 0
        %2546 = vmatprep.subr.bf16.mxu0 0
        %2547 = vmatpush1.bf16.msra.mxu0 0
        %2548 = vmatprep.subr.bf16.mxu0 0
        %2549 = vmatpush1.bf16.msra.mxu0 0
        %2550 = vmatprep.subr.bf16.mxu0 0
        %2551 = vmatpush1.bf16.msra.mxu0 0
        %2552 = vmatprep.subr.bf16.mxu0 0
        %2553 = vmatpush1.bf16.msra.mxu0 0
        %2554 = vmatprep.subr.bf16.mxu0 0
        %2555 = vmatpush1.bf16.msra.mxu0 0
        %2556 = vmatprep.subr.bf16.mxu0 0
        %2557 = vmatpush1.bf16.msra.mxu0 0
        %2558 = vmatprep.subr.bf16.mxu0 0
        %2559 = vmatpush1.bf16.msra.mxu0 0
        %2560 = vmatprep.subr.bf16.mxu0 0
        %2561 = vmatpush1.bf16.msra.mxu0 0
        %2562 = vmatprep.subr.bf16.mxu0 0
        %2563 = vmatpush1.bf16.msra.mxu0 0
        %2564 = vmatprep.subr.bf16.mxu0 0
        %2565 = vmatpush1.bf16.msra.mxu0 0
        %2566 = vmatprep.mubr.bf16.mxu0 0
        %2567 = vmatmul.mubr.bf16.gmra.mrb[0].mxu0 %v2532
        %v2568 = vpop.f32.mrb[0].mxu0
        %v2569 = vadd.f32 %v367, %v2568
        %v2570 = vpop.f32.mrb[0].mxu0
        %v2571 = vpop.f32.mrb[0].mxu0
        %v2572 = vpop.f32.mrb[0].mxu0
        %2573 = vdwg.mxu0
        %2574 = vst.msk [vmem:[%s225 + $0x3] sm:$0x1] %vm913, %v2569
        %v2576 = vlaneseq
        %v2577 = vshrl.u32 %v2576, 7
        %v2578 = vsub.s32 %v918, %v2577
        %v2579 = vrot.slane %v2355, %v2578
        %2581 = vst.msk [vmem:[%s225 + $0x3] sm:$0x1] %vm924, %v2579
        %v2582 = vld [vmem:[#allocation4 + $0x20] sm:$0xf]
        %v2583 = vld [vmem:[#allocation4 + $0x24] sm:$0xf]
        %v2584 = vpack.c.bf16 %v2569, %v2569
        %v2587 = vunpack.c.l.b16 %v2582
        %v2588 = vunpack.c.l.b16 %v2583
        %v2589 = vpack.c.b16 %v2588, %v2587
        %v2592 = vsel %vm377, %v2584, 0
        %2594 = vmatprep.subr.bf16.mxu0 0
        %2595 = vmatpush1.bf16.msra.mxu0 %v2589
        %2596 = vmatprep.subr.bf16.mxu0 0
        %2597 = vmatpush1.bf16.msra.mxu0 0
        %2598 = vmatprep.subr.bf16.mxu0 0
        %2599 = vmatpush1.bf16.msra.mxu0 0
        %2600 = vmatprep.subr.bf16.mxu0 0
        %2601 = vmatpush1.bf16.msra.mxu0 0
        %2602 = vmatprep.subr.bf16.mxu0 0
        %2603 = vmatpush1.bf16.msra.mxu0 0
        %2604 = vmatprep.subr.bf16.mxu0 0
        %2605 = vmatpush1.bf16.msra.mxu0 0
        %2606 = vmatprep.subr.bf16.mxu0 0
        %2607 = vmatpush1.bf16.msra.mxu0 0
        %2608 = vmatprep.subr.bf16.mxu0 0
        %2609 = vmatpush1.bf16.msra.mxu0 0
        %2610 = vmatprep.subr.bf16.mxu0 0
        %2611 = vmatpush1.bf16.msra.mxu0 0
        %2612 = vmatprep.subr.bf16.mxu0 0
        %2613 = vmatpush1.bf16.msra.mxu0 0
        %2614 = vmatprep.subr.bf16.mxu0 0
        %2615 = vmatpush1.bf16.msra.mxu0 0
        %2616 = vmatprep.subr.bf16.mxu0 0
        %2617 = vmatpush1.bf16.msra.mxu0 0
        %2618 = vmatprep.subr.bf16.mxu0 0
        %2619 = vmatpush1.bf16.msra.mxu0 0
        %2620 = vmatprep.subr.bf16.mxu0 0
        %2621 = vmatpush1.bf16.msra.mxu0 0
        %2622 = vmatprep.subr.bf16.mxu0 0
        %2623 = vmatpush1.bf16.msra.mxu0 0
        %2624 = vmatprep.subr.bf16.mxu0 0
        %2625 = vmatpush1.bf16.msra.mxu0 0
        %2626 = vmatprep.mubr.bf16.mxu0 0
        %2627 = vmatmul.mubr.bf16.gmra.mrb[0].mxu0 %v2592
        %v2628 = vpop.f32.mrb[0].mxu0
        %v2629 = vadd.f32 %v363, %v2628
        %v2630 = vpop.f32.mrb[0].mxu0
        %v2631 = vpop.f32.mrb[0].mxu0
        %v2632 = vpop.f32.mrb[0].mxu0
        %2633 = vdwg.mxu0
        %v2634 = vmax.f32 %v2629, 0.0
        %v2635 = vld [vmem:[#allocation4 + $0x28] sm:$0xf]
        %v2636 = vld [vmem:[#allocation4 + $0x2c] sm:$0xf]
        %v2637 = vld [vmem:[#allocation4 + $0x30] sm:$0xf]
        %v2638 = vld [vmem:[#allocation4 + $0x34] sm:$0xf]
        %v2639 = vpack.c.bf16 %v2634, %v2634
        %v2644 = vunpack.c.l.b16 %v2635
        %v2645 = vunpack.c.l.b16 %v2636
        %v2646 = vunpack.c.l.b16 %v2637
        %v2647 = vunpack.c.l.b16 %v2638
        %v2648 = vpack.c.b16 %v2645, %v2644
        %v2649 = vpack.c.b16 %v2647, %v2646
        %v2653 = vsel %vm251, %v2639, 0
        %2655 = vmatprep.subr.bf16.mxu0 0
        %2656 = vmatpush1.bf16.msra.mxu0 %v2648
        %2657 = vmatprep.subr.bf16.mxu0 0
        %2658 = vmatpush1.bf16.msra.mxu0 %v2649
        %2659 = vmatprep.subr.bf16.mxu0 0
        %2660 = vmatpush1.bf16.msra.mxu0 0
        %2661 = vmatprep.subr.bf16.mxu0 0
        %2662 = vmatpush1.bf16.msra.mxu0 0
        %2663 = vmatprep.subr.bf16.mxu0 0
        %2664 = vmatpush1.bf16.msra.mxu0 0
        %2665 = vmatprep.subr.bf16.mxu0 0
        %2666 = vmatpush1.bf16.msra.mxu0 0
        %2667 = vmatprep.subr.bf16.mxu0 0
        %2668 = vmatpush1.bf16.msra.mxu0 0
        %2669 = vmatprep.subr.bf16.mxu0 0
        %2670 = vmatpush1.bf16.msra.mxu0 0
        %2671 = vmatprep.subr.bf16.mxu0 0
        %2672 = vmatpush1.bf16.msra.mxu0 0
        %2673 = vmatprep.subr.bf16.mxu0 0
        %2674 = vmatpush1.bf16.msra.mxu0 0
        %2675 = vmatprep.subr.bf16.mxu0 0
        %2676 = vmatpush1.bf16.msra.mxu0 0
        %2677 = vmatprep.subr.bf16.mxu0 0
        %2678 = vmatpush1.bf16.msra.mxu0 0
        %2679 = vmatprep.subr.bf16.mxu0 0
        %2680 = vmatpush1.bf16.msra.mxu0 0
        %2681 = vmatprep.subr.bf16.mxu0 0
        %2682 = vmatpush1.bf16.msra.mxu0 0
        %2683 = vmatprep.subr.bf16.mxu0 0
        %2684 = vmatpush1.bf16.msra.mxu0 0
        %2685 = vmatprep.subr.bf16.mxu0 0
        %2686 = vmatpush1.bf16.msra.mxu0 0
        %2687 = vmatprep.mubr.bf16.mxu0 0
        %2688 = vmatmul.mubr.bf16.gmra.mrb[0].mxu0 %v2653
        %v2689 = vpop.f32.mrb[0].mxu0
        %v2690 = vadd.f32 %v364, %v2689
        %v2691 = vpop.f32.mrb[0].mxu0
        %v2692 = vpop.f32.mrb[0].mxu0
        %v2693 = vpop.f32.mrb[0].mxu0
        %2694 = vdwg.mxu0
        %v2695 = vmax.f32 %v2690, 0.0
        %2696 = vrot.lane.b32.xlu0 %v2264, 96
        %v2697 = vpop.permute.xlu0 %2696
        %v2699 = vsel %vm251, %v2695, %v2370
        %v2700 = vsel %vm484, %v2699, %v2697
        %v2701 = vld [vmem:[#allocation4 + $0x48] sm:$0xf]
        %v2702 = vld [vmem:[#allocation4 + $0x4c] sm:$0xf]
        %v2703 = vld [vmem:[#allocation4 + $0x50] sm:$0xf]
        %v2704 = vld [vmem:[#allocation4 + $0x54] sm:$0xf]
        %v2705 = vld [vmem:[#allocation4 + $0x58] sm:$0xf]
        %v2706 = vld [vmem:[#allocation4 + $0x5c] sm:$0xf]
        %v2707 = vld [vmem:[#allocation4 + $0x60] sm:$0xf]
        %v2708 = vld [vmem:[#allocation4 + $0x64] sm:$0xf]
        %v2709 = vld [vmem:[#allocation4 + $0x68] sm:$0xf]
        %v2710 = vld [vmem:[#allocation4 + $0x6c] sm:$0xf]
        %v2711 = vld [vmem:[#allocation4 + $0x70] sm:$0xf]
        %v2712 = vld [vmem:[#allocation4 + $0x74] sm:$0xf]
        %v2713 = vpack.c.bf16 %v2700, %v2700
        %v2726 = vunpack.c.l.b16 %v2701
        %v2727 = vunpack.c.l.b16 %v2702
        %v2728 = vunpack.c.l.b16 %v2703
        %v2729 = vunpack.c.l.b16 %v2704
        %v2730 = vunpack.c.l.b16 %v2705
        %v2731 = vunpack.c.l.b16 %v2706
        %v2732 = vunpack.c.l.b16 %v2707
        %v2733 = vunpack.c.l.b16 %v2708
        %v2734 = vunpack.c.l.b16 %v2709
        %v2735 = vunpack.c.l.b16 %v2710
        %v2736 = vunpack.c.l.b16 %v2711
        %v2737 = vunpack.c.l.b16 %v2712
        %v2738 = vpack.c.b16 %v2727, %v2726
        %v2739 = vpack.c.b16 %v2729, %v2728
        %v2740 = vpack.c.b16 %v2731, %v2730
        %v2741 = vpack.c.b16 %v2733, %v2732
        %v2742 = vpack.c.b16 %v2735, %v2734
        %v2743 = vpack.c.b16 %v2737, %v2736
        %v2751 = vsel %vm535, %v2713, 0
        %2753 = vmatprep.subr.bf16.mxu0 0
        %2754 = vmatpush1.bf16.msra.mxu0 %v2738
        %2755 = vmatprep.subr.bf16.mxu0 0
        %2756 = vmatpush1.bf16.msra.mxu0 %v2739
        %2757 = vmatprep.subr.bf16.mxu0 0
        %2758 = vmatpush1.bf16.msra.mxu0 %v2740
        %2759 = vmatprep.subr.bf16.mxu0 0
        %2760 = vmatpush1.bf16.msra.mxu0 %v2741
        %2761 = vmatprep.subr.bf16.mxu0 0
        %2762 = vmatpush1.bf16.msra.mxu0 %v2742
        %2763 = vmatprep.subr.bf16.mxu0 0
        %2764 = vmatpush1.bf16.msra.mxu0 %v2743
        %2765 = vmatprep.subr.bf16.mxu0 0
        %2766 = vmatpush1.bf16.msra.mxu0 0
        %2767 = vmatprep.subr.bf16.mxu0 0
        %2768 = vmatpush1.bf16.msra.mxu0 0
        %2769 = vmatprep.subr.bf16.mxu0 0
        %2770 = vmatpush1.bf16.msra.mxu0 0
        %2771 = vmatprep.subr.bf16.mxu0 0
        %2772 = vmatpush1.bf16.msra.mxu0 0
        %2773 = vmatprep.subr.bf16.mxu0 0
        %2774 = vmatpush1.bf16.msra.mxu0 0
        %2775 = vmatprep.subr.bf16.mxu0 0
        %2776 = vmatpush1.bf16.msra.mxu0 0
        %2777 = vmatprep.subr.bf16.mxu0 0
        %2778 = vmatpush1.bf16.msra.mxu0 0
        %2779 = vmatprep.subr.bf16.mxu0 0
        %2780 = vmatpush1.bf16.msra.mxu0 0
        %2781 = vmatprep.subr.bf16.mxu0 0
        %2782 = vmatpush1.bf16.msra.mxu0 0
        %2783 = vmatprep.subr.bf16.mxu0 0
        %2784 = vmatpush1.bf16.msra.mxu0 0
        %2785 = vmatprep.mubr.bf16.mxu0 0
        %2786 = vmatmul.mubr.bf16.gmra.mrb[0].mxu0 %v2751
        %v2787 = vpop.f32.mrb[0].mxu0
        %v2788 = vadd.f32 %v365, %v2787
        %v2789 = vpop.f32.mrb[0].mxu0
        %v2790 = vpop.f32.mrb[0].mxu0
        %v2791 = vpop.f32.mrb[0].mxu0
        %2792 = vdwg.mxu0
        %v2793 = vxor.u32 %v2788, 2147483648
        %v2794 = vmul.f32 %v2793, 1.442695
        %v2795 = vpow.pop %v2794
        %v2796 = vadd.f32 %v2795, 1.0
        %v2797 = vrcp.pop %v2796
        %v2798 = vmul.f32 1.0, %v2797
        %v2799 = vtanh.pop %v2788
        %v2800 = vmul.f32 %v2798, %v2258
        %2802 = vrot.lane.b32.xlu0 %v2799, 64
        %v2803 = vpop.permute.xlu0 %2802
        %v2805 = vmul.f32 %v2798, %v2803
        %2807 = vrot.lane.b32.xlu0 %v2805, 32
        %v2808 = vpop.permute.xlu0 %2807
        %v2810 = vadd.f32 %v2800, %v2808
        %v2811 = vtanh.pop %v2810
        %2813 = vrot.lane.b32.xlu0 %v2811, 64
        %v2814 = vpop.permute.xlu0 %2813
        %v2816 = vmul.f32 %v2798, %v2814
        %v2817 = vld [vmem:[#allocation4 + $0x38] sm:$0xf]
        %v2818 = vld [vmem:[#allocation4 + $0x3c] sm:$0xf]
        %v2819 = vld [vmem:[#allocation4 + $0x40] sm:$0xf]
        %v2820 = vld [vmem:[#allocation4 + $0x44] sm:$0xf]
        %v2821 = vpack.c.bf16 %v2816, %v2816
        %2823 = vrot.lane.b32.xlu0 %v2821, 32
        %v2824 = vpop.permute.xlu0 %2823
        %v2829 = vunpack.c.l.b16 %v2817
        %v2830 = vunpack.c.l.b16 %v2818
        %v2831 = vunpack.c.l.b16 %v2819
        %v2832 = vunpack.c.l.b16 %v2820
        %v2833 = vpack.c.b16 %v2830, %v2829
        %v2834 = vpack.c.b16 %v2832, %v2831
        %v2838 = vsel %vm251, %v2824, 0
        %2840 = vmatprep.subr.bf16.mxu0 0
        %2841 = vmatpush1.bf16.msra.mxu0 %v2833
        %2842 = vmatprep.subr.bf16.mxu0 0
        %2843 = vmatpush1.bf16.msra.mxu0 %v2834
        %2844 = vmatprep.subr.bf16.mxu0 0
        %2845 = vmatpush1.bf16.msra.mxu0 0
        %2846 = vmatprep.subr.bf16.mxu0 0
        %2847 = vmatpush1.bf16.msra.mxu0 0
        %2848 = vmatprep.subr.bf16.mxu0 0
        %2849 = vmatpush1.bf16.msra.mxu0 0
        %2850 = vmatprep.subr.bf16.mxu0 0
        %2851 = vmatpush1.bf16.msra.mxu0 0
        %2852 = vmatprep.subr.bf16.mxu0 0
        %2853 = vmatpush1.bf16.msra.mxu0 0
        %2854 = vmatprep.subr.bf16.mxu0 0
        %2855 = vmatpush1.bf16.msra.mxu0 0
        %2856 = vmatprep.subr.bf16.mxu0 0
        %2857 = vmatpush1.bf16.msra.mxu0 0
        %2858 = vmatprep.subr.bf16.mxu0 0
        %2859 = vmatpush1.bf16.msra.mxu0 0
        %2860 = vmatprep.subr.bf16.mxu0 0
        %2861 = vmatpush1.bf16.msra.mxu0 0
        %2862 = vmatprep.subr.bf16.mxu0 0
        %2863 = vmatpush1.bf16.msra.mxu0 0
        %2864 = vmatprep.subr.bf16.mxu0 0
        %2865 = vmatpush1.bf16.msra.mxu0 0
        %2866 = vmatprep.subr.bf16.mxu0 0
        %2867 = vmatpush1.bf16.msra.mxu0 0
        %2868 = vmatprep.subr.bf16.mxu0 0
        %2869 = vmatpush1.bf16.msra.mxu0 0
        %2870 = vmatprep.subr.bf16.mxu0 0
        %2871 = vmatpush1.bf16.msra.mxu0 0
        %2872 = vmatprep.mubr.bf16.mxu0 0
        %2873 = vmatmul.mubr.bf16.gmra.mrb[0].mxu0 %v2838
        %v2874 = vpop.f32.mrb[0].mxu0
        %v2875 = vadd.f32 0.0, %v2874
        %v2876 = vpop.f32.mrb[0].mxu0
        %v2877 = vpop.f32.mrb[0].mxu0
        %v2878 = vpop.f32.mrb[0].mxu0
        %2879 = vdwg.mxu0
        %v2880 = vlaneseq
        %v2881 = vshrl.u32 %v2880, 7
        %v2882 = vsub.s32 0, %v2881
        %v2883 = vrot.slane %v2875, %v2882
        %v2884 = vadd.f32 %v351, %v2883
        %v2885 = vtanh.pop %v2884
        %v2886 = vmul.f32 %v2885, %v675
        %v2887 = vsel %vm251, %v2886, 0.0
        %2888 = vadd.xlane.f32.xlu0 %v2887
        %v2889 = vpop.xlane.xlu0 %2888
        %v2890 = vsel %vm362, %v2889, -1e+30
        %v2891 = vrot.slane %v2890, 4
        %v2892 = vmax.f32 %v2890, %v2891
        %v2893 = vrot.slane %v2892, 2
        %v2894 = vmax.f32 %v2892, %v2893
        %v2895 = vrot.slane %v2894, 1
        %v2896 = vmax.f32 %v2894, %v2895
        %v2897 = vsub.f32 %v2890, %v2896
        %v2898 = vmul.f32 %v2897, 1.442695
        %v2899 = vpow.pop %v2898
        %v2900 = vrot.slane %v2899, 4
        %v2901 = vadd.f32 %v2899, %v2900
        %v2902 = vrot.slane %v2901, 2
        %v2903 = vadd.f32 %v2901, %v2902
        %v2904 = vrot.slane %v2903, 1
        %v2905 = vadd.f32 %v2903, %v2904
        %v2906 = vrcp.pop %v2905
        %v2907 = vmul.f32 %v2899, %v2906
        %v2908 = vmul.f32 %v2907, %v295
        %v2909 = vsel %vm251, %v2908, 0.0
        %v2910 = vrot.slane %v2909, 4
        %v2911 = vadd.f32 %v2909, %v2910
        %v2912 = vrot.slane %v2911, 2
        %v2913 = vadd.f32 %v2911, %v2912
        %v2914 = vrot.slane %v2913, 1
        %v2915 = vadd.f32 %v2913, %v2914
        %2917 = vrot.lane.b32.xlu0 %v2816, 32
        %v2918 = vpop.permute.xlu0 %2917
        %2921 = vrot.lane.b32.xlu0 %v2915, 32
        %v2922 = vpop.permute.xlu0 %2921
        %2924 = vrot.lane.b32.xlu0 %v2492, 96
        %v2925 = vpop.permute.xlu0 %2924
        %v2927 = vsel %vm251, %v2918, %v2922
        %v2928 = vsel %vm484, %v2927, %v2925
        %v2929 = vld [vmem:[#allocation4 + $0x78] sm:$0xf]
        %v2930 = vld [vmem:[#allocation4 + $0x7c] sm:$0xf]
        %v2931 = vld [vmem:[#allocation4 + $0x80] sm:$0xf]
        %v2932 = vld [vmem:[#allocation4 + $0x84] sm:$0xf]
        %v2933 = vld [vmem:[#allocation4 + $0x88] sm:$0xf]
        %v2934 = vld [vmem:[#allocation4 + $0x8c] sm:$0xf]
        %v2935 = vld [vmem:[#allocation4 + $0x90] sm:$0xf]
        %v2936 = vld [vmem:[#allocation4 + $0x94] sm:$0xf]
        %v2937 = vld [vmem:[#allocation4 + $0x98] sm:$0xf]
        %v2938 = vld [vmem:[#allocation4 + $0x9c] sm:$0xf]
        %v2939 = vld [vmem:[#allocation4 + $0xa0] sm:$0xf]
        %v2940 = vld [vmem:[#allocation4 + $0xa4] sm:$0xf]
        %v2941 = vpack.c.bf16 %v2928, %v2928
        %v2954 = vunpack.c.l.b16 %v2929
        %v2955 = vunpack.c.l.b16 %v2930
        %v2956 = vunpack.c.l.b16 %v2931
        %v2957 = vunpack.c.l.b16 %v2932
        %v2958 = vunpack.c.l.b16 %v2933
        %v2959 = vunpack.c.l.b16 %v2934
        %v2960 = vunpack.c.l.b16 %v2935
        %v2961 = vunpack.c.l.b16 %v2936
        %v2962 = vunpack.c.l.b16 %v2937
        %v2963 = vunpack.c.l.b16 %v2938
        %v2964 = vunpack.c.l.b16 %v2939
        %v2965 = vunpack.c.l.b16 %v2940
        %v2966 = vpack.c.b16 %v2955, %v2954
        %v2967 = vpack.c.b16 %v2957, %v2956
        %v2968 = vpack.c.b16 %v2959, %v2958
        %v2969 = vpack.c.b16 %v2961, %v2960
        %v2970 = vpack.c.b16 %v2963, %v2962
        %v2971 = vpack.c.b16 %v2965, %v2964
        %v2979 = vsel %vm535, %v2941, 0
        %2981 = vmatprep.subr.bf16.mxu0 0
        %2982 = vmatpush1.bf16.msra.mxu0 %v2966
        %2983 = vmatprep.subr.bf16.mxu0 0
        %2984 = vmatpush1.bf16.msra.mxu0 %v2967
        %2985 = vmatprep.subr.bf16.mxu0 0
        %2986 = vmatpush1.bf16.msra.mxu0 %v2968
        %2987 = vmatprep.subr.bf16.mxu0 0
        %2988 = vmatpush1.bf16.msra.mxu0 %v2969
        %2989 = vmatprep.subr.bf16.mxu0 0
        %2990 = vmatpush1.bf16.msra.mxu0 %v2970
        %2991 = vmatprep.subr.bf16.mxu0 0
        %2992 = vmatpush1.bf16.msra.mxu0 %v2971
        %2993 = vmatprep.subr.bf16.mxu0 0
        %2994 = vmatpush1.bf16.msra.mxu0 0
        %2995 = vmatprep.subr.bf16.mxu0 0
        %2996 = vmatpush1.bf16.msra.mxu0 0
        %2997 = vmatprep.subr.bf16.mxu0 0
        %2998 = vmatpush1.bf16.msra.mxu0 0
        %2999 = vmatprep.subr.bf16.mxu0 0
        %3000 = vmatpush1.bf16.msra.mxu0 0
        %3001 = vmatprep.subr.bf16.mxu0 0
        %3002 = vmatpush1.bf16.msra.mxu0 0
        %3003 = vmatprep.subr.bf16.mxu0 0
        %3004 = vmatpush1.bf16.msra.mxu0 0
        %3005 = vmatprep.subr.bf16.mxu0 0
        %3006 = vmatpush1.bf16.msra.mxu0 0
        %3007 = vmatprep.subr.bf16.mxu0 0
        %3008 = vmatpush1.bf16.msra.mxu0 0
        %3009 = vmatprep.subr.bf16.mxu0 0
        %3010 = vmatpush1.bf16.msra.mxu0 0
        %3011 = vmatprep.subr.bf16.mxu0 0
        %3012 = vmatpush1.bf16.msra.mxu0 0
        %3013 = vmatprep.mubr.bf16.mxu0 0
        %3014 = vmatmul.mubr.bf16.gmra.mrb[0].mxu0 %v2979
        %v3015 = vpop.f32.mrb[0].mxu0
        %v3016 = vadd.f32 %v366, %v3015
        %v3017 = vpop.f32.mrb[0].mxu0
        %v3018 = vpop.f32.mrb[0].mxu0
        %v3019 = vpop.f32.mrb[0].mxu0
        %3020 = vdwg.mxu0
        %v3021 = vxor.u32 %v3016, 2147483648
        %v3022 = vmul.f32 %v3021, 1.442695
        %v3023 = vpow.pop %v3022
        %v3024 = vadd.f32 %v3023, 1.0
        %v3025 = vrcp.pop %v3024
        %v3026 = vmul.f32 1.0, %v3025
        %v3027 = vtanh.pop %v3016
        %v3028 = vmul.f32 %v3026, %v2486
        %3030 = vrot.lane.b32.xlu0 %v3027, 64
        %v3031 = vpop.permute.xlu0 %3030
        %v3033 = vmul.f32 %v3026, %v3031
        %3035 = vrot.lane.b32.xlu0 %v3033, 32
        %v3036 = vpop.permute.xlu0 %3035
        %v3038 = vadd.f32 %v3028, %v3036
        %v3039 = vtanh.pop %v3038
        %3041 = vrot.lane.b32.xlu0 %v3039, 64
        %v3042 = vpop.permute.xlu0 %3041
        %v3044 = vmul.f32 %v3026, %v3042
        %3046 = vrot.lane.b32.xlu0 %v3044, 32
        %v3047 = vpop.permute.xlu0 %3046
        %v3049 = vsel %vm251, %v3047, %v2922
        %v3050 = vld [vmem:[#allocation4 + $0xa8] sm:$0xf]
        %v3051 = vld [vmem:[#allocation4 + $0xac] sm:$0xf]
        %v3052 = vld [vmem:[#allocation4 + $0xb0] sm:$0xf]
        %v3053 = vld [vmem:[#allocation4 + $0xb4] sm:$0xf]
        %v3054 = vld [vmem:[#allocation4 + $0xb8] sm:$0xf]
        %v3055 = vld [vmem:[#allocation4 + $0xbc] sm:$0xf]
        %v3056 = vld [vmem:[#allocation4 + $0xc0] sm:$0xf]
        %v3057 = vld [vmem:[#allocation4 + $0xc4] sm:$0xf]
        %v3058 = vpack.c.bf16 %v3049, %v3049
        %v3067 = vunpack.c.l.b16 %v3050
        %v3068 = vunpack.c.l.b16 %v3051
        %v3069 = vunpack.c.l.b16 %v3052
        %v3070 = vunpack.c.l.b16 %v3053
        %v3071 = vunpack.c.l.b16 %v3054
        %v3072 = vunpack.c.l.b16 %v3055
        %v3073 = vunpack.c.l.b16 %v3056
        %v3074 = vunpack.c.l.b16 %v3057
        %v3075 = vpack.c.b16 %v3068, %v3067
        %v3076 = vpack.c.b16 %v3070, %v3069
        %v3077 = vpack.c.b16 %v3072, %v3071
        %v3078 = vpack.c.b16 %v3074, %v3073
        %v3084 = vsel %vm484, %v3058, 0
        %3086 = vmatprep.subr.bf16.mxu0 0
        %3087 = vmatpush1.bf16.msra.mxu0 %v3075
        %3088 = vmatprep.subr.bf16.mxu0 0
        %3089 = vmatpush1.bf16.msra.mxu0 %v3076
        %3090 = vmatprep.subr.bf16.mxu0 0
        %3091 = vmatpush1.bf16.msra.mxu0 %v3077
        %3092 = vmatprep.subr.bf16.mxu0 0
        %3093 = vmatpush1.bf16.msra.mxu0 %v3078
        %3094 = vmatprep.subr.bf16.mxu0 0
        %3095 = vmatpush1.bf16.msra.mxu0 0
        %3096 = vmatprep.subr.bf16.mxu0 0
        %3097 = vmatpush1.bf16.msra.mxu0 0
        %3098 = vmatprep.subr.bf16.mxu0 0
        %3099 = vmatpush1.bf16.msra.mxu0 0
        %3100 = vmatprep.subr.bf16.mxu0 0
        %3101 = vmatpush1.bf16.msra.mxu0 0
        %3102 = vmatprep.subr.bf16.mxu0 0
        %3103 = vmatpush1.bf16.msra.mxu0 0
        %3104 = vmatprep.subr.bf16.mxu0 0
        %3105 = vmatpush1.bf16.msra.mxu0 0
        %3106 = vmatprep.subr.bf16.mxu0 0
        %3107 = vmatpush1.bf16.msra.mxu0 0
        %3108 = vmatprep.subr.bf16.mxu0 0
        %3109 = vmatpush1.bf16.msra.mxu0 0
        %3110 = vmatprep.subr.bf16.mxu0 0
        %3111 = vmatpush1.bf16.msra.mxu0 0
        %3112 = vmatprep.subr.bf16.mxu0 0
        %3113 = vmatpush1.bf16.msra.mxu0 0
        %3114 = vmatprep.subr.bf16.mxu0 0
        %3115 = vmatpush1.bf16.msra.mxu0 0
        %3116 = vmatprep.subr.bf16.mxu0 0
        %3117 = vmatpush1.bf16.msra.mxu0 0
        %3118 = vmatprep.mubr.bf16.mxu0 0
        %3119 = vmatmul.mubr.bf16.gmra.mrb[0].mxu0 %v3084
        %v3120 = vpop.f32.mrb[0].mxu0
        %v3121 = vadd.f32 %v367, %v3120
        %v3122 = vpop.f32.mrb[0].mxu0
        %v3123 = vpop.f32.mrb[0].mxu0
        %v3124 = vpop.f32.mrb[0].mxu0
        %3125 = vdwg.mxu0
        %3126 = vst.msk [vmem:[%s225 + $0x4] sm:$0x1] %vm913, %v3121
        %v3128 = vlaneseq
        %v3129 = vshrl.u32 %v3128, 7
        %v3130 = vsub.s32 %v918, %v3129
        %v3131 = vrot.slane %v2907, %v3130
        %3133 = vst.msk [vmem:[%s225 + $0x4] sm:$0x1] %vm924, %v3131
        %v3134 = vld [vmem:[#allocation4 + $0x20] sm:$0xf]
        %v3135 = vld [vmem:[#allocation4 + $0x24] sm:$0xf]
        %v3136 = vpack.c.bf16 %v3121, %v3121
        %v3139 = vunpack.c.l.b16 %v3134
        %v3140 = vunpack.c.l.b16 %v3135
        %v3141 = vpack.c.b16 %v3140, %v3139
        %v3144 = vsel %vm377, %v3136, 0
        %3146 = vmatprep.subr.bf16.mxu0 0
        %3147 = vmatpush1.bf16.msra.mxu0 %v3141
        %3148 = vmatprep.subr.bf16.mxu0 0
        %3149 = vmatpush1.bf16.msra.mxu0 0
        %3150 = vmatprep.subr.bf16.mxu0 0
        %3151 = vmatpush1.bf16.msra.mxu0 0
        %3152 = vmatprep.subr.bf16.mxu0 0
        %3153 = vmatpush1.bf16.msra.mxu0 0
        %3154 = vmatprep.subr.bf16.mxu0 0
        %3155 = vmatpush1.bf16.msra.mxu0 0
        %3156 = vmatprep.subr.bf16.mxu0 0
        %3157 = vmatpush1.bf16.msra.mxu0 0
        %3158 = vmatprep.subr.bf16.mxu0 0
        %3159 = vmatpush1.bf16.msra.mxu0 0
        %3160 = vmatprep.subr.bf16.mxu0 0
        %3161 = vmatpush1.bf16.msra.mxu0 0
        %3162 = vmatprep.subr.bf16.mxu0 0
        %3163 = vmatpush1.bf16.msra.mxu0 0
        %3164 = vmatprep.subr.bf16.mxu0 0
        %3165 = vmatpush1.bf16.msra.mxu0 0
        %3166 = vmatprep.subr.bf16.mxu0 0
        %3167 = vmatpush1.bf16.msra.mxu0 0
        %3168 = vmatprep.subr.bf16.mxu0 0
        %3169 = vmatpush1.bf16.msra.mxu0 0
        %3170 = vmatprep.subr.bf16.mxu0 0
        %3171 = vmatpush1.bf16.msra.mxu0 0
        %3172 = vmatprep.subr.bf16.mxu0 0
        %3173 = vmatpush1.bf16.msra.mxu0 0
        %3174 = vmatprep.subr.bf16.mxu0 0
        %3175 = vmatpush1.bf16.msra.mxu0 0
        %3176 = vmatprep.subr.bf16.mxu0 0
        %3177 = vmatpush1.bf16.msra.mxu0 0
        %3178 = vmatprep.mubr.bf16.mxu0 0
        %3179 = vmatmul.mubr.bf16.gmra.mrb[0].mxu0 %v3144
        %v3180 = vpop.f32.mrb[0].mxu0
        %v3181 = vadd.f32 %v363, %v3180
        %v3182 = vpop.f32.mrb[0].mxu0
        %v3183 = vpop.f32.mrb[0].mxu0
        %v3184 = vpop.f32.mrb[0].mxu0
        %3185 = vdwg.mxu0
        %v3186 = vmax.f32 %v3181, 0.0
        %v3187 = vld [vmem:[#allocation4 + $0x28] sm:$0xf]
        %v3188 = vld [vmem:[#allocation4 + $0x2c] sm:$0xf]
        %v3189 = vld [vmem:[#allocation4 + $0x30] sm:$0xf]
        %v3190 = vld [vmem:[#allocation4 + $0x34] sm:$0xf]
        %v3191 = vpack.c.bf16 %v3186, %v3186
        %v3196 = vunpack.c.l.b16 %v3187
        %v3197 = vunpack.c.l.b16 %v3188
        %v3198 = vunpack.c.l.b16 %v3189
        %v3199 = vunpack.c.l.b16 %v3190
        %v3200 = vpack.c.b16 %v3197, %v3196
        %v3201 = vpack.c.b16 %v3199, %v3198
        %v3205 = vsel %vm251, %v3191, 0
        %3207 = vmatprep.subr.bf16.mxu0 0
        %3208 = vmatpush1.bf16.msra.mxu0 %v3200
        %3209 = vmatprep.subr.bf16.mxu0 0
        %3210 = vmatpush1.bf16.msra.mxu0 %v3201
        %3211 = vmatprep.subr.bf16.mxu0 0
        %3212 = vmatpush1.bf16.msra.mxu0 0
        %3213 = vmatprep.subr.bf16.mxu0 0
        %3214 = vmatpush1.bf16.msra.mxu0 0
        %3215 = vmatprep.subr.bf16.mxu0 0
        %3216 = vmatpush1.bf16.msra.mxu0 0
        %3217 = vmatprep.subr.bf16.mxu0 0
        %3218 = vmatpush1.bf16.msra.mxu0 0
        %3219 = vmatprep.subr.bf16.mxu0 0
        %3220 = vmatpush1.bf16.msra.mxu0 0
        %3221 = vmatprep.subr.bf16.mxu0 0
        %3222 = vmatpush1.bf16.msra.mxu0 0
        %3223 = vmatprep.subr.bf16.mxu0 0
        %3224 = vmatpush1.bf16.msra.mxu0 0
        %3225 = vmatprep.subr.bf16.mxu0 0
        %3226 = vmatpush1.bf16.msra.mxu0 0
        %3227 = vmatprep.subr.bf16.mxu0 0
        %3228 = vmatpush1.bf16.msra.mxu0 0
        %3229 = vmatprep.subr.bf16.mxu0 0
        %3230 = vmatpush1.bf16.msra.mxu0 0
        %3231 = vmatprep.subr.bf16.mxu0 0
        %3232 = vmatpush1.bf16.msra.mxu0 0
        %3233 = vmatprep.subr.bf16.mxu0 0
        %3234 = vmatpush1.bf16.msra.mxu0 0
        %3235 = vmatprep.subr.bf16.mxu0 0
        %3236 = vmatpush1.bf16.msra.mxu0 0
        %3237 = vmatprep.subr.bf16.mxu0 0
        %3238 = vmatpush1.bf16.msra.mxu0 0
        %3239 = vmatprep.mubr.bf16.mxu0 0
        %3240 = vmatmul.mubr.bf16.gmra.mrb[0].mxu0 %v3205
        %v3241 = vpop.f32.mrb[0].mxu0
        %v3242 = vadd.f32 %v364, %v3241
        %v3243 = vpop.f32.mrb[0].mxu0
        %v3244 = vpop.f32.mrb[0].mxu0
        %v3245 = vpop.f32.mrb[0].mxu0
        %3246 = vdwg.mxu0
        %v3247 = vmax.f32 %v3242, 0.0
        %3248 = vrot.lane.b32.xlu0 %v2816, 96
        %v3249 = vpop.permute.xlu0 %3248
        %v3251 = vsel %vm251, %v3247, %v2922
        %v3252 = vsel %vm484, %v3251, %v3249
        %v3253 = vld [vmem:[#allocation4 + $0x48] sm:$0xf]
        %v3254 = vld [vmem:[#allocation4 + $0x4c] sm:$0xf]
        %v3255 = vld [vmem:[#allocation4 + $0x50] sm:$0xf]
        %v3256 = vld [vmem:[#allocation4 + $0x54] sm:$0xf]
        %v3257 = vld [vmem:[#allocation4 + $0x58] sm:$0xf]
        %v3258 = vld [vmem:[#allocation4 + $0x5c] sm:$0xf]
        %v3259 = vld [vmem:[#allocation4 + $0x60] sm:$0xf]
        %v3260 = vld [vmem:[#allocation4 + $0x64] sm:$0xf]
        %v3261 = vld [vmem:[#allocation4 + $0x68] sm:$0xf]
        %v3262 = vld [vmem:[#allocation4 + $0x6c] sm:$0xf]
        %v3263 = vld [vmem:[#allocation4 + $0x70] sm:$0xf]
        %v3264 = vld [vmem:[#allocation4 + $0x74] sm:$0xf]
        %v3265 = vpack.c.bf16 %v3252, %v3252
        %v3278 = vunpack.c.l.b16 %v3253
        %v3279 = vunpack.c.l.b16 %v3254
        %v3280 = vunpack.c.l.b16 %v3255
        %v3281 = vunpack.c.l.b16 %v3256
        %v3282 = vunpack.c.l.b16 %v3257
        %v3283 = vunpack.c.l.b16 %v3258
        %v3284 = vunpack.c.l.b16 %v3259
        %v3285 = vunpack.c.l.b16 %v3260
        %v3286 = vunpack.c.l.b16 %v3261
        %v3287 = vunpack.c.l.b16 %v3262
        %v3288 = vunpack.c.l.b16 %v3263
        %v3289 = vunpack.c.l.b16 %v3264
        %v3290 = vpack.c.b16 %v3279, %v3278
        %v3291 = vpack.c.b16 %v3281, %v3280
        %v3292 = vpack.c.b16 %v3283, %v3282
        %v3293 = vpack.c.b16 %v3285, %v3284
        %v3294 = vpack.c.b16 %v3287, %v3286
        %v3295 = vpack.c.b16 %v3289, %v3288
        %v3303 = vsel %vm535, %v3265, 0
        %3305 = vmatprep.subr.bf16.mxu0 0
        %3306 = vmatpush1.bf16.msra.mxu0 %v3290
        %3307 = vmatprep.subr.bf16.mxu0 0
        %3308 = vmatpush1.bf16.msra.mxu0 %v3291
        %3309 = vmatprep.subr.bf16.mxu0 0
        %3310 = vmatpush1.bf16.msra.mxu0 %v3292
        %3311 = vmatprep.subr.bf16.mxu0 0
        %3312 = vmatpush1.bf16.msra.mxu0 %v3293
        %3313 = vmatprep.subr.bf16.mxu0 0
        %3314 = vmatpush1.bf16.msra.mxu0 %v3294
        %3315 = vmatprep.subr.bf16.mxu0 0
        %3316 = vmatpush1.bf16.msra.mxu0 %v3295
        %3317 = vmatprep.subr.bf16.mxu0 0
        %3318 = vmatpush1.bf16.msra.mxu0 0
        %3319 = vmatprep.subr.bf16.mxu0 0
        %3320 = vmatpush1.bf16.msra.mxu0 0
        %3321 = vmatprep.subr.bf16.mxu0 0
        %3322 = vmatpush1.bf16.msra.mxu0 0
        %3323 = vmatprep.subr.bf16.mxu0 0
        %3324 = vmatpush1.bf16.msra.mxu0 0
        %3325 = vmatprep.subr.bf16.mxu0 0
        %3326 = vmatpush1.bf16.msra.mxu0 0
        %3327 = vmatprep.subr.bf16.mxu0 0
        %3328 = vmatpush1.bf16.msra.mxu0 0
        %3329 = vmatprep.subr.bf16.mxu0 0
        %3330 = vmatpush1.bf16.msra.mxu0 0
        %3331 = vmatprep.subr.bf16.mxu0 0
        %3332 = vmatpush1.bf16.msra.mxu0 0
        %3333 = vmatprep.subr.bf16.mxu0 0
        %3334 = vmatpush1.bf16.msra.mxu0 0
        %3335 = vmatprep.subr.bf16.mxu0 0
        %3336 = vmatpush1.bf16.msra.mxu0 0
        %3337 = vmatprep.mubr.bf16.mxu0 0
        %3338 = vmatmul.mubr.bf16.gmra.mrb[0].mxu0 %v3303
        %v3339 = vpop.f32.mrb[0].mxu0
        %v3340 = vadd.f32 %v365, %v3339
        %v3341 = vpop.f32.mrb[0].mxu0
        %v3342 = vpop.f32.mrb[0].mxu0
        %v3343 = vpop.f32.mrb[0].mxu0
        %3344 = vdwg.mxu0
        %v3345 = vxor.u32 %v3340, 2147483648
        %v3346 = vmul.f32 %v3345, 1.442695
        %v3347 = vpow.pop %v3346
        %v3348 = vadd.f32 %v3347, 1.0
        %v3349 = vrcp.pop %v3348
        %v3350 = vmul.f32 1.0, %v3349
        %v3351 = vtanh.pop %v3340
        %v3352 = vmul.f32 %v3350, %v2810
        %3354 = vrot.lane.b32.xlu0 %v3351, 64
        %v3355 = vpop.permute.xlu0 %3354
        %v3357 = vmul.f32 %v3350, %v3355
        %3359 = vrot.lane.b32.xlu0 %v3357, 32
        %v3360 = vpop.permute.xlu0 %3359
        %v3362 = vadd.f32 %v3352, %v3360
        %v3363 = vtanh.pop %v3362
        %3365 = vrot.lane.b32.xlu0 %v3363, 64
        %v3366 = vpop.permute.xlu0 %3365
        %v3368 = vmul.f32 %v3350, %v3366
        %v3369 = vld [vmem:[#allocation4 + $0x38] sm:$0xf]
        %v3370 = vld [vmem:[#allocation4 + $0x3c] sm:$0xf]
        %v3371 = vld [vmem:[#allocation4 + $0x40] sm:$0xf]
        %v3372 = vld [vmem:[#allocation4 + $0x44] sm:$0xf]
        %v3373 = vpack.c.bf16 %v3368, %v3368
        %3375 = vrot.lane.b32.xlu0 %v3373, 32
        %v3376 = vpop.permute.xlu0 %3375
        %v3381 = vunpack.c.l.b16 %v3369
        %v3382 = vunpack.c.l.b16 %v3370
        %v3383 = vunpack.c.l.b16 %v3371
        %v3384 = vunpack.c.l.b16 %v3372
        %v3385 = vpack.c.b16 %v3382, %v3381
        %v3386 = vpack.c.b16 %v3384, %v3383
        %v3390 = vsel %vm251, %v3376, 0
        %3392 = vmatprep.subr.bf16.mxu0 0
        %3393 = vmatpush1.bf16.msra.mxu0 %v3385
        %3394 = vmatprep.subr.bf16.mxu0 0
        %3395 = vmatpush1.bf16.msra.mxu0 %v3386
        %3396 = vmatprep.subr.bf16.mxu0 0
        %3397 = vmatpush1.bf16.msra.mxu0 0
        %3398 = vmatprep.subr.bf16.mxu0 0
        %3399 = vmatpush1.bf16.msra.mxu0 0
        %3400 = vmatprep.subr.bf16.mxu0 0
        %3401 = vmatpush1.bf16.msra.mxu0 0
        %3402 = vmatprep.subr.bf16.mxu0 0
        %3403 = vmatpush1.bf16.msra.mxu0 0
        %3404 = vmatprep.subr.bf16.mxu0 0
        %3405 = vmatpush1.bf16.msra.mxu0 0
        %3406 = vmatprep.subr.bf16.mxu0 0
        %3407 = vmatpush1.bf16.msra.mxu0 0
        %3408 = vmatprep.subr.bf16.mxu0 0
        %3409 = vmatpush1.bf16.msra.mxu0 0
        %3410 = vmatprep.subr.bf16.mxu0 0
        %3411 = vmatpush1.bf16.msra.mxu0 0
        %3412 = vmatprep.subr.bf16.mxu0 0
        %3413 = vmatpush1.bf16.msra.mxu0 0
        %3414 = vmatprep.subr.bf16.mxu0 0
        %3415 = vmatpush1.bf16.msra.mxu0 0
        %3416 = vmatprep.subr.bf16.mxu0 0
        %3417 = vmatpush1.bf16.msra.mxu0 0
        %3418 = vmatprep.subr.bf16.mxu0 0
        %3419 = vmatpush1.bf16.msra.mxu0 0
        %3420 = vmatprep.subr.bf16.mxu0 0
        %3421 = vmatpush1.bf16.msra.mxu0 0
        %3422 = vmatprep.subr.bf16.mxu0 0
        %3423 = vmatpush1.bf16.msra.mxu0 0
        %3424 = vmatprep.mubr.bf16.mxu0 0
        %3425 = vmatmul.mubr.bf16.gmra.mrb[0].mxu0 %v3390
        %v3426 = vpop.f32.mrb[0].mxu0
        %v3427 = vadd.f32 0.0, %v3426
        %v3428 = vpop.f32.mrb[0].mxu0
        %v3429 = vpop.f32.mrb[0].mxu0
        %v3430 = vpop.f32.mrb[0].mxu0
        %3431 = vdwg.mxu0
        %v3432 = vlaneseq
        %v3433 = vshrl.u32 %v3432, 7
        %v3434 = vsub.s32 0, %v3433
        %v3435 = vrot.slane %v3427, %v3434
        %v3436 = vadd.f32 %v351, %v3435
        %v3437 = vtanh.pop %v3436
        %v3438 = vmul.f32 %v3437, %v675
        %v3439 = vsel %vm251, %v3438, 0.0
        %3440 = vadd.xlane.f32.xlu0 %v3439
        %v3441 = vpop.xlane.xlu0 %3440
        %v3442 = vsel %vm362, %v3441, -1e+30
        %v3443 = vrot.slane %v3442, 4
        %v3444 = vmax.f32 %v3442, %v3443
        %v3445 = vrot.slane %v3444, 2
        %v3446 = vmax.f32 %v3444, %v3445
        %v3447 = vrot.slane %v3446, 1
        %v3448 = vmax.f32 %v3446, %v3447
        %v3449 = vsub.f32 %v3442, %v3448
        %v3450 = vmul.f32 %v3449, 1.442695
        %v3451 = vpow.pop %v3450
        %v3452 = vrot.slane %v3451, 4
        %v3453 = vadd.f32 %v3451, %v3452
        %v3454 = vrot.slane %v3453, 2
        %v3455 = vadd.f32 %v3453, %v3454
        %v3456 = vrot.slane %v3455, 1
        %v3457 = vadd.f32 %v3455, %v3456
        %v3458 = vrcp.pop %v3457
        %v3459 = vmul.f32 %v3451, %v3458
        %v3460 = vmul.f32 %v3459, %v295
        %v3461 = vsel %vm251, %v3460, 0.0
        %v3462 = vrot.slane %v3461, 4
        %v3463 = vadd.f32 %v3461, %v3462
        %v3464 = vrot.slane %v3463, 2
        %v3465 = vadd.f32 %v3463, %v3464
        %v3466 = vrot.slane %v3465, 1
        %v3467 = vadd.f32 %v3465, %v3466
        %3469 = vrot.lane.b32.xlu0 %v3368, 32
        %v3470 = vpop.permute.xlu0 %3469
        %3473 = vrot.lane.b32.xlu0 %v3467, 32
        %v3474 = vpop.permute.xlu0 %3473
        %3476 = vrot.lane.b32.xlu0 %v3044, 96
        %v3477 = vpop.permute.xlu0 %3476
        %v3479 = vsel %vm251, %v3470, %v3474
        %v3480 = vsel %vm484, %v3479, %v3477
        %v3481 = vld [vmem:[#allocation4 + $0x78] sm:$0xf]
        %v3482 = vld [vmem:[#allocation4 + $0x7c] sm:$0xf]
        %v3483 = vld [vmem:[#allocation4 + $0x80] sm:$0xf]
        %v3484 = vld [vmem:[#allocation4 + $0x84] sm:$0xf]
        %v3485 = vld [vmem:[#allocation4 + $0x88] sm:$0xf]
        %v3486 = vld [vmem:[#allocation4 + $0x8c] sm:$0xf]
        %v3487 = vld [vmem:[#allocation4 + $0x90] sm:$0xf]
        %v3488 = vld [vmem:[#allocation4 + $0x94] sm:$0xf]
        %v3489 = vld [vmem:[#allocation4 + $0x98] sm:$0xf]
        %v3490 = vld [vmem:[#allocation4 + $0x9c] sm:$0xf]
        %v3491 = vld [vmem:[#allocation4 + $0xa0] sm:$0xf]
        %v3492 = vld [vmem:[#allocation4 + $0xa4] sm:$0xf]
        %v3493 = vpack.c.bf16 %v3480, %v3480
        %v3506 = vunpack.c.l.b16 %v3481
        %v3507 = vunpack.c.l.b16 %v3482
        %v3508 = vunpack.c.l.b16 %v3483
        %v3509 = vunpack.c.l.b16 %v3484
        %v3510 = vunpack.c.l.b16 %v3485
        %v3511 = vunpack.c.l.b16 %v3486
        %v3512 = vunpack.c.l.b16 %v3487
        %v3513 = vunpack.c.l.b16 %v3488
        %v3514 = vunpack.c.l.b16 %v3489
        %v3515 = vunpack.c.l.b16 %v3490
        %v3516 = vunpack.c.l.b16 %v3491
        %v3517 = vunpack.c.l.b16 %v3492
        %v3518 = vpack.c.b16 %v3507, %v3506
        %v3519 = vpack.c.b16 %v3509, %v3508
        %v3520 = vpack.c.b16 %v3511, %v3510
        %v3521 = vpack.c.b16 %v3513, %v3512
        %v3522 = vpack.c.b16 %v3515, %v3514
        %v3523 = vpack.c.b16 %v3517, %v3516
        %v3531 = vsel %vm535, %v3493, 0
        %3533 = vmatprep.subr.bf16.mxu0 0
        %3534 = vmatpush1.bf16.msra.mxu0 %v3518
        %3535 = vmatprep.subr.bf16.mxu0 0
        %3536 = vmatpush1.bf16.msra.mxu0 %v3519
        %3537 = vmatprep.subr.bf16.mxu0 0
        %3538 = vmatpush1.bf16.msra.mxu0 %v3520
        %3539 = vmatprep.subr.bf16.mxu0 0
        %3540 = vmatpush1.bf16.msra.mxu0 %v3521
        %3541 = vmatprep.subr.bf16.mxu0 0
        %3542 = vmatpush1.bf16.msra.mxu0 %v3522
        %3543 = vmatprep.subr.bf16.mxu0 0
        %3544 = vmatpush1.bf16.msra.mxu0 %v3523
        %3545 = vmatprep.subr.bf16.mxu0 0
        %3546 = vmatpush1.bf16.msra.mxu0 0
        %3547 = vmatprep.subr.bf16.mxu0 0
        %3548 = vmatpush1.bf16.msra.mxu0 0
        %3549 = vmatprep.subr.bf16.mxu0 0
        %3550 = vmatpush1.bf16.msra.mxu0 0
        %3551 = vmatprep.subr.bf16.mxu0 0
        %3552 = vmatpush1.bf16.msra.mxu0 0
        %3553 = vmatprep.subr.bf16.mxu0 0
        %3554 = vmatpush1.bf16.msra.mxu0 0
        %3555 = vmatprep.subr.bf16.mxu0 0
        %3556 = vmatpush1.bf16.msra.mxu0 0
        %3557 = vmatprep.subr.bf16.mxu0 0
        %3558 = vmatpush1.bf16.msra.mxu0 0
        %3559 = vmatprep.subr.bf16.mxu0 0
        %3560 = vmatpush1.bf16.msra.mxu0 0
        %3561 = vmatprep.subr.bf16.mxu0 0
        %3562 = vmatpush1.bf16.msra.mxu0 0
        %3563 = vmatprep.subr.bf16.mxu0 0
        %3564 = vmatpush1.bf16.msra.mxu0 0
        %3565 = vmatprep.mubr.bf16.mxu0 0
        %3566 = vmatmul.mubr.bf16.gmra.mrb[0].mxu0 %v3531
        %v3567 = vpop.f32.mrb[0].mxu0
        %v3568 = vadd.f32 %v366, %v3567
        %v3569 = vpop.f32.mrb[0].mxu0
        %v3570 = vpop.f32.mrb[0].mxu0
        %v3571 = vpop.f32.mrb[0].mxu0
        %3572 = vdwg.mxu0
        %v3573 = vxor.u32 %v3568, 2147483648
        %v3574 = vmul.f32 %v3573, 1.442695
        %v3575 = vpow.pop %v3574
        %v3576 = vadd.f32 %v3575, 1.0
        %v3577 = vrcp.pop %v3576
        %v3578 = vmul.f32 1.0, %v3577
        %v3579 = vtanh.pop %v3568
        %v3580 = vmul.f32 %v3578, %v3038
        %3582 = vrot.lane.b32.xlu0 %v3579, 64
        %v3583 = vpop.permute.xlu0 %3582
        %v3585 = vmul.f32 %v3578, %v3583
        %3587 = vrot.lane.b32.xlu0 %v3585, 32
        %v3588 = vpop.permute.xlu0 %3587
        %v3590 = vadd.f32 %v3580, %v3588
        %v3591 = vtanh.pop %v3590
        %3593 = vrot.lane.b32.xlu0 %v3591, 64
        %v3594 = vpop.permute.xlu0 %3593
        %v3596 = vmul.f32 %v3578, %v3594
        %3598 = vrot.lane.b32.xlu0 %v3596, 32
        %v3599 = vpop.permute.xlu0 %3598
        %v3601 = vsel %vm251, %v3599, %v3474
        %v3602 = vld [vmem:[#allocation4 + $0xa8] sm:$0xf]
        %v3603 = vld [vmem:[#allocation4 + $0xac] sm:$0xf]
        %v3604 = vld [vmem:[#allocation4 + $0xb0] sm:$0xf]
        %v3605 = vld [vmem:[#allocation4 + $0xb4] sm:$0xf]
        %v3606 = vld [vmem:[#allocation4 + $0xb8] sm:$0xf]
        %v3607 = vld [vmem:[#allocation4 + $0xbc] sm:$0xf]
        %v3608 = vld [vmem:[#allocation4 + $0xc0] sm:$0xf]
        %v3609 = vld [vmem:[#allocation4 + $0xc4] sm:$0xf]
        %v3610 = vpack.c.bf16 %v3601, %v3601
        %v3619 = vunpack.c.l.b16 %v3602
        %v3620 = vunpack.c.l.b16 %v3603
        %v3621 = vunpack.c.l.b16 %v3604
        %v3622 = vunpack.c.l.b16 %v3605
        %v3623 = vunpack.c.l.b16 %v3606
        %v3624 = vunpack.c.l.b16 %v3607
        %v3625 = vunpack.c.l.b16 %v3608
        %v3626 = vunpack.c.l.b16 %v3609
        %v3627 = vpack.c.b16 %v3620, %v3619
        %v3628 = vpack.c.b16 %v3622, %v3621
        %v3629 = vpack.c.b16 %v3624, %v3623
        %v3630 = vpack.c.b16 %v3626, %v3625
        %v3636 = vsel %vm484, %v3610, 0
        %3638 = vmatprep.subr.bf16.mxu0 0
        %3639 = vmatpush1.bf16.msra.mxu0 %v3627
        %3640 = vmatprep.subr.bf16.mxu0 0
        %3641 = vmatpush1.bf16.msra.mxu0 %v3628
        %3642 = vmatprep.subr.bf16.mxu0 0
        %3643 = vmatpush1.bf16.msra.mxu0 %v3629
        %3644 = vmatprep.subr.bf16.mxu0 0
        %3645 = vmatpush1.bf16.msra.mxu0 %v3630
        %3646 = vmatprep.subr.bf16.mxu0 0
        %3647 = vmatpush1.bf16.msra.mxu0 0
        %3648 = vmatprep.subr.bf16.mxu0 0
        %3649 = vmatpush1.bf16.msra.mxu0 0
        %3650 = vmatprep.subr.bf16.mxu0 0
        %3651 = vmatpush1.bf16.msra.mxu0 0
        %3652 = vmatprep.subr.bf16.mxu0 0
        %3653 = vmatpush1.bf16.msra.mxu0 0
        %3654 = vmatprep.subr.bf16.mxu0 0
        %3655 = vmatpush1.bf16.msra.mxu0 0
        %3656 = vmatprep.subr.bf16.mxu0 0
        %3657 = vmatpush1.bf16.msra.mxu0 0
        %3658 = vmatprep.subr.bf16.mxu0 0
        %3659 = vmatpush1.bf16.msra.mxu0 0
        %3660 = vmatprep.subr.bf16.mxu0 0
        %3661 = vmatpush1.bf16.msra.mxu0 0
        %3662 = vmatprep.subr.bf16.mxu0 0
        %3663 = vmatpush1.bf16.msra.mxu0 0
        %3664 = vmatprep.subr.bf16.mxu0 0
        %3665 = vmatpush1.bf16.msra.mxu0 0
        %3666 = vmatprep.subr.bf16.mxu0 0
        %3667 = vmatpush1.bf16.msra.mxu0 0
        %3668 = vmatprep.subr.bf16.mxu0 0
        %3669 = vmatpush1.bf16.msra.mxu0 0
        %3670 = vmatprep.mubr.bf16.mxu0 0
        %3671 = vmatmul.mubr.bf16.gmra.mrb[0].mxu0 %v3636
        %v3672 = vpop.f32.mrb[0].mxu0
        %v3673 = vadd.f32 %v367, %v3672
        %v3674 = vpop.f32.mrb[0].mxu0
        %v3675 = vpop.f32.mrb[0].mxu0
        %v3676 = vpop.f32.mrb[0].mxu0
        %3677 = vdwg.mxu0
        %3678 = vst.msk [vmem:[%s225 + $0x5] sm:$0x1] %vm913, %v3673
        %v3680 = vlaneseq
        %v3681 = vshrl.u32 %v3680, 7
        %v3682 = vsub.s32 %v918, %v3681
        %v3683 = vrot.slane %v3459, %v3682
        %3685 = vst.msk [vmem:[%s225 + $0x5] sm:$0x1] %vm924, %v3683
        %v3686 = vld [vmem:[#allocation4 + $0x20] sm:$0xf]
        %v3687 = vld [vmem:[#allocation4 + $0x24] sm:$0xf]
        %v3688 = vpack.c.bf16 %v3673, %v3673
        %v3691 = vunpack.c.l.b16 %v3686
        %v3692 = vunpack.c.l.b16 %v3687
        %v3693 = vpack.c.b16 %v3692, %v3691
        %v3696 = vsel %vm377, %v3688, 0
        %3698 = vmatprep.subr.bf16.mxu0 0
        %3699 = vmatpush1.bf16.msra.mxu0 %v3693
        %3700 = vmatprep.subr.bf16.mxu0 0
        %3701 = vmatpush1.bf16.msra.mxu0 0
        %3702 = vmatprep.subr.bf16.mxu0 0
        %3703 = vmatpush1.bf16.msra.mxu0 0
        %3704 = vmatprep.subr.bf16.mxu0 0
        %3705 = vmatpush1.bf16.msra.mxu0 0
        %3706 = vmatprep.subr.bf16.mxu0 0
        %3707 = vmatpush1.bf16.msra.mxu0 0
        %3708 = vmatprep.subr.bf16.mxu0 0
        %3709 = vmatpush1.bf16.msra.mxu0 0
        %3710 = vmatprep.subr.bf16.mxu0 0
        %3711 = vmatpush1.bf16.msra.mxu0 0
        %3712 = vmatprep.subr.bf16.mxu0 0
        %3713 = vmatpush1.bf16.msra.mxu0 0
        %3714 = vmatprep.subr.bf16.mxu0 0
        %3715 = vmatpush1.bf16.msra.mxu0 0
        %3716 = vmatprep.subr.bf16.mxu0 0
        %3717 = vmatpush1.bf16.msra.mxu0 0
        %3718 = vmatprep.subr.bf16.mxu0 0
        %3719 = vmatpush1.bf16.msra.mxu0 0
        %3720 = vmatprep.subr.bf16.mxu0 0
        %3721 = vmatpush1.bf16.msra.mxu0 0
        %3722 = vmatprep.subr.bf16.mxu0 0
        %3723 = vmatpush1.bf16.msra.mxu0 0
        %3724 = vmatprep.subr.bf16.mxu0 0
        %3725 = vmatpush1.bf16.msra.mxu0 0
        %3726 = vmatprep.subr.bf16.mxu0 0
        %3727 = vmatpush1.bf16.msra.mxu0 0
        %3728 = vmatprep.subr.bf16.mxu0 0
        %3729 = vmatpush1.bf16.msra.mxu0 0
        %3730 = vmatprep.mubr.bf16.mxu0 0
        %3731 = vmatmul.mubr.bf16.gmra.mrb[0].mxu0 %v3696
        %v3732 = vpop.f32.mrb[0].mxu0
        %v3733 = vadd.f32 %v363, %v3732
        %v3734 = vpop.f32.mrb[0].mxu0
        %v3735 = vpop.f32.mrb[0].mxu0
        %v3736 = vpop.f32.mrb[0].mxu0
        %3737 = vdwg.mxu0
        %v3738 = vmax.f32 %v3733, 0.0
        %v3739 = vld [vmem:[#allocation4 + $0x28] sm:$0xf]
        %v3740 = vld [vmem:[#allocation4 + $0x2c] sm:$0xf]
        %v3741 = vld [vmem:[#allocation4 + $0x30] sm:$0xf]
        %v3742 = vld [vmem:[#allocation4 + $0x34] sm:$0xf]
        %v3743 = vpack.c.bf16 %v3738, %v3738
        %v3748 = vunpack.c.l.b16 %v3739
        %v3749 = vunpack.c.l.b16 %v3740
        %v3750 = vunpack.c.l.b16 %v3741
        %v3751 = vunpack.c.l.b16 %v3742
        %v3752 = vpack.c.b16 %v3749, %v3748
        %v3753 = vpack.c.b16 %v3751, %v3750
        %v3757 = vsel %vm251, %v3743, 0
        %3759 = vmatprep.subr.bf16.mxu0 0
        %3760 = vmatpush1.bf16.msra.mxu0 %v3752
        %3761 = vmatprep.subr.bf16.mxu0 0
        %3762 = vmatpush1.bf16.msra.mxu0 %v3753
        %3763 = vmatprep.subr.bf16.mxu0 0
        %3764 = vmatpush1.bf16.msra.mxu0 0
        %3765 = vmatprep.subr.bf16.mxu0 0
        %3766 = vmatpush1.bf16.msra.mxu0 0
        %3767 = vmatprep.subr.bf16.mxu0 0
        %3768 = vmatpush1.bf16.msra.mxu0 0
        %3769 = vmatprep.subr.bf16.mxu0 0
        %3770 = vmatpush1.bf16.msra.mxu0 0
        %3771 = vmatprep.subr.bf16.mxu0 0
        %3772 = vmatpush1.bf16.msra.mxu0 0
        %3773 = vmatprep.subr.bf16.mxu0 0
        %3774 = vmatpush1.bf16.msra.mxu0 0
        %3775 = vmatprep.subr.bf16.mxu0 0
        %3776 = vmatpush1.bf16.msra.mxu0 0
        %3777 = vmatprep.subr.bf16.mxu0 0
        %3778 = vmatpush1.bf16.msra.mxu0 0
        %3779 = vmatprep.subr.bf16.mxu0 0
        %3780 = vmatpush1.bf16.msra.mxu0 0
        %3781 = vmatprep.subr.bf16.mxu0 0
        %3782 = vmatpush1.bf16.msra.mxu0 0
        %3783 = vmatprep.subr.bf16.mxu0 0
        %3784 = vmatpush1.bf16.msra.mxu0 0
        %3785 = vmatprep.subr.bf16.mxu0 0
        %3786 = vmatpush1.bf16.msra.mxu0 0
        %3787 = vmatprep.subr.bf16.mxu0 0
        %3788 = vmatpush1.bf16.msra.mxu0 0
        %3789 = vmatprep.subr.bf16.mxu0 0
        %3790 = vmatpush1.bf16.msra.mxu0 0
        %3791 = vmatprep.mubr.bf16.mxu0 0
        %3792 = vmatmul.mubr.bf16.gmra.mrb[0].mxu0 %v3757
        %v3793 = vpop.f32.mrb[0].mxu0
        %v3794 = vadd.f32 %v364, %v3793
        %v3795 = vpop.f32.mrb[0].mxu0
        %v3796 = vpop.f32.mrb[0].mxu0
        %v3797 = vpop.f32.mrb[0].mxu0
        %3798 = vdwg.mxu0
        %v3799 = vmax.f32 %v3794, 0.0
        %3800 = vrot.lane.b32.xlu0 %v3368, 96
        %v3801 = vpop.permute.xlu0 %3800
        %v3803 = vsel %vm251, %v3799, %v3474
        %v3804 = vsel %vm484, %v3803, %v3801
        %v3805 = vld [vmem:[#allocation4 + $0x48] sm:$0xf]
        %v3806 = vld [vmem:[#allocation4 + $0x4c] sm:$0xf]
        %v3807 = vld [vmem:[#allocation4 + $0x50] sm:$0xf]
        %v3808 = vld [vmem:[#allocation4 + $0x54] sm:$0xf]
        %v3809 = vld [vmem:[#allocation4 + $0x58] sm:$0xf]
        %v3810 = vld [vmem:[#allocation4 + $0x5c] sm:$0xf]
        %v3811 = vld [vmem:[#allocation4 + $0x60] sm:$0xf]
        %v3812 = vld [vmem:[#allocation4 + $0x64] sm:$0xf]
        %v3813 = vld [vmem:[#allocation4 + $0x68] sm:$0xf]
        %v3814 = vld [vmem:[#allocation4 + $0x6c] sm:$0xf]
        %v3815 = vld [vmem:[#allocation4 + $0x70] sm:$0xf]
        %v3816 = vld [vmem:[#allocation4 + $0x74] sm:$0xf]
        %v3817 = vpack.c.bf16 %v3804, %v3804
        %v3830 = vunpack.c.l.b16 %v3805
        %v3831 = vunpack.c.l.b16 %v3806
        %v3832 = vunpack.c.l.b16 %v3807
        %v3833 = vunpack.c.l.b16 %v3808
        %v3834 = vunpack.c.l.b16 %v3809
        %v3835 = vunpack.c.l.b16 %v3810
        %v3836 = vunpack.c.l.b16 %v3811
        %v3837 = vunpack.c.l.b16 %v3812
        %v3838 = vunpack.c.l.b16 %v3813
        %v3839 = vunpack.c.l.b16 %v3814
        %v3840 = vunpack.c.l.b16 %v3815
        %v3841 = vunpack.c.l.b16 %v3816
        %v3842 = vpack.c.b16 %v3831, %v3830
        %v3843 = vpack.c.b16 %v3833, %v3832
        %v3844 = vpack.c.b16 %v3835, %v3834
        %v3845 = vpack.c.b16 %v3837, %v3836
        %v3846 = vpack.c.b16 %v3839, %v3838
        %v3847 = vpack.c.b16 %v3841, %v3840
        %v3855 = vsel %vm535, %v3817, 0
        %3857 = vmatprep.subr.bf16.mxu0 0
        %3858 = vmatpush1.bf16.msra.mxu0 %v3842
        %3859 = vmatprep.subr.bf16.mxu0 0
        %3860 = vmatpush1.bf16.msra.mxu0 %v3843
        %3861 = vmatprep.subr.bf16.mxu0 0
        %3862 = vmatpush1.bf16.msra.mxu0 %v3844
        %3863 = vmatprep.subr.bf16.mxu0 0
        %3864 = vmatpush1.bf16.msra.mxu0 %v3845
        %3865 = vmatprep.subr.bf16.mxu0 0
        %3866 = vmatpush1.bf16.msra.mxu0 %v3846
        %3867 = vmatprep.subr.bf16.mxu0 0
        %3868 = vmatpush1.bf16.msra.mxu0 %v3847
        %3869 = vmatprep.subr.bf16.mxu0 0
        %3870 = vmatpush1.bf16.msra.mxu0 0
        %3871 = vmatprep.subr.bf16.mxu0 0
        %3872 = vmatpush1.bf16.msra.mxu0 0
        %3873 = vmatprep.subr.bf16.mxu0 0
        %3874 = vmatpush1.bf16.msra.mxu0 0
        %3875 = vmatprep.subr.bf16.mxu0 0
        %3876 = vmatpush1.bf16.msra.mxu0 0
        %3877 = vmatprep.subr.bf16.mxu0 0
        %3878 = vmatpush1.bf16.msra.mxu0 0
        %3879 = vmatprep.subr.bf16.mxu0 0
        %3880 = vmatpush1.bf16.msra.mxu0 0
        %3881 = vmatprep.subr.bf16.mxu0 0
        %3882 = vmatpush1.bf16.msra.mxu0 0
        %3883 = vmatprep.subr.bf16.mxu0 0
        %3884 = vmatpush1.bf16.msra.mxu0 0
        %3885 = vmatprep.subr.bf16.mxu0 0
        %3886 = vmatpush1.bf16.msra.mxu0 0
        %3887 = vmatprep.subr.bf16.mxu0 0
        %3888 = vmatpush1.bf16.msra.mxu0 0
        %3889 = vmatprep.mubr.bf16.mxu0 0
        %3890 = vmatmul.mubr.bf16.gmra.mrb[0].mxu0 %v3855
        %v3891 = vpop.f32.mrb[0].mxu0
        %v3892 = vadd.f32 %v365, %v3891
        %v3893 = vpop.f32.mrb[0].mxu0
        %v3894 = vpop.f32.mrb[0].mxu0
        %v3895 = vpop.f32.mrb[0].mxu0
        %3896 = vdwg.mxu0
        %v3897 = vxor.u32 %v3892, 2147483648
        %v3898 = vmul.f32 %v3897, 1.442695
        %v3899 = vpow.pop %v3898
        %v3900 = vadd.f32 %v3899, 1.0
        %v3901 = vrcp.pop %v3900
        %v3902 = vmul.f32 1.0, %v3901
        %v3903 = vtanh.pop %v3892
        %v3904 = vmul.f32 %v3902, %v3362
        %3906 = vrot.lane.b32.xlu0 %v3903, 64
        %v3907 = vpop.permute.xlu0 %3906
        %v3909 = vmul.f32 %v3902, %v3907
        %3911 = vrot.lane.b32.xlu0 %v3909, 32
        %v3912 = vpop.permute.xlu0 %3911
        %v3914 = vadd.f32 %v3904, %v3912
        %v3915 = vtanh.pop %v3914
        %3917 = vrot.lane.b32.xlu0 %v3915, 64
        %v3918 = vpop.permute.xlu0 %3917
        %v3920 = vmul.f32 %v3902, %v3918
        %v3921 = vld [vmem:[#allocation4 + $0x38] sm:$0xf]
        %v3922 = vld [vmem:[#allocation4 + $0x3c] sm:$0xf]
        %v3923 = vld [vmem:[#allocation4 + $0x40] sm:$0xf]
        %v3924 = vld [vmem:[#allocation4 + $0x44] sm:$0xf]
        %v3925 = vpack.c.bf16 %v3920, %v3920
        %3927 = vrot.lane.b32.xlu0 %v3925, 32
        %v3928 = vpop.permute.xlu0 %3927
        %v3933 = vunpack.c.l.b16 %v3921
        %v3934 = vunpack.c.l.b16 %v3922
        %v3935 = vunpack.c.l.b16 %v3923
        %v3936 = vunpack.c.l.b16 %v3924
        %v3937 = vpack.c.b16 %v3934, %v3933
        %v3938 = vpack.c.b16 %v3936, %v3935
        %v3942 = vsel %vm251, %v3928, 0
        %3944 = vmatprep.subr.bf16.mxu0 0
        %3945 = vmatpush1.bf16.msra.mxu0 %v3937
        %3946 = vmatprep.subr.bf16.mxu0 0
        %3947 = vmatpush1.bf16.msra.mxu0 %v3938
        %3948 = vmatprep.subr.bf16.mxu0 0
        %3949 = vmatpush1.bf16.msra.mxu0 0
        %3950 = vmatprep.subr.bf16.mxu0 0
        %3951 = vmatpush1.bf16.msra.mxu0 0
        %3952 = vmatprep.subr.bf16.mxu0 0
        %3953 = vmatpush1.bf16.msra.mxu0 0
        %3954 = vmatprep.subr.bf16.mxu0 0
        %3955 = vmatpush1.bf16.msra.mxu0 0
        %3956 = vmatprep.subr.bf16.mxu0 0
        %3957 = vmatpush1.bf16.msra.mxu0 0
        %3958 = vmatprep.subr.bf16.mxu0 0
        %3959 = vmatpush1.bf16.msra.mxu0 0
        %3960 = vmatprep.subr.bf16.mxu0 0
        %3961 = vmatpush1.bf16.msra.mxu0 0
        %3962 = vmatprep.subr.bf16.mxu0 0
        %3963 = vmatpush1.bf16.msra.mxu0 0
        %3964 = vmatprep.subr.bf16.mxu0 0
        %3965 = vmatpush1.bf16.msra.mxu0 0
        %3966 = vmatprep.subr.bf16.mxu0 0
        %3967 = vmatpush1.bf16.msra.mxu0 0
        %3968 = vmatprep.subr.bf16.mxu0 0
        %3969 = vmatpush1.bf16.msra.mxu0 0
        %3970 = vmatprep.subr.bf16.mxu0 0
        %3971 = vmatpush1.bf16.msra.mxu0 0
        %3972 = vmatprep.subr.bf16.mxu0 0
        %3973 = vmatpush1.bf16.msra.mxu0 0
        %3974 = vmatprep.subr.bf16.mxu0 0
        %3975 = vmatpush1.bf16.msra.mxu0 0
        %3976 = vmatprep.mubr.bf16.mxu0 0
        %3977 = vmatmul.mubr.bf16.gmra.mrb[0].mxu0 %v3942
        %v3978 = vpop.f32.mrb[0].mxu0
        %v3979 = vadd.f32 0.0, %v3978
        %v3980 = vpop.f32.mrb[0].mxu0
        %v3981 = vpop.f32.mrb[0].mxu0
        %v3982 = vpop.f32.mrb[0].mxu0
        %3983 = vdwg.mxu0
        %v3984 = vlaneseq
        %v3985 = vshrl.u32 %v3984, 7
        %v3986 = vsub.s32 0, %v3985
        %v3987 = vrot.slane %v3979, %v3986
        %v3988 = vadd.f32 %v351, %v3987
        %v3989 = vtanh.pop %v3988
        %v3990 = vmul.f32 %v3989, %v675
        %v3991 = vsel %vm251, %v3990, 0.0
        %3992 = vadd.xlane.f32.xlu0 %v3991
        %v3993 = vpop.xlane.xlu0 %3992
        %v3994 = vsel %vm362, %v3993, -1e+30
        %v3995 = vrot.slane %v3994, 4
        %v3996 = vmax.f32 %v3994, %v3995
        %v3997 = vrot.slane %v3996, 2
        %v3998 = vmax.f32 %v3996, %v3997
        %v3999 = vrot.slane %v3998, 1
        %v4000 = vmax.f32 %v3998, %v3999
        %v4001 = vsub.f32 %v3994, %v4000
        %v4002 = vmul.f32 %v4001, 1.442695
        %v4003 = vpow.pop %v4002
        %v4004 = vrot.slane %v4003, 4
        %v4005 = vadd.f32 %v4003, %v4004
        %v4006 = vrot.slane %v4005, 2
        %v4007 = vadd.f32 %v4005, %v4006
        %v4008 = vrot.slane %v4007, 1
        %v4009 = vadd.f32 %v4007, %v4008
        %v4010 = vrcp.pop %v4009
        %v4011 = vmul.f32 %v4003, %v4010
        %v4012 = vmul.f32 %v4011, %v295
        %v4013 = vsel %vm251, %v4012, 0.0
        %v4014 = vrot.slane %v4013, 4
        %v4015 = vadd.f32 %v4013, %v4014
        %v4016 = vrot.slane %v4015, 2
        %v4017 = vadd.f32 %v4015, %v4016
        %v4018 = vrot.slane %v4017, 1
        %v4019 = vadd.f32 %v4017, %v4018
        %4021 = vrot.lane.b32.xlu0 %v3920, 32
        %v4022 = vpop.permute.xlu0 %4021
        %4025 = vrot.lane.b32.xlu0 %v4019, 32
        %v4026 = vpop.permute.xlu0 %4025
        %4028 = vrot.lane.b32.xlu0 %v3596, 96
        %v4029 = vpop.permute.xlu0 %4028
        %v4031 = vsel %vm251, %v4022, %v4026
        %v4032 = vsel %vm484, %v4031, %v4029
        %v4033 = vld [vmem:[#allocation4 + $0x78] sm:$0xf]
        %v4034 = vld [vmem:[#allocation4 + $0x7c] sm:$0xf]
        %v4035 = vld [vmem:[#allocation4 + $0x80] sm:$0xf]
        %v4036 = vld [vmem:[#allocation4 + $0x84] sm:$0xf]
        %v4037 = vld [vmem:[#allocation4 + $0x88] sm:$0xf]
        %v4038 = vld [vmem:[#allocation4 + $0x8c] sm:$0xf]
        %v4039 = vld [vmem:[#allocation4 + $0x90] sm:$0xf]
        %v4040 = vld [vmem:[#allocation4 + $0x94] sm:$0xf]
        %v4041 = vld [vmem:[#allocation4 + $0x98] sm:$0xf]
        %v4042 = vld [vmem:[#allocation4 + $0x9c] sm:$0xf]
        %v4043 = vld [vmem:[#allocation4 + $0xa0] sm:$0xf]
        %v4044 = vld [vmem:[#allocation4 + $0xa4] sm:$0xf]
        %v4045 = vpack.c.bf16 %v4032, %v4032
        %v4058 = vunpack.c.l.b16 %v4033
        %v4059 = vunpack.c.l.b16 %v4034
        %v4060 = vunpack.c.l.b16 %v4035
        %v4061 = vunpack.c.l.b16 %v4036
        %v4062 = vunpack.c.l.b16 %v4037
        %v4063 = vunpack.c.l.b16 %v4038
        %v4064 = vunpack.c.l.b16 %v4039
        %v4065 = vunpack.c.l.b16 %v4040
        %v4066 = vunpack.c.l.b16 %v4041
        %v4067 = vunpack.c.l.b16 %v4042
        %v4068 = vunpack.c.l.b16 %v4043
        %v4069 = vunpack.c.l.b16 %v4044
        %v4070 = vpack.c.b16 %v4059, %v4058
        %v4071 = vpack.c.b16 %v4061, %v4060
        %v4072 = vpack.c.b16 %v4063, %v4062
        %v4073 = vpack.c.b16 %v4065, %v4064
        %v4074 = vpack.c.b16 %v4067, %v4066
        %v4075 = vpack.c.b16 %v4069, %v4068
        %v4083 = vsel %vm535, %v4045, 0
        %4085 = vmatprep.subr.bf16.mxu0 0
        %4086 = vmatpush1.bf16.msra.mxu0 %v4070
        %4087 = vmatprep.subr.bf16.mxu0 0
        %4088 = vmatpush1.bf16.msra.mxu0 %v4071
        %4089 = vmatprep.subr.bf16.mxu0 0
        %4090 = vmatpush1.bf16.msra.mxu0 %v4072
        %4091 = vmatprep.subr.bf16.mxu0 0
        %4092 = vmatpush1.bf16.msra.mxu0 %v4073
        %4093 = vmatprep.subr.bf16.mxu0 0
        %4094 = vmatpush1.bf16.msra.mxu0 %v4074
        %4095 = vmatprep.subr.bf16.mxu0 0
        %4096 = vmatpush1.bf16.msra.mxu0 %v4075
        %4097 = vmatprep.subr.bf16.mxu0 0
        %4098 = vmatpush1.bf16.msra.mxu0 0
        %4099 = vmatprep.subr.bf16.mxu0 0
        %4100 = vmatpush1.bf16.msra.mxu0 0
        %4101 = vmatprep.subr.bf16.mxu0 0
        %4102 = vmatpush1.bf16.msra.mxu0 0
        %4103 = vmatprep.subr.bf16.mxu0 0
        %4104 = vmatpush1.bf16.msra.mxu0 0
        %4105 = vmatprep.subr.bf16.mxu0 0
        %4106 = vmatpush1.bf16.msra.mxu0 0
        %4107 = vmatprep.subr.bf16.mxu0 0
        %4108 = vmatpush1.bf16.msra.mxu0 0
        %4109 = vmatprep.subr.bf16.mxu0 0
        %4110 = vmatpush1.bf16.msra.mxu0 0
        %4111 = vmatprep.subr.bf16.mxu0 0
        %4112 = vmatpush1.bf16.msra.mxu0 0
        %4113 = vmatprep.subr.bf16.mxu0 0
        %4114 = vmatpush1.bf16.msra.mxu0 0
        %4115 = vmatprep.subr.bf16.mxu0 0
        %4116 = vmatpush1.bf16.msra.mxu0 0
        %4117 = vmatprep.mubr.bf16.mxu0 0
        %4118 = vmatmul.mubr.bf16.gmra.mrb[0].mxu0 %v4083
        %v4119 = vpop.f32.mrb[0].mxu0
        %v4120 = vadd.f32 %v366, %v4119
        %v4121 = vpop.f32.mrb[0].mxu0
        %v4122 = vpop.f32.mrb[0].mxu0
        %v4123 = vpop.f32.mrb[0].mxu0
        %4124 = vdwg.mxu0
        %v4125 = vxor.u32 %v4120, 2147483648
        %v4126 = vmul.f32 %v4125, 1.442695
        %v4127 = vpow.pop %v4126
        %v4128 = vadd.f32 %v4127, 1.0
        %v4129 = vrcp.pop %v4128
        %v4130 = vmul.f32 1.0, %v4129
        %v4131 = vtanh.pop %v4120
        %v4132 = vmul.f32 %v4130, %v3590
        %4134 = vrot.lane.b32.xlu0 %v4131, 64
        %v4135 = vpop.permute.xlu0 %4134
        %v4137 = vmul.f32 %v4130, %v4135
        %4139 = vrot.lane.b32.xlu0 %v4137, 32
        %v4140 = vpop.permute.xlu0 %4139
        %v4142 = vadd.f32 %v4132, %v4140
        %v4143 = vtanh.pop %v4142
        %4145 = vrot.lane.b32.xlu0 %v4143, 64
        %v4146 = vpop.permute.xlu0 %4145
        %v4148 = vmul.f32 %v4130, %v4146
        %4150 = vrot.lane.b32.xlu0 %v4148, 32
        %v4151 = vpop.permute.xlu0 %4150
        %v4153 = vsel %vm251, %v4151, %v4026
        %v4154 = vld [vmem:[#allocation4 + $0xa8] sm:$0xf]
        %v4155 = vld [vmem:[#allocation4 + $0xac] sm:$0xf]
        %v4156 = vld [vmem:[#allocation4 + $0xb0] sm:$0xf]
        %v4157 = vld [vmem:[#allocation4 + $0xb4] sm:$0xf]
        %v4158 = vld [vmem:[#allocation4 + $0xb8] sm:$0xf]
        %v4159 = vld [vmem:[#allocation4 + $0xbc] sm:$0xf]
        %v4160 = vld [vmem:[#allocation4 + $0xc0] sm:$0xf]
        %v4161 = vld [vmem:[#allocation4 + $0xc4] sm:$0xf]
        %v4162 = vpack.c.bf16 %v4153, %v4153
        %v4171 = vunpack.c.l.b16 %v4154
        %v4172 = vunpack.c.l.b16 %v4155
        %v4173 = vunpack.c.l.b16 %v4156
        %v4174 = vunpack.c.l.b16 %v4157
        %v4175 = vunpack.c.l.b16 %v4158
        %v4176 = vunpack.c.l.b16 %v4159
        %v4177 = vunpack.c.l.b16 %v4160
        %v4178 = vunpack.c.l.b16 %v4161
        %v4179 = vpack.c.b16 %v4172, %v4171
        %v4180 = vpack.c.b16 %v4174, %v4173
        %v4181 = vpack.c.b16 %v4176, %v4175
        %v4182 = vpack.c.b16 %v4178, %v4177
        %v4188 = vsel %vm484, %v4162, 0
        %4190 = vmatprep.subr.bf16.mxu0 0
        %4191 = vmatpush1.bf16.msra.mxu0 %v4179
        %4192 = vmatprep.subr.bf16.mxu0 0
        %4193 = vmatpush1.bf16.msra.mxu0 %v4180
        %4194 = vmatprep.subr.bf16.mxu0 0
        %4195 = vmatpush1.bf16.msra.mxu0 %v4181
        %4196 = vmatprep.subr.bf16.mxu0 0
        %4197 = vmatpush1.bf16.msra.mxu0 %v4182
        %4198 = vmatprep.subr.bf16.mxu0 0
        %4199 = vmatpush1.bf16.msra.mxu0 0
        %4200 = vmatprep.subr.bf16.mxu0 0
        %4201 = vmatpush1.bf16.msra.mxu0 0
        %4202 = vmatprep.subr.bf16.mxu0 0
        %4203 = vmatpush1.bf16.msra.mxu0 0
        %4204 = vmatprep.subr.bf16.mxu0 0
        %4205 = vmatpush1.bf16.msra.mxu0 0
        %4206 = vmatprep.subr.bf16.mxu0 0
        %4207 = vmatpush1.bf16.msra.mxu0 0
        %4208 = vmatprep.subr.bf16.mxu0 0
        %4209 = vmatpush1.bf16.msra.mxu0 0
        %4210 = vmatprep.subr.bf16.mxu0 0
        %4211 = vmatpush1.bf16.msra.mxu0 0
        %4212 = vmatprep.subr.bf16.mxu0 0
        %4213 = vmatpush1.bf16.msra.mxu0 0
        %4214 = vmatprep.subr.bf16.mxu0 0
        %4215 = vmatpush1.bf16.msra.mxu0 0
        %4216 = vmatprep.subr.bf16.mxu0 0
        %4217 = vmatpush1.bf16.msra.mxu0 0
        %4218 = vmatprep.subr.bf16.mxu0 0
        %4219 = vmatpush1.bf16.msra.mxu0 0
        %4220 = vmatprep.subr.bf16.mxu0 0
        %4221 = vmatpush1.bf16.msra.mxu0 0
        %4222 = vmatprep.mubr.bf16.mxu0 0
        %4223 = vmatmul.mubr.bf16.gmra.mrb[0].mxu0 %v4188
        %v4224 = vpop.f32.mrb[0].mxu0
        %v4225 = vadd.f32 %v367, %v4224
        %v4226 = vpop.f32.mrb[0].mxu0
        %v4227 = vpop.f32.mrb[0].mxu0
        %v4228 = vpop.f32.mrb[0].mxu0
        %4229 = vdwg.mxu0
        %4230 = vst.msk [vmem:[%s225 + $0x6] sm:$0x1] %vm913, %v4225
        %v4232 = vlaneseq
        %v4233 = vshrl.u32 %v4232, 7
        %v4234 = vsub.s32 %v918, %v4233
        %v4235 = vrot.slane %v4011, %v4234
        %4237 = vst.msk [vmem:[%s225 + $0x6] sm:$0x1] %vm924, %v4235
        %v4238 = vld [vmem:[#allocation4 + $0x20] sm:$0xf]
        %v4239 = vld [vmem:[#allocation4 + $0x24] sm:$0xf]
        %v4240 = vpack.c.bf16 %v4225, %v4225
        %v4243 = vunpack.c.l.b16 %v4238
        %v4244 = vunpack.c.l.b16 %v4239
        %v4245 = vpack.c.b16 %v4244, %v4243
        %v4248 = vsel %vm377, %v4240, 0
        %4250 = vmatprep.subr.bf16.mxu0 0
        %4251 = vmatpush1.bf16.msra.mxu0 %v4245
        %4252 = vmatprep.subr.bf16.mxu0 0
        %4253 = vmatpush1.bf16.msra.mxu0 0
        %4254 = vmatprep.subr.bf16.mxu0 0
        %4255 = vmatpush1.bf16.msra.mxu0 0
        %4256 = vmatprep.subr.bf16.mxu0 0
        %4257 = vmatpush1.bf16.msra.mxu0 0
        %4258 = vmatprep.subr.bf16.mxu0 0
        %4259 = vmatpush1.bf16.msra.mxu0 0
        %4260 = vmatprep.subr.bf16.mxu0 0
        %4261 = vmatpush1.bf16.msra.mxu0 0
        %4262 = vmatprep.subr.bf16.mxu0 0
        %4263 = vmatpush1.bf16.msra.mxu0 0
        %4264 = vmatprep.subr.bf16.mxu0 0
        %4265 = vmatpush1.bf16.msra.mxu0 0
        %4266 = vmatprep.subr.bf16.mxu0 0
        %4267 = vmatpush1.bf16.msra.mxu0 0
        %4268 = vmatprep.subr.bf16.mxu0 0
        %4269 = vmatpush1.bf16.msra.mxu0 0
        %4270 = vmatprep.subr.bf16.mxu0 0
        %4271 = vmatpush1.bf16.msra.mxu0 0
        %4272 = vmatprep.subr.bf16.mxu0 0
        %4273 = vmatpush1.bf16.msra.mxu0 0
        %4274 = vmatprep.subr.bf16.mxu0 0
        %4275 = vmatpush1.bf16.msra.mxu0 0
        %4276 = vmatprep.subr.bf16.mxu0 0
        %4277 = vmatpush1.bf16.msra.mxu0 0
        %4278 = vmatprep.subr.bf16.mxu0 0
        %4279 = vmatpush1.bf16.msra.mxu0 0
        %4280 = vmatprep.subr.bf16.mxu0 0
        %4281 = vmatpush1.bf16.msra.mxu0 0
        %4282 = vmatprep.mubr.bf16.mxu0 0
        %4283 = vmatmul.mubr.bf16.gmra.mrb[0].mxu0 %v4248
        %v4284 = vpop.f32.mrb[0].mxu0
        %v4285 = vadd.f32 %v363, %v4284
        %v4286 = vpop.f32.mrb[0].mxu0
        %v4287 = vpop.f32.mrb[0].mxu0
        %v4288 = vpop.f32.mrb[0].mxu0
        %4289 = vdwg.mxu0
        %v4290 = vmax.f32 %v4285, 0.0
        %v4291 = vld [vmem:[#allocation4 + $0x28] sm:$0xf]
        %v4292 = vld [vmem:[#allocation4 + $0x2c] sm:$0xf]
        %v4293 = vld [vmem:[#allocation4 + $0x30] sm:$0xf]
        %v4294 = vld [vmem:[#allocation4 + $0x34] sm:$0xf]
        %v4295 = vpack.c.bf16 %v4290, %v4290
        %v4300 = vunpack.c.l.b16 %v4291
        %v4301 = vunpack.c.l.b16 %v4292
        %v4302 = vunpack.c.l.b16 %v4293
        %v4303 = vunpack.c.l.b16 %v4294
        %v4304 = vpack.c.b16 %v4301, %v4300
        %v4305 = vpack.c.b16 %v4303, %v4302
        %v4309 = vsel %vm251, %v4295, 0
        %4311 = vmatprep.subr.bf16.mxu0 0
        %4312 = vmatpush1.bf16.msra.mxu0 %v4304
        %4313 = vmatprep.subr.bf16.mxu0 0
        %4314 = vmatpush1.bf16.msra.mxu0 %v4305
        %4315 = vmatprep.subr.bf16.mxu0 0
        %4316 = vmatpush1.bf16.msra.mxu0 0
        %4317 = vmatprep.subr.bf16.mxu0 0
        %4318 = vmatpush1.bf16.msra.mxu0 0
        %4319 = vmatprep.subr.bf16.mxu0 0
        %4320 = vmatpush1.bf16.msra.mxu0 0
        %4321 = vmatprep.subr.bf16.mxu0 0
        %4322 = vmatpush1.bf16.msra.mxu0 0
        %4323 = vmatprep.subr.bf16.mxu0 0
        %4324 = vmatpush1.bf16.msra.mxu0 0
        %4325 = vmatprep.subr.bf16.mxu0 0
        %4326 = vmatpush1.bf16.msra.mxu0 0
        %4327 = vmatprep.subr.bf16.mxu0 0
        %4328 = vmatpush1.bf16.msra.mxu0 0
        %4329 = vmatprep.subr.bf16.mxu0 0
        %4330 = vmatpush1.bf16.msra.mxu0 0
        %4331 = vmatprep.subr.bf16.mxu0 0
        %4332 = vmatpush1.bf16.msra.mxu0 0
        %4333 = vmatprep.subr.bf16.mxu0 0
        %4334 = vmatpush1.bf16.msra.mxu0 0
        %4335 = vmatprep.subr.bf16.mxu0 0
        %4336 = vmatpush1.bf16.msra.mxu0 0
        %4337 = vmatprep.subr.bf16.mxu0 0
        %4338 = vmatpush1.bf16.msra.mxu0 0
        %4339 = vmatprep.subr.bf16.mxu0 0
        %4340 = vmatpush1.bf16.msra.mxu0 0
        %4341 = vmatprep.subr.bf16.mxu0 0
        %4342 = vmatpush1.bf16.msra.mxu0 0
        %4343 = vmatprep.mubr.bf16.mxu0 0
        %4344 = vmatmul.mubr.bf16.gmra.mrb[0].mxu0 %v4309
        %v4345 = vpop.f32.mrb[0].mxu0
        %v4346 = vadd.f32 %v364, %v4345
        %v4347 = vpop.f32.mrb[0].mxu0
        %v4348 = vpop.f32.mrb[0].mxu0
        %v4349 = vpop.f32.mrb[0].mxu0
        %4350 = vdwg.mxu0
        %v4351 = vmax.f32 %v4346, 0.0
        %4352 = vrot.lane.b32.xlu0 %v3920, 96
        %v4353 = vpop.permute.xlu0 %4352
        %v4355 = vsel %vm251, %v4351, %v4026
        %v4356 = vsel %vm484, %v4355, %v4353
        %v4357 = vld [vmem:[#allocation4 + $0x48] sm:$0xf]
        %v4358 = vld [vmem:[#allocation4 + $0x4c] sm:$0xf]
        %v4359 = vld [vmem:[#allocation4 + $0x50] sm:$0xf]
        %v4360 = vld [vmem:[#allocation4 + $0x54] sm:$0xf]
        %v4361 = vld [vmem:[#allocation4 + $0x58] sm:$0xf]
        %v4362 = vld [vmem:[#allocation4 + $0x5c] sm:$0xf]
        %v4363 = vld [vmem:[#allocation4 + $0x60] sm:$0xf]
        %v4364 = vld [vmem:[#allocation4 + $0x64] sm:$0xf]
        %v4365 = vld [vmem:[#allocation4 + $0x68] sm:$0xf]
        %v4366 = vld [vmem:[#allocation4 + $0x6c] sm:$0xf]
        %v4367 = vld [vmem:[#allocation4 + $0x70] sm:$0xf]
        %v4368 = vld [vmem:[#allocation4 + $0x74] sm:$0xf]
        %v4369 = vpack.c.bf16 %v4356, %v4356
        %v4382 = vunpack.c.l.b16 %v4357
        %v4383 = vunpack.c.l.b16 %v4358
        %v4384 = vunpack.c.l.b16 %v4359
        %v4385 = vunpack.c.l.b16 %v4360
        %v4386 = vunpack.c.l.b16 %v4361
        %v4387 = vunpack.c.l.b16 %v4362
        %v4388 = vunpack.c.l.b16 %v4363
        %v4389 = vunpack.c.l.b16 %v4364
        %v4390 = vunpack.c.l.b16 %v4365
        %v4391 = vunpack.c.l.b16 %v4366
        %v4392 = vunpack.c.l.b16 %v4367
        %v4393 = vunpack.c.l.b16 %v4368
        %v4394 = vpack.c.b16 %v4383, %v4382
        %v4395 = vpack.c.b16 %v4385, %v4384
        %v4396 = vpack.c.b16 %v4387, %v4386
        %v4397 = vpack.c.b16 %v4389, %v4388
        %v4398 = vpack.c.b16 %v4391, %v4390
        %v4399 = vpack.c.b16 %v4393, %v4392
        %v4407 = vsel %vm535, %v4369, 0
        %4409 = vmatprep.subr.bf16.mxu0 0
        %4410 = vmatpush1.bf16.msra.mxu0 %v4394
        %4411 = vmatprep.subr.bf16.mxu0 0
        %4412 = vmatpush1.bf16.msra.mxu0 %v4395
        %4413 = vmatprep.subr.bf16.mxu0 0
        %4414 = vmatpush1.bf16.msra.mxu0 %v4396
        %4415 = vmatprep.subr.bf16.mxu0 0
        %4416 = vmatpush1.bf16.msra.mxu0 %v4397
        %4417 = vmatprep.subr.bf16.mxu0 0
        %4418 = vmatpush1.bf16.msra.mxu0 %v4398
        %4419 = vmatprep.subr.bf16.mxu0 0
        %4420 = vmatpush1.bf16.msra.mxu0 %v4399
        %4421 = vmatprep.subr.bf16.mxu0 0
        %4422 = vmatpush1.bf16.msra.mxu0 0
        %4423 = vmatprep.subr.bf16.mxu0 0
        %4424 = vmatpush1.bf16.msra.mxu0 0
        %4425 = vmatprep.subr.bf16.mxu0 0
        %4426 = vmatpush1.bf16.msra.mxu0 0
        %4427 = vmatprep.subr.bf16.mxu0 0
        %4428 = vmatpush1.bf16.msra.mxu0 0
        %4429 = vmatprep.subr.bf16.mxu0 0
        %4430 = vmatpush1.bf16.msra.mxu0 0
        %4431 = vmatprep.subr.bf16.mxu0 0
        %4432 = vmatpush1.bf16.msra.mxu0 0
        %4433 = vmatprep.subr.bf16.mxu0 0
        %4434 = vmatpush1.bf16.msra.mxu0 0
        %4435 = vmatprep.subr.bf16.mxu0 0
        %4436 = vmatpush1.bf16.msra.mxu0 0
        %4437 = vmatprep.subr.bf16.mxu0 0
        %4438 = vmatpush1.bf16.msra.mxu0 0
        %4439 = vmatprep.subr.bf16.mxu0 0
        %4440 = vmatpush1.bf16.msra.mxu0 0
        %4441 = vmatprep.mubr.bf16.mxu0 0
        %4442 = vmatmul.mubr.bf16.gmra.mrb[0].mxu0 %v4407
        %v4443 = vpop.f32.mrb[0].mxu0
        %v4444 = vadd.f32 %v365, %v4443
        %v4445 = vpop.f32.mrb[0].mxu0
        %v4446 = vpop.f32.mrb[0].mxu0
        %v4447 = vpop.f32.mrb[0].mxu0
        %4448 = vdwg.mxu0
        %v4449 = vxor.u32 %v4444, 2147483648
        %v4450 = vmul.f32 %v4449, 1.442695
        %v4451 = vpow.pop %v4450
        %v4452 = vadd.f32 %v4451, 1.0
        %v4453 = vrcp.pop %v4452
        %v4454 = vmul.f32 1.0, %v4453
        %v4455 = vtanh.pop %v4444
        %v4456 = vmul.f32 %v4454, %v3914
        %4458 = vrot.lane.b32.xlu0 %v4455, 64
        %v4459 = vpop.permute.xlu0 %4458
        %v4461 = vmul.f32 %v4454, %v4459
        %4463 = vrot.lane.b32.xlu0 %v4461, 32
        %v4464 = vpop.permute.xlu0 %4463
        %v4466 = vadd.f32 %v4456, %v4464
        %v4467 = vtanh.pop %v4466
        %4469 = vrot.lane.b32.xlu0 %v4467, 64
        %v4470 = vpop.permute.xlu0 %4469
        %v4472 = vmul.f32 %v4454, %v4470
        %v4473 = vld [vmem:[#allocation4 + $0x38] sm:$0xf]
        %v4474 = vld [vmem:[#allocation4 + $0x3c] sm:$0xf]
        %v4475 = vld [vmem:[#allocation4 + $0x40] sm:$0xf]
        %v4476 = vld [vmem:[#allocation4 + $0x44] sm:$0xf]
        %v4477 = vpack.c.bf16 %v4472, %v4472
        %4479 = vrot.lane.b32.xlu0 %v4477, 32
        %v4480 = vpop.permute.xlu0 %4479
        %v4485 = vunpack.c.l.b16 %v4473
        %v4486 = vunpack.c.l.b16 %v4474
        %v4487 = vunpack.c.l.b16 %v4475
        %v4488 = vunpack.c.l.b16 %v4476
        %v4489 = vpack.c.b16 %v4486, %v4485
        %v4490 = vpack.c.b16 %v4488, %v4487
        %v4494 = vsel %vm251, %v4480, 0
        %4496 = vmatprep.subr.bf16.mxu0 0
        %4497 = vmatpush1.bf16.msra.mxu0 %v4489
        %4498 = vmatprep.subr.bf16.mxu0 0
        %4499 = vmatpush1.bf16.msra.mxu0 %v4490
        %4500 = vmatprep.subr.bf16.mxu0 0
        %4501 = vmatpush1.bf16.msra.mxu0 0
        %4502 = vmatprep.subr.bf16.mxu0 0
        %4503 = vmatpush1.bf16.msra.mxu0 0
        %4504 = vmatprep.subr.bf16.mxu0 0
        %4505 = vmatpush1.bf16.msra.mxu0 0
        %4506 = vmatprep.subr.bf16.mxu0 0
        %4507 = vmatpush1.bf16.msra.mxu0 0
        %4508 = vmatprep.subr.bf16.mxu0 0
        %4509 = vmatpush1.bf16.msra.mxu0 0
        %4510 = vmatprep.subr.bf16.mxu0 0
        %4511 = vmatpush1.bf16.msra.mxu0 0
        %4512 = vmatprep.subr.bf16.mxu0 0
        %4513 = vmatpush1.bf16.msra.mxu0 0
        %4514 = vmatprep.subr.bf16.mxu0 0
        %4515 = vmatpush1.bf16.msra.mxu0 0
        %4516 = vmatprep.subr.bf16.mxu0 0
        %4517 = vmatpush1.bf16.msra.mxu0 0
        %4518 = vmatprep.subr.bf16.mxu0 0
        %4519 = vmatpush1.bf16.msra.mxu0 0
        %4520 = vmatprep.subr.bf16.mxu0 0
        %4521 = vmatpush1.bf16.msra.mxu0 0
        %4522 = vmatprep.subr.bf16.mxu0 0
        %4523 = vmatpush1.bf16.msra.mxu0 0
        %4524 = vmatprep.subr.bf16.mxu0 0
        %4525 = vmatpush1.bf16.msra.mxu0 0
        %4526 = vmatprep.subr.bf16.mxu0 0
        %4527 = vmatpush1.bf16.msra.mxu0 0
        %4528 = vmatprep.mubr.bf16.mxu0 0
        %4529 = vmatmul.mubr.bf16.gmra.mrb[0].mxu0 %v4494
        %v4530 = vpop.f32.mrb[0].mxu0
        %v4531 = vadd.f32 0.0, %v4530
        %v4532 = vpop.f32.mrb[0].mxu0
        %v4533 = vpop.f32.mrb[0].mxu0
        %v4534 = vpop.f32.mrb[0].mxu0
        %4535 = vdwg.mxu0
        %v4536 = vlaneseq
        %v4537 = vshrl.u32 %v4536, 7
        %v4538 = vsub.s32 0, %v4537
        %v4539 = vrot.slane %v4531, %v4538
        %v4540 = vadd.f32 %v351, %v4539
        %v4541 = vtanh.pop %v4540
        %v4542 = vmul.f32 %v4541, %v675
        %v4543 = vsel %vm251, %v4542, 0.0
        %4544 = vadd.xlane.f32.xlu0 %v4543
        %v4545 = vpop.xlane.xlu0 %4544
        %v4546 = vsel %vm362, %v4545, -1e+30
        %v4547 = vrot.slane %v4546, 4
        %v4548 = vmax.f32 %v4546, %v4547
        %v4549 = vrot.slane %v4548, 2
        %v4550 = vmax.f32 %v4548, %v4549
        %v4551 = vrot.slane %v4550, 1
        %v4552 = vmax.f32 %v4550, %v4551
        %v4553 = vsub.f32 %v4546, %v4552
        %v4554 = vmul.f32 %v4553, 1.442695
        %v4555 = vpow.pop %v4554
        %v4556 = vrot.slane %v4555, 4
        %v4557 = vadd.f32 %v4555, %v4556
        %v4558 = vrot.slane %v4557, 2
        %v4559 = vadd.f32 %v4557, %v4558
        %v4560 = vrot.slane %v4559, 1
        %v4561 = vadd.f32 %v4559, %v4560
        %v4562 = vrcp.pop %v4561
        %v4563 = vmul.f32 %v4555, %v4562
        %v4564 = vmul.f32 %v4563, %v295
        %v4565 = vsel %vm251, %v4564, 0.0
        %v4566 = vrot.slane %v4565, 4
        %v4567 = vadd.f32 %v4565, %v4566
        %v4568 = vrot.slane %v4567, 2
        %v4569 = vadd.f32 %v4567, %v4568
        %v4570 = vrot.slane %v4569, 1
        %v4571 = vadd.f32 %v4569, %v4570
        %4573 = vrot.lane.b32.xlu0 %v4472, 32
        %v4574 = vpop.permute.xlu0 %4573
        %4577 = vrot.lane.b32.xlu0 %v4571, 32
        %v4578 = vpop.permute.xlu0 %4577
        %4580 = vrot.lane.b32.xlu0 %v4148, 96
        %v4581 = vpop.permute.xlu0 %4580
        %v4583 = vsel %vm251, %v4574, %v4578
        %v4584 = vsel %vm484, %v4583, %v4581
        %v4585 = vld [vmem:[#allocation4 + $0x78] sm:$0xf]
        %v4586 = vld [vmem:[#allocation4 + $0x7c] sm:$0xf]
        %v4587 = vld [vmem:[#allocation4 + $0x80] sm:$0xf]
        %v4588 = vld [vmem:[#allocation4 + $0x84] sm:$0xf]
        %v4589 = vld [vmem:[#allocation4 + $0x88] sm:$0xf]
        %v4590 = vld [vmem:[#allocation4 + $0x8c] sm:$0xf]
        %v4591 = vld [vmem:[#allocation4 + $0x90] sm:$0xf]
        %v4592 = vld [vmem:[#allocation4 + $0x94] sm:$0xf]
        %v4593 = vld [vmem:[#allocation4 + $0x98] sm:$0xf]
        %v4594 = vld [vmem:[#allocation4 + $0x9c] sm:$0xf]
        %v4595 = vld [vmem:[#allocation4 + $0xa0] sm:$0xf]
        %v4596 = vld [vmem:[#allocation4 + $0xa4] sm:$0xf]
        %v4597 = vpack.c.bf16 %v4584, %v4584
        %v4610 = vunpack.c.l.b16 %v4585
        %v4611 = vunpack.c.l.b16 %v4586
        %v4612 = vunpack.c.l.b16 %v4587
        %v4613 = vunpack.c.l.b16 %v4588
        %v4614 = vunpack.c.l.b16 %v4589
        %v4615 = vunpack.c.l.b16 %v4590
        %v4616 = vunpack.c.l.b16 %v4591
        %v4617 = vunpack.c.l.b16 %v4592
        %v4618 = vunpack.c.l.b16 %v4593
        %v4619 = vunpack.c.l.b16 %v4594
        %v4620 = vunpack.c.l.b16 %v4595
        %v4621 = vunpack.c.l.b16 %v4596
        %v4622 = vpack.c.b16 %v4611, %v4610
        %v4623 = vpack.c.b16 %v4613, %v4612
        %v4624 = vpack.c.b16 %v4615, %v4614
        %v4625 = vpack.c.b16 %v4617, %v4616
        %v4626 = vpack.c.b16 %v4619, %v4618
        %v4627 = vpack.c.b16 %v4621, %v4620
        %v4635 = vsel %vm535, %v4597, 0
        %4637 = vmatprep.subr.bf16.mxu0 0
        %4638 = vmatpush1.bf16.msra.mxu0 %v4622
        %4639 = vmatprep.subr.bf16.mxu0 0
        %4640 = vmatpush1.bf16.msra.mxu0 %v4623
        %4641 = vmatprep.subr.bf16.mxu0 0
        %4642 = vmatpush1.bf16.msra.mxu0 %v4624
        %4643 = vmatprep.subr.bf16.mxu0 0
        %4644 = vmatpush1.bf16.msra.mxu0 %v4625
        %4645 = vmatprep.subr.bf16.mxu0 0
        %4646 = vmatpush1.bf16.msra.mxu0 %v4626
        %4647 = vmatprep.subr.bf16.mxu0 0
        %4648 = vmatpush1.bf16.msra.mxu0 %v4627
        %4649 = vmatprep.subr.bf16.mxu0 0
        %4650 = vmatpush1.bf16.msra.mxu0 0
        %4651 = vmatprep.subr.bf16.mxu0 0
        %4652 = vmatpush1.bf16.msra.mxu0 0
        %4653 = vmatprep.subr.bf16.mxu0 0
        %4654 = vmatpush1.bf16.msra.mxu0 0
        %4655 = vmatprep.subr.bf16.mxu0 0
        %4656 = vmatpush1.bf16.msra.mxu0 0
        %4657 = vmatprep.subr.bf16.mxu0 0
        %4658 = vmatpush1.bf16.msra.mxu0 0
        %4659 = vmatprep.subr.bf16.mxu0 0
        %4660 = vmatpush1.bf16.msra.mxu0 0
        %4661 = vmatprep.subr.bf16.mxu0 0
        %4662 = vmatpush1.bf16.msra.mxu0 0
        %4663 = vmatprep.subr.bf16.mxu0 0
        %4664 = vmatpush1.bf16.msra.mxu0 0
        %4665 = vmatprep.subr.bf16.mxu0 0
        %4666 = vmatpush1.bf16.msra.mxu0 0
        %4667 = vmatprep.subr.bf16.mxu0 0
        %4668 = vmatpush1.bf16.msra.mxu0 0
        %4669 = vmatprep.mubr.bf16.mxu0 0
        %4670 = vmatmul.mubr.bf16.gmra.mrb[0].mxu0 %v4635
        %v4671 = vpop.f32.mrb[0].mxu0
        %v4672 = vadd.f32 %v366, %v4671
        %v4673 = vpop.f32.mrb[0].mxu0
        %v4674 = vpop.f32.mrb[0].mxu0
        %v4675 = vpop.f32.mrb[0].mxu0
        %4676 = vdwg.mxu0
        %v4677 = vxor.u32 %v4672, 2147483648
        %v4678 = vmul.f32 %v4677, 1.442695
        %v4679 = vpow.pop %v4678
        %v4680 = vadd.f32 %v4679, 1.0
        %v4681 = vrcp.pop %v4680
        %v4682 = vmul.f32 1.0, %v4681
        %v4683 = vtanh.pop %v4672
        %v4684 = vmul.f32 %v4682, %v4142
        %4686 = vrot.lane.b32.xlu0 %v4683, 64
        %v4687 = vpop.permute.xlu0 %4686
        %v4689 = vmul.f32 %v4682, %v4687
        %4691 = vrot.lane.b32.xlu0 %v4689, 32
        %v4692 = vpop.permute.xlu0 %4691
        %v4694 = vadd.f32 %v4684, %v4692
        %v4695 = vtanh.pop %v4694
        %4697 = vrot.lane.b32.xlu0 %v4695, 64
        %v4698 = vpop.permute.xlu0 %4697
        %v4700 = vmul.f32 %v4682, %v4698
        %4702 = vrot.lane.b32.xlu0 %v4700, 32
        %v4703 = vpop.permute.xlu0 %4702
        %v4705 = vsel %vm251, %v4703, %v4578
        %v4706 = vld [vmem:[#allocation4 + $0xa8] sm:$0xf]
        %v4707 = vld [vmem:[#allocation4 + $0xac] sm:$0xf]
        %v4708 = vld [vmem:[#allocation4 + $0xb0] sm:$0xf]
        %v4709 = vld [vmem:[#allocation4 + $0xb4] sm:$0xf]
        %v4710 = vld [vmem:[#allocation4 + $0xb8] sm:$0xf]
        %v4711 = vld [vmem:[#allocation4 + $0xbc] sm:$0xf]
        %v4712 = vld [vmem:[#allocation4 + $0xc0] sm:$0xf]
        %v4713 = vld [vmem:[#allocation4 + $0xc4] sm:$0xf]
        %v4714 = vpack.c.bf16 %v4705, %v4705
        %v4723 = vunpack.c.l.b16 %v4706
        %v4724 = vunpack.c.l.b16 %v4707
        %v4725 = vunpack.c.l.b16 %v4708
        %v4726 = vunpack.c.l.b16 %v4709
        %v4727 = vunpack.c.l.b16 %v4710
        %v4728 = vunpack.c.l.b16 %v4711
        %v4729 = vunpack.c.l.b16 %v4712
        %v4730 = vunpack.c.l.b16 %v4713
        %v4731 = vpack.c.b16 %v4724, %v4723
        %v4732 = vpack.c.b16 %v4726, %v4725
        %v4733 = vpack.c.b16 %v4728, %v4727
        %v4734 = vpack.c.b16 %v4730, %v4729
        %v4740 = vsel %vm484, %v4714, 0
        %4742 = vmatprep.subr.bf16.mxu0 0
        %4743 = vmatpush1.bf16.msra.mxu0 %v4731
        %4744 = vmatprep.subr.bf16.mxu0 0
        %4745 = vmatpush1.bf16.msra.mxu0 %v4732
        %4746 = vmatprep.subr.bf16.mxu0 0
        %4747 = vmatpush1.bf16.msra.mxu0 %v4733
        %4748 = vmatprep.subr.bf16.mxu0 0
        %4749 = vmatpush1.bf16.msra.mxu0 %v4734
        %4750 = vmatprep.subr.bf16.mxu0 0
        %4751 = vmatpush1.bf16.msra.mxu0 0
        %4752 = vmatprep.subr.bf16.mxu0 0
        %4753 = vmatpush1.bf16.msra.mxu0 0
        %4754 = vmatprep.subr.bf16.mxu0 0
        %4755 = vmatpush1.bf16.msra.mxu0 0
        %4756 = vmatprep.subr.bf16.mxu0 0
        %4757 = vmatpush1.bf16.msra.mxu0 0
        %4758 = vmatprep.subr.bf16.mxu0 0
        %4759 = vmatpush1.bf16.msra.mxu0 0
        %4760 = vmatprep.subr.bf16.mxu0 0
        %4761 = vmatpush1.bf16.msra.mxu0 0
        %4762 = vmatprep.subr.bf16.mxu0 0
        %4763 = vmatpush1.bf16.msra.mxu0 0
        %4764 = vmatprep.subr.bf16.mxu0 0
        %4765 = vmatpush1.bf16.msra.mxu0 0
        %4766 = vmatprep.subr.bf16.mxu0 0
        %4767 = vmatpush1.bf16.msra.mxu0 0
        %4768 = vmatprep.subr.bf16.mxu0 0
        %4769 = vmatpush1.bf16.msra.mxu0 0
        %4770 = vmatprep.subr.bf16.mxu0 0
        %4771 = vmatpush1.bf16.msra.mxu0 0
        %4772 = vmatprep.subr.bf16.mxu0 0
        %4773 = vmatpush1.bf16.msra.mxu0 0
        %4774 = vmatprep.mubr.bf16.mxu0 0
        %4775 = vmatmul.mubr.bf16.gmra.mrb[0].mxu0 %v4740
        %v4776 = vpop.f32.mrb[0].mxu0
        %v4777 = vadd.f32 %v367, %v4776
        %v4778 = vpop.f32.mrb[0].mxu0
        %v4779 = vpop.f32.mrb[0].mxu0
        %v4780 = vpop.f32.mrb[0].mxu0
        %4781 = vdwg.mxu0
        %4782 = vst.msk [vmem:[%s225 + $0x7] sm:$0x1] %vm913, %v4777
        %v4784 = vlaneseq
        %v4785 = vshrl.u32 %v4784, 7
        %v4786 = vsub.s32 %v918, %v4785
        %v4787 = vrot.slane %v4563, %v4786
        %4789 = vst.msk [vmem:[%s225 + $0x7] sm:$0x1] %vm924, %v4787
        %v4790 = vld [vmem:[%s225] sm:$0xff]
        %v4792 = vrot.slane %v4790, 6
        %vm4794 = vcmask 1041408
        %v4795 = vsel %vm4794, 0.0, %v4792
        %v4796 = vsel %vm4794, %v4792, 0.0
        %v4797 = vld [vmem:[#allocation4 + $0xc8] sm:$0xf]
        %v4798 = vld [vmem:[#allocation4 + $0xcc] sm:$0xf]
        %v4799 = vpack.c.bf16 %v4795, %v4795
        %v4800 = vld [vmem:[#allocation4 + $0xd0] sm:$0xf]
        %v4801 = vld [vmem:[#allocation4 + $0xd4] sm:$0xf]
        %v4802 = vpack.c.bf16 %v4796, %v4795
        %v4804 = vshrl.u32 %v4802, 16
        %v4806 = vshll.u32 %v4802, 16
        %v4808 = vrot.slane %v4806, 1
        %v4809 = vor.u32 %v4804, %v4808
        %v4812 = vunpack.c.l.b16 %v4800
        %v4813 = vunpack.c.l.b16 %v4801
        %v4814 = vpack.c.b16 %v4813, %v4812
        %v4817 = vsel %vm377, %v4809, 0
        %4819 = vmatprep.subr.bf16.mxu0 0
        %4820 = vmatpush1.bf16.msra.mxu0 %v4814
        %4821 = vmatprep.subr.bf16.mxu0 0
        %4822 = vmatpush1.bf16.msra.mxu0 0
        %4823 = vmatprep.subr.bf16.mxu0 0
        %4824 = vmatpush1.bf16.msra.mxu0 0
        %4825 = vmatprep.subr.bf16.mxu0 0
        %4826 = vmatpush1.bf16.msra.mxu0 0
        %4827 = vmatprep.subr.bf16.mxu0 0
        %4828 = vmatpush1.bf16.msra.mxu0 0
        %4829 = vmatprep.subr.bf16.mxu0 0
        %4830 = vmatpush1.bf16.msra.mxu0 0
        %4831 = vmatprep.subr.bf16.mxu0 0
        %4832 = vmatpush1.bf16.msra.mxu0 0
        %4833 = vmatprep.subr.bf16.mxu0 0
        %4834 = vmatpush1.bf16.msra.mxu0 0
        %4835 = vmatprep.subr.bf16.mxu0 0
        %4836 = vmatpush1.bf16.msra.mxu0 0
        %4837 = vmatprep.subr.bf16.mxu0 0
        %4838 = vmatpush1.bf16.msra.mxu0 0
        %4839 = vmatprep.subr.bf16.mxu0 0
        %4840 = vmatpush1.bf16.msra.mxu0 0
        %4841 = vmatprep.subr.bf16.mxu0 0
        %4842 = vmatpush1.bf16.msra.mxu0 0
        %4843 = vmatprep.subr.bf16.mxu0 0
        %4844 = vmatpush1.bf16.msra.mxu0 0
        %4845 = vmatprep.subr.bf16.mxu0 0
        %4846 = vmatpush1.bf16.msra.mxu0 0
        %4847 = vmatprep.subr.bf16.mxu0 0
        %4848 = vmatpush1.bf16.msra.mxu0 0
        %4849 = vmatprep.subr.bf16.mxu0 0
        %4850 = vmatpush1.bf16.msra.mxu0 0
        %4851 = vmatprep.mubr.bf16.mxu0 0
        %4852 = vmatmul.mubr.bf16.gmra.mrb[0].mxu0 %v4817
        %v4853 = vpop.f32.mrb[0].mxu0
        %v4854 = vadd.f32 0.0, %v4853
        %v4855 = vpop.f32.mrb[0].mxu0
        %v4856 = vpop.f32.mrb[0].mxu0
        %v4857 = vpop.f32.mrb[0].mxu0
        %4858 = vdwg.mxu0
        %v4861 = vunpack.c.l.b16 %v4797
        %v4862 = vunpack.c.l.b16 %v4798
        %v4863 = vpack.c.b16 %v4862, %v4861
        %v4866 = vsel %vm377, %v4799, 0
        %4868 = vmatprep.subr.bf16.mxu0 0
        %4869 = vmatpush1.bf16.msra.mxu0 %v4863
        %4870 = vmatprep.subr.bf16.mxu0 0
        %4871 = vmatpush1.bf16.msra.mxu0 0
        %4872 = vmatprep.subr.bf16.mxu0 0
        %4873 = vmatpush1.bf16.msra.mxu0 0
        %4874 = vmatprep.subr.bf16.mxu0 0
        %4875 = vmatpush1.bf16.msra.mxu0 0
        %4876 = vmatprep.subr.bf16.mxu0 0
        %4877 = vmatpush1.bf16.msra.mxu0 0
        %4878 = vmatprep.subr.bf16.mxu0 0
        %4879 = vmatpush1.bf16.msra.mxu0 0
        %4880 = vmatprep.subr.bf16.mxu0 0
        %4881 = vmatpush1.bf16.msra.mxu0 0
        %4882 = vmatprep.subr.bf16.mxu0 0
        %4883 = vmatpush1.bf16.msra.mxu0 0
        %4884 = vmatprep.subr.bf16.mxu0 0
        %4885 = vmatpush1.bf16.msra.mxu0 0
        %4886 = vmatprep.subr.bf16.mxu0 0
        %4887 = vmatpush1.bf16.msra.mxu0 0
        %4888 = vmatprep.subr.bf16.mxu0 0
        %4889 = vmatpush1.bf16.msra.mxu0 0
        %4890 = vmatprep.subr.bf16.mxu0 0
        %4891 = vmatpush1.bf16.msra.mxu0 0
        %4892 = vmatprep.subr.bf16.mxu0 0
        %4893 = vmatpush1.bf16.msra.mxu0 0
        %4894 = vmatprep.subr.bf16.mxu0 0
        %4895 = vmatpush1.bf16.msra.mxu0 0
        %4896 = vmatprep.subr.bf16.mxu0 0
        %4897 = vmatpush1.bf16.msra.mxu0 0
        %4898 = vmatprep.subr.bf16.mxu0 0
        %4899 = vmatpush1.bf16.msra.mxu0 0
        %4900 = vmatprep.mubr.bf16.mxu0 0
        %4901 = vmatmul.mubr.bf16.gmra.mrb[0].mxu0 %v4866
        %v4902 = vpop.f32.mrb[0].mxu0
        %v4903 = vadd.f32 %v4854, %v4902
        %v4904 = vpop.f32.mrb[0].mxu0
        %v4905 = vpop.f32.mrb[0].mxu0
        %v4906 = vpop.f32.mrb[0].mxu0
        %4907 = vdwg.mxu0
        %v4908 = vld [vmem:[#allocation4 + $0xd8] sm:$0xf]
        %v4909 = vld [vmem:[#allocation4 + $0xdc] sm:$0xf]
        %v4911 = vrot.slane %v4802, 1
        %v4914 = vunpack.c.l.b16 %v4908
        %v4915 = vunpack.c.l.b16 %v4909
        %v4916 = vpack.c.b16 %v4915, %v4914
        %v4919 = vsel %vm377, %v4911, 0
        %4921 = vmatprep.subr.bf16.mxu0 0
        %4922 = vmatpush1.bf16.msra.mxu0 %v4916
        %4923 = vmatprep.subr.bf16.mxu0 0
        %4924 = vmatpush1.bf16.msra.mxu0 0
        %4925 = vmatprep.subr.bf16.mxu0 0
        %4926 = vmatpush1.bf16.msra.mxu0 0
        %4927 = vmatprep.subr.bf16.mxu0 0
        %4928 = vmatpush1.bf16.msra.mxu0 0
        %4929 = vmatprep.subr.bf16.mxu0 0
        %4930 = vmatpush1.bf16.msra.mxu0 0
        %4931 = vmatprep.subr.bf16.mxu0 0
        %4932 = vmatpush1.bf16.msra.mxu0 0
        %4933 = vmatprep.subr.bf16.mxu0 0
        %4934 = vmatpush1.bf16.msra.mxu0 0
        %4935 = vmatprep.subr.bf16.mxu0 0
        %4936 = vmatpush1.bf16.msra.mxu0 0
        %4937 = vmatprep.subr.bf16.mxu0 0
        %4938 = vmatpush1.bf16.msra.mxu0 0
        %4939 = vmatprep.subr.bf16.mxu0 0
        %4940 = vmatpush1.bf16.msra.mxu0 0
        %4941 = vmatprep.subr.bf16.mxu0 0
        %4942 = vmatpush1.bf16.msra.mxu0 0
        %4943 = vmatprep.subr.bf16.mxu0 0
        %4944 = vmatpush1.bf16.msra.mxu0 0
        %4945 = vmatprep.subr.bf16.mxu0 0
        %4946 = vmatpush1.bf16.msra.mxu0 0
        %4947 = vmatprep.subr.bf16.mxu0 0
        %4948 = vmatpush1.bf16.msra.mxu0 0
        %4949 = vmatprep.subr.bf16.mxu0 0
        %4950 = vmatpush1.bf16.msra.mxu0 0
        %4951 = vmatprep.subr.bf16.mxu0 0
        %4952 = vmatpush1.bf16.msra.mxu0 0
        %4953 = vmatprep.mubr.bf16.mxu0 0
        %4954 = vmatmul.mubr.bf16.gmra.mrb[0].mxu0 %v4919
        %v4955 = vpop.f32.mrb[0].mxu0
        %v4956 = vadd.f32 0.0, %v4955
        %v4957 = vpop.f32.mrb[0].mxu0
        %v4958 = vpop.f32.mrb[0].mxu0
        %v4959 = vpop.f32.mrb[0].mxu0
        %4960 = vdwg.mxu0
        %v4961 = vadd.f32 %v4903, %v4956
        %v4962 = vld [vmem:[#allocation4 + $0xe0] sm:$0xf]
        %v4963 = vld [vmem:[#allocation4 + $0xe4] sm:$0xf]
        %v4964 = vrot.slane %v4804, 1
        %v4965 = vrot.slane %v4806, 2
        %v4966 = vor.u32 %v4964, %v4965
        %v4969 = vunpack.c.l.b16 %v4962
        %v4970 = vunpack.c.l.b16 %v4963
        %v4971 = vpack.c.b16 %v4970, %v4969
        %v4974 = vsel %vm377, %v4966, 0
        %4976 = vmatprep.subr.bf16.mxu0 0
        %4977 = vmatpush1.bf16.msra.mxu0 %v4971
        %4978 = vmatprep.subr.bf16.mxu0 0
        %4979 = vmatpush1.bf16.msra.mxu0 0
        %4980 = vmatprep.subr.bf16.mxu0 0
        %4981 = vmatpush1.bf16.msra.mxu0 0
        %4982 = vmatprep.subr.bf16.mxu0 0
        %4983 = vmatpush1.bf16.msra.mxu0 0
        %4984 = vmatprep.subr.bf16.mxu0 0
        %4985 = vmatpush1.bf16.msra.mxu0 0
        %4986 = vmatprep.subr.bf16.mxu0 0
        %4987 = vmatpush1.bf16.msra.mxu0 0
        %4988 = vmatprep.subr.bf16.mxu0 0
        %4989 = vmatpush1.bf16.msra.mxu0 0
        %4990 = vmatprep.subr.bf16.mxu0 0
        %4991 = vmatpush1.bf16.msra.mxu0 0
        %4992 = vmatprep.subr.bf16.mxu0 0
        %4993 = vmatpush1.bf16.msra.mxu0 0
        %4994 = vmatprep.subr.bf16.mxu0 0
        %4995 = vmatpush1.bf16.msra.mxu0 0
        %4996 = vmatprep.subr.bf16.mxu0 0
        %4997 = vmatpush1.bf16.msra.mxu0 0
        %4998 = vmatprep.subr.bf16.mxu0 0
        %4999 = vmatpush1.bf16.msra.mxu0 0
        %5000 = vmatprep.subr.bf16.mxu0 0
        %5001 = vmatpush1.bf16.msra.mxu0 0
        %5002 = vmatprep.subr.bf16.mxu0 0
        %5003 = vmatpush1.bf16.msra.mxu0 0
        %5004 = vmatprep.subr.bf16.mxu0 0
        %5005 = vmatpush1.bf16.msra.mxu0 0
        %5006 = vmatprep.subr.bf16.mxu0 0
        %5007 = vmatpush1.bf16.msra.mxu0 0
        %5008 = vmatprep.mubr.bf16.mxu0 0
        %5009 = vmatmul.mubr.bf16.gmra.mrb[0].mxu0 %v4974
        %v5010 = vpop.f32.mrb[0].mxu0
        %v5011 = vadd.f32 0.0, %v5010
        %v5012 = vpop.f32.mrb[0].mxu0
        %v5013 = vpop.f32.mrb[0].mxu0
        %v5014 = vpop.f32.mrb[0].mxu0
        %5015 = vdwg.mxu0
        %v5016 = vadd.f32 %v4961, %v5011
        %v5017 = vld [vmem:[#allocation4 + $0xe8] sm:$0xf]
        %v5018 = vld [vmem:[#allocation4 + $0xec] sm:$0xf]
        %v5019 = vrot.slane %v4802, 2
        %v5022 = vunpack.c.l.b16 %v5017
        %v5023 = vunpack.c.l.b16 %v5018
        %v5024 = vpack.c.b16 %v5023, %v5022
        %v5027 = vsel %vm377, %v5019, 0
        %5029 = vmatprep.subr.bf16.mxu0 0
        %5030 = vmatpush1.bf16.msra.mxu0 %v5024
        %5031 = vmatprep.subr.bf16.mxu0 0
        %5032 = vmatpush1.bf16.msra.mxu0 0
        %5033 = vmatprep.subr.bf16.mxu0 0
        %5034 = vmatpush1.bf16.msra.mxu0 0
        %5035 = vmatprep.subr.bf16.mxu0 0
        %5036 = vmatpush1.bf16.msra.mxu0 0
        %5037 = vmatprep.subr.bf16.mxu0 0
        %5038 = vmatpush1.bf16.msra.mxu0 0
        %5039 = vmatprep.subr.bf16.mxu0 0
        %5040 = vmatpush1.bf16.msra.mxu0 0
        %5041 = vmatprep.subr.bf16.mxu0 0
        %5042 = vmatpush1.bf16.msra.mxu0 0
        %5043 = vmatprep.subr.bf16.mxu0 0
        %5044 = vmatpush1.bf16.msra.mxu0 0
        %5045 = vmatprep.subr.bf16.mxu0 0
        %5046 = vmatpush1.bf16.msra.mxu0 0
        %5047 = vmatprep.subr.bf16.mxu0 0
        %5048 = vmatpush1.bf16.msra.mxu0 0
        %5049 = vmatprep.subr.bf16.mxu0 0
        %5050 = vmatpush1.bf16.msra.mxu0 0
        %5051 = vmatprep.subr.bf16.mxu0 0
        %5052 = vmatpush1.bf16.msra.mxu0 0
        %5053 = vmatprep.subr.bf16.mxu0 0
        %5054 = vmatpush1.bf16.msra.mxu0 0
        %5055 = vmatprep.subr.bf16.mxu0 0
        %5056 = vmatpush1.bf16.msra.mxu0 0
        %5057 = vmatprep.subr.bf16.mxu0 0
        %5058 = vmatpush1.bf16.msra.mxu0 0
        %5059 = vmatprep.subr.bf16.mxu0 0
        %5060 = vmatpush1.bf16.msra.mxu0 0
        %5061 = vmatprep.mubr.bf16.mxu0 0
        %5062 = vmatmul.mubr.bf16.gmra.mrb[0].mxu0 %v5027
        %v5063 = vpop.f32.mrb[0].mxu0
        %v5064 = vadd.f32 0.0, %v5063
        %v5065 = vpop.f32.mrb[0].mxu0
        %v5066 = vpop.f32.mrb[0].mxu0
        %v5067 = vpop.f32.mrb[0].mxu0
        %5068 = vdwg.mxu0
        %v5069 = vadd.f32 %v5016, %v5064
        %v5070 = vld [vmem:[%s3 + $0x7] sm:$0x1]
        %v5071 = vlaneseq
        %v5072 = vshrl.u32 %v5071, 7
        %v5073 = vsub.s32 0, %v5072
        %v5074 = vrot.slane %v5070, %v5073
        %v5075 = vadd.f32 %v5069, %v5074
        %v5076 = vtanh.pop %v5075
        %v5078 = vrot.slane %v5076, 6
        %v5080 = vsel %vm4794, 0.0, %v5078
        %v5081 = vsel %vm4794, %v5078, 0.0
        %v5082 = vld [vmem:[#allocation4 + $0xf0] sm:$0xf]
        %v5083 = vld [vmem:[#allocation4 + $0xf4] sm:$0xf]
        %v5084 = vld [vmem:[#allocation4 + $0xf8] sm:$0xf]
        %v5085 = vld [vmem:[#allocation4 + $0xfc] sm:$0xf]
        %v5086 = vpack.c.bf16 %v5080, %v5080
        %v5087 = vld [vmem:[#allocation4 + $0x100] sm:$0xf]
        %v5088 = vld [vmem:[#allocation4 + $0x104] sm:$0xf]
        %v5089 = vld [vmem:[#allocation4 + $0x108] sm:$0xf]
        %v5090 = vld [vmem:[#allocation4 + $0x10c] sm:$0xf]
        %v5091 = vpack.c.bf16 %v5081, %v5080
        %v5093 = vshrl.u32 %v5091, 16
        %v5095 = vshll.u32 %v5091, 16
        %v5097 = vrot.slane %v5095, 1
        %v5098 = vor.u32 %v5093, %v5097
        %v5103 = vunpack.c.l.b16 %v5087
        %v5104 = vunpack.c.l.b16 %v5088
        %v5105 = vunpack.c.l.b16 %v5089
        %v5106 = vunpack.c.l.b16 %v5090
        %v5107 = vpack.c.b16 %v5104, %v5103
        %v5108 = vpack.c.b16 %v5106, %v5105
        %v5112 = vsel %vm251, %v5098, 0
        %5114 = vmatprep.subr.bf16.mxu0 0
        %5115 = vmatpush1.bf16.msra.mxu0 %v5107
        %5116 = vmatprep.subr.bf16.mxu0 0
        %5117 = vmatpush1.bf16.msra.mxu0 %v5108
        %5118 = vmatprep.subr.bf16.mxu0 0
        %5119 = vmatpush1.bf16.msra.mxu0 0
        %5120 = vmatprep.subr.bf16.mxu0 0
        %5121 = vmatpush1.bf16.msra.mxu0 0
        %5122 = vmatprep.subr.bf16.mxu0 0
        %5123 = vmatpush1.bf16.msra.mxu0 0
        %5124 = vmatprep.subr.bf16.mxu0 0
        %5125 = vmatpush1.bf16.msra.mxu0 0
        %5126 = vmatprep.subr.bf16.mxu0 0
        %5127 = vmatpush1.bf16.msra.mxu0 0
        %5128 = vmatprep.subr.bf16.mxu0 0
        %5129 = vmatpush1.bf16.msra.mxu0 0
        %5130 = vmatprep.subr.bf16.mxu0 0
        %5131 = vmatpush1.bf16.msra.mxu0 0
        %5132 = vmatprep.subr.bf16.mxu0 0
        %5133 = vmatpush1.bf16.msra.mxu0 0
        %5134 = vmatprep.subr.bf16.mxu0 0
        %5135 = vmatpush1.bf16.msra.mxu0 0
        %5136 = vmatprep.subr.bf16.mxu0 0
        %5137 = vmatpush1.bf16.msra.mxu0 0
        %5138 = vmatprep.subr.bf16.mxu0 0
        %5139 = vmatpush1.bf16.msra.mxu0 0
        %5140 = vmatprep.subr.bf16.mxu0 0
        %5141 = vmatpush1.bf16.msra.mxu0 0
        %5142 = vmatprep.subr.bf16.mxu0 0
        %5143 = vmatpush1.bf16.msra.mxu0 0
        %5144 = vmatprep.subr.bf16.mxu0 0
        %5145 = vmatpush1.bf16.msra.mxu0 0
        %5146 = vmatprep.mubr.bf16.mxu0 0
        %5147 = vmatmul.mubr.bf16.gmra.mrb[0].mxu0 %v5112
        %v5148 = vpop.f32.mrb[0].mxu0
        %v5149 = vadd.f32 0.0, %v5148
        %v5150 = vpop.f32.mrb[0].mxu0
        %v5151 = vpop.f32.mrb[0].mxu0
        %v5152 = vpop.f32.mrb[0].mxu0
        %5153 = vdwg.mxu0
        %v5158 = vunpack.c.l.b16 %v5082
        %v5159 = vunpack.c.l.b16 %v5083
        %v5160 = vunpack.c.l.b16 %v5084
        %v5161 = vunpack.c.l.b16 %v5085
        %v5162 = vpack.c.b16 %v5159, %v5158
        %v5163 = vpack.c.b16 %v5161, %v5160
        %v5167 = vsel %vm251, %v5086, 0
        %5169 = vmatprep.subr.bf16.mxu0 0
        %5170 = vmatpush1.bf16.msra.mxu0 %v5162
        %5171 = vmatprep.subr.bf16.mxu0 0
        %5172 = vmatpush1.bf16.msra.mxu0 %v5163
        %5173 = vmatprep.subr.bf16.mxu0 0
        %5174 = vmatpush1.bf16.msra.mxu0 0
        %5175 = vmatprep.subr.bf16.mxu0 0
        %5176 = vmatpush1.bf16.msra.mxu0 0
        %5177 = vmatprep.subr.bf16.mxu0 0
        %5178 = vmatpush1.bf16.msra.mxu0 0
        %5179 = vmatprep.subr.bf16.mxu0 0
        %5180 = vmatpush1.bf16.msra.mxu0 0
        %5181 = vmatprep.subr.bf16.mxu0 0
        %5182 = vmatpush1.bf16.msra.mxu0 0
        %5183 = vmatprep.subr.bf16.mxu0 0
        %5184 = vmatpush1.bf16.msra.mxu0 0
        %5185 = vmatprep.subr.bf16.mxu0 0
        %5186 = vmatpush1.bf16.msra.mxu0 0
        %5187 = vmatprep.subr.bf16.mxu0 0
        %5188 = vmatpush1.bf16.msra.mxu0 0
        %5189 = vmatprep.subr.bf16.mxu0 0
        %5190 = vmatpush1.bf16.msra.mxu0 0
        %5191 = vmatprep.subr.bf16.mxu0 0
        %5192 = vmatpush1.bf16.msra.mxu0 0
        %5193 = vmatprep.subr.bf16.mxu0 0
        %5194 = vmatpush1.bf16.msra.mxu0 0
        %5195 = vmatprep.subr.bf16.mxu0 0
        %5196 = vmatpush1.bf16.msra.mxu0 0
        %5197 = vmatprep.subr.bf16.mxu0 0
        %5198 = vmatpush1.bf16.msra.mxu0 0
        %5199 = vmatprep.subr.bf16.mxu0 0
        %5200 = vmatpush1.bf16.msra.mxu0 0
        %5201 = vmatprep.mubr.bf16.mxu0 0
        %5202 = vmatmul.mubr.bf16.gmra.mrb[0].mxu0 %v5167
        %v5203 = vpop.f32.mrb[0].mxu0
        %v5204 = vadd.f32 %v5149, %v5203
        %v5205 = vpop.f32.mrb[0].mxu0
        %v5206 = vpop.f32.mrb[0].mxu0
        %v5207 = vpop.f32.mrb[0].mxu0
        %5208 = vdwg.mxu0
        %v5209 = vld [vmem:[#allocation4 + $0x110] sm:$0xf]
        %v5210 = vld [vmem:[#allocation4 + $0x114] sm:$0xf]
        %v5211 = vld [vmem:[#allocation4 + $0x118] sm:$0xf]
        %v5212 = vld [vmem:[#allocation4 + $0x11c] sm:$0xf]
        %v5214 = vrot.slane %v5091, 1
        %v5219 = vunpack.c.l.b16 %v5209
        %v5220 = vunpack.c.l.b16 %v5210
        %v5221 = vunpack.c.l.b16 %v5211
        %v5222 = vunpack.c.l.b16 %v5212
        %v5223 = vpack.c.b16 %v5220, %v5219
        %v5224 = vpack.c.b16 %v5222, %v5221
        %v5228 = vsel %vm251, %v5214, 0
        %5230 = vmatprep.subr.bf16.mxu0 0
        %5231 = vmatpush1.bf16.msra.mxu0 %v5223
        %5232 = vmatprep.subr.bf16.mxu0 0
        %5233 = vmatpush1.bf16.msra.mxu0 %v5224
        %5234 = vmatprep.subr.bf16.mxu0 0
        %5235 = vmatpush1.bf16.msra.mxu0 0
        %5236 = vmatprep.subr.bf16.mxu0 0
        %5237 = vmatpush1.bf16.msra.mxu0 0
        %5238 = vmatprep.subr.bf16.mxu0 0
        %5239 = vmatpush1.bf16.msra.mxu0 0
        %5240 = vmatprep.subr.bf16.mxu0 0
        %5241 = vmatpush1.bf16.msra.mxu0 0
        %5242 = vmatprep.subr.bf16.mxu0 0
        %5243 = vmatpush1.bf16.msra.mxu0 0
        %5244 = vmatprep.subr.bf16.mxu0 0
        %5245 = vmatpush1.bf16.msra.mxu0 0
        %5246 = vmatprep.subr.bf16.mxu0 0
        %5247 = vmatpush1.bf16.msra.mxu0 0
        %5248 = vmatprep.subr.bf16.mxu0 0
        %5249 = vmatpush1.bf16.msra.mxu0 0
        %5250 = vmatprep.subr.bf16.mxu0 0
        %5251 = vmatpush1.bf16.msra.mxu0 0
        %5252 = vmatprep.subr.bf16.mxu0 0
        %5253 = vmatpush1.bf16.msra.mxu0 0
        %5254 = vmatprep.subr.bf16.mxu0 0
        %5255 = vmatpush1.bf16.msra.mxu0 0
        %5256 = vmatprep.subr.bf16.mxu0 0
        %5257 = vmatpush1.bf16.msra.mxu0 0
        %5258 = vmatprep.subr.bf16.mxu0 0
        %5259 = vmatpush1.bf16.msra.mxu0 0
        %5260 = vmatprep.subr.bf16.mxu0 0
        %5261 = vmatpush1.bf16.msra.mxu0 0
        %5262 = vmatprep.mubr.bf16.mxu0 0
        %5263 = vmatmul.mubr.bf16.gmra.mrb[0].mxu0 %v5228
        %v5264 = vpop.f32.mrb[0].mxu0
        %v5265 = vadd.f32 0.0, %v5264
        %v5266 = vpop.f32.mrb[0].mxu0
        %v5267 = vpop.f32.mrb[0].mxu0
        %v5268 = vpop.f32.mrb[0].mxu0
        %5269 = vdwg.mxu0
        %v5270 = vadd.f32 %v5204, %v5265
        %v5271 = vld [vmem:[#allocation4 + $0x120] sm:$0xf]
        %v5272 = vld [vmem:[#allocation4 + $0x124] sm:$0xf]
        %v5273 = vld [vmem:[#allocation4 + $0x128] sm:$0xf]
        %v5274 = vld [vmem:[#allocation4 + $0x12c] sm:$0xf]
        %v5275 = vrot.slane %v5093, 1
        %v5276 = vrot.slane %v5095, 2
        %v5277 = vor.u32 %v5275, %v5276
        %v5282 = vunpack.c.l.b16 %v5271
        %v5283 = vunpack.c.l.b16 %v5272
        %v5284 = vunpack.c.l.b16 %v5273
        %v5285 = vunpack.c.l.b16 %v5274
        %v5286 = vpack.c.b16 %v5283, %v5282
        %v5287 = vpack.c.b16 %v5285, %v5284
        %v5291 = vsel %vm251, %v5277, 0
        %5293 = vmatprep.subr.bf16.mxu0 0
        %5294 = vmatpush1.bf16.msra.mxu0 %v5286
        %5295 = vmatprep.subr.bf16.mxu0 0
        %5296 = vmatpush1.bf16.msra.mxu0 %v5287
        %5297 = vmatprep.subr.bf16.mxu0 0
        %5298 = vmatpush1.bf16.msra.mxu0 0
        %5299 = vmatprep.subr.bf16.mxu0 0
        %5300 = vmatpush1.bf16.msra.mxu0 0
        %5301 = vmatprep.subr.bf16.mxu0 0
        %5302 = vmatpush1.bf16.msra.mxu0 0
        %5303 = vmatprep.subr.bf16.mxu0 0
        %5304 = vmatpush1.bf16.msra.mxu0 0
        %5305 = vmatprep.subr.bf16.mxu0 0
        %5306 = vmatpush1.bf16.msra.mxu0 0
        %5307 = vmatprep.subr.bf16.mxu0 0
        %5308 = vmatpush1.bf16.msra.mxu0 0
        %5309 = vmatprep.subr.bf16.mxu0 0
        %5310 = vmatpush1.bf16.msra.mxu0 0
        %5311 = vmatprep.subr.bf16.mxu0 0
        %5312 = vmatpush1.bf16.msra.mxu0 0
        %5313 = vmatprep.subr.bf16.mxu0 0
        %5314 = vmatpush1.bf16.msra.mxu0 0
        %5315 = vmatprep.subr.bf16.mxu0 0
        %5316 = vmatpush1.bf16.msra.mxu0 0
        %5317 = vmatprep.subr.bf16.mxu0 0
        %5318 = vmatpush1.bf16.msra.mxu0 0
        %5319 = vmatprep.subr.bf16.mxu0 0
        %5320 = vmatpush1.bf16.msra.mxu0 0
        %5321 = vmatprep.subr.bf16.mxu0 0
        %5322 = vmatpush1.bf16.msra.mxu0 0
        %5323 = vmatprep.subr.bf16.mxu0 0
        %5324 = vmatpush1.bf16.msra.mxu0 0
        %5325 = vmatprep.mubr.bf16.mxu0 0
        %5326 = vmatmul.mubr.bf16.gmra.mrb[0].mxu0 %v5291
        %v5327 = vpop.f32.mrb[0].mxu0
        %v5328 = vadd.f32 0.0, %v5327
        %v5329 = vpop.f32.mrb[0].mxu0
        %v5330 = vpop.f32.mrb[0].mxu0
        %v5331 = vpop.f32.mrb[0].mxu0
        %5332 = vdwg.mxu0
        %v5333 = vadd.f32 %v5270, %v5328
        %v5334 = vld [vmem:[#allocation4 + $0x130] sm:$0xf]
        %v5335 = vld [vmem:[#allocation4 + $0x134] sm:$0xf]
        %v5336 = vld [vmem:[#allocation4 + $0x138] sm:$0xf]
        %v5337 = vld [vmem:[#allocation4 + $0x13c] sm:$0xf]
        %v5338 = vrot.slane %v5091, 2
        %v5343 = vunpack.c.l.b16 %v5334
        %v5344 = vunpack.c.l.b16 %v5335
        %v5345 = vunpack.c.l.b16 %v5336
        %v5346 = vunpack.c.l.b16 %v5337
        %v5347 = vpack.c.b16 %v5344, %v5343
        %v5348 = vpack.c.b16 %v5346, %v5345
        %v5352 = vsel %vm251, %v5338, 0
        %5354 = vmatprep.subr.bf16.mxu0 0
        %5355 = vmatpush1.bf16.msra.mxu0 %v5347
        %5356 = vmatprep.subr.bf16.mxu0 0
        %5357 = vmatpush1.bf16.msra.mxu0 %v5348
        %5358 = vmatprep.subr.bf16.mxu0 0
        %5359 = vmatpush1.bf16.msra.mxu0 0
        %5360 = vmatprep.subr.bf16.mxu0 0
        %5361 = vmatpush1.bf16.msra.mxu0 0
        %5362 = vmatprep.subr.bf16.mxu0 0
        %5363 = vmatpush1.bf16.msra.mxu0 0
        %5364 = vmatprep.subr.bf16.mxu0 0
        %5365 = vmatpush1.bf16.msra.mxu0 0
        %5366 = vmatprep.subr.bf16.mxu0 0
        %5367 = vmatpush1.bf16.msra.mxu0 0
        %5368 = vmatprep.subr.bf16.mxu0 0
        %5369 = vmatpush1.bf16.msra.mxu0 0
        %5370 = vmatprep.subr.bf16.mxu0 0
        %5371 = vmatpush1.bf16.msra.mxu0 0
        %5372 = vmatprep.subr.bf16.mxu0 0
        %5373 = vmatpush1.bf16.msra.mxu0 0
        %5374 = vmatprep.subr.bf16.mxu0 0
        %5375 = vmatpush1.bf16.msra.mxu0 0
        %5376 = vmatprep.subr.bf16.mxu0 0
        %5377 = vmatpush1.bf16.msra.mxu0 0
        %5378 = vmatprep.subr.bf16.mxu0 0
        %5379 = vmatpush1.bf16.msra.mxu0 0
        %5380 = vmatprep.subr.bf16.mxu0 0
        %5381 = vmatpush1.bf16.msra.mxu0 0
        %5382 = vmatprep.subr.bf16.mxu0 0
        %5383 = vmatpush1.bf16.msra.mxu0 0
        %5384 = vmatprep.subr.bf16.mxu0 0
        %5385 = vmatpush1.bf16.msra.mxu0 0
        %5386 = vmatprep.mubr.bf16.mxu0 0
        %5387 = vmatmul.mubr.bf16.gmra.mrb[0].mxu0 %v5352
        %v5388 = vpop.f32.mrb[0].mxu0
        %v5389 = vadd.f32 0.0, %v5388
        %v5390 = vpop.f32.mrb[0].mxu0
        %v5391 = vpop.f32.mrb[0].mxu0
        %v5392 = vpop.f32.mrb[0].mxu0
        %5393 = vdwg.mxu0
        %v5394 = vadd.f32 %v5333, %v5389
        %v5395 = vld [vmem:[%s3 + $0x8] sm:$0x1]
        %v5396 = vlaneseq
        %v5397 = vshrl.u32 %v5396, 7
        %v5398 = vsub.s32 0, %v5397
        %v5399 = vrot.slane %v5395, %v5398
        %v5400 = vadd.f32 %v5394, %v5399
        %v5401 = vtanh.pop %v5400
        %v5403 = vrot.slane %v5401, 6
        %v5405 = vsel %vm4794, 0.0, %v5403
        %v5406 = vsel %vm4794, %v5403, 0.0
        %v5407 = vld [vmem:[#allocation4 + $0x140] sm:$0xf]
        %v5408 = vld [vmem:[#allocation4 + $0x144] sm:$0xf]
        %v5409 = vld [vmem:[#allocation4 + $0x148] sm:$0xf]
        %v5410 = vld [vmem:[#allocation4 + $0x14c] sm:$0xf]
        %v5411 = vpack.c.bf16 %v5405, %v5405
        %v5412 = vld [vmem:[#allocation4 + $0x150] sm:$0xf]
        %v5413 = vld [vmem:[#allocation4 + $0x154] sm:$0xf]
        %v5414 = vld [vmem:[#allocation4 + $0x158] sm:$0xf]
        %v5415 = vld [vmem:[#allocation4 + $0x15c] sm:$0xf]
        %v5416 = vpack.c.bf16 %v5406, %v5405
        %v5418 = vshrl.u32 %v5416, 16
        %v5420 = vshll.u32 %v5416, 16
        %v5422 = vrot.slane %v5420, 1
        %v5423 = vor.u32 %v5418, %v5422
        %v5428 = vunpack.c.l.b16 %v5412
        %v5429 = vunpack.c.l.b16 %v5413
        %v5430 = vunpack.c.l.b16 %v5414
        %v5431 = vunpack.c.l.b16 %v5415
        %v5432 = vpack.c.b16 %v5429, %v5428
        %v5433 = vpack.c.b16 %v5431, %v5430
        %v5437 = vsel %vm251, %v5423, 0
        %5439 = vmatprep.subr.bf16.mxu0 0
        %5440 = vmatpush1.bf16.msra.mxu0 %v5432
        %5441 = vmatprep.subr.bf16.mxu0 0
        %5442 = vmatpush1.bf16.msra.mxu0 %v5433
        %5443 = vmatprep.subr.bf16.mxu0 0
        %5444 = vmatpush1.bf16.msra.mxu0 0
        %5445 = vmatprep.subr.bf16.mxu0 0
        %5446 = vmatpush1.bf16.msra.mxu0 0
        %5447 = vmatprep.subr.bf16.mxu0 0
        %5448 = vmatpush1.bf16.msra.mxu0 0
        %5449 = vmatprep.subr.bf16.mxu0 0
        %5450 = vmatpush1.bf16.msra.mxu0 0
        %5451 = vmatprep.subr.bf16.mxu0 0
        %5452 = vmatpush1.bf16.msra.mxu0 0
        %5453 = vmatprep.subr.bf16.mxu0 0
        %5454 = vmatpush1.bf16.msra.mxu0 0
        %5455 = vmatprep.subr.bf16.mxu0 0
        %5456 = vmatpush1.bf16.msra.mxu0 0
        %5457 = vmatprep.subr.bf16.mxu0 0
        %5458 = vmatpush1.bf16.msra.mxu0 0
        %5459 = vmatprep.subr.bf16.mxu0 0
        %5460 = vmatpush1.bf16.msra.mxu0 0
        %5461 = vmatprep.subr.bf16.mxu0 0
        %5462 = vmatpush1.bf16.msra.mxu0 0
        %5463 = vmatprep.subr.bf16.mxu0 0
        %5464 = vmatpush1.bf16.msra.mxu0 0
        %5465 = vmatprep.subr.bf16.mxu0 0
        %5466 = vmatpush1.bf16.msra.mxu0 0
        %5467 = vmatprep.subr.bf16.mxu0 0
        %5468 = vmatpush1.bf16.msra.mxu0 0
        %5469 = vmatprep.subr.bf16.mxu0 0
        %5470 = vmatpush1.bf16.msra.mxu0 0
        %5471 = vmatprep.mubr.bf16.mxu0 0
        %5472 = vmatmul.mubr.bf16.gmra.mrb[0].mxu0 %v5437
        %v5473 = vpop.f32.mrb[0].mxu0
        %v5474 = vadd.f32 0.0, %v5473
        %v5475 = vpop.f32.mrb[0].mxu0
        %v5476 = vpop.f32.mrb[0].mxu0
        %v5477 = vpop.f32.mrb[0].mxu0
        %5478 = vdwg.mxu0
        %v5483 = vunpack.c.l.b16 %v5407
        %v5484 = vunpack.c.l.b16 %v5408
        %v5485 = vunpack.c.l.b16 %v5409
        %v5486 = vunpack.c.l.b16 %v5410
        %v5487 = vpack.c.b16 %v5484, %v5483
        %v5488 = vpack.c.b16 %v5486, %v5485
        %v5492 = vsel %vm251, %v5411, 0
        %5494 = vmatprep.subr.bf16.mxu0 0
        %5495 = vmatpush1.bf16.msra.mxu0 %v5487
        %5496 = vmatprep.subr.bf16.mxu0 0
        %5497 = vmatpush1.bf16.msra.mxu0 %v5488
        %5498 = vmatprep.subr.bf16.mxu0 0
        %5499 = vmatpush1.bf16.msra.mxu0 0
        %5500 = vmatprep.subr.bf16.mxu0 0
        %5501 = vmatpush1.bf16.msra.mxu0 0
        %5502 = vmatprep.subr.bf16.mxu0 0
        %5503 = vmatpush1.bf16.msra.mxu0 0
        %5504 = vmatprep.subr.bf16.mxu0 0
        %5505 = vmatpush1.bf16.msra.mxu0 0
        %5506 = vmatprep.subr.bf16.mxu0 0
        %5507 = vmatpush1.bf16.msra.mxu0 0
        %5508 = vmatprep.subr.bf16.mxu0 0
        %5509 = vmatpush1.bf16.msra.mxu0 0
        %5510 = vmatprep.subr.bf16.mxu0 0
        %5511 = vmatpush1.bf16.msra.mxu0 0
        %5512 = vmatprep.subr.bf16.mxu0 0
        %5513 = vmatpush1.bf16.msra.mxu0 0
        %5514 = vmatprep.subr.bf16.mxu0 0
        %5515 = vmatpush1.bf16.msra.mxu0 0
        %5516 = vmatprep.subr.bf16.mxu0 0
        %5517 = vmatpush1.bf16.msra.mxu0 0
        %5518 = vmatprep.subr.bf16.mxu0 0
        %5519 = vmatpush1.bf16.msra.mxu0 0
        %5520 = vmatprep.subr.bf16.mxu0 0
        %5521 = vmatpush1.bf16.msra.mxu0 0
        %5522 = vmatprep.subr.bf16.mxu0 0
        %5523 = vmatpush1.bf16.msra.mxu0 0
        %5524 = vmatprep.subr.bf16.mxu0 0
        %5525 = vmatpush1.bf16.msra.mxu0 0
        %5526 = vmatprep.mubr.bf16.mxu0 0
        %5527 = vmatmul.mubr.bf16.gmra.mrb[0].mxu0 %v5492
        %v5528 = vpop.f32.mrb[0].mxu0
        %v5529 = vadd.f32 %v5474, %v5528
        %v5530 = vpop.f32.mrb[0].mxu0
        %v5531 = vpop.f32.mrb[0].mxu0
        %v5532 = vpop.f32.mrb[0].mxu0
        %5533 = vdwg.mxu0
        %v5534 = vld [vmem:[#allocation4 + $0x160] sm:$0xf]
        %v5535 = vld [vmem:[#allocation4 + $0x164] sm:$0xf]
        %v5536 = vld [vmem:[#allocation4 + $0x168] sm:$0xf]
        %v5537 = vld [vmem:[#allocation4 + $0x16c] sm:$0xf]
        %v5539 = vrot.slane %v5416, 1
        %v5544 = vunpack.c.l.b16 %v5534
        %v5545 = vunpack.c.l.b16 %v5535
        %v5546 = vunpack.c.l.b16 %v5536
        %v5547 = vunpack.c.l.b16 %v5537
        %v5548 = vpack.c.b16 %v5545, %v5544
        %v5549 = vpack.c.b16 %v5547, %v5546
        %v5553 = vsel %vm251, %v5539, 0
        %5555 = vmatprep.subr.bf16.mxu0 0
        %5556 = vmatpush1.bf16.msra.mxu0 %v5548
        %5557 = vmatprep.subr.bf16.mxu0 0
        %5558 = vmatpush1.bf16.msra.mxu0 %v5549
        %5559 = vmatprep.subr.bf16.mxu0 0
        %5560 = vmatpush1.bf16.msra.mxu0 0
        %5561 = vmatprep.subr.bf16.mxu0 0
        %5562 = vmatpush1.bf16.msra.mxu0 0
        %5563 = vmatprep.subr.bf16.mxu0 0
        %5564 = vmatpush1.bf16.msra.mxu0 0
        %5565 = vmatprep.subr.bf16.mxu0 0
        %5566 = vmatpush1.bf16.msra.mxu0 0
        %5567 = vmatprep.subr.bf16.mxu0 0
        %5568 = vmatpush1.bf16.msra.mxu0 0
        %5569 = vmatprep.subr.bf16.mxu0 0
        %5570 = vmatpush1.bf16.msra.mxu0 0
        %5571 = vmatprep.subr.bf16.mxu0 0
        %5572 = vmatpush1.bf16.msra.mxu0 0
        %5573 = vmatprep.subr.bf16.mxu0 0
        %5574 = vmatpush1.bf16.msra.mxu0 0
        %5575 = vmatprep.subr.bf16.mxu0 0
        %5576 = vmatpush1.bf16.msra.mxu0 0
        %5577 = vmatprep.subr.bf16.mxu0 0
        %5578 = vmatpush1.bf16.msra.mxu0 0
        %5579 = vmatprep.subr.bf16.mxu0 0
        %5580 = vmatpush1.bf16.msra.mxu0 0
        %5581 = vmatprep.subr.bf16.mxu0 0
        %5582 = vmatpush1.bf16.msra.mxu0 0
        %5583 = vmatprep.subr.bf16.mxu0 0
        %5584 = vmatpush1.bf16.msra.mxu0 0
        %5585 = vmatprep.subr.bf16.mxu0 0
        %5586 = vmatpush1.bf16.msra.mxu0 0
        %5587 = vmatprep.mubr.bf16.mxu0 0
        %5588 = vmatmul.mubr.bf16.gmra.mrb[0].mxu0 %v5553
        %v5589 = vpop.f32.mrb[0].mxu0
        %v5590 = vadd.f32 0.0, %v5589
        %v5591 = vpop.f32.mrb[0].mxu0
        %v5592 = vpop.f32.mrb[0].mxu0
        %v5593 = vpop.f32.mrb[0].mxu0
        %5594 = vdwg.mxu0
        %v5595 = vadd.f32 %v5529, %v5590
        %v5596 = vld [vmem:[#allocation4 + $0x170] sm:$0xf]
        %v5597 = vld [vmem:[#allocation4 + $0x174] sm:$0xf]
        %v5598 = vld [vmem:[#allocation4 + $0x178] sm:$0xf]
        %v5599 = vld [vmem:[#allocation4 + $0x17c] sm:$0xf]
        %v5600 = vrot.slane %v5418, 1
        %v5601 = vrot.slane %v5420, 2
        %v5602 = vor.u32 %v5600, %v5601
        %v5607 = vunpack.c.l.b16 %v5596
        %v5608 = vunpack.c.l.b16 %v5597
        %v5609 = vunpack.c.l.b16 %v5598
        %v5610 = vunpack.c.l.b16 %v5599
        %v5611 = vpack.c.b16 %v5608, %v5607
        %v5612 = vpack.c.b16 %v5610, %v5609
        %v5616 = vsel %vm251, %v5602, 0
        %5618 = vmatprep.subr.bf16.mxu0 0
        %5619 = vmatpush1.bf16.msra.mxu0 %v5611
        %5620 = vmatprep.subr.bf16.mxu0 0
        %5621 = vmatpush1.bf16.msra.mxu0 %v5612
        %5622 = vmatprep.subr.bf16.mxu0 0
        %5623 = vmatpush1.bf16.msra.mxu0 0
        %5624 = vmatprep.subr.bf16.mxu0 0
        %5625 = vmatpush1.bf16.msra.mxu0 0
        %5626 = vmatprep.subr.bf16.mxu0 0
        %5627 = vmatpush1.bf16.msra.mxu0 0
        %5628 = vmatprep.subr.bf16.mxu0 0
        %5629 = vmatpush1.bf16.msra.mxu0 0
        %5630 = vmatprep.subr.bf16.mxu0 0
        %5631 = vmatpush1.bf16.msra.mxu0 0
        %5632 = vmatprep.subr.bf16.mxu0 0
        %5633 = vmatpush1.bf16.msra.mxu0 0
        %5634 = vmatprep.subr.bf16.mxu0 0
        %5635 = vmatpush1.bf16.msra.mxu0 0
        %5636 = vmatprep.subr.bf16.mxu0 0
        %5637 = vmatpush1.bf16.msra.mxu0 0
        %5638 = vmatprep.subr.bf16.mxu0 0
        %5639 = vmatpush1.bf16.msra.mxu0 0
        %5640 = vmatprep.subr.bf16.mxu0 0
        %5641 = vmatpush1.bf16.msra.mxu0 0
        %5642 = vmatprep.subr.bf16.mxu0 0
        %5643 = vmatpush1.bf16.msra.mxu0 0
        %5644 = vmatprep.subr.bf16.mxu0 0
        %5645 = vmatpush1.bf16.msra.mxu0 0
        %5646 = vmatprep.subr.bf16.mxu0 0
        %5647 = vmatpush1.bf16.msra.mxu0 0
        %5648 = vmatprep.subr.bf16.mxu0 0
        %5649 = vmatpush1.bf16.msra.mxu0 0
        %5650 = vmatprep.mubr.bf16.mxu0 0
        %5651 = vmatmul.mubr.bf16.gmra.mrb[0].mxu0 %v5616
        %v5652 = vpop.f32.mrb[0].mxu0
        %v5653 = vadd.f32 0.0, %v5652
        %v5654 = vpop.f32.mrb[0].mxu0
        %v5655 = vpop.f32.mrb[0].mxu0
        %v5656 = vpop.f32.mrb[0].mxu0
        %5657 = vdwg.mxu0
        %v5658 = vadd.f32 %v5595, %v5653
        %v5659 = vld [vmem:[#allocation4 + $0x180] sm:$0xf]
        %v5660 = vld [vmem:[#allocation4 + $0x184] sm:$0xf]
        %v5661 = vld [vmem:[#allocation4 + $0x188] sm:$0xf]
        %v5662 = vld [vmem:[#allocation4 + $0x18c] sm:$0xf]
        %v5663 = vrot.slane %v5416, 2
        %v5668 = vunpack.c.l.b16 %v5659
        %v5669 = vunpack.c.l.b16 %v5660
        %v5670 = vunpack.c.l.b16 %v5661
        %v5671 = vunpack.c.l.b16 %v5662
        %v5672 = vpack.c.b16 %v5669, %v5668
        %v5673 = vpack.c.b16 %v5671, %v5670
        %v5677 = vsel %vm251, %v5663, 0
        %5679 = vmatprep.subr.bf16.mxu0 0
        %5680 = vmatpush1.bf16.msra.mxu0 %v5672
        %5681 = vmatprep.subr.bf16.mxu0 0
        %5682 = vmatpush1.bf16.msra.mxu0 %v5673
        %5683 = vmatprep.subr.bf16.mxu0 0
        %5684 = vmatpush1.bf16.msra.mxu0 0
        %5685 = vmatprep.subr.bf16.mxu0 0
        %5686 = vmatpush1.bf16.msra.mxu0 0
        %5687 = vmatprep.subr.bf16.mxu0 0
        %5688 = vmatpush1.bf16.msra.mxu0 0
        %5689 = vmatprep.subr.bf16.mxu0 0
        %5690 = vmatpush1.bf16.msra.mxu0 0
        %5691 = vmatprep.subr.bf16.mxu0 0
        %5692 = vmatpush1.bf16.msra.mxu0 0
        %5693 = vmatprep.subr.bf16.mxu0 0
        %5694 = vmatpush1.bf16.msra.mxu0 0
        %5695 = vmatprep.subr.bf16.mxu0 0
        %5696 = vmatpush1.bf16.msra.mxu0 0
        %5697 = vmatprep.subr.bf16.mxu0 0
        %5698 = vmatpush1.bf16.msra.mxu0 0
        %5699 = vmatprep.subr.bf16.mxu0 0
        %5700 = vmatpush1.bf16.msra.mxu0 0
        %5701 = vmatprep.subr.bf16.mxu0 0
        %5702 = vmatpush1.bf16.msra.mxu0 0
        %5703 = vmatprep.subr.bf16.mxu0 0
        %5704 = vmatpush1.bf16.msra.mxu0 0
        %5705 = vmatprep.subr.bf16.mxu0 0
        %5706 = vmatpush1.bf16.msra.mxu0 0
        %5707 = vmatprep.subr.bf16.mxu0 0
        %5708 = vmatpush1.bf16.msra.mxu0 0
        %5709 = vmatprep.subr.bf16.mxu0 0
        %5710 = vmatpush1.bf16.msra.mxu0 0
        %5711 = vmatprep.mubr.bf16.mxu0 0
        %5712 = vmatmul.mubr.bf16.gmra.mrb[0].mxu0 %v5677
        %v5713 = vpop.f32.mrb[0].mxu0
        %v5714 = vadd.f32 0.0, %v5713
        %v5715 = vpop.f32.mrb[0].mxu0
        %v5716 = vpop.f32.mrb[0].mxu0
        %v5717 = vpop.f32.mrb[0].mxu0
        %5718 = vdwg.mxu0
        %v5719 = vadd.f32 %v5658, %v5714
        %v5720 = vld [vmem:[%s3 + $0x9] sm:$0x1]
        %v5721 = vlaneseq
        %v5722 = vshrl.u32 %v5721, 7
        %v5723 = vsub.s32 0, %v5722
        %v5724 = vrot.slane %v5720, %v5723
        %v5725 = vadd.f32 %v5719, %v5724
        %v5726 = vtanh.pop %v5725
        %v5728 = vrot.slane %v5726, 6
        %v5730 = vsel %vm4794, 0.0, %v5728
        %v5731 = vsel %vm4794, %v5728, 0.0
        %v5732 = vld [vmem:[#allocation4 + $0x190] sm:$0xf]
        %v5733 = vld [vmem:[#allocation4 + $0x194] sm:$0xf]
        %v5734 = vld [vmem:[#allocation4 + $0x198] sm:$0xf]
        %v5735 = vld [vmem:[#allocation4 + $0x19c] sm:$0xf]
        %v5736 = vpack.c.bf16 %v5730, %v5730
        %v5737 = vld [vmem:[#allocation4 + $0x1a0] sm:$0xf]
        %v5738 = vld [vmem:[#allocation4 + $0x1a4] sm:$0xf]
        %v5739 = vld [vmem:[#allocation4 + $0x1a8] sm:$0xf]
        %v5740 = vld [vmem:[#allocation4 + $0x1ac] sm:$0xf]
        %v5741 = vpack.c.bf16 %v5731, %v5730
        %v5743 = vshrl.u32 %v5741, 16
        %v5745 = vshll.u32 %v5741, 16
        %v5747 = vrot.slane %v5745, 1
        %v5748 = vor.u32 %v5743, %v5747
        %v5753 = vunpack.c.l.b16 %v5737
        %v5754 = vunpack.c.l.b16 %v5738
        %v5755 = vunpack.c.l.b16 %v5739
        %v5756 = vunpack.c.l.b16 %v5740
        %v5757 = vpack.c.b16 %v5754, %v5753
        %v5758 = vpack.c.b16 %v5756, %v5755
        %v5762 = vsel %vm251, %v5748, 0
        %5764 = vmatprep.subr.bf16.mxu0 0
        %5765 = vmatpush1.bf16.msra.mxu0 %v5757
        %5766 = vmatprep.subr.bf16.mxu0 0
        %5767 = vmatpush1.bf16.msra.mxu0 %v5758
        %5768 = vmatprep.subr.bf16.mxu0 0
        %5769 = vmatpush1.bf16.msra.mxu0 0
        %5770 = vmatprep.subr.bf16.mxu0 0
        %5771 = vmatpush1.bf16.msra.mxu0 0
        %5772 = vmatprep.subr.bf16.mxu0 0
        %5773 = vmatpush1.bf16.msra.mxu0 0
        %5774 = vmatprep.subr.bf16.mxu0 0
        %5775 = vmatpush1.bf16.msra.mxu0 0
        %5776 = vmatprep.subr.bf16.mxu0 0
        %5777 = vmatpush1.bf16.msra.mxu0 0
        %5778 = vmatprep.subr.bf16.mxu0 0
        %5779 = vmatpush1.bf16.msra.mxu0 0
        %5780 = vmatprep.subr.bf16.mxu0 0
        %5781 = vmatpush1.bf16.msra.mxu0 0
        %5782 = vmatprep.subr.bf16.mxu0 0
        %5783 = vmatpush1.bf16.msra.mxu0 0
        %5784 = vmatprep.subr.bf16.mxu0 0
        %5785 = vmatpush1.bf16.msra.mxu0 0
        %5786 = vmatprep.subr.bf16.mxu0 0
        %5787 = vmatpush1.bf16.msra.mxu0 0
        %5788 = vmatprep.subr.bf16.mxu0 0
        %5789 = vmatpush1.bf16.msra.mxu0 0
        %5790 = vmatprep.subr.bf16.mxu0 0
        %5791 = vmatpush1.bf16.msra.mxu0 0
        %5792 = vmatprep.subr.bf16.mxu0 0
        %5793 = vmatpush1.bf16.msra.mxu0 0
        %5794 = vmatprep.subr.bf16.mxu0 0
        %5795 = vmatpush1.bf16.msra.mxu0 0
        %5796 = vmatprep.mubr.bf16.mxu0 0
        %5797 = vmatmul.mubr.bf16.gmra.mrb[0].mxu0 %v5762
        %v5798 = vpop.f32.mrb[0].mxu0
        %v5799 = vadd.f32 0.0, %v5798
        %v5800 = vpop.f32.mrb[0].mxu0
        %v5801 = vpop.f32.mrb[0].mxu0
        %v5802 = vpop.f32.mrb[0].mxu0
        %5803 = vdwg.mxu0
        %v5808 = vunpack.c.l.b16 %v5732
        %v5809 = vunpack.c.l.b16 %v5733
        %v5810 = vunpack.c.l.b16 %v5734
        %v5811 = vunpack.c.l.b16 %v5735
        %v5812 = vpack.c.b16 %v5809, %v5808
        %v5813 = vpack.c.b16 %v5811, %v5810
        %v5817 = vsel %vm251, %v5736, 0
        %5819 = vmatprep.subr.bf16.mxu0 0
        %5820 = vmatpush1.bf16.msra.mxu0 %v5812
        %5821 = vmatprep.subr.bf16.mxu0 0
        %5822 = vmatpush1.bf16.msra.mxu0 %v5813
        %5823 = vmatprep.subr.bf16.mxu0 0
        %5824 = vmatpush1.bf16.msra.mxu0 0
        %5825 = vmatprep.subr.bf16.mxu0 0
        %5826 = vmatpush1.bf16.msra.mxu0 0
        %5827 = vmatprep.subr.bf16.mxu0 0
        %5828 = vmatpush1.bf16.msra.mxu0 0
        %5829 = vmatprep.subr.bf16.mxu0 0
        %5830 = vmatpush1.bf16.msra.mxu0 0
        %5831 = vmatprep.subr.bf16.mxu0 0
        %5832 = vmatpush1.bf16.msra.mxu0 0
        %5833 = vmatprep.subr.bf16.mxu0 0
        %5834 = vmatpush1.bf16.msra.mxu0 0
        %5835 = vmatprep.subr.bf16.mxu0 0
        %5836 = vmatpush1.bf16.msra.mxu0 0
        %5837 = vmatprep.subr.bf16.mxu0 0
        %5838 = vmatpush1.bf16.msra.mxu0 0
        %5839 = vmatprep.subr.bf16.mxu0 0
        %5840 = vmatpush1.bf16.msra.mxu0 0
        %5841 = vmatprep.subr.bf16.mxu0 0
        %5842 = vmatpush1.bf16.msra.mxu0 0
        %5843 = vmatprep.subr.bf16.mxu0 0
        %5844 = vmatpush1.bf16.msra.mxu0 0
        %5845 = vmatprep.subr.bf16.mxu0 0
        %5846 = vmatpush1.bf16.msra.mxu0 0
        %5847 = vmatprep.subr.bf16.mxu0 0
        %5848 = vmatpush1.bf16.msra.mxu0 0
        %5849 = vmatprep.subr.bf16.mxu0 0
        %5850 = vmatpush1.bf16.msra.mxu0 0
        %5851 = vmatprep.mubr.bf16.mxu0 0
        %5852 = vmatmul.mubr.bf16.gmra.mrb[0].mxu0 %v5817
        %v5853 = vpop.f32.mrb[0].mxu0
        %v5854 = vadd.f32 %v5799, %v5853
        %v5855 = vpop.f32.mrb[0].mxu0
        %v5856 = vpop.f32.mrb[0].mxu0
        %v5857 = vpop.f32.mrb[0].mxu0
        %5858 = vdwg.mxu0
        %v5859 = vld [vmem:[#allocation4 + $0x1b0] sm:$0xf]
        %v5860 = vld [vmem:[#allocation4 + $0x1b4] sm:$0xf]
        %v5861 = vld [vmem:[#allocation4 + $0x1b8] sm:$0xf]
        %v5862 = vld [vmem:[#allocation4 + $0x1bc] sm:$0xf]
        %v5864 = vrot.slane %v5741, 1
        %v5869 = vunpack.c.l.b16 %v5859
        %v5870 = vunpack.c.l.b16 %v5860
        %v5871 = vunpack.c.l.b16 %v5861
        %v5872 = vunpack.c.l.b16 %v5862
        %v5873 = vpack.c.b16 %v5870, %v5869
        %v5874 = vpack.c.b16 %v5872, %v5871
        %v5878 = vsel %vm251, %v5864, 0
        %5880 = vmatprep.subr.bf16.mxu0 0
        %5881 = vmatpush1.bf16.msra.mxu0 %v5873
        %5882 = vmatprep.subr.bf16.mxu0 0
        %5883 = vmatpush1.bf16.msra.mxu0 %v5874
        %5884 = vmatprep.subr.bf16.mxu0 0
        %5885 = vmatpush1.bf16.msra.mxu0 0
        %5886 = vmatprep.subr.bf16.mxu0 0
        %5887 = vmatpush1.bf16.msra.mxu0 0
        %5888 = vmatprep.subr.bf16.mxu0 0
        %5889 = vmatpush1.bf16.msra.mxu0 0
        %5890 = vmatprep.subr.bf16.mxu0 0
        %5891 = vmatpush1.bf16.msra.mxu0 0
        %5892 = vmatprep.subr.bf16.mxu0 0
        %5893 = vmatpush1.bf16.msra.mxu0 0
        %5894 = vmatprep.subr.bf16.mxu0 0
        %5895 = vmatpush1.bf16.msra.mxu0 0
        %5896 = vmatprep.subr.bf16.mxu0 0
        %5897 = vmatpush1.bf16.msra.mxu0 0
        %5898 = vmatprep.subr.bf16.mxu0 0
        %5899 = vmatpush1.bf16.msra.mxu0 0
        %5900 = vmatprep.subr.bf16.mxu0 0
        %5901 = vmatpush1.bf16.msra.mxu0 0
        %5902 = vmatprep.subr.bf16.mxu0 0
        %5903 = vmatpush1.bf16.msra.mxu0 0
        %5904 = vmatprep.subr.bf16.mxu0 0
        %5905 = vmatpush1.bf16.msra.mxu0 0
        %5906 = vmatprep.subr.bf16.mxu0 0
        %5907 = vmatpush1.bf16.msra.mxu0 0
        %5908 = vmatprep.subr.bf16.mxu0 0
        %5909 = vmatpush1.bf16.msra.mxu0 0
        %5910 = vmatprep.subr.bf16.mxu0 0
        %5911 = vmatpush1.bf16.msra.mxu0 0
        %5912 = vmatprep.mubr.bf16.mxu0 0
        %5913 = vmatmul.mubr.bf16.gmra.mrb[0].mxu0 %v5878
        %v5914 = vpop.f32.mrb[0].mxu0
        %v5915 = vadd.f32 0.0, %v5914
        %v5916 = vpop.f32.mrb[0].mxu0
        %v5917 = vpop.f32.mrb[0].mxu0
        %v5918 = vpop.f32.mrb[0].mxu0
        %5919 = vdwg.mxu0
        %v5920 = vadd.f32 %v5854, %v5915
        %v5921 = vld [vmem:[#allocation4 + $0x1c0] sm:$0xf]
        %v5922 = vld [vmem:[#allocation4 + $0x1c4] sm:$0xf]
        %v5923 = vld [vmem:[#allocation4 + $0x1c8] sm:$0xf]
        %v5924 = vld [vmem:[#allocation4 + $0x1cc] sm:$0xf]
        %v5925 = vrot.slane %v5743, 1
        %v5926 = vrot.slane %v5745, 2
        %v5927 = vor.u32 %v5925, %v5926
        %v5932 = vunpack.c.l.b16 %v5921
        %v5933 = vunpack.c.l.b16 %v5922
        %v5934 = vunpack.c.l.b16 %v5923
        %v5935 = vunpack.c.l.b16 %v5924
        %v5936 = vpack.c.b16 %v5933, %v5932
        %v5937 = vpack.c.b16 %v5935, %v5934
        %v5941 = vsel %vm251, %v5927, 0
        %5943 = vmatprep.subr.bf16.mxu0 0
        %5944 = vmatpush1.bf16.msra.mxu0 %v5936
        %5945 = vmatprep.subr.bf16.mxu0 0
        %5946 = vmatpush1.bf16.msra.mxu0 %v5937
        %5947 = vmatprep.subr.bf16.mxu0 0
        %5948 = vmatpush1.bf16.msra.mxu0 0
        %5949 = vmatprep.subr.bf16.mxu0 0
        %5950 = vmatpush1.bf16.msra.mxu0 0
        %5951 = vmatprep.subr.bf16.mxu0 0
        %5952 = vmatpush1.bf16.msra.mxu0 0
        %5953 = vmatprep.subr.bf16.mxu0 0
        %5954 = vmatpush1.bf16.msra.mxu0 0
        %5955 = vmatprep.subr.bf16.mxu0 0
        %5956 = vmatpush1.bf16.msra.mxu0 0
        %5957 = vmatprep.subr.bf16.mxu0 0
        %5958 = vmatpush1.bf16.msra.mxu0 0
        %5959 = vmatprep.subr.bf16.mxu0 0
        %5960 = vmatpush1.bf16.msra.mxu0 0
        %5961 = vmatprep.subr.bf16.mxu0 0
        %5962 = vmatpush1.bf16.msra.mxu0 0
        %5963 = vmatprep.subr.bf16.mxu0 0
        %5964 = vmatpush1.bf16.msra.mxu0 0
        %5965 = vmatprep.subr.bf16.mxu0 0
        %5966 = vmatpush1.bf16.msra.mxu0 0
        %5967 = vmatprep.subr.bf16.mxu0 0
        %5968 = vmatpush1.bf16.msra.mxu0 0
        %5969 = vmatprep.subr.bf16.mxu0 0
        %5970 = vmatpush1.bf16.msra.mxu0 0
        %5971 = vmatprep.subr.bf16.mxu0 0
        %5972 = vmatpush1.bf16.msra.mxu0 0
        %5973 = vmatprep.subr.bf16.mxu0 0
        %5974 = vmatpush1.bf16.msra.mxu0 0
        %5975 = vmatprep.mubr.bf16.mxu0 0
        %5976 = vmatmul.mubr.bf16.gmra.mrb[0].mxu0 %v5941
        %v5977 = vpop.f32.mrb[0].mxu0
        %v5978 = vadd.f32 0.0, %v5977
        %v5979 = vpop.f32.mrb[0].mxu0
        %v5980 = vpop.f32.mrb[0].mxu0
        %v5981 = vpop.f32.mrb[0].mxu0
        %5982 = vdwg.mxu0
        %v5983 = vadd.f32 %v5920, %v5978
        %v5984 = vld [vmem:[#allocation4 + $0x1d0] sm:$0xf]
        %v5985 = vld [vmem:[#allocation4 + $0x1d4] sm:$0xf]
        %v5986 = vld [vmem:[#allocation4 + $0x1d8] sm:$0xf]
        %v5987 = vld [vmem:[#allocation4 + $0x1dc] sm:$0xf]
        %v5988 = vrot.slane %v5741, 2
        %v5993 = vunpack.c.l.b16 %v5984
        %v5994 = vunpack.c.l.b16 %v5985
        %v5995 = vunpack.c.l.b16 %v5986
        %v5996 = vunpack.c.l.b16 %v5987
        %v5997 = vpack.c.b16 %v5994, %v5993
        %v5998 = vpack.c.b16 %v5996, %v5995
        %v6002 = vsel %vm251, %v5988, 0
        %6004 = vmatprep.subr.bf16.mxu0 0
        %6005 = vmatpush1.bf16.msra.mxu0 %v5997
        %6006 = vmatprep.subr.bf16.mxu0 0
        %6007 = vmatpush1.bf16.msra.mxu0 %v5998
        %6008 = vmatprep.subr.bf16.mxu0 0
        %6009 = vmatpush1.bf16.msra.mxu0 0
        %6010 = vmatprep.subr.bf16.mxu0 0
        %6011 = vmatpush1.bf16.msra.mxu0 0
        %6012 = vmatprep.subr.bf16.mxu0 0
        %6013 = vmatpush1.bf16.msra.mxu0 0
        %6014 = vmatprep.subr.bf16.mxu0 0
        %6015 = vmatpush1.bf16.msra.mxu0 0
        %6016 = vmatprep.subr.bf16.mxu0 0
        %6017 = vmatpush1.bf16.msra.mxu0 0
        %6018 = vmatprep.subr.bf16.mxu0 0
        %6019 = vmatpush1.bf16.msra.mxu0 0
        %6020 = vmatprep.subr.bf16.mxu0 0
        %6021 = vmatpush1.bf16.msra.mxu0 0
        %6022 = vmatprep.subr.bf16.mxu0 0
        %6023 = vmatpush1.bf16.msra.mxu0 0
        %6024 = vmatprep.subr.bf16.mxu0 0
        %6025 = vmatpush1.bf16.msra.mxu0 0
        %6026 = vmatprep.subr.bf16.mxu0 0
        %6027 = vmatpush1.bf16.msra.mxu0 0
        %6028 = vmatprep.subr.bf16.mxu0 0
        %6029 = vmatpush1.bf16.msra.mxu0 0
        %6030 = vmatprep.subr.bf16.mxu0 0
        %6031 = vmatpush1.bf16.msra.mxu0 0
        %6032 = vmatprep.subr.bf16.mxu0 0
        %6033 = vmatpush1.bf16.msra.mxu0 0
        %6034 = vmatprep.subr.bf16.mxu0 0
        %6035 = vmatpush1.bf16.msra.mxu0 0
        %6036 = vmatprep.mubr.bf16.mxu0 0
        %6037 = vmatmul.mubr.bf16.gmra.mrb[0].mxu0 %v6002
        %v6038 = vpop.f32.mrb[0].mxu0
        %v6039 = vadd.f32 0.0, %v6038
        %v6040 = vpop.f32.mrb[0].mxu0
        %v6041 = vpop.f32.mrb[0].mxu0
        %v6042 = vpop.f32.mrb[0].mxu0
        %6043 = vdwg.mxu0
        %v6044 = vadd.f32 %v5983, %v6039
        %v6045 = vld [vmem:[%s3 + $0xa] sm:$0x1]
        %v6046 = vlaneseq
        %v6047 = vshrl.u32 %v6046, 7
        %v6048 = vsub.s32 0, %v6047
        %v6049 = vrot.slane %v6045, %v6048
        %v6050 = vadd.f32 %v6044, %v6049
        %v6051 = vtanh.pop %v6050
        %v6053 = vrot.slane %v6051, 6
        %v6055 = vsel %vm4794, 0.0, %v6053
        %v6056 = vsel %vm4794, %v6053, 0.0
        %v6057 = vld [vmem:[#allocation4 + $0x1e0] sm:$0xf]
        %v6058 = vld [vmem:[#allocation4 + $0x1e4] sm:$0xf]
        %v6059 = vld [vmem:[#allocation4 + $0x1e8] sm:$0xf]
        %v6060 = vld [vmem:[#allocation4 + $0x1ec] sm:$0xf]
        %v6061 = vpack.c.bf16 %v6055, %v6055
        %v6062 = vld [vmem:[#allocation4 + $0x1f0] sm:$0xf]
        %v6063 = vld [vmem:[#allocation4 + $0x1f4] sm:$0xf]
        %v6064 = vld [vmem:[#allocation4 + $0x1f8] sm:$0xf]
        %v6065 = vld [vmem:[#allocation4 + $0x1fc] sm:$0xf]
        %v6066 = vpack.c.bf16 %v6056, %v6055
        %v6068 = vshrl.u32 %v6066, 16
        %v6070 = vshll.u32 %v6066, 16
        %v6072 = vrot.slane %v6070, 1
        %v6073 = vor.u32 %v6068, %v6072
        %v6078 = vunpack.c.l.b16 %v6062
        %v6079 = vunpack.c.l.b16 %v6063
        %v6080 = vunpack.c.l.b16 %v6064
        %v6081 = vunpack.c.l.b16 %v6065
        %v6082 = vpack.c.b16 %v6079, %v6078
        %v6083 = vpack.c.b16 %v6081, %v6080
        %v6087 = vsel %vm251, %v6073, 0
        %6089 = vmatprep.subr.bf16.mxu0 0
        %6090 = vmatpush1.bf16.msra.mxu0 %v6082
        %6091 = vmatprep.subr.bf16.mxu0 0
        %6092 = vmatpush1.bf16.msra.mxu0 %v6083
        %6093 = vmatprep.subr.bf16.mxu0 0
        %6094 = vmatpush1.bf16.msra.mxu0 0
        %6095 = vmatprep.subr.bf16.mxu0 0
        %6096 = vmatpush1.bf16.msra.mxu0 0
        %6097 = vmatprep.subr.bf16.mxu0 0
        %6098 = vmatpush1.bf16.msra.mxu0 0
        %6099 = vmatprep.subr.bf16.mxu0 0
        %6100 = vmatpush1.bf16.msra.mxu0 0
        %6101 = vmatprep.subr.bf16.mxu0 0
        %6102 = vmatpush1.bf16.msra.mxu0 0
        %6103 = vmatprep.subr.bf16.mxu0 0
        %6104 = vmatpush1.bf16.msra.mxu0 0
        %6105 = vmatprep.subr.bf16.mxu0 0
        %6106 = vmatpush1.bf16.msra.mxu0 0
        %6107 = vmatprep.subr.bf16.mxu0 0
        %6108 = vmatpush1.bf16.msra.mxu0 0
        %6109 = vmatprep.subr.bf16.mxu0 0
        %6110 = vmatpush1.bf16.msra.mxu0 0
        %6111 = vmatprep.subr.bf16.mxu0 0
        %6112 = vmatpush1.bf16.msra.mxu0 0
        %6113 = vmatprep.subr.bf16.mxu0 0
        %6114 = vmatpush1.bf16.msra.mxu0 0
        %6115 = vmatprep.subr.bf16.mxu0 0
        %6116 = vmatpush1.bf16.msra.mxu0 0
        %6117 = vmatprep.subr.bf16.mxu0 0
        %6118 = vmatpush1.bf16.msra.mxu0 0
        %6119 = vmatprep.subr.bf16.mxu0 0
        %6120 = vmatpush1.bf16.msra.mxu0 0
        %6121 = vmatprep.mubr.bf16.mxu0 0
        %6122 = vmatmul.mubr.bf16.gmra.mrb[0].mxu0 %v6087
        %v6123 = vpop.f32.mrb[0].mxu0
        %v6124 = vadd.f32 0.0, %v6123
        %v6125 = vpop.f32.mrb[0].mxu0
        %v6126 = vpop.f32.mrb[0].mxu0
        %v6127 = vpop.f32.mrb[0].mxu0
        %6128 = vdwg.mxu0
        %v6133 = vunpack.c.l.b16 %v6057
        %v6134 = vunpack.c.l.b16 %v6058
        %v6135 = vunpack.c.l.b16 %v6059
        %v6136 = vunpack.c.l.b16 %v6060
        %v6137 = vpack.c.b16 %v6134, %v6133
        %v6138 = vpack.c.b16 %v6136, %v6135
        %v6142 = vsel %vm251, %v6061, 0
        %6144 = vmatprep.subr.bf16.mxu0 0
        %6145 = vmatpush1.bf16.msra.mxu0 %v6137
        %6146 = vmatprep.subr.bf16.mxu0 0
        %6147 = vmatpush1.bf16.msra.mxu0 %v6138
        %6148 = vmatprep.subr.bf16.mxu0 0
        %6149 = vmatpush1.bf16.msra.mxu0 0
        %6150 = vmatprep.subr.bf16.mxu0 0
        %6151 = vmatpush1.bf16.msra.mxu0 0
        %6152 = vmatprep.subr.bf16.mxu0 0
        %6153 = vmatpush1.bf16.msra.mxu0 0
        %6154 = vmatprep.subr.bf16.mxu0 0
        %6155 = vmatpush1.bf16.msra.mxu0 0
        %6156 = vmatprep.subr.bf16.mxu0 0
        %6157 = vmatpush1.bf16.msra.mxu0 0
        %6158 = vmatprep.subr.bf16.mxu0 0
        %6159 = vmatpush1.bf16.msra.mxu0 0
        %6160 = vmatprep.subr.bf16.mxu0 0
        %6161 = vmatpush1.bf16.msra.mxu0 0
        %6162 = vmatprep.subr.bf16.mxu0 0
        %6163 = vmatpush1.bf16.msra.mxu0 0
        %6164 = vmatprep.subr.bf16.mxu0 0
        %6165 = vmatpush1.bf16.msra.mxu0 0
        %6166 = vmatprep.subr.bf16.mxu0 0
        %6167 = vmatpush1.bf16.msra.mxu0 0
        %6168 = vmatprep.subr.bf16.mxu0 0
        %6169 = vmatpush1.bf16.msra.mxu0 0
        %6170 = vmatprep.subr.bf16.mxu0 0
        %6171 = vmatpush1.bf16.msra.mxu0 0
        %6172 = vmatprep.subr.bf16.mxu0 0
        %6173 = vmatpush1.bf16.msra.mxu0 0
        %6174 = vmatprep.subr.bf16.mxu0 0
        %6175 = vmatpush1.bf16.msra.mxu0 0
        %6176 = vmatprep.mubr.bf16.mxu0 0
        %6177 = vmatmul.mubr.bf16.gmra.mrb[0].mxu0 %v6142
        %v6178 = vpop.f32.mrb[0].mxu0
        %v6179 = vadd.f32 %v6124, %v6178
        %v6180 = vpop.f32.mrb[0].mxu0
        %v6181 = vpop.f32.mrb[0].mxu0
        %v6182 = vpop.f32.mrb[0].mxu0
        %6183 = vdwg.mxu0
        %v6184 = vld [vmem:[#allocation4 + $0x200] sm:$0xf]
        %v6185 = vld [vmem:[#allocation4 + $0x204] sm:$0xf]
        %v6186 = vld [vmem:[#allocation4 + $0x208] sm:$0xf]
        %v6187 = vld [vmem:[#allocation4 + $0x20c] sm:$0xf]
        %v6189 = vrot.slane %v6066, 1
        %v6194 = vunpack.c.l.b16 %v6184
        %v6195 = vunpack.c.l.b16 %v6185
        %v6196 = vunpack.c.l.b16 %v6186
        %v6197 = vunpack.c.l.b16 %v6187
        %v6198 = vpack.c.b16 %v6195, %v6194
        %v6199 = vpack.c.b16 %v6197, %v6196
        %v6203 = vsel %vm251, %v6189, 0
        %6205 = vmatprep.subr.bf16.mxu0 0
        %6206 = vmatpush1.bf16.msra.mxu0 %v6198
        %6207 = vmatprep.subr.bf16.mxu0 0
        %6208 = vmatpush1.bf16.msra.mxu0 %v6199
        %6209 = vmatprep.subr.bf16.mxu0 0
        %6210 = vmatpush1.bf16.msra.mxu0 0
        %6211 = vmatprep.subr.bf16.mxu0 0
        %6212 = vmatpush1.bf16.msra.mxu0 0
        %6213 = vmatprep.subr.bf16.mxu0 0
        %6214 = vmatpush1.bf16.msra.mxu0 0
        %6215 = vmatprep.subr.bf16.mxu0 0
        %6216 = vmatpush1.bf16.msra.mxu0 0
        %6217 = vmatprep.subr.bf16.mxu0 0
        %6218 = vmatpush1.bf16.msra.mxu0 0
        %6219 = vmatprep.subr.bf16.mxu0 0
        %6220 = vmatpush1.bf16.msra.mxu0 0
        %6221 = vmatprep.subr.bf16.mxu0 0
        %6222 = vmatpush1.bf16.msra.mxu0 0
        %6223 = vmatprep.subr.bf16.mxu0 0
        %6224 = vmatpush1.bf16.msra.mxu0 0
        %6225 = vmatprep.subr.bf16.mxu0 0
        %6226 = vmatpush1.bf16.msra.mxu0 0
        %6227 = vmatprep.subr.bf16.mxu0 0
        %6228 = vmatpush1.bf16.msra.mxu0 0
        %6229 = vmatprep.subr.bf16.mxu0 0
        %6230 = vmatpush1.bf16.msra.mxu0 0
        %6231 = vmatprep.subr.bf16.mxu0 0
        %6232 = vmatpush1.bf16.msra.mxu0 0
        %6233 = vmatprep.subr.bf16.mxu0 0
        %6234 = vmatpush1.bf16.msra.mxu0 0
        %6235 = vmatprep.subr.bf16.mxu0 0
        %6236 = vmatpush1.bf16.msra.mxu0 0
        %6237 = vmatprep.mubr.bf16.mxu0 0
        %6238 = vmatmul.mubr.bf16.gmra.mrb[0].mxu0 %v6203
        %v6239 = vpop.f32.mrb[0].mxu0
        %v6240 = vadd.f32 0.0, %v6239
        %v6241 = vpop.f32.mrb[0].mxu0
        %v6242 = vpop.f32.mrb[0].mxu0
        %v6243 = vpop.f32.mrb[0].mxu0
        %6244 = vdwg.mxu0
        %v6245 = vadd.f32 %v6179, %v6240
        %v6246 = vld [vmem:[#allocation4 + $0x210] sm:$0xf]
        %v6247 = vld [vmem:[#allocation4 + $0x214] sm:$0xf]
        %v6248 = vld [vmem:[#allocation4 + $0x218] sm:$0xf]
        %v6249 = vld [vmem:[#allocation4 + $0x21c] sm:$0xf]
        %v6250 = vrot.slane %v6068, 1
        %v6251 = vrot.slane %v6070, 2
        %v6252 = vor.u32 %v6250, %v6251
        %v6257 = vunpack.c.l.b16 %v6246
        %v6258 = vunpack.c.l.b16 %v6247
        %v6259 = vunpack.c.l.b16 %v6248
        %v6260 = vunpack.c.l.b16 %v6249
        %v6261 = vpack.c.b16 %v6258, %v6257
        %v6262 = vpack.c.b16 %v6260, %v6259
        %v6266 = vsel %vm251, %v6252, 0
        %6268 = vmatprep.subr.bf16.mxu0 0
        %6269 = vmatpush1.bf16.msra.mxu0 %v6261
        %6270 = vmatprep.subr.bf16.mxu0 0
        %6271 = vmatpush1.bf16.msra.mxu0 %v6262
        %6272 = vmatprep.subr.bf16.mxu0 0
        %6273 = vmatpush1.bf16.msra.mxu0 0
        %6274 = vmatprep.subr.bf16.mxu0 0
        %6275 = vmatpush1.bf16.msra.mxu0 0
        %6276 = vmatprep.subr.bf16.mxu0 0
        %6277 = vmatpush1.bf16.msra.mxu0 0
        %6278 = vmatprep.subr.bf16.mxu0 0
        %6279 = vmatpush1.bf16.msra.mxu0 0
        %6280 = vmatprep.subr.bf16.mxu0 0
        %6281 = vmatpush1.bf16.msra.mxu0 0
        %6282 = vmatprep.subr.bf16.mxu0 0
        %6283 = vmatpush1.bf16.msra.mxu0 0
        %6284 = vmatprep.subr.bf16.mxu0 0
        %6285 = vmatpush1.bf16.msra.mxu0 0
        %6286 = vmatprep.subr.bf16.mxu0 0
        %6287 = vmatpush1.bf16.msra.mxu0 0
        %6288 = vmatprep.subr.bf16.mxu0 0
        %6289 = vmatpush1.bf16.msra.mxu0 0
        %6290 = vmatprep.subr.bf16.mxu0 0
        %6291 = vmatpush1.bf16.msra.mxu0 0
        %6292 = vmatprep.subr.bf16.mxu0 0
        %6293 = vmatpush1.bf16.msra.mxu0 0
        %6294 = vmatprep.subr.bf16.mxu0 0
        %6295 = vmatpush1.bf16.msra.mxu0 0
        %6296 = vmatprep.subr.bf16.mxu0 0
        %6297 = vmatpush1.bf16.msra.mxu0 0
        %6298 = vmatprep.subr.bf16.mxu0 0
        %6299 = vmatpush1.bf16.msra.mxu0 0
        %6300 = vmatprep.mubr.bf16.mxu0 0
        %6301 = vmatmul.mubr.bf16.gmra.mrb[0].mxu0 %v6266
        %v6302 = vpop.f32.mrb[0].mxu0
        %v6303 = vadd.f32 0.0, %v6302
        %v6304 = vpop.f32.mrb[0].mxu0
        %v6305 = vpop.f32.mrb[0].mxu0
        %v6306 = vpop.f32.mrb[0].mxu0
        %6307 = vdwg.mxu0
        %v6308 = vadd.f32 %v6245, %v6303
        %v6309 = vld [vmem:[#allocation4 + $0x220] sm:$0xf]
        %v6310 = vld [vmem:[#allocation4 + $0x224] sm:$0xf]
        %v6311 = vld [vmem:[#allocation4 + $0x228] sm:$0xf]
        %v6312 = vld [vmem:[#allocation4 + $0x22c] sm:$0xf]
        %v6313 = vrot.slane %v6066, 2
        %v6318 = vunpack.c.l.b16 %v6309
        %v6319 = vunpack.c.l.b16 %v6310
        %v6320 = vunpack.c.l.b16 %v6311
        %v6321 = vunpack.c.l.b16 %v6312
        %v6322 = vpack.c.b16 %v6319, %v6318
        %v6323 = vpack.c.b16 %v6321, %v6320
        %v6327 = vsel %vm251, %v6313, 0
        %6329 = vmatprep.subr.bf16.mxu0 0
        %6330 = vmatpush1.bf16.msra.mxu0 %v6322
        %6331 = vmatprep.subr.bf16.mxu0 0
        %6332 = vmatpush1.bf16.msra.mxu0 %v6323
        %6333 = vmatprep.subr.bf16.mxu0 0
        %6334 = vmatpush1.bf16.msra.mxu0 0
        %6335 = vmatprep.subr.bf16.mxu0 0
        %6336 = vmatpush1.bf16.msra.mxu0 0
        %6337 = vmatprep.subr.bf16.mxu0 0
        %6338 = vmatpush1.bf16.msra.mxu0 0
        %6339 = vmatprep.subr.bf16.mxu0 0
        %6340 = vmatpush1.bf16.msra.mxu0 0
        %6341 = vmatprep.subr.bf16.mxu0 0
        %6342 = vmatpush1.bf16.msra.mxu0 0
        %6343 = vmatprep.subr.bf16.mxu0 0
        %6344 = vmatpush1.bf16.msra.mxu0 0
        %6345 = vmatprep.subr.bf16.mxu0 0
        %6346 = vmatpush1.bf16.msra.mxu0 0
        %6347 = vmatprep.subr.bf16.mxu0 0
        %6348 = vmatpush1.bf16.msra.mxu0 0
        %6349 = vmatprep.subr.bf16.mxu0 0
        %6350 = vmatpush1.bf16.msra.mxu0 0
        %6351 = vmatprep.subr.bf16.mxu0 0
        %6352 = vmatpush1.bf16.msra.mxu0 0
        %6353 = vmatprep.subr.bf16.mxu0 0
        %6354 = vmatpush1.bf16.msra.mxu0 0
        %6355 = vmatprep.subr.bf16.mxu0 0
        %6356 = vmatpush1.bf16.msra.mxu0 0
        %6357 = vmatprep.subr.bf16.mxu0 0
        %6358 = vmatpush1.bf16.msra.mxu0 0
        %6359 = vmatprep.subr.bf16.mxu0 0
        %6360 = vmatpush1.bf16.msra.mxu0 0
        %6361 = vmatprep.mubr.bf16.mxu0 0
        %6362 = vmatmul.mubr.bf16.gmra.mrb[0].mxu0 %v6327
        %v6363 = vpop.f32.mrb[0].mxu0
        %v6364 = vadd.f32 0.0, %v6363
        %v6365 = vpop.f32.mrb[0].mxu0
        %v6366 = vpop.f32.mrb[0].mxu0
        %v6367 = vpop.f32.mrb[0].mxu0
        %6368 = vdwg.mxu0
        %v6369 = vadd.f32 %v6308, %v6364
        %v6370 = vld [vmem:[%s3 + $0xb] sm:$0x1]
        %v6371 = vlaneseq
        %v6372 = vshrl.u32 %v6371, 7
        %v6373 = vsub.s32 0, %v6372
        %v6374 = vrot.slane %v6370, %v6373
        %v6375 = vadd.f32 %v6369, %v6374
        %v6376 = vadd.f32 %v4790, %v6375
        %6378 = vrot.lane.b32.xlu0 %v6376, 64
        %v6379 = vpop.permute.xlu0 %6378
        %vm6381 = vcmask 654848
        %6382 = vst.msk [vmem:[%s225] sm:$0xff] %vm6381, %v6379
        %s6383 = sand.u32 %s103, 1
        %s6384 = scalar_lea.sflag [#allocation6], %s6383
        %s6385 = sand.u32 %s103, 1
        %s6386 = smul.addr %s6385, 8
        %s6387 = scalar_lea.vmem [#allocation7], %s6386
        %p6388 = scmp.lt.s32.totalorder %s27, 1
        %s6389 = scalar_select %p6388, %s27, 1
        %s6390 = smul.addr %s6389, 8
        %s6391 = scalar_lea.vmem %s5, %s6390
        // Predicated region
        $region37: #{_forward_jit.1} parent=31 // pred_check
          %p6392 = pneg %p113
        $region38: #{_forward_jit.1} parent=31 // pred_check_branch
          %6394 = sbr.rel (%p6392) target = $region40
        $region39: #{_forward_jit.1} parent=31 // pred_region
          %s6396 = ssub.s32 128, 128
          %6397 = vsyncadd %s6384, %s6396
          %s6398 = smul.addr %s27, 128
          %s6399 = scalar_lea.hbm %s4, %s6398
          %s6401 = sshll.u32 %s6387, 4
          %s6402 = int_to_ptr.vmem [resolvable:$true] %s6401
          %6404 = dma.vmem_to_hbm [thread:$0]  %s6402, 128, %s6399, %s6384
        $region40: #{_forward_jit.1} parent=31 // pred_fallthru
          _
        // Predicated region
        $region41: #{_forward_jit.1} parent=31 // pred_check
          %p6405 = pneg %p139
        $region42: #{_forward_jit.1} parent=31 // pred_check_branch
          %6407 = sbr.rel (%p6405) target = $region44
        $region43: #{_forward_jit.1} parent=31 // pred_region
          _
        $region44: #{_forward_jit.1} parent=31 // pred_fallthru
          _
      $region32: #{_forward_jit.1} parent=5 // pred_fallthru
        _
      %p6408 = scmp.le.s32.totalorder 2, %s22
      // Predicated region
      $region45: #{_forward_jit.1} parent=5 // pred_check
        %p6409 = pneg %p6408
      $region46: #{_forward_jit.1} parent=5 // pred_check_branch
        %6411 = sbr.rel (%p6409) target = $region48
      $region47: #{_forward_jit.1} parent=5 // pred_region
        %s6412 = ssub.s32 %s22, 2
        // Predicated region
        $region49: #{_forward_jit.1} parent=47 // pred_check
          %p6413 = pneg %p119
        $region50: #{_forward_jit.1} parent=47 // pred_check_branch
          %6415 = sbr.rel (%p6413) target = $region52
        $region51: #{_forward_jit.1} parent=47 // pred_region
          %s6416 = sand.u32 %s104, 1
          %s6417 = scalar_lea.sflag [#allocation6], %s6416
          %s6418 = sand.u32 %s104, 1
          %s6419 = smul.addr %s6418, 8
          %s6420 = scalar_lea.vmem [#allocation7], %s6419
          %6421 = dma.done %s6417, 128
        $region52: #{_forward_jit.1} parent=47 // pred_fallthru
          _
        // Predicated region
        $region53: #{_forward_jit.1} parent=47 // pred_check
          %p6422 = pneg %p145
        $region54: #{_forward_jit.1} parent=47 // pred_check_branch
          %6424 = sbr.rel (%p6422) target = $region56
        $region55: #{_forward_jit.1} parent=47 // pred_region
          %p6425 = scmp.lt.s32.totalorder %s28, 1
          %s6426 = scalar_select %p6425, %s28, 1
          %s6427 = smul.addr %s6426, 8
          %s6428 = scalar_lea.vmem %s5, %s6427
        $region56: #{_forward_jit.1} parent=47 // pred_fallthru
          _
      $region48: #{_forward_jit.1} parent=5 // pred_fallthru
        _
    $region6: #{_forward_jit.1} parent=1 // loop_footer
      %s26 = sadd.s32 1, %s22
    $region7: #{_forward_jit.1} parent=1 // loop_footer_branch
      %21 = sbr.rel target = $region3
    $region8: #{_forward_jit.1} parent=1 // loop_exit
      _
    %6429 = vsyncpa [#allocation5], 1
    %s6430 = scalar_lea.sflag [#allocation5], 1
    %6431 = vsyncpa %s6430, 1
    %6432 = vsyncpa [#allocation6], 1
    %s6433 = scalar_lea.sflag [#allocation6], 1
    %6434 = vsyncpa %s6433, 1

</llo_original>
